<compile_context>
chip_gen: v7x
topology: tpu7x:2x2x1
jax: 0.10.0
libtpu: 0.0.40
codegen_flags: <defaults>
</compile_context>

<pallas_src>
import math
from functools import partial

import jax
import jax.numpy as jnp
from jax.experimental import pallas as pl
from jax.experimental.pallas import tpu as pltpu


# --------------------------- in-kernel helpers ----------------------------- #

def _ln_f32(x, g, b, eps):
    """LayerNorm over last dim; x (M, D) f32, g/b (1, D) f32."""
    mean = jnp.mean(x, axis=-1, keepdims=True)
    xc = x - mean
    var = jnp.mean(xc * xc, axis=-1, keepdims=True)
    return xc * jax.lax.rsqrt(var + eps) * g + b


def _attn_one(q_all, k_all, v_all, bias, n_heads):
    """All-heads scaled-dot-product attention for one batch row.

    q_all (Sq, D), k_all/v_all (Sk, D) f32; bias additive f32, broadcastable to
    (Sq, Sk).  Returns the concatenated per-head context (Sq, D) f32 (the output
    projection is applied by the caller as ONE full-K matmul).
    """
    _, D = q_all.shape
    Dh = D // n_heads
    scale = 1.0 / math.sqrt(Dh)
    outs = []
    for h in range(n_heads):
        lo = h * Dh
        qh = q_all[:, lo:lo + Dh].astype(jnp.bfloat16)
        kh = k_all[:, lo:lo + Dh].astype(jnp.bfloat16)
        vh = v_all[:, lo:lo + Dh].astype(jnp.bfloat16)
        # q @ k^T via dot_general contracting last dims (no explicit transpose).
        s = jax.lax.dot_general(qh, kh, (((1,), (1,)), ((), ())),
                                preferred_element_type=jnp.float32)
        s = s * scale + bias
        m = jnp.max(s, axis=-1, keepdims=True)
        p = jnp.exp(s - m)
        denom = jnp.sum(p, axis=-1, keepdims=True)
        p = p * pl.reciprocal(denom, approx=True)   # divide -> EUP slot
        outs.append(jnp.dot(p.astype(jnp.bfloat16), vh,
                            preferred_element_type=jnp.float32))
    return jnp.concatenate(outs, axis=-1)           # (Sq, D)


# ----------------------------- Pallas kernels ------------------------------ #

def _enc_stack_kernel(x_ref, kpm_ref, pe_ref,
                      pg, pb, pw, pbias,
                      ln1g, ln1b, wqkv, bqkv, wo, bo,
                      ln2g, ln2b, w1, b1, w2, b2,
                      o_ref, h_scr, *, n_heads, eps, bc, s, de, d):
    """Whole encoder stack: grid=(n_par, L); residual stream resident in VMEM."""
    l = pl.program_id(1)

    @pl.when(l == 0)
    def _():
        # embedding_projection: LayerNorm -> Dropout(eval) -> Linear, + pos.enc.
        x = x_ref[...].reshape(bc * s, de).astype(jnp.float32)
        xn = _ln_f32(x, pg[...], pb[...], eps)
        hp = jnp.dot(xn.astype(jnp.bfloat16), pw[...],
                     preferred_element_type=jnp.float32) + pbias[...]
        pe = pe_ref[...]
        hp = hp + (pe if bc == 1 else jnp.tile(pe, (bc, 1)))
        h_scr[...] = hp

    h = h_scr[...]                                          # (Bc*S, D) f32

    # --- self-attention block (pre-norm) ---
    a = _ln_f32(h, ln1g[...], ln1b[...], eps)
    qkv = jnp.dot(a.astype(jnp.bfloat16), wqkv[...],
                  preferred_element_type=jnp.float32) + bqkv[...]   # (Bc*S, 3D)
    rows = []
    for bi in range(bc):
        qkv_b = qkv[bi * s:(bi + 1) * s]
        rows.append(_attn_one(qkv_b[:, :d], qkv_b[:, d:2 * d], qkv_b[:, 2 * d:],
                              kpm_ref[bi], n_heads))
    attn = rows[0] if bc == 1 else jnp.concatenate(rows, axis=0)    # (Bc*S, D)
    h = h + jnp.dot(attn.astype(jnp.bfloat16), wo[...],
                    preferred_element_type=jnp.float32) + bo[...]

    # --- FFN block (pre-norm) ---
    f = _ln_f32(h, ln2g[...], ln2b[...], eps)
    f = jnp.dot(f.astype(jnp.bfloat16), w1[...],
                preferred_element_type=jnp.float32) + b1[...]
    f = jnp.maximum(f, 0.0)
    f = jnp.dot(f.astype(jnp.bfloat16), w2[...],
                preferred_element_type=jnp.float32) + b2[...]
    h = h + f
    h_scr[...] = h

    @pl.when(l == pl.num_programs(1) - 1)
    def _():
        o_ref[...] = h.reshape(bc, s, d).astype(o_ref.dtype)


def _dec_stack_kernel(x_ref, mem_ref, cbias_ref, skpm_ref, ckpm_ref,
                      ln1g, ln1b, wqkv, bqkv, wo1, bo1,
                      ln2g, ln2b, wqc, bqc, wkvc, bkvc, wo2, bo2,
                      ln3g, ln3b, w1, b1, w2, b2,
                      o_ref, h_scr, *, n_heads, eps, bc, st, sm, d):
    """Whole decoder stack: grid=(n_par, L); residual stream resident in VMEM."""
    l = pl.program_id(1)

    @pl.when(l == 0)
    def _():
        h_scr[...] = x_ref[...].reshape(bc * st, d).astype(jnp.float32)

    h = h_scr[...]                                          # (Bc*St, D) f32
    mem = mem_ref[...].reshape(bc * sm, d).astype(jnp.bfloat16)

    # --- causal self-attention ---
    a = _ln_f32(h, ln1g[...], ln1b[...], eps)
    qkv = jnp.dot(a.astype(jnp.bfloat16), wqkv[...],
                  preferred_element_type=jnp.float32) + bqkv[...]   # (Bc*St, 3D)
    rows = []
    for bi in range(bc):
        qkv_b = qkv[bi * st:(bi + 1) * st]
        bias = cbias_ref[...] + skpm_ref[bi]                # (St,St) + (1,St)
        rows.append(_attn_one(qkv_b[:, :d], qkv_b[:, d:2 * d], qkv_b[:, 2 * d:],
                              bias, n_heads))
    attn = rows[0] if bc == 1 else jnp.concatenate(rows, axis=0)
    h = h + jnp.dot(attn.astype(jnp.bfloat16), wo1[...],
                    preferred_element_type=jnp.float32) + bo1[...]

    # --- cross-attention over encoder memory ---
    c = _ln_f32(h, ln2g[...], ln2b[...], eps)
    qc = jnp.dot(c.astype(jnp.bfloat16), wqc[...],
                 preferred_element_type=jnp.float32) + bqc[...]     # (Bc*St, D)
    kvm = jnp.dot(mem, wkvc[...],
                  preferred_element_type=jnp.float32) + bkvc[...]   # (Bc*Sm, 2D)
    rows = []
    for bi in range(bc):
        q_b = qc[bi * st:(bi + 1) * st]
        kv_b = kvm[bi * sm:(bi + 1) * sm]
        rows.append(_attn_one(q_b, kv_b[:, :d], kv_b[:, d:],
                              ckpm_ref[bi], n_heads))
    attn = rows[0] if bc == 1 else jnp.concatenate(rows, axis=0)
    h = h + jnp.dot(attn.astype(jnp.bfloat16), wo2[...],
                    preferred_element_type=jnp.float32) + bo2[...]

    # --- FFN block ---
    f = _ln_f32(h, ln3g[...], ln3b[...], eps)
    f = jnp.dot(f.astype(jnp.bfloat16), w1[...],
                preferred_element_type=jnp.float32) + b1[...]
    f = jnp.maximum(f, 0.0)
    f = jnp.dot(f.astype(jnp.bfloat16), w2[...],
                preferred_element_type=jnp.float32) + b2[...]
    h = h + f
    h_scr[...] = h

    @pl.when(l == pl.num_programs(1) - 1)
    def _():
        o_ref[...] = h.reshape(bc, st, d).astype(o_ref.dtype)


def _ln_vocab_kernel(x_ref, g_ref, b_ref, w_ref, o_ref, *, eps):
    """Fused final LayerNorm + tied-embedding vocab projection (one N tile)."""
    x = x_ref[...].astype(jnp.float32)
    xn = _ln_f32(x, g_ref[...], b_ref[...], eps)
    o_ref[...] = jnp.dot(xn.astype(jnp.bfloat16), w_ref[...],
                         preferred_element_type=jnp.float32).astype(o_ref.dtype)


# ------------------------------- wrappers ----------------------------------- #

_VMEM_LIMIT = 32 * 1024 * 1024   # explicit scoped-VMEM budget (safe on v5e/v6e/v7x)


def _const_spec(a):
    """Full-array BlockSpec, constant block index across the (b, l) grid."""
    return pl.BlockSpec(tuple(a.shape), lambda b, l, _n=a.ndim: (0,) * _n)


def _stacked_spec(a):
    """Per-layer weight stacked on a leading L axis; indexed by the l grid axis."""
    return pl.BlockSpec((None,) + tuple(a.shape[1:]),
                        lambda b, l, _n=a.ndim: (l,) + (0,) * (_n - 1))


def _num_parallel(B):
    # Keep >=2 parallel grid points when possible (v7x: two TensorCores),
    # otherwise fold the whole batch into one step (v5e/v6e friendly).
    return 2 if (B >= 2 and B % 2 == 0) else 1


def fused_encoder_stack(x, kpm, pe_s, p, lp, n_heads, eps=1e-5):
    B, S, De = x.shape
    D = pe_s.shape[-1]
    L = lp["wqkv"].shape[0]
    n_par = _num_parallel(B)
    Bc = B // n_par

    proj_ws = [p["proj_ln_g"], p["proj_ln_b"], p["proj_w"], p["proj_b"]]
    layer_ws = [lp[k] for k in ("ln1_g", "ln1_b", "wqkv", "bqkv", "wo", "bo",
                                "ln2_g", "ln2_b", "w1", "b1", "w2", "b2")]

    in_specs = ([pl.BlockSpec((Bc, S, De), lambda b, l: (b, 0, 0)),
                 pl.BlockSpec((Bc, 1, S), lambda b, l: (b, 0, 0)),
                 _const_spec(pe_s)]
                + [_const_spec(w) for w in proj_ws]
                + [_stacked_spec(w) for w in layer_ws])

    return pl.pallas_call(
        partial(_enc_stack_kernel, n_heads=n_heads, eps=eps,
                bc=Bc, s=S, de=De, d=D),
        out_shape=jax.ShapeDtypeStruct((B, S, D), jnp.float32),
        grid=(n_par, L),
        in_specs=in_specs,
        out_specs=pl.BlockSpec((Bc, S, D), lambda b, l: (b, 0, 0)),
        scratch_shapes=[pltpu.VMEM((Bc * S, D), jnp.float32)],
        compiler_params=pltpu.CompilerParams(
            dimension_semantics=("parallel", "arbitrary"),
            vmem_limit_bytes=_VMEM_LIMIT),
    )(x, kpm, pe_s, *proj_ws, *layer_ws)


def fused_decoder_stack(h0, memory, causal, skpm, ckpm, lp, n_heads, eps=1e-5):
    B, St, D = h0.shape
    Sm = memory.shape[1]
    L = lp["wqkv"].shape[0]
    n_par = _num_parallel(B)
    Bc = B // n_par

    layer_ws = [lp[k] for k in ("ln1_g", "ln1_b", "wqkv", "bqkv", "wo1", "bo1",
                                "ln2_g", "ln2_b", "wq_c", "bq_c", "wkv_c",
                                "bkv_c", "wo2", "bo2",
                                "ln3_g", "ln3_b", "w1", "b1", "w2", "b2")]

    in_specs = ([pl.BlockSpec((Bc, St, D), lambda b, l: (b, 0, 0)),
                 pl.BlockSpec((Bc, Sm, D), lambda b, l: (b, 0, 0)),
                 _const_spec(causal),
                 pl.BlockSpec((Bc, 1, St), lambda b, l: (b, 0, 0)),
                 pl.BlockSpec((Bc, 1, Sm), lambda b, l: (b, 0, 0))]
                + [_stacked_spec(w) for w in layer_ws])

    return pl.pallas_call(
        partial(_dec_stack_kernel, n_heads=n_heads, eps=eps,
                bc=Bc, st=St, sm=Sm, d=D),
        out_shape=jax.ShapeDtypeStruct((B, St, D), jnp.float32),
        grid=(n_par, L),
        in_specs=in_specs,
        out_specs=pl.BlockSpec((Bc, St, D), lambda b, l: (b, 0, 0)),
        scratch_shapes=[pltpu.VMEM((Bc * St, D), jnp.float32)],
        compiler_params=pltpu.CompilerParams(
            dimension_semantics=("parallel", "arbitrary"),
            vmem_limit_bytes=_VMEM_LIMIT),
    )(h0, memory, causal, skpm, ckpm, *layer_ws)


def fused_ln_vocab_proj(x, g, b, w_vocab, vocab_size, eps=1e-5):
    """Final LayerNorm + logits = ln(x) @ W_vocab, batch folded into M,
    lane-dense N tiles (largest <=512 divisor of the padded vocab)."""
    B, St, D = x.shape
    Vpad = w_vocab.shape[1]
    tile_n = 512
    while Vpad % tile_n:
        tile_n //= 2
    n_tiles = Vpad // tile_n
    M = B * St
    x2 = x.reshape(M, D)

    out = pl.pallas_call(
        partial(_ln_vocab_kernel, eps=eps),
        out_shape=jax.ShapeDtypeStruct((M, Vpad), jnp.float32),
        grid=(n_tiles,),
        in_specs=[pl.BlockSpec((M, D), lambda j: (0, 0)),
                  pl.BlockSpec((1, D), lambda j: (0, 0)),
                  pl.BlockSpec((1, D), lambda j: (0, 0)),
                  pl.BlockSpec((D, tile_n), lambda j: (0, j))],
        out_specs=pl.BlockSpec((M, tile_n), lambda j: (0, j)),
        compiler_params=pltpu.CompilerParams(
            dimension_semantics=("parallel",),
            vmem_limit_bytes=_VMEM_LIMIT),
    )(x2, g, b, w_vocab)
    return out.reshape(B, St, Vpad)[:, :, :vocab_size]


# ------------------------------ model pieces -------------------------------- #

def additive_key_padding_mask(mask_bool, B, S):
    """bool (B, S), True == padded  ->  additive f32 (B, 1, S) with -1e9."""
    if mask_bool is None:
        return jnp.zeros((B, 1, S), jnp.float32)
    return jnp.where(mask_bool, -1e9, 0.0).astype(jnp.float32).reshape(B, 1, S)


def positional_encoding(max_len, d_model):
    position = jnp.arange(max_len, dtype=jnp.float32)[:, None]
    div_term = jnp.exp(jnp.arange(0, d_model, 2, dtype=jnp.float32)
                       * (-math.log(10000.0) / d_model))
    pe = jnp.zeros((max_len, d_model), jnp.float32)
    pe = pe.at[:, 0::2].set(jnp.sin(position * div_term))
    pe = pe.at[:, 1::2].set(jnp.cos(position * div_term))
    return pe[None]  # (1, max_len, d_model)


def encoder_forward(params, x, x_mask, n_heads):
    B, S, _ = x.shape
    kpm = additive_key_padding_mask(x_mask, B, S)
    pe_s = params["pe"][0, :S]                       # (S, D)
    # whole encoder (embedding projection + PE + all layers) in one pallas_call
    return fused_encoder_stack(x, kpm, pe_s, params, params["layers"], n_heads)


def decoder_forward(params, tokens, memory, token_mask, memory_mask,
                    n_heads, vocab_size):
    B, St = tokens.shape
    Sm = memory.shape[1]
    # token-embedding gather + PE add as glue XLA ops (tiny, fuse together)
    h0 = params["embedding"][tokens] + params["pe"][0, :St]
    skpm = additive_key_padding_mask(token_mask, B, St)
    ckpm = additive_key_padding_mask(memory_mask, B, Sm)
    row = jnp.arange(St, dtype=jnp.int32)[:, None]
    col = jnp.arange(St, dtype=jnp.int32)[None, :]
    causal = jnp.where(col > row, -1e9, 0.0).astype(jnp.float32)   # (St, St)
    h = fused_decoder_stack(h0, memory, causal, skpm, ckpm,
                            params["layers"], n_heads)
    return fused_ln_vocab_proj(h, params["ln_g"], params["ln_b"],
                               params["vocab_w"], vocab_size)


def audio_captioner_forward(params, embeddings, tokens,
                            embedding_mask=None, token_mask=None,
                            *, n_enc_heads, n_dec_heads, vocab_size):
    enc_out = encoder_forward(params["encoder"], embeddings, embedding_mask,
                              n_enc_heads)
    return decoder_forward(params["decoder"], tokens, enc_out,
                           token_mask, embedding_mask, n_dec_heads, vocab_size)


# ------------------------------- param init --------------------------------- #

def init_params(key, cfg):
    D, De, V = cfg["d_model"], cfg["d_embedding"], cfg["vocab_size"]
    Le, Ld = cfg["n_enc_layers"], cfg["n_dec_layers"]
    dff = 4 * D
    Vpad = ((V + 127) // 128) * 128
    keys = iter(jax.random.split(key, 64))

    def w(shape, scale=0.02):
        # Pre-transposed (K, N), bf16: MXU-ready, no per-call transpose / cast.
        return (scale * jax.random.normal(next(keys), shape, jnp.float32)
                ).astype(jnp.bfloat16)

    zeros = lambda s: jnp.zeros(s, jnp.float32)
    ones = lambda s: jnp.ones(s, jnp.float32)

    # Per-layer weights stacked on a leading L axis (consumed by the l grid axis).
    enc_layers = dict(
        ln1_g=ones((Le, 1, D)), ln1_b=zeros((Le, 1, D)),
        wqkv=w((Le, D, 3 * D)), bqkv=zeros((Le, 1, 3 * D)),
        wo=w((Le, D, D)), bo=zeros((Le, 1, D)),
        ln2_g=ones((Le, 1, D)), ln2_b=zeros((Le, 1, D)),
        w1=w((Le, D, dff)), b1=zeros((Le, 1, dff)),
        w2=w((Le, dff, D)), b2=zeros((Le, 1, D)))
    dec_layers = dict(
        ln1_g=ones((Ld, 1, D)), ln1_b=zeros((Ld, 1, D)),
        wqkv=w((Ld, D, 3 * D)), bqkv=zeros((Ld, 1, 3 * D)),
        wo1=w((Ld, D, D)), bo1=zeros((Ld, 1, D)),
        ln2_g=ones((Ld, 1, D)), ln2_b=zeros((Ld, 1, D)),
        wq_c=w((Ld, D, D)), bq_c=zeros((Ld, 1, D)),
        wkv_c=w((Ld, D, 2 * D)), bkv_c=zeros((Ld, 1, 2 * D)),
        wo2=w((Ld, D, D)), bo2=zeros((Ld, 1, D)),
        ln3_g=ones((Ld, 1, D)), ln3_b=zeros((Ld, 1, D)),
        w1=w((Ld, D, dff)), b1=zeros((Ld, 1, dff)),
        w2=w((Ld, dff, D)), b2=zeros((Ld, 1, D)))

    pe = positional_encoding(cfg["max_tokens"], D)
    embedding = jax.random.normal(next(keys), (V, D), jnp.float32)
    # Tied vocab projection: embedding.T, zero-padded to a 128-multiple so the
    # logits kernel stores lane-dense (unmasked) tiles.
    vocab_w = jnp.zeros((D, Vpad), jnp.float32).at[:, :V].set(embedding.T)
    vocab_w = vocab_w.astype(jnp.bfloat16)

    # NOTE: mask_token parameters exist in the PyTorch module but are only used
    # when training with p_mask > 0, which is off in this eval-mode forward.
    encoder = dict(proj_ln_g=ones((1, De)), proj_ln_b=zeros((1, De)),
                   proj_w=w((De, D)), proj_b=zeros((1, D)),
                   pe=pe, layers=enc_layers)
    decoder = dict(embedding=embedding, vocab_w=vocab_w, pe=pe,
                   ln_g=ones((1, D)), ln_b=zeros((1, D)),
                   layers=dec_layers)
    return dict(encoder=encoder, decoder=decoder)


# ---------------------------------- main ------------------------------------ #

if __name__ == "__main__":
    cfg = dict(d_embedding=48, vocab_size=100, d_model=64,
               n_enc_layers=2, n_enc_heads=4,
               n_dec_layers=2, n_dec_heads=4,
               max_tokens=64)

    key = jax.random.PRNGKey(0)
    pkey, ekey, tkey = jax.random.split(key, 3)
    params = init_params(pkey, cfg)

    B, S_emb, S_tok = 2, 16, 8
    embeddings = jax.random.normal(ekey, (B, S_emb, cfg["d_embedding"]), jnp.float32)
    tokens = jax.random.randint(tkey, (B, S_tok), 0, cfg["vocab_size"], jnp.int32)

    fwd = jax.jit(partial(audio_captioner_forward,
                          n_enc_heads=cfg["n_enc_heads"],
                          n_dec_heads=cfg["n_dec_heads"],
                          vocab_size=cfg["vocab_size"]))
    logits = fwd(params, embeddings, tokens)
    jax.block_until_ready(logits)

    assert logits.shape == (B, S_tok, cfg["vocab_size"]), logits.shape
    assert bool(jnp.all(jnp.isfinite(logits)))
    print("KERNEL_OK")
</pallas_src>

<mosaic_0001>
module attributes {stable_mosaic.version = 11 : i64} {
  func.func @_ln_vocab_kernel(%arg0: i32, %arg1: memref<16x64xf32, #tpu.memory_space<vmem>>, %arg2: memref<1x64xf32, #tpu.memory_space<vmem>>, %arg3: memref<1x64xf32, #tpu.memory_space<vmem>>, %arg4: memref<64x128xbf16, #tpu.memory_space<vmem>>, %arg5: memref<16x128xf32, #tpu.memory_space<vmem>>) attributes {dimension_semantics = [#tpu.dimension_semantics<parallel>], iteration_bounds = array<i64: 1>, scalar_prefetch = 0 : i64, scratch_operands = 0 : i64, tpu.core_type = #tpu.core_type<tc>, window_params = [{pipeline_mode = #tpu.pipeline_mode<synchronous>, transform_indices = @transform_0, window_bounds = array<i64: 16, 64>}, {pipeline_mode = #tpu.pipeline_mode<synchronous>, transform_indices = @transform_1, window_bounds = array<i64: 1, 64>}, {pipeline_mode = #tpu.pipeline_mode<synchronous>, transform_indices = @transform_2, window_bounds = array<i64: 1, 64>}, {transform_indices = @transform_3, window_bounds = array<i64: 64, 128>}, {transform_indices = @transform_4, window_bounds = array<i64: 16, 128>}]} {
    %c0 = arith.constant 0 : index
    %c0_0 = arith.constant 0 : index
    %0 = vector.load %arg1[%c0, %c0_0] : memref<16x64xf32, #tpu.memory_space<vmem>>, vector<16x64xf32>
    %c0_1 = arith.constant 0 : index
    %c0_2 = arith.constant 0 : index
    %1 = vector.load %arg2[%c0_1, %c0_2] : memref<1x64xf32, #tpu.memory_space<vmem>>, vector<1x64xf32>
    %c0_3 = arith.constant 0 : index
    %c0_4 = arith.constant 0 : index
    %2 = vector.load %arg3[%c0_3, %c0_4] : memref<1x64xf32, #tpu.memory_space<vmem>>, vector<1x64xf32>
    %cst = arith.constant dense<0.000000e+00> : vector<16xf32>
    %3 = vector.multi_reduction <add>, %0, %cst [1] : vector<16x64xf32> to vector<16xf32>
    %4 = vector.shape_cast %3 : vector<16xf32> to vector<16x1xf32>
    %cst_5 = arith.constant 6.400000e+01 : f32
    %5 = vector.broadcast %cst_5 : f32 to vector<16x1xf32>
    %6 = arith.divf %4, %5 : vector<16x1xf32>
    %7 = vector.broadcast %6 : vector<16x1xf32> to vector<16x64xf32>
    %8 = arith.subf %0, %7 : vector<16x64xf32>
    %9 = arith.mulf %8, %8 : vector<16x64xf32>
    %cst_6 = arith.constant dense<0.000000e+00> : vector<16xf32>
    %10 = vector.multi_reduction <add>, %9, %cst_6 [1] : vector<16x64xf32> to vector<16xf32>
    %11 = vector.shape_cast %10 : vector<16xf32> to vector<16x1xf32>
    %cst_7 = arith.constant 6.400000e+01 : f32
    %12 = vector.broadcast %cst_7 : f32 to vector<16x1xf32>
    %13 = arith.divf %11, %12 : vector<16x1xf32>
    %cst_8 = arith.constant 9.99999974E-6 : f32
    %14 = vector.broadcast %cst_8 : f32 to vector<16x1xf32>
    %15 = arith.addf %13, %14 : vector<16x1xf32>
    %16 = math.rsqrt %15 : vector<16x1xf32>
    %17 = vector.broadcast %16 : vector<16x1xf32> to vector<16x64xf32>
    %18 = arith.mulf %8, %17 : vector<16x64xf32>
    %19 = vector.broadcast %1 : vector<1x64xf32> to vector<16x64xf32>
    %20 = arith.mulf %18, %19 : vector<16x64xf32>
    %21 = vector.broadcast %2 : vector<1x64xf32> to vector<16x64xf32>
    %22 = arith.addf %20, %21 : vector<16x64xf32>
    %23 = arith.truncf %22 : vector<16x64xf32> to vector<16x64xbf16>
    %c0_9 = arith.constant 0 : index
    %c0_10 = arith.constant 0 : index
    %24 = vector.load %arg4[%c0_9, %c0_10] : memref<64x128xbf16, #tpu.memory_space<vmem>>, vector<64x128xbf16>
    %cst_11 = arith.constant dense<0.000000e+00> : vector<16x128xf32>
    %25 = tpu.matmul %23, %24, %cst_11 {dimension_numbers = #tpu.dot_dimension_numbers<[1], [0], [0], [1], [0, 0, 1, 1], [], []>} : vector<16x64xbf16>, vector<64x128xbf16>, vector<16x128xf32> -> vector<16x128xf32>
    %c0_12 = arith.constant 0 : index
    %c0_13 = arith.constant 0 : index
    %26 = vector.load %arg5[%c0_12, %c0_13] : memref<16x128xf32, #tpu.memory_space<vmem>>, vector<16x128xf32>
    tpu.vector_store %arg5[%c0_12, %c0_13], %25 {strides = array<i32>} : memref<16x128xf32, #tpu.memory_space<vmem>>, vector<16x128xf32>,
    return
  }
  func.func @transform_0(%arg0: i32) -> (i32, i32) {
    %c0_i32 = arith.constant 0 : i32
    %c0_i32_0 = arith.constant 0 : i32
    %c0_i32_1 = arith.constant 0 : i32
    return %c0_i32, %c0_i32_0 : i32, i32
  }
  func.func @transform_1(%arg0: i32) -> (i32, i32) {
    %c0_i32 = arith.constant 0 : i32
    %c0_i32_0 = arith.constant 0 : i32
    %c0_i32_1 = arith.constant 0 : i32
    return %c0_i32, %c0_i32_0 : i32, i32
  }
  func.func @transform_2(%arg0: i32) -> (i32, i32) {
    %c0_i32 = arith.constant 0 : i32
    %c0_i32_0 = arith.constant 0 : i32
    %c0_i32_1 = arith.constant 0 : i32
    return %c0_i32, %c0_i32_0 : i32, i32
  }
  func.func @transform_3(%arg0: i32) -> (i32, i32) {
    %c0_i32 = arith.constant 0 : i32
    %c0_i32_0 = arith.constant 0 : i32
    return %c0_i32, %arg0 : i32, i32
  }
  func.func @transform_4(%arg0: i32) -> (i32, i32) {
    %c0_i32 = arith.constant 0 : i32
    %c0_i32_0 = arith.constant 0 : i32
    return %c0_i32, %arg0 : i32, i32
  }
}

module attributes {stable_mosaic.version = 11 : i64} {
  func.func @_enc_stack_kernel(%arg0: i32, %arg1: i32, %arg2: memref<1x16x48xf32, #tpu.memory_space<vmem>>, %arg3: memref<1x1x16xf32, #tpu.memory_space<vmem>>, %arg4: memref<16x64xf32, #tpu.memory_space<vmem>>, %arg5: memref<1x48xf32, #tpu.memory_space<vmem>>, %arg6: memref<1x48xf32, #tpu.memory_space<vmem>>, %arg7: memref<48x64xbf16, #tpu.memory_space<vmem>>, %arg8: memref<1x64xf32, #tpu.memory_space<vmem>>, %arg9: memref<1x1x64xf32, #tpu.memory_space<vmem>>, %arg10: memref<1x1x64xf32, #tpu.memory_space<vmem>>, %arg11: memref<1x64x192xbf16, #tpu.memory_space<vmem>>, %arg12: memref<1x1x192xf32, #tpu.memory_space<vmem>>, %arg13: memref<1x64x64xbf16, #tpu.memory_space<vmem>>, %arg14: memref<1x1x64xf32, #tpu.memory_space<vmem>>, %arg15: memref<1x1x64xf32, #tpu.memory_space<vmem>>, %arg16: memref<1x1x64xf32, #tpu.memory_space<vmem>>, %arg17: memref<1x64x256xbf16, #tpu.memory_space<vmem>>, %arg18: memref<1x1x256xf32, #tpu.memory_space<vmem>>, %arg19: memref<1x256x64xbf16, #tpu.memory_space<vmem>>, %arg20: memref<1x1x64xf32, #tpu.memory_space<vmem>>, %arg21: memref<1x16x64xf32, #tpu.memory_space<vmem>>, %arg22: memref<16x64xf32, #tpu.memory_space<vmem>>) attributes {dimension_semantics = [#tpu.dimension_semantics<parallel>, #tpu.dimension_semantics<arbitrary>], iteration_bounds = array<i64: 2, 2>, scalar_prefetch = 0 : i64, scratch_operands = 1 : i64, tpu.core_type = #tpu.core_type<tc>, window_params = [{transform_indices = @transform_0, window_bounds = array<i64: 1, 16, 48>}, {transform_indices = @transform_1, window_bounds = array<i64: 1, 1, 16>}, {pipeline_mode = #tpu.pipeline_mode<synchronous>, transform_indices = @transform_2, window_bounds = array<i64: 16, 64>}, {pipeline_mode = #tpu.pipeline_mode<synchronous>, transform_indices = @transform_3, window_bounds = array<i64: 1, 48>}, {pipeline_mode = #tpu.pipeline_mode<synchronous>, transform_indices = @transform_4, window_bounds = array<i64: 1, 48>}, {pipeline_mode = #tpu.pipeline_mode<synchronous>, transform_indices = @transform_5, window_bounds = array<i64: 48, 64>}, {pipeline_mode = #tpu.pipeline_mode<synchronous>, transform_indices = @transform_6, window_bounds = array<i64: 1, 64>}, {transform_indices = @transform_7, window_bounds = array<i64: 1, 1, 64>}, {transform_indices = @transform_8, window_bounds = array<i64: 1, 1, 64>}, {transform_indices = @transform_9, window_bounds = array<i64: 1, 64, 192>}, {transform_indices = @transform_10, window_bounds = array<i64: 1, 1, 192>}, {transform_indices = @transform_11, window_bounds = array<i64: 1, 64, 64>}, {transform_indices = @transform_12, window_bounds = array<i64: 1, 1, 64>}, {transform_indices = @transform_13, window_bounds = array<i64: 1, 1, 64>}, {transform_indices = @transform_14, window_bounds = array<i64: 1, 1, 64>}, {transform_indices = @transform_15, window_bounds = array<i64: 1, 64, 256>}, {transform_indices = @transform_16, window_bounds = array<i64: 1, 1, 256>}, {transform_indices = @transform_17, window_bounds = array<i64: 1, 256, 64>}, {transform_indices = @transform_18, window_bounds = array<i64: 1, 1, 64>}, {transform_indices = @transform_19, window_bounds = array<i64: 1, 16, 64>}]} {
    %c0_i32 = arith.constant 0 : i32
    %0 = arith.cmpi eq, %arg1, %c0_i32 : i32
    %1 = arith.extui %0 : i1 to i32
    %c0_i32_0 = arith.constant 0 : i32
    %2 = arith.cmpi ne, %1, %c0_i32_0 : i32
    scf.if %2 {
      %c0_78 = arith.constant 0 : index
      %c0_79 = arith.constant 0 : index
      %c0_80 = arith.constant 0 : index
      %190 = vector.load %arg2[%c0_78, %c0_79, %c0_80] : memref<1x16x48xf32, #tpu.memory_space<vmem>>, vector<1x16x48xf32>
      %191 = vector.shape_cast %190 : vector<1x16x48xf32> to vector<16x48xf32>
      %c0_81 = arith.constant 0 : index
      %c0_82 = arith.constant 0 : index
      %192 = vector.load %arg5[%c0_81, %c0_82] : memref<1x48xf32, #tpu.memory_space<vmem>>, vector<1x48xf32>
      %c0_83 = arith.constant 0 : index
      %c0_84 = arith.constant 0 : index
      %193 = vector.load %arg6[%c0_83, %c0_84] : memref<1x48xf32, #tpu.memory_space<vmem>>, vector<1x48xf32>
      %cst_85 = arith.constant dense<0.000000e+00> : vector<16xf32>
      %194 = vector.multi_reduction <add>, %191, %cst_85 [1] : vector<16x48xf32> to vector<16xf32>
      %195 = vector.shape_cast %194 : vector<16xf32> to vector<16x1xf32>
      %cst_86 = arith.constant 4.800000e+01 : f32
      %196 = vector.broadcast %cst_86 : f32 to vector<16x1xf32>
      %197 = arith.divf %195, %196 : vector<16x1xf32>
      %198 = vector.broadcast %197 : vector<16x1xf32> to vector<16x48xf32>
      %199 = arith.subf %191, %198 : vector<16x48xf32>
      %200 = arith.mulf %199, %199 : vector<16x48xf32>
      %cst_87 = arith.constant dense<0.000000e+00> : vector<16xf32>
      %201 = vector.multi_reduction <add>, %200, %cst_87 [1] : vector<16x48xf32> to vector<16xf32>
      %202 = vector.shape_cast %201 : vector<16xf32> to vector<16x1xf32>
      %cst_88 = arith.constant 4.800000e+01 : f32
      %203 = vector.broadcast %cst_88 : f32 to vector<16x1xf32>
      %204 = arith.divf %202, %203 : vector<16x1xf32>
      %cst_89 = arith.constant 9.99999974E-6 : f32
      %205 = vector.broadcast %cst_89 : f32 to vector<16x1xf32>
      %206 = arith.addf %204, %205 : vector<16x1xf32>
      %207 = math.rsqrt %206 : vector<16x1xf32>
      %208 = vector.broadcast %207 : vector<16x1xf32> to vector<16x48xf32>
      %209 = arith.mulf %199, %208 : vector<16x48xf32>
      %210 = vector.broadcast %192 : vector<1x48xf32> to vector<16x48xf32>
      %211 = arith.mulf %209, %210 : vector<16x48xf32>
      %212 = vector.broadcast %193 : vector<1x48xf32> to vector<16x48xf32>
      %213 = arith.addf %211, %212 : vector<16x48xf32>
      %214 = arith.truncf %213 : vector<16x48xf32> to vector<16x48xbf16>
      %c0_90 = arith.constant 0 : index
      %c0_91 = arith.constant 0 : index
      %215 = vector.load %arg7[%c0_90, %c0_91] : memref<48x64xbf16, #tpu.memory_space<vmem>>, vector<48x64xbf16>
      %cst_92 = arith.constant dense<0.000000e+00> : vector<16x64xf32>
      %216 = tpu.matmul %214, %215, %cst_92 {dimension_numbers = #tpu.dot_dimension_numbers<[1], [0], [0], [1], [0, 0, 1, 1], [], []>} : vector<16x48xbf16>, vector<48x64xbf16>, vector<16x64xf32> -> vector<16x64xf32>
      %c0_93 = arith.constant 0 : index
      %c0_94 = arith.constant 0 : index
      %217 = vector.load %arg8[%c0_93, %c0_94] : memref<1x64xf32, #tpu.memory_space<vmem>>, vector<1x64xf32>
      %218 = vector.broadcast %217 : vector<1x64xf32> to vector<16x64xf32>
      %219 = arith.addf %216, %218 : vector<16x64xf32>
      %c0_95 = arith.constant 0 : index
      %c0_96 = arith.constant 0 : index
      %220 = vector.load %arg4[%c0_95, %c0_96] : memref<16x64xf32, #tpu.memory_space<vmem>>, vector<16x64xf32>
      %221 = arith.addf %219, %220 : vector<16x64xf32>
      %c0_97 = arith.constant 0 : index
      %c0_98 = arith.constant 0 : index
      %222 = vector.load %arg22[%c0_97, %c0_98] : memref<16x64xf32, #tpu.memory_space<vmem>>, vector<16x64xf32>
      tpu.vector_store %arg22[%c0_97, %c0_98], %221 {strides = array<i32>} : memref<16x64xf32, #tpu.memory_space<vmem>>, vector<16x64xf32>,
    } else {
    }
    %c0 = arith.constant 0 : index
    %c0_1 = arith.constant 0 : index
    %3 = vector.load %arg22[%c0, %c0_1] : memref<16x64xf32, #tpu.memory_space<vmem>>, vector<16x64xf32>
    %c0_2 = arith.constant 0 : index
    %c0_3 = arith.constant 0 : index
    %c0_4 = arith.constant 0 : index
    %4 = vector.load %arg9[%c0_2, %c0_3, %c0_4] : memref<1x1x64xf32, #tpu.memory_space<vmem>>, vector<1x1x64xf32>
    %5 = vector.shape_cast %4 : vector<1x1x64xf32> to vector<1x64xf32>
    %c0_5 = arith.constant 0 : index
    %c0_6 = arith.constant 0 : index
    %c0_7 = arith.constant 0 : index
    %6 = vector.load %arg10[%c0_5, %c0_6, %c0_7] : memref<1x1x64xf32, #tpu.memory_space<vmem>>, vector<1x1x64xf32>
    %7 = vector.shape_cast %6 : vector<1x1x64xf32> to vector<1x64xf32>
    %cst = arith.constant dense<0.000000e+00> : vector<16xf32>
    %8 = vector.multi_reduction <add>, %3, %cst [1] : vector<16x64xf32> to vector<16xf32>
    %9 = vector.shape_cast %8 : vector<16xf32> to vector<16x1xf32>
    %cst_8 = arith.constant 6.400000e+01 : f32
    %10 = vector.broadcast %cst_8 : f32 to vector<16x1xf32>
    %11 = arith.divf %9, %10 : vector<16x1xf32>
    %12 = vector.broadcast %11 : vector<16x1xf32> to vector<16x64xf32>
    %13 = arith.subf %3, %12 : vector<16x64xf32>
    %14 = arith.mulf %13, %13 : vector<16x64xf32>
    %cst_9 = arith.constant dense<0.000000e+00> : vector<16xf32>
    %15 = vector.multi_reduction <add>, %14, %cst_9 [1] : vector<16x64xf32> to vector<16xf32>
    %16 = vector.shape_cast %15 : vector<16xf32> to vector<16x1xf32>
    %cst_10 = arith.constant 6.400000e+01 : f32
    %17 = vector.broadcast %cst_10 : f32 to vector<16x1xf32>
    %18 = arith.divf %16, %17 : vector<16x1xf32>
    %cst_11 = arith.constant 9.99999974E-6 : f32
    %19 = vector.broadcast %cst_11 : f32 to vector<16x1xf32>
    %20 = arith.addf %18, %19 : vector<16x1xf32>
    %21 = math.rsqrt %20 : vector<16x1xf32>
    %22 = vector.broadcast %21 : vector<16x1xf32> to vector<16x64xf32>
    %23 = arith.mulf %13, %22 : vector<16x64xf32>
    %24 = vector.broadcast %5 : vector<1x64xf32> to vector<16x64xf32>
    %25 = arith.mulf %23, %24 : vector<16x64xf32>
    %26 = vector.broadcast %7 : vector<1x64xf32> to vector<16x64xf32>
    %27 = arith.addf %25, %26 : vector<16x64xf32>
    %28 = arith.truncf %27 : vector<16x64xf32> to vector<16x64xbf16>
    %c0_12 = arith.constant 0 : index
    %c0_13 = arith.constant 0 : index
    %c0_14 = arith.constant 0 : index
    %29 = vector.load %arg11[%c0_12, %c0_13, %c0_14] : memref<1x64x192xbf16, #tpu.memory_space<vmem>>, vector<1x64x192xbf16>
    %30 = vector.shape_cast %29 : vector<1x64x192xbf16> to vector<64x192xbf16>
    %cst_15 = arith.constant dense<0.000000e+00> : vector<16x192xf32>
    %31 = tpu.matmul %28, %30, %cst_15 {dimension_numbers = #tpu.dot_dimension_numbers<[1], [0], [0], [1], [0, 0, 1, 1], [], []>} : vector<16x64xbf16>, vector<64x192xbf16>, vector<16x192xf32> -> vector<16x192xf32>
    %c0_16 = arith.constant 0 : index
    %c0_17 = arith.constant 0 : index
    %c0_18 = arith.constant 0 : index
    %32 = vector.load %arg12[%c0_16, %c0_17, %c0_18] : memref<1x1x192xf32, #tpu.memory_space<vmem>>, vector<1x1x192xf32>
    %33 = vector.shape_cast %32 : vector<1x1x192xf32> to vector<1x192xf32>
    %34 = vector.broadcast %33 : vector<1x192xf32> to vector<16x192xf32>
    %35 = arith.addf %31, %34 : vector<16x192xf32>
    %36 = vector.extract_strided_slice %35 {offsets = [0, 0], sizes = [16, 64], strides = [1, 1]} : vector<16x192xf32> to vector<16x64xf32>
    %37 = vector.extract_strided_slice %35 {offsets = [0, 64], sizes = [16, 64], strides = [1, 1]} : vector<16x192xf32> to vector<16x64xf32>
    %38 = vector.extract_strided_slice %35 {offsets = [0, 128], sizes = [16, 64], strides = [1, 1]} : vector<16x192xf32> to vector<16x64xf32>
    %c0_19 = arith.constant 0 : index
    %c0_20 = arith.constant 0 : index
    %c0_21 = arith.constant 0 : index
    %39 = vector.load %arg3[%c0_19, %c0_20, %c0_21] : memref<1x1x16xf32, #tpu.memory_space<vmem>>, vector<1x1x16xf32>
    %40 = vector.shape_cast %39 : vector<1x1x16xf32> to vector<1x16xf32>
    %41 = vector.extract_strided_slice %36 {offsets = [0, 0], sizes = [16, 16], strides = [1, 1]} : vector<16x64xf32> to vector<16x16xf32>
    %42 = arith.truncf %41 : vector<16x16xf32> to vector<16x16xbf16>
    %43 = vector.extract_strided_slice %37 {offsets = [0, 0], sizes = [16, 16], strides = [1, 1]} : vector<16x64xf32> to vector<16x16xf32>
    %44 = arith.truncf %43 : vector<16x16xf32> to vector<16x16xbf16>
    %45 = vector.extract_strided_slice %38 {offsets = [0, 0], sizes = [16, 16], strides = [1, 1]} : vector<16x64xf32> to vector<16x16xf32>
    %46 = arith.truncf %45 : vector<16x16xf32> to vector<16x16xbf16>
    %cst_22 = arith.constant dense<0.000000e+00> : vector<16x16xf32>
    %47 = tpu.matmul %42, %44, %cst_22 {dimension_numbers = #tpu.dot_dimension_numbers<[1], [1], [0], [0], [0, 0, 1, 0], [], []>} : vector<16x16xbf16>, vector<16x16xbf16>, vector<16x16xf32> -> vector<16x16xf32>
    %cst_23 = arith.constant 2.500000e-01 : f32
    %48 = vector.broadcast %cst_23 : f32 to vector<16x16xf32>
    %49 = arith.mulf %47, %48 : vector<16x16xf32>
    %50 = vector.broadcast %40 : vector<1x16xf32> to vector<16x16xf32>
    %51 = arith.addf %49, %50 : vector<16x16xf32>
    %cst_24 = arith.constant dense<0xFF800000> : vector<16xf32>
    %52 = vector.multi_reduction <maximumf>, %51, %cst_24 [1] : vector<16x16xf32> to vector<16xf32>
    %53 = vector.shape_cast %52 : vector<16xf32> to vector<16x1xf32>
    %54 = vector.broadcast %53 : vector<16x1xf32> to vector<16x16xf32>
    %55 = arith.subf %51, %54 : vector<16x16xf32>
    %56 = math.exp %55 : vector<16x16xf32>
    %cst_25 = arith.constant dense<0.000000e+00> : vector<16xf32>
    %57 = vector.multi_reduction <add>, %56, %cst_25 [1] : vector<16x16xf32> to vector<16xf32>
    %58 = vector.shape_cast %57 : vector<16xf32> to vector<16x1xf32>
    %59 = tpu.reciprocal %58 {approx = true} : vector<16x1xf32> -> vector<16x1xf32>
    %60 = vector.broadcast %59 : vector<16x1xf32> to vector<16x16xf32>
    %61 = arith.mulf %56, %60 : vector<16x16xf32>
    %62 = arith.truncf %61 : vector<16x16xf32> to vector<16x16xbf16>
    %cst_26 = arith.constant dense<0.000000e+00> : vector<16x16xf32>
    %63 = tpu.matmul %62, %46, %cst_26 {dimension_numbers = #tpu.dot_dimension_numbers<[1], [0], [0], [1], [0, 0, 1, 1], [], []>} : vector<16x16xbf16>, vector<16x16xbf16>, vector<16x16xf32> -> vector<16x16xf32>
    %64 = vector.extract_strided_slice %36 {offsets = [0, 16], sizes = [16, 16], strides = [1, 1]} : vector<16x64xf32> to vector<16x16xf32>
    %65 = arith.truncf %64 : vector<16x16xf32> to vector<16x16xbf16>
    %66 = vector.extract_strided_slice %37 {offsets = [0, 16], sizes = [16, 16], strides = [1, 1]} : vector<16x64xf32> to vector<16x16xf32>
    %67 = arith.truncf %66 : vector<16x16xf32> to vector<16x16xbf16>
    %68 = vector.extract_strided_slice %38 {offsets = [0, 16], sizes = [16, 16], strides = [1, 1]} : vector<16x64xf32> to vector<16x16xf32>
    %69 = arith.truncf %68 : vector<16x16xf32> to vector<16x16xbf16>
    %cst_27 = arith.constant dense<0.000000e+00> : vector<16x16xf32>
    %70 = tpu.matmul %65, %67, %cst_27 {dimension_numbers = #tpu.dot_dimension_numbers<[1], [1], [0], [0], [0, 0, 1, 0], [], []>} : vector<16x16xbf16>, vector<16x16xbf16>, vector<16x16xf32> -> vector<16x16xf32>
    %cst_28 = arith.constant 2.500000e-01 : f32
    %71 = vector.broadcast %cst_28 : f32 to vector<16x16xf32>
    %72 = arith.mulf %70, %71 : vector<16x16xf32>
    %73 = vector.broadcast %40 : vector<1x16xf32> to vector<16x16xf32>
    %74 = arith.addf %72, %73 : vector<16x16xf32>
    %cst_29 = arith.constant dense<0xFF800000> : vector<16xf32>
    %75 = vector.multi_reduction <maximumf>, %74, %cst_29 [1] : vector<16x16xf32> to vector<16xf32>
    %76 = vector.shape_cast %75 : vector<16xf32> to vector<16x1xf32>
    %77 = vector.broadcast %76 : vector<16x1xf32> to vector<16x16xf32>
    %78 = arith.subf %74, %77 : vector<16x16xf32>
    %79 = math.exp %78 : vector<16x16xf32>
    %cst_30 = arith.constant dense<0.000000e+00> : vector<16xf32>
    %80 = vector.multi_reduction <add>, %79, %cst_30 [1] : vector<16x16xf32> to vector<16xf32>
    %81 = vector.shape_cast %80 : vector<16xf32> to vector<16x1xf32>
    %82 = tpu.reciprocal %81 {approx = true} : vector<16x1xf32> -> vector<16x1xf32>
    %83 = vector.broadcast %82 : vector<16x1xf32> to vector<16x16xf32>
    %84 = arith.mulf %79, %83 : vector<16x16xf32>
    %85 = arith.truncf %84 : vector<16x16xf32> to vector<16x16xbf16>
    %cst_31 = arith.constant dense<0.000000e+00> : vector<16x16xf32>
    %86 = tpu.matmul %85, %69, %cst_31 {dimension_numbers = #tpu.dot_dimension_numbers<[1], [0], [0], [1], [0, 0, 1, 1], [], []>} : vector<16x16xbf16>, vector<16x16xbf16>, vector<16x16xf32> -> vector<16x16xf32>
    %87 = vector.extract_strided_slice %36 {offsets = [0, 32], sizes = [16, 16], strides = [1, 1]} : vector<16x64xf32> to vector<16x16xf32>
    %88 = arith.truncf %87 : vector<16x16xf32> to vector<16x16xbf16>
    %89 = vector.extract_strided_slice %37 {offsets = [0, 32], sizes = [16, 16], strides = [1, 1]} : vector<16x64xf32> to vector<16x16xf32>
    %90 = arith.truncf %89 : vector<16x16xf32> to vector<16x16xbf16>
    %91 = vector.extract_strided_slice %38 {offsets = [0, 32], sizes = [16, 16], strides = [1, 1]} : vector<16x64xf32> to vector<16x16xf32>
    %92 = arith.truncf %91 : vector<16x16xf32> to vector<16x16xbf16>
    %cst_32 = arith.constant dense<0.000000e+00> : vector<16x16xf32>
    %93 = tpu.matmul %88, %90, %cst_32 {dimension_numbers = #tpu.dot_dimension_numbers<[1], [1], [0], [0], [0, 0, 1, 0], [], []>} : vector<16x16xbf16>, vector<16x16xbf16>, vector<16x16xf32> -> vector<16x16xf32>
    %cst_33 = arith.constant 2.500000e-01 : f32
    %94 = vector.broadcast %cst_33 : f32 to vector<16x16xf32>
    %95 = arith.mulf %93, %94 : vector<16x16xf32>
    %96 = vector.broadcast %40 : vector<1x16xf32> to vector<16x16xf32>
    %97 = arith.addf %95, %96 : vector<16x16xf32>
    %cst_34 = arith.constant dense<0xFF800000> : vector<16xf32>
    %98 = vector.multi_reduction <maximumf>, %97, %cst_34 [1] : vector<16x16xf32> to vector<16xf32>
    %99 = vector.shape_cast %98 : vector<16xf32> to vector<16x1xf32>
    %100 = vector.broadcast %99 : vector<16x1xf32> to vector<16x16xf32>
    %101 = arith.subf %97, %100 : vector<16x16xf32>
    %102 = math.exp %101 : vector<16x16xf32>
    %cst_35 = arith.constant dense<0.000000e+00> : vector<16xf32>
    %103 = vector.multi_reduction <add>, %102, %cst_35 [1] : vector<16x16xf32> to vector<16xf32>
    %104 = vector.shape_cast %103 : vector<16xf32> to vector<16x1xf32>
    %105 = tpu.reciprocal %104 {approx = true} : vector<16x1xf32> -> vector<16x1xf32>
    %106 = vector.broadcast %105 : vector<16x1xf32> to vector<16x16xf32>
    %107 = arith.mulf %102, %106 : vector<16x16xf32>
    %108 = arith.truncf %107 : vector<16x16xf32> to vector<16x16xbf16>
    %cst_36 = arith.constant dense<0.000000e+00> : vector<16x16xf32>
    %109 = tpu.matmul %108, %92, %cst_36 {dimension_numbers = #tpu.dot_dimension_numbers<[1], [0], [0], [1], [0, 0, 1, 1], [], []>} : vector<16x16xbf16>, vector<16x16xbf16>, vector<16x16xf32> -> vector<16x16xf32>
    %110 = vector.extract_strided_slice %36 {offsets = [0, 48], sizes = [16, 16], strides = [1, 1]} : vector<16x64xf32> to vector<16x16xf32>
    %111 = arith.truncf %110 : vector<16x16xf32> to vector<16x16xbf16>
    %112 = vector.extract_strided_slice %37 {offsets = [0, 48], sizes = [16, 16], strides = [1, 1]} : vector<16x64xf32> to vector<16x16xf32>
    %113 = arith.truncf %112 : vector<16x16xf32> to vector<16x16xbf16>
    %114 = vector.extract_strided_slice %38 {offsets = [0, 48], sizes = [16, 16], strides = [1, 1]} : vector<16x64xf32> to vector<16x16xf32>
    %115 = arith.truncf %114 : vector<16x16xf32> to vector<16x16xbf16>
    %cst_37 = arith.constant dense<0.000000e+00> : vector<16x16xf32>
    %116 = tpu.matmul %111, %113, %cst_37 {dimension_numbers = #tpu.dot_dimension_numbers<[1], [1], [0], [0], [0, 0, 1, 0], [], []>} : vector<16x16xbf16>, vector<16x16xbf16>, vector<16x16xf32> -> vector<16x16xf32>
    %cst_38 = arith.constant 2.500000e-01 : f32
    %117 = vector.broadcast %cst_38 : f32 to vector<16x16xf32>
    %118 = arith.mulf %116, %117 : vector<16x16xf32>
    %119 = vector.broadcast %40 : vector<1x16xf32> to vector<16x16xf32>
    %120 = arith.addf %118, %119 : vector<16x16xf32>
    %cst_39 = arith.constant dense<0xFF800000> : vector<16xf32>
    %121 = vector.multi_reduction <maximumf>, %120, %cst_39 [1] : vector<16x16xf32> to vector<16xf32>
    %122 = vector.shape_cast %121 : vector<16xf32> to vector<16x1xf32>
    %123 = vector.broadcast %122 : vector<16x1xf32> to vector<16x16xf32>
    %124 = arith.subf %120, %123 : vector<16x16xf32>
    %125 = math.exp %124 : vector<16x16xf32>
    %cst_40 = arith.constant dense<0.000000e+00> : vector<16xf32>
    %126 = vector.multi_reduction <add>, %125, %cst_40 [1] : vector<16x16xf32> to vector<16xf32>
    %127 = vector.shape_cast %126 : vector<16xf32> to vector<16x1xf32>
    %128 = tpu.reciprocal %127 {approx = true} : vector<16x1xf32> -> vector<16x1xf32>
    %129 = vector.broadcast %128 : vector<16x1xf32> to vector<16x16xf32>
    %130 = arith.mulf %125, %129 : vector<16x16xf32>
    %131 = arith.truncf %130 : vector<16x16xf32> to vector<16x16xbf16>
    %cst_41 = arith.constant dense<0.000000e+00> : vector<16x16xf32>
    %132 = tpu.matmul %131, %115, %cst_41 {dimension_numbers = #tpu.dot_dimension_numbers<[1], [0], [0], [1], [0, 0, 1, 1], [], []>} : vector<16x16xbf16>, vector<16x16xbf16>, vector<16x16xf32> -> vector<16x16xf32>
    %133 = tpu.concatenate %63, %86, %109, %132 in 1 : vector<16x16xf32>, vector<16x16xf32>, vector<16x16xf32>, vector<16x16xf32> -> vector<16x64xf32>
    %134 = arith.truncf %133 : vector<16x64xf32> to vector<16x64xbf16>
    %c0_42 = arith.constant 0 : index
    %c0_43 = arith.constant 0 : index
    %c0_44 = arith.constant 0 : index
    %135 = vector.load %arg13[%c0_42, %c0_43, %c0_44] : memref<1x64x64xbf16, #tpu.memory_space<vmem>>, vector<1x64x64xbf16>
    %136 = vector.shape_cast %135 : vector<1x64x64xbf16> to vector<64x64xbf16>
    %cst_45 = arith.constant dense<0.000000e+00> : vector<16x64xf32>
    %137 = tpu.matmul %134, %136, %cst_45 {dimension_numbers = #tpu.dot_dimension_numbers<[1], [0], [0], [1], [0, 0, 1, 1], [], []>} : vector<16x64xbf16>, vector<64x64xbf16>, vector<16x64xf32> -> vector<16x64xf32>
    %138 = arith.addf %3, %137 : vector<16x64xf32>
    %c0_46 = arith.constant 0 : index
    %c0_47 = arith.constant 0 : index
    %c0_48 = arith.constant 0 : index
    %139 = vector.load %arg14[%c0_46, %c0_47, %c0_48] : memref<1x1x64xf32, #tpu.memory_space<vmem>>, vector<1x1x64xf32>
    %140 = vector.shape_cast %139 : vector<1x1x64xf32> to vector<1x64xf32>
    %141 = vector.broadcast %140 : vector<1x64xf32> to vector<16x64xf32>
    %142 = arith.addf %138, %141 : vector<16x64xf32>
    %c0_49 = arith.constant 0 : index
    %c0_50 = arith.constant 0 : index
    %c0_51 = arith.constant 0 : index
    %143 = vector.load %arg15[%c0_49, %c0_50, %c0_51] : memref<1x1x64xf32, #tpu.memory_space<vmem>>, vector<1x1x64xf32>
    %144 = vector.shape_cast %143 : vector<1x1x64xf32> to vector<1x64xf32>
    %c0_52 = arith.constant 0 : index
    %c0_53 = arith.constant 0 : index
    %c0_54 = arith.constant 0 : index
    %145 = vector.load %arg16[%c0_52, %c0_53, %c0_54] : memref<1x1x64xf32, #tpu.memory_space<vmem>>, vector<1x1x64xf32>
    %146 = vector.shape_cast %145 : vector<1x1x64xf32> to vector<1x64xf32>
    %cst_55 = arith.constant dense<0.000000e+00> : vector<16xf32>
    %147 = vector.multi_reduction <add>, %142, %cst_55 [1] : vector<16x64xf32> to vector<16xf32>
    %148 = vector.shape_cast %147 : vector<16xf32> to vector<16x1xf32>
    %cst_56 = arith.constant 6.400000e+01 : f32
    %149 = vector.broadcast %cst_56 : f32 to vector<16x1xf32>
    %150 = arith.divf %148, %149 : vector<16x1xf32>
    %151 = vector.broadcast %150 : vector<16x1xf32> to vector<16x64xf32>
    %152 = arith.subf %142, %151 : vector<16x64xf32>
    %153 = arith.mulf %152, %152 : vector<16x64xf32>
    %cst_57 = arith.constant dense<0.000000e+00> : vector<16xf32>
    %154 = vector.multi_reduction <add>, %153, %cst_57 [1] : vector<16x64xf32> to vector<16xf32>
    %155 = vector.shape_cast %154 : vector<16xf32> to vector<16x1xf32>
    %cst_58 = arith.constant 6.400000e+01 : f32
    %156 = vector.broadcast %cst_58 : f32 to vector<16x1xf32>
    %157 = arith.divf %155, %156 : vector<16x1xf32>
    %cst_59 = arith.constant 9.99999974E-6 : f32
    %158 = vector.broadcast %cst_59 : f32 to vector<16x1xf32>
    %159 = arith.addf %157, %158 : vector<16x1xf32>
    %160 = math.rsqrt %159 : vector<16x1xf32>
    %161 = vector.broadcast %160 : vector<16x1xf32> to vector<16x64xf32>
    %162 = arith.mulf %152, %161 : vector<16x64xf32>
    %163 = vector.broadcast %144 : vector<1x64xf32> to vector<16x64xf32>
    %164 = arith.mulf %162, %163 : vector<16x64xf32>
    %165 = vector.broadcast %146 : vector<1x64xf32> to vector<16x64xf32>
    %166 = arith.addf %164, %165 : vector<16x64xf32>
    %167 = arith.truncf %166 : vector<16x64xf32> to vector<16x64xbf16>
    %c0_60 = arith.constant 0 : index
    %c0_61 = arith.constant 0 : index
    %c0_62 = arith.constant 0 : index
    %168 = vector.load %arg17[%c0_60, %c0_61, %c0_62] : memref<1x64x256xbf16, #tpu.memory_space<vmem>>, vector<1x64x256xbf16>
    %169 = vector.shape_cast %168 : vector<1x64x256xbf16> to vector<64x256xbf16>
    %cst_63 = arith.constant dense<0.000000e+00> : vector<16x256xf32>
    %170 = tpu.matmul %167, %169, %cst_63 {dimension_numbers = #tpu.dot_dimension_numbers<[1], [0], [0], [1], [0, 0, 1, 1], [], []>} : vector<16x64xbf16>, vector<64x256xbf16>, vector<16x256xf32> -> vector<16x256xf32>
    %c0_64 = arith.constant 0 : index
    %c0_65 = arith.constant 0 : index
    %c0_66 = arith.constant 0 : index
    %171 = vector.load %arg18[%c0_64, %c0_65, %c0_66] : memref<1x1x256xf32, #tpu.memory_space<vmem>>, vector<1x1x256xf32>
    %172 = vector.shape_cast %171 : vector<1x1x256xf32> to vector<1x256xf32>
    %173 = vector.broadcast %172 : vector<1x256xf32> to vector<16x256xf32>
    %174 = arith.addf %170, %173 : vector<16x256xf32>
    %cst_67 = arith.constant 0.000000e+00 : f32
    %175 = vector.broadcast %cst_67 : f32 to vector<16x256xf32>
    %176 = arith.maximumf %174, %175 : vector<16x256xf32>
    %177 = arith.truncf %176 : vector<16x256xf32> to vector<16x256xbf16>
    %c0_68 = arith.constant 0 : index
    %c0_69 = arith.constant 0 : index
    %c0_70 = arith.constant 0 : index
    %178 = vector.load %arg19[%c0_68, %c0_69, %c0_70] : memref<1x256x64xbf16, #tpu.memory_space<vmem>>, vector<1x256x64xbf16>
    %179 = vector.shape_cast %178 : vector<1x256x64xbf16> to vector<256x64xbf16>
    %cst_71 = arith.constant dense<0.000000e+00> : vector<16x64xf32>
    %180 = tpu.matmul %177, %179, %cst_71 {dimension_numbers = #tpu.dot_dimension_numbers<[1], [0], [0], [1], [0, 0, 1, 1], [], []>} : vector<16x256xbf16>, vector<256x64xbf16>, vector<16x64xf32> -> vector<16x64xf32>
    %c0_72 = arith.constant 0 : index
    %c0_73 = arith.constant 0 : index
    %c0_74 = arith.constant 0 : index
    %181 = vector.load %arg20[%c0_72, %c0_73, %c0_74] : memref<1x1x64xf32, #tpu.memory_space<vmem>>, vector<1x1x64xf32>
    %182 = vector.shape_cast %181 : vector<1x1x64xf32> to vector<1x64xf32>
    %183 = vector.broadcast %182 : vector<1x64xf32> to vector<16x64xf32>
    %184 = arith.addf %180, %183 : vector<16x64xf32>
    %185 = arith.addf %142, %184 : vector<16x64xf32>
    %c0_75 = arith.constant 0 : index
    %c0_76 = arith.constant 0 : index
    %186 = vector.load %arg22[%c0_75, %c0_76] : memref<16x64xf32, #tpu.memory_space<vmem>>, vector<16x64xf32>
    tpu.vector_store %arg22[%c0_75, %c0_76], %185 {strides = array<i32>} : memref<16x64xf32, #tpu.memory_space<vmem>>, vector<16x64xf32>,
    %c1_i32 = arith.constant 1 : i32
    %187 = arith.cmpi eq, %arg1, %c1_i32 : i32
    %188 = arith.extui %187 : i1 to i32
    %c0_i32_77 = arith.constant 0 : i32
    %189 = arith.cmpi ne, %188, %c0_i32_77 : i32
    scf.if %189 {
      %190 = vector.shape_cast %185 : vector<16x64xf32> to vector<1x16x64xf32>
      %c0_78 = arith.constant 0 : index
      %c0_79 = arith.constant 0 : index
      %c0_80 = arith.constant 0 : index
      %191 = vector.load %arg21[%c0_78, %c0_79, %c0_80] : memref<1x16x64xf32, #tpu.memory_space<vmem>>, vector<1x16x64xf32>
      tpu.vector_store %arg21[%c0_78, %c0_79, %c0_80], %190 {strides = array<i32>} : memref<1x16x64xf32, #tpu.memory_space<vmem>>, vector<1x16x64xf32>,
    } else {
    }
    return
  }
  func.func @transform_0(%arg0: i32, %arg1: i32) -> (i32, i32, i32) {
    %c0_i32 = arith.constant 0 : i32
    %c0_i32_0 = arith.constant 0 : i32
    %c0_i32_1 = arith.constant 0 : i32
    return %arg0, %c0_i32, %c0_i32_0 : i32, i32, i32
  }
  func.func @transform_1(%arg0: i32, %arg1: i32) -> (i32, i32, i32) {
    %c0_i32 = arith.constant 0 : i32
    %c0_i32_0 = arith.constant 0 : i32
    %c0_i32_1 = arith.constant 0 : i32
    return %arg0, %c0_i32, %c0_i32_0 : i32, i32, i32
  }
  func.func @transform_2(%arg0: i32, %arg1: i32) -> (i32, i32) {
    %c0_i32 = arith.constant 0 : i32
    %c0_i32_0 = arith.constant 0 : i32
    %c0_i32_1 = arith.constant 0 : i32
    return %c0_i32, %c0_i32_0 : i32, i32
  }
  func.func @transform_3(%arg0: i32, %arg1: i32) -> (i32, i32) {
    %c0_i32 = arith.constant 0 : i32
    %c0_i32_0 = arith.constant 0 : i32
    %c0_i32_1 = arith.constant 0 : i32
    return %c0_i32, %c0_i32_0 : i32, i32
  }
  func.func @transform_4(%arg0: i32, %arg1: i32) -> (i32, i32) {
    %c0_i32 = arith.constant 0 : i32
    %c0_i32_0 = arith.constant 0 : i32
    %c0_i32_1 = arith.constant 0 : i32
    return %c0_i32, %c0_i32_0 : i32, i32
  }
  func.func @transform_5(%arg0: i32, %arg1: i32) -> (i32, i32) {
    %c0_i32 = arith.constant 0 : i32
    %c0_i32_0 = arith.constant 0 : i32
    %c0_i32_1 = arith.constant 0 : i32
    return %c0_i32, %c0_i32_0 : i32, i32
  }
  func.func @transform_6(%arg0: i32, %arg1: i32) -> (i32, i32) {
    %c0_i32 = arith.constant 0 : i32
    %c0_i32_0 = arith.constant 0 : i32
    %c0_i32_1 = arith.constant 0 : i32
    return %c0_i32, %c0_i32_0 : i32, i32
  }
  func.func @transform_7(%arg0: i32, %arg1: i32) -> (i32, i32, i32) {
    %c0_i32 = arith.constant 0 : i32
    %c0_i32_0 = arith.constant 0 : i32
    %c0_i32_1 = arith.constant 0 : i32
    return %arg1, %c0_i32, %c0_i32_0 : i32, i32, i32
  }
  func.func @transform_8(%arg0: i32, %arg1: i32) -> (i32, i32, i32) {
    %c0_i32 = arith.constant 0 : i32
    %c0_i32_0 = arith.constant 0 : i32
    %c0_i32_1 = arith.constant 0 : i32
    return %arg1, %c0_i32, %c0_i32_0 : i32, i32, i32
  }
  func.func @transform_9(%arg0: i32, %arg1: i32) -> (i32, i32, i32) {
    %c0_i32 = arith.constant 0 : i32
    %c0_i32_0 = arith.constant 0 : i32
    %c0_i32_1 = arith.constant 0 : i32
    return %arg1, %c0_i32, %c0_i32_0 : i32, i32, i32
  }
  func.func @transform_10(%arg0: i32, %arg1: i32) -> (i32, i32, i32) {
    %c0_i32 = arith.constant 0 : i32
    %c0_i32_0 = arith.constant 0 : i32
    %c0_i32_1 = arith.constant 0 : i32
    return %arg1, %c0_i32, %c0_i32_0 : i32, i32, i32
  }
  func.func @transform_11(%arg0: i32, %arg1: i32) -> (i32, i32, i32) {
    %c0_i32 = arith.constant 0 : i32
    %c0_i32_0 = arith.constant 0 : i32
    %c0_i32_1 = arith.constant 0 : i32
    return %arg1, %c0_i32, %c0_i32_0 : i32, i32, i32
  }
  func.func @transform_12(%arg0: i32, %arg1: i32) -> (i32, i32, i32) {
    %c0_i32 = arith.constant 0 : i32
    %c0_i32_0 = arith.constant 0 : i32
    %c0_i32_1 = arith.constant 0 : i32
    return %arg1, %c0_i32, %c0_i32_0 : i32, i32, i32
  }
  func.func @transform_13(%arg0: i32, %arg1: i32) -> (i32, i32, i32) {
    %c0_i32 = arith.constant 0 : i32
    %c0_i32_0 = arith.constant 0 : i32
    %c0_i32_1 = arith.constant 0 : i32
    return %arg1, %c0_i32, %c0_i32_0 : i32, i32, i32
  }
  func.func @transform_14(%arg0: i32, %arg1: i32) -> (i32, i32, i32) {
    %c0_i32 = arith.constant 0 : i32
    %c0_i32_0 = arith.constant 0 : i32
    %c0_i32_1 = arith.constant 0 : i32
    return %arg1, %c0_i32, %c0_i32_0 : i32, i32, i32
  }
  func.func @transform_15(%arg0: i32, %arg1: i32) -> (i32, i32, i32) {
    %c0_i32 = arith.constant 0 : i32
    %c0_i32_0 = arith.constant 0 : i32
    %c0_i32_1 = arith.constant 0 : i32
    return %arg1, %c0_i32, %c0_i32_0 : i32, i32, i32
  }
  func.func @transform_16(%arg0: i32, %arg1: i32) -> (i32, i32, i32) {
    %c0_i32 = arith.constant 0 : i32
    %c0_i32_0 = arith.constant 0 : i32
    %c0_i32_1 = arith.constant 0 : i32
    return %arg1, %c0_i32, %c0_i32_0 : i32, i32, i32
  }
  func.func @transform_17(%arg0: i32, %arg1: i32) -> (i32, i32, i32) {
    %c0_i32 = arith.constant 0 : i32
    %c0_i32_0 = arith.constant 0 : i32
    %c0_i32_1 = arith.constant 0 : i32
    return %arg1, %c0_i32, %c0_i32_0 : i32, i32, i32
  }
  func.func @transform_18(%arg0: i32, %arg1: i32) -> (i32, i32, i32) {
    %c0_i32 = arith.constant 0 : i32
    %c0_i32_0 = arith.constant 0 : i32
    %c0_i32_1 = arith.constant 0 : i32
    return %arg1, %c0_i32, %c0_i32_0 : i32, i32, i32
  }
  func.func @transform_19(%arg0: i32, %arg1: i32) -> (i32, i32, i32) {
    %c0_i32 = arith.constant 0 : i32
    %c0_i32_0 = arith.constant 0 : i32
    %c0_i32_1 = arith.constant 0 : i32
    return %arg0, %c0_i32, %c0_i32_0 : i32, i32, i32
  }
}

module attributes {stable_mosaic.version = 11 : i64} {
  func.func @_dec_stack_kernel(%arg0: i32, %arg1: i32, %arg2: memref<1x8x64xf32, #tpu.memory_space<vmem>>, %arg3: memref<1x16x64xf32, #tpu.memory_space<vmem>>, %arg4: memref<8x8xf32, #tpu.memory_space<vmem>>, %arg5: memref<1x1x8xf32, #tpu.memory_space<vmem>>, %arg6: memref<1x1x16xf32, #tpu.memory_space<vmem>>, %arg7: memref<1x1x64xf32, #tpu.memory_space<vmem>>, %arg8: memref<1x1x64xf32, #tpu.memory_space<vmem>>, %arg9: memref<1x64x192xbf16, #tpu.memory_space<vmem>>, %arg10: memref<1x1x192xf32, #tpu.memory_space<vmem>>, %arg11: memref<1x64x64xbf16, #tpu.memory_space<vmem>>, %arg12: memref<1x1x64xf32, #tpu.memory_space<vmem>>, %arg13: memref<1x1x64xf32, #tpu.memory_space<vmem>>, %arg14: memref<1x1x64xf32, #tpu.memory_space<vmem>>, %arg15: memref<1x64x64xbf16, #tpu.memory_space<vmem>>, %arg16: memref<1x1x64xf32, #tpu.memory_space<vmem>>, %arg17: memref<1x64x128xbf16, #tpu.memory_space<vmem>>, %arg18: memref<1x1x128xf32, #tpu.memory_space<vmem>>, %arg19: memref<1x64x64xbf16, #tpu.memory_space<vmem>>, %arg20: memref<1x1x64xf32, #tpu.memory_space<vmem>>, %arg21: memref<1x1x64xf32, #tpu.memory_space<vmem>>, %arg22: memref<1x1x64xf32, #tpu.memory_space<vmem>>, %arg23: memref<1x64x256xbf16, #tpu.memory_space<vmem>>, %arg24: memref<1x1x256xf32, #tpu.memory_space<vmem>>, %arg25: memref<1x256x64xbf16, #tpu.memory_space<vmem>>, %arg26: memref<1x1x64xf32, #tpu.memory_space<vmem>>, %arg27: memref<1x8x64xf32, #tpu.memory_space<vmem>>, %arg28: memref<8x64xf32, #tpu.memory_space<vmem>>) attributes {dimension_semantics = [#tpu.dimension_semantics<parallel>, #tpu.dimension_semantics<arbitrary>], iteration_bounds = array<i64: 2, 2>, scalar_prefetch = 0 : i64, scratch_operands = 1 : i64, tpu.core_type = #tpu.core_type<tc>, window_params = [{transform_indices = @transform_0, window_bounds = array<i64: 1, 8, 64>}, {transform_indices = @transform_1, window_bounds = array<i64: 1, 16, 64>}, {pipeline_mode = #tpu.pipeline_mode<synchronous>, transform_indices = @transform_2, window_bounds = array<i64: 8, 8>}, {transform_indices = @transform_3, window_bounds = array<i64: 1, 1, 8>}, {transform_indices = @transform_4, window_bounds = array<i64: 1, 1, 16>}, {transform_indices = @transform_5, window_bounds = array<i64: 1, 1, 64>}, {transform_indices = @transform_6, window_bounds = array<i64: 1, 1, 64>}, {transform_indices = @transform_7, window_bounds = array<i64: 1, 64, 192>}, {transform_indices = @transform_8, window_bounds = array<i64: 1, 1, 192>}, {transform_indices = @transform_9, window_bounds = array<i64: 1, 64, 64>}, {transform_indices = @transform_10, window_bounds = array<i64: 1, 1, 64>}, {transform_indices = @transform_11, window_bounds = array<i64: 1, 1, 64>}, {transform_indices = @transform_12, window_bounds = array<i64: 1, 1, 64>}, {transform_indices = @transform_13, window_bounds = array<i64: 1, 64, 64>}, {transform_indices = @transform_14, window_bounds = array<i64: 1, 1, 64>}, {transform_indices = @transform_15, window_bounds = array<i64: 1, 64, 128>}, {transform_indices = @transform_16, window_bounds = array<i64: 1, 1, 128>}, {transform_indices = @transform_17, window_bounds = array<i64: 1, 64, 64>}, {transform_indices = @transform_18, window_bounds = array<i64: 1, 1, 64>}, {transform_indices = @transform_19, window_bounds = array<i64: 1, 1, 64>}, {transform_indices = @transform_20, window_bounds = array<i64: 1, 1, 64>}, {transform_indices = @transform_21, window_bounds = array<i64: 1, 64, 256>}, {transform_indices = @transform_22, window_bounds = array<i64: 1, 1, 256>}, {transform_indices = @transform_23, window_bounds = array<i64: 1, 256, 64>}, {transform_indices = @transform_24, window_bounds = array<i64: 1, 1, 64>}, {transform_indices = @transform_25, window_bounds = array<i64: 1, 8, 64>}]} {
    %c0_i32 = arith.constant 0 : i32
    %0 = arith.cmpi eq, %arg1, %c0_i32 : i32
    %1 = arith.extui %0 : i1 to i32
    %c0_i32_0 = arith.constant 0 : i32
    %2 = arith.cmpi ne, %1, %c0_i32_0 : i32
    scf.if %2 {
      %c0_138 = arith.constant 0 : index
      %c0_139 = arith.constant 0 : index
      %c0_140 = arith.constant 0 : index
      %337 = vector.load %arg2[%c0_138, %c0_139, %c0_140] : memref<1x8x64xf32, #tpu.memory_space<vmem>>, vector<1x8x64xf32>
      %338 = vector.shape_cast %337 : vector<1x8x64xf32> to vector<8x64xf32>
      %c0_141 = arith.constant 0 : index
      %c0_142 = arith.constant 0 : index
      %339 = vector.load %arg28[%c0_141, %c0_142] : memref<8x64xf32, #tpu.memory_space<vmem>>, vector<8x64xf32>
      tpu.vector_store %arg28[%c0_141, %c0_142], %338 {strides = array<i32>} : memref<8x64xf32, #tpu.memory_space<vmem>>, vector<8x64xf32>,
    } else {
    }
    %c0 = arith.constant 0 : index
    %c0_1 = arith.constant 0 : index
    %3 = vector.load %arg28[%c0, %c0_1] : memref<8x64xf32, #tpu.memory_space<vmem>>, vector<8x64xf32>
    %c0_2 = arith.constant 0 : index
    %c0_3 = arith.constant 0 : index
    %c0_4 = arith.constant 0 : index
    %4 = vector.load %arg3[%c0_2, %c0_3, %c0_4] : memref<1x16x64xf32, #tpu.memory_space<vmem>>, vector<1x16x64xf32>
    %5 = vector.shape_cast %4 : vector<1x16x64xf32> to vector<16x64xf32>
    %6 = arith.truncf %5 : vector<16x64xf32> to vector<16x64xbf16>
    %c0_5 = arith.constant 0 : index
    %c0_6 = arith.constant 0 : index
    %c0_7 = arith.constant 0 : index
    %7 = vector.load %arg7[%c0_5, %c0_6, %c0_7] : memref<1x1x64xf32, #tpu.memory_space<vmem>>, vector<1x1x64xf32>
    %8 = vector.shape_cast %7 : vector<1x1x64xf32> to vector<1x64xf32>
    %c0_8 = arith.constant 0 : index
    %c0_9 = arith.constant 0 : index
    %c0_10 = arith.constant 0 : index
    %9 = vector.load %arg8[%c0_8, %c0_9, %c0_10] : memref<1x1x64xf32, #tpu.memory_space<vmem>>, vector<1x1x64xf32>
    %10 = vector.shape_cast %9 : vector<1x1x64xf32> to vector<1x64xf32>
    %cst = arith.constant dense<0.000000e+00> : vector<8xf32>
    %11 = vector.multi_reduction <add>, %3, %cst [1] : vector<8x64xf32> to vector<8xf32>
    %12 = vector.shape_cast %11 : vector<8xf32> to vector<8x1xf32>
    %cst_11 = arith.constant 6.400000e+01 : f32
    %13 = vector.broadcast %cst_11 : f32 to vector<8x1xf32>
    %14 = arith.divf %12, %13 : vector<8x1xf32>
    %15 = vector.broadcast %14 : vector<8x1xf32> to vector<8x64xf32>
    %16 = arith.subf %3, %15 : vector<8x64xf32>
    %17 = arith.mulf %16, %16 : vector<8x64xf32>
    %cst_12 = arith.constant dense<0.000000e+00> : vector<8xf32>
    %18 = vector.multi_reduction <add>, %17, %cst_12 [1] : vector<8x64xf32> to vector<8xf32>
    %19 = vector.shape_cast %18 : vector<8xf32> to vector<8x1xf32>
    %cst_13 = arith.constant 6.400000e+01 : f32
    %20 = vector.broadcast %cst_13 : f32 to vector<8x1xf32>
    %21 = arith.divf %19, %20 : vector<8x1xf32>
    %cst_14 = arith.constant 9.99999974E-6 : f32
    %22 = vector.broadcast %cst_14 : f32 to vector<8x1xf32>
    %23 = arith.addf %21, %22 : vector<8x1xf32>
    %24 = math.rsqrt %23 : vector<8x1xf32>
    %25 = vector.broadcast %24 : vector<8x1xf32> to vector<8x64xf32>
    %26 = arith.mulf %16, %25 : vector<8x64xf32>
    %27 = vector.broadcast %8 : vector<1x64xf32> to vector<8x64xf32>
    %28 = arith.mulf %26, %27 : vector<8x64xf32>
    %29 = vector.broadcast %10 : vector<1x64xf32> to vector<8x64xf32>
    %30 = arith.addf %28, %29 : vector<8x64xf32>
    %31 = arith.truncf %30 : vector<8x64xf32> to vector<8x64xbf16>
    %c0_15 = arith.constant 0 : index
    %c0_16 = arith.constant 0 : index
    %c0_17 = arith.constant 0 : index
    %32 = vector.load %arg9[%c0_15, %c0_16, %c0_17] : memref<1x64x192xbf16, #tpu.memory_space<vmem>>, vector<1x64x192xbf16>
    %33 = vector.shape_cast %32 : vector<1x64x192xbf16> to vector<64x192xbf16>
    %cst_18 = arith.constant dense<0.000000e+00> : vector<8x192xf32>
    %34 = tpu.matmul %31, %33, %cst_18 {dimension_numbers = #tpu.dot_dimension_numbers<[1], [0], [0], [1], [0, 0, 1, 1], [], []>} : vector<8x64xbf16>, vector<64x192xbf16>, vector<8x192xf32> -> vector<8x192xf32>
    %c0_19 = arith.constant 0 : index
    %c0_20 = arith.constant 0 : index
    %c0_21 = arith.constant 0 : index
    %35 = vector.load %arg10[%c0_19, %c0_20, %c0_21] : memref<1x1x192xf32, #tpu.memory_space<vmem>>, vector<1x1x192xf32>
    %36 = vector.shape_cast %35 : vector<1x1x192xf32> to vector<1x192xf32>
    %37 = vector.broadcast %36 : vector<1x192xf32> to vector<8x192xf32>
    %38 = arith.addf %34, %37 : vector<8x192xf32>
    %c0_22 = arith.constant 0 : index
    %c0_23 = arith.constant 0 : index
    %39 = vector.load %arg4[%c0_22, %c0_23] : memref<8x8xf32, #tpu.memory_space<vmem>>, vector<8x8xf32>
    %c0_24 = arith.constant 0 : index
    %c0_25 = arith.constant 0 : index
    %c0_26 = arith.constant 0 : index
    %40 = vector.load %arg5[%c0_24, %c0_25, %c0_26] : memref<1x1x8xf32, #tpu.memory_space<vmem>>, vector<1x1x8xf32>
    %41 = vector.shape_cast %40 : vector<1x1x8xf32> to vector<1x8xf32>
    %42 = vector.broadcast %41 : vector<1x8xf32> to vector<8x8xf32>
    %43 = arith.addf %39, %42 : vector<8x8xf32>
    %44 = vector.extract_strided_slice %38 {offsets = [0, 0], sizes = [8, 64], strides = [1, 1]} : vector<8x192xf32> to vector<8x64xf32>
    %45 = vector.extract_strided_slice %38 {offsets = [0, 64], sizes = [8, 64], strides = [1, 1]} : vector<8x192xf32> to vector<8x64xf32>
    %46 = vector.extract_strided_slice %38 {offsets = [0, 128], sizes = [8, 64], strides = [1, 1]} : vector<8x192xf32> to vector<8x64xf32>
    %47 = vector.extract_strided_slice %44 {offsets = [0, 0], sizes = [8, 16], strides = [1, 1]} : vector<8x64xf32> to vector<8x16xf32>
    %48 = arith.truncf %47 : vector<8x16xf32> to vector<8x16xbf16>
    %49 = vector.extract_strided_slice %45 {offsets = [0, 0], sizes = [8, 16], strides = [1, 1]} : vector<8x64xf32> to vector<8x16xf32>
    %50 = arith.truncf %49 : vector<8x16xf32> to vector<8x16xbf16>
    %51 = vector.extract_strided_slice %46 {offsets = [0, 0], sizes = [8, 16], strides = [1, 1]} : vector<8x64xf32> to vector<8x16xf32>
    %52 = arith.truncf %51 : vector<8x16xf32> to vector<8x16xbf16>
    %cst_27 = arith.constant dense<0.000000e+00> : vector<8x8xf32>
    %53 = tpu.matmul %48, %50, %cst_27 {dimension_numbers = #tpu.dot_dimension_numbers<[1], [1], [0], [0], [0, 0, 1, 0], [], []>} : vector<8x16xbf16>, vector<8x16xbf16>, vector<8x8xf32> -> vector<8x8xf32>
    %cst_28 = arith.constant 2.500000e-01 : f32
    %54 = vector.broadcast %cst_28 : f32 to vector<8x8xf32>
    %55 = arith.mulf %53, %54 : vector<8x8xf32>
    %56 = arith.addf %55, %43 : vector<8x8xf32>
    %cst_29 = arith.constant dense<0xFF800000> : vector<8xf32>
    %57 = vector.multi_reduction <maximumf>, %56, %cst_29 [1] : vector<8x8xf32> to vector<8xf32>
    %58 = vector.shape_cast %57 : vector<8xf32> to vector<8x1xf32>
    %59 = vector.broadcast %58 : vector<8x1xf32> to vector<8x8xf32>
    %60 = arith.subf %56, %59 : vector<8x8xf32>
    %61 = math.exp %60 : vector<8x8xf32>
    %cst_30 = arith.constant dense<0.000000e+00> : vector<8xf32>
    %62 = vector.multi_reduction <add>, %61, %cst_30 [1] : vector<8x8xf32> to vector<8xf32>
    %63 = vector.shape_cast %62 : vector<8xf32> to vector<8x1xf32>
    %64 = tpu.reciprocal %63 {approx = true} : vector<8x1xf32> -> vector<8x1xf32>
    %65 = vector.broadcast %64 : vector<8x1xf32> to vector<8x8xf32>
    %66 = arith.mulf %61, %65 : vector<8x8xf32>
    %67 = arith.truncf %66 : vector<8x8xf32> to vector<8x8xbf16>
    %cst_31 = arith.constant dense<0.000000e+00> : vector<8x16xf32>
    %68 = tpu.matmul %67, %52, %cst_31 {dimension_numbers = #tpu.dot_dimension_numbers<[1], [0], [0], [1], [0, 0, 1, 1], [], []>} : vector<8x8xbf16>, vector<8x16xbf16>, vector<8x16xf32> -> vector<8x16xf32>
    %69 = vector.extract_strided_slice %44 {offsets = [0, 16], sizes = [8, 16], strides = [1, 1]} : vector<8x64xf32> to vector<8x16xf32>
    %70 = arith.truncf %69 : vector<8x16xf32> to vector<8x16xbf16>
    %71 = vector.extract_strided_slice %45 {offsets = [0, 16], sizes = [8, 16], strides = [1, 1]} : vector<8x64xf32> to vector<8x16xf32>
    %72 = arith.truncf %71 : vector<8x16xf32> to vector<8x16xbf16>
    %73 = vector.extract_strided_slice %46 {offsets = [0, 16], sizes = [8, 16], strides = [1, 1]} : vector<8x64xf32> to vector<8x16xf32>
    %74 = arith.truncf %73 : vector<8x16xf32> to vector<8x16xbf16>
    %cst_32 = arith.constant dense<0.000000e+00> : vector<8x8xf32>
    %75 = tpu.matmul %70, %72, %cst_32 {dimension_numbers = #tpu.dot_dimension_numbers<[1], [1], [0], [0], [0, 0, 1, 0], [], []>} : vector<8x16xbf16>, vector<8x16xbf16>, vector<8x8xf32> -> vector<8x8xf32>
    %cst_33 = arith.constant 2.500000e-01 : f32
    %76 = vector.broadcast %cst_33 : f32 to vector<8x8xf32>
    %77 = arith.mulf %75, %76 : vector<8x8xf32>
    %78 = arith.addf %77, %43 : vector<8x8xf32>
    %cst_34 = arith.constant dense<0xFF800000> : vector<8xf32>
    %79 = vector.multi_reduction <maximumf>, %78, %cst_34 [1] : vector<8x8xf32> to vector<8xf32>
    %80 = vector.shape_cast %79 : vector<8xf32> to vector<8x1xf32>
    %81 = vector.broadcast %80 : vector<8x1xf32> to vector<8x8xf32>
    %82 = arith.subf %78, %81 : vector<8x8xf32>
    %83 = math.exp %82 : vector<8x8xf32>
    %cst_35 = arith.constant dense<0.000000e+00> : vector<8xf32>
    %84 = vector.multi_reduction <add>, %83, %cst_35 [1] : vector<8x8xf32> to vector<8xf32>
    %85 = vector.shape_cast %84 : vector<8xf32> to vector<8x1xf32>
    %86 = tpu.reciprocal %85 {approx = true} : vector<8x1xf32> -> vector<8x1xf32>
    %87 = vector.broadcast %86 : vector<8x1xf32> to vector<8x8xf32>
    %88 = arith.mulf %83, %87 : vector<8x8xf32>
    %89 = arith.truncf %88 : vector<8x8xf32> to vector<8x8xbf16>
    %cst_36 = arith.constant dense<0.000000e+00> : vector<8x16xf32>
    %90 = tpu.matmul %89, %74, %cst_36 {dimension_numbers = #tpu.dot_dimension_numbers<[1], [0], [0], [1], [0, 0, 1, 1], [], []>} : vector<8x8xbf16>, vector<8x16xbf16>, vector<8x16xf32> -> vector<8x16xf32>
    %91 = vector.extract_strided_slice %44 {offsets = [0, 32], sizes = [8, 16], strides = [1, 1]} : vector<8x64xf32> to vector<8x16xf32>
    %92 = arith.truncf %91 : vector<8x16xf32> to vector<8x16xbf16>
    %93 = vector.extract_strided_slice %45 {offsets = [0, 32], sizes = [8, 16], strides = [1, 1]} : vector<8x64xf32> to vector<8x16xf32>
    %94 = arith.truncf %93 : vector<8x16xf32> to vector<8x16xbf16>
    %95 = vector.extract_strided_slice %46 {offsets = [0, 32], sizes = [8, 16], strides = [1, 1]} : vector<8x64xf32> to vector<8x16xf32>
    %96 = arith.truncf %95 : vector<8x16xf32> to vector<8x16xbf16>
    %cst_37 = arith.constant dense<0.000000e+00> : vector<8x8xf32>
    %97 = tpu.matmul %92, %94, %cst_37 {dimension_numbers = #tpu.dot_dimension_numbers<[1], [1], [0], [0], [0, 0, 1, 0], [], []>} : vector<8x16xbf16>, vector<8x16xbf16>, vector<8x8xf32> -> vector<8x8xf32>
    %cst_38 = arith.constant 2.500000e-01 : f32
    %98 = vector.broadcast %cst_38 : f32 to vector<8x8xf32>
    %99 = arith.mulf %97, %98 : vector<8x8xf32>
    %100 = arith.addf %99, %43 : vector<8x8xf32>
    %cst_39 = arith.constant dense<0xFF800000> : vector<8xf32>
    %101 = vector.multi_reduction <maximumf>, %100, %cst_39 [1] : vector<8x8xf32> to vector<8xf32>
    %102 = vector.shape_cast %101 : vector<8xf32> to vector<8x1xf32>
    %103 = vector.broadcast %102 : vector<8x1xf32> to vector<8x8xf32>
    %104 = arith.subf %100, %103 : vector<8x8xf32>
    %105 = math.exp %104 : vector<8x8xf32>
    %cst_40 = arith.constant dense<0.000000e+00> : vector<8xf32>
    %106 = vector.multi_reduction <add>, %105, %cst_40 [1] : vector<8x8xf32> to vector<8xf32>
    %107 = vector.shape_cast %106 : vector<8xf32> to vector<8x1xf32>
    %108 = tpu.reciprocal %107 {approx = true} : vector<8x1xf32> -> vector<8x1xf32>
    %109 = vector.broadcast %108 : vector<8x1xf32> to vector<8x8xf32>
    %110 = arith.mulf %105, %109 : vector<8x8xf32>
    %111 = arith.truncf %110 : vector<8x8xf32> to vector<8x8xbf16>
    %cst_41 = arith.constant dense<0.000000e+00> : vector<8x16xf32>
    %112 = tpu.matmul %111, %96, %cst_41 {dimension_numbers = #tpu.dot_dimension_numbers<[1], [0], [0], [1], [0, 0, 1, 1], [], []>} : vector<8x8xbf16>, vector<8x16xbf16>, vector<8x16xf32> -> vector<8x16xf32>
    %113 = vector.extract_strided_slice %44 {offsets = [0, 48], sizes = [8, 16], strides = [1, 1]} : vector<8x64xf32> to vector<8x16xf32>
    %114 = arith.truncf %113 : vector<8x16xf32> to vector<8x16xbf16>
    %115 = vector.extract_strided_slice %45 {offsets = [0, 48], sizes = [8, 16], strides = [1, 1]} : vector<8x64xf32> to vector<8x16xf32>
    %116 = arith.truncf %115 : vector<8x16xf32> to vector<8x16xbf16>
    %117 = vector.extract_strided_slice %46 {offsets = [0, 48], sizes = [8, 16], strides = [1, 1]} : vector<8x64xf32> to vector<8x16xf32>
    %118 = arith.truncf %117 : vector<8x16xf32> to vector<8x16xbf16>
    %cst_42 = arith.constant dense<0.000000e+00> : vector<8x8xf32>
    %119 = tpu.matmul %114, %116, %cst_42 {dimension_numbers = #tpu.dot_dimension_numbers<[1], [1], [0], [0], [0, 0, 1, 0], [], []>} : vector<8x16xbf16>, vector<8x16xbf16>, vector<8x8xf32> -> vector<8x8xf32>
    %cst_43 = arith.constant 2.500000e-01 : f32
    %120 = vector.broadcast %cst_43 : f32 to vector<8x8xf32>
    %121 = arith.mulf %119, %120 : vector<8x8xf32>
    %122 = arith.addf %121, %43 : vector<8x8xf32>
    %cst_44 = arith.constant dense<0xFF800000> : vector<8xf32>
    %123 = vector.multi_reduction <maximumf>, %122, %cst_44 [1] : vector<8x8xf32> to vector<8xf32>
    %124 = vector.shape_cast %123 : vector<8xf32> to vector<8x1xf32>
    %125 = vector.broadcast %124 : vector<8x1xf32> to vector<8x8xf32>
    %126 = arith.subf %122, %125 : vector<8x8xf32>
    %127 = math.exp %126 : vector<8x8xf32>
    %cst_45 = arith.constant dense<0.000000e+00> : vector<8xf32>
    %128 = vector.multi_reduction <add>, %127, %cst_45 [1] : vector<8x8xf32> to vector<8xf32>
    %129 = vector.shape_cast %128 : vector<8xf32> to vector<8x1xf32>
    %130 = tpu.reciprocal %129 {approx = true} : vector<8x1xf32> -> vector<8x1xf32>
    %131 = vector.broadcast %130 : vector<8x1xf32> to vector<8x8xf32>
    %132 = arith.mulf %127, %131 : vector<8x8xf32>
    %133 = arith.truncf %132 : vector<8x8xf32> to vector<8x8xbf16>
    %cst_46 = arith.constant dense<0.000000e+00> : vector<8x16xf32>
    %134 = tpu.matmul %133, %118, %cst_46 {dimension_numbers = #tpu.dot_dimension_numbers<[1], [0], [0], [1], [0, 0, 1, 1], [], []>} : vector<8x8xbf16>, vector<8x16xbf16>, vector<8x16xf32> -> vector<8x16xf32>
    %135 = tpu.concatenate %68, %90, %112, %134 in 1 : vector<8x16xf32>, vector<8x16xf32>, vector<8x16xf32>, vector<8x16xf32> -> vector<8x64xf32>
    %136 = arith.truncf %135 : vector<8x64xf32> to vector<8x64xbf16>
    %c0_47 = arith.constant 0 : index
    %c0_48 = arith.constant 0 : index
    %c0_49 = arith.constant 0 : index
    %137 = vector.load %arg11[%c0_47, %c0_48, %c0_49] : memref<1x64x64xbf16, #tpu.memory_space<vmem>>, vector<1x64x64xbf16>
    %138 = vector.shape_cast %137 : vector<1x64x64xbf16> to vector<64x64xbf16>
    %cst_50 = arith.constant dense<0.000000e+00> : vector<8x64xf32>
    %139 = tpu.matmul %136, %138, %cst_50 {dimension_numbers = #tpu.dot_dimension_numbers<[1], [0], [0], [1], [0, 0, 1, 1], [], []>} : vector<8x64xbf16>, vector<64x64xbf16>, vector<8x64xf32> -> vector<8x64xf32>
    %140 = arith.addf %3, %139 : vector<8x64xf32>
    %c0_51 = arith.constant 0 : index
    %c0_52 = arith.constant 0 : index
    %c0_53 = arith.constant 0 : index
    %141 = vector.load %arg12[%c0_51, %c0_52, %c0_53] : memref<1x1x64xf32, #tpu.memory_space<vmem>>, vector<1x1x64xf32>
    %142 = vector.shape_cast %141 : vector<1x1x64xf32> to vector<1x64xf32>
    %143 = vector.broadcast %142 : vector<1x64xf32> to vector<8x64xf32>
    %144 = arith.addf %140, %143 : vector<8x64xf32>
    %c0_54 = arith.constant 0 : index
    %c0_55 = arith.constant 0 : index
    %c0_56 = arith.constant 0 : index
    %145 = vector.load %arg13[%c0_54, %c0_55, %c0_56] : memref<1x1x64xf32, #tpu.memory_space<vmem>>, vector<1x1x64xf32>
    %146 = vector.shape_cast %145 : vector<1x1x64xf32> to vector<1x64xf32>
    %c0_57 = arith.constant 0 : index
    %c0_58 = arith.constant 0 : index
    %c0_59 = arith.constant 0 : index
    %147 = vector.load %arg14[%c0_57, %c0_58, %c0_59] : memref<1x1x64xf32, #tpu.memory_space<vmem>>, vector<1x1x64xf32>
    %148 = vector.shape_cast %147 : vector<1x1x64xf32> to vector<1x64xf32>
    %cst_60 = arith.constant dense<0.000000e+00> : vector<8xf32>
    %149 = vector.multi_reduction <add>, %144, %cst_60 [1] : vector<8x64xf32> to vector<8xf32>
    %150 = vector.shape_cast %149 : vector<8xf32> to vector<8x1xf32>
    %cst_61 = arith.constant 6.400000e+01 : f32
    %151 = vector.broadcast %cst_61 : f32 to vector<8x1xf32>
    %152 = arith.divf %150, %151 : vector<8x1xf32>
    %153 = vector.broadcast %152 : vector<8x1xf32> to vector<8x64xf32>
    %154 = arith.subf %144, %153 : vector<8x64xf32>
    %155 = arith.mulf %154, %154 : vector<8x64xf32>
    %cst_62 = arith.constant dense<0.000000e+00> : vector<8xf32>
    %156 = vector.multi_reduction <add>, %155, %cst_62 [1] : vector<8x64xf32> to vector<8xf32>
    %157 = vector.shape_cast %156 : vector<8xf32> to vector<8x1xf32>
    %cst_63 = arith.constant 6.400000e+01 : f32
    %158 = vector.broadcast %cst_63 : f32 to vector<8x1xf32>
    %159 = arith.divf %157, %158 : vector<8x1xf32>
    %cst_64 = arith.constant 9.99999974E-6 : f32
    %160 = vector.broadcast %cst_64 : f32 to vector<8x1xf32>
    %161 = arith.addf %159, %160 : vector<8x1xf32>
    %162 = math.rsqrt %161 : vector<8x1xf32>
    %163 = vector.broadcast %162 : vector<8x1xf32> to vector<8x64xf32>
    %164 = arith.mulf %154, %163 : vector<8x64xf32>
    %165 = vector.broadcast %146 : vector<1x64xf32> to vector<8x64xf32>
    %166 = arith.mulf %164, %165 : vector<8x64xf32>
    %167 = vector.broadcast %148 : vector<1x64xf32> to vector<8x64xf32>
    %168 = arith.addf %166, %167 : vector<8x64xf32>
    %169 = arith.truncf %168 : vector<8x64xf32> to vector<8x64xbf16>
    %c0_65 = arith.constant 0 : index
    %c0_66 = arith.constant 0 : index
    %c0_67 = arith.constant 0 : index
    %170 = vector.load %arg15[%c0_65, %c0_66, %c0_67] : memref<1x64x64xbf16, #tpu.memory_space<vmem>>, vector<1x64x64xbf16>
    %171 = vector.shape_cast %170 : vector<1x64x64xbf16> to vector<64x64xbf16>
    %cst_68 = arith.constant dense<0.000000e+00> : vector<8x64xf32>
    %172 = tpu.matmul %169, %171, %cst_68 {dimension_numbers = #tpu.dot_dimension_numbers<[1], [0], [0], [1], [0, 0, 1, 1], [], []>} : vector<8x64xbf16>, vector<64x64xbf16>, vector<8x64xf32> -> vector<8x64xf32>
    %c0_69 = arith.constant 0 : index
    %c0_70 = arith.constant 0 : index
    %c0_71 = arith.constant 0 : index
    %173 = vector.load %arg16[%c0_69, %c0_70, %c0_71] : memref<1x1x64xf32, #tpu.memory_space<vmem>>, vector<1x1x64xf32>
    %174 = vector.shape_cast %173 : vector<1x1x64xf32> to vector<1x64xf32>
    %175 = vector.broadcast %174 : vector<1x64xf32> to vector<8x64xf32>
    %176 = arith.addf %172, %175 : vector<8x64xf32>
    %c0_72 = arith.constant 0 : index
    %c0_73 = arith.constant 0 : index
    %c0_74 = arith.constant 0 : index
    %177 = vector.load %arg17[%c0_72, %c0_73, %c0_74] : memref<1x64x128xbf16, #tpu.memory_space<vmem>>, vector<1x64x128xbf16>
    %178 = vector.shape_cast %177 : vector<1x64x128xbf16> to vector<64x128xbf16>
    %cst_75 = arith.constant dense<0.000000e+00> : vector<16x128xf32>
    %179 = tpu.matmul %6, %178, %cst_75 {dimension_numbers = #tpu.dot_dimension_numbers<[1], [0], [0], [1], [0, 0, 1, 1], [], []>} : vector<16x64xbf16>, vector<64x128xbf16>, vector<16x128xf32> -> vector<16x128xf32>
    %c0_76 = arith.constant 0 : index
    %c0_77 = arith.constant 0 : index
    %c0_78 = arith.constant 0 : index
    %180 = vector.load %arg18[%c0_76, %c0_77, %c0_78] : memref<1x1x128xf32, #tpu.memory_space<vmem>>, vector<1x1x128xf32>
    %181 = vector.shape_cast %180 : vector<1x1x128xf32> to vector<1x128xf32>
    %182 = vector.broadcast %181 : vector<1x128xf32> to vector<16x128xf32>
    %183 = arith.addf %179, %182 : vector<16x128xf32>
    %184 = vector.extract_strided_slice %183 {offsets = [0, 0], sizes = [16, 64], strides = [1, 1]} : vector<16x128xf32> to vector<16x64xf32>
    %185 = vector.extract_strided_slice %183 {offsets = [0, 64], sizes = [16, 64], strides = [1, 1]} : vector<16x128xf32> to vector<16x64xf32>
    %c0_79 = arith.constant 0 : index
    %c0_80 = arith.constant 0 : index
    %c0_81 = arith.constant 0 : index
    %186 = vector.load %arg6[%c0_79, %c0_80, %c0_81] : memref<1x1x16xf32, #tpu.memory_space<vmem>>, vector<1x1x16xf32>
    %187 = vector.shape_cast %186 : vector<1x1x16xf32> to vector<1x16xf32>
    %188 = vector.extract_strided_slice %176 {offsets = [0, 0], sizes = [8, 16], strides = [1, 1]} : vector<8x64xf32> to vector<8x16xf32>
    %189 = arith.truncf %188 : vector<8x16xf32> to vector<8x16xbf16>
    %190 = vector.extract_strided_slice %184 {offsets = [0, 0], sizes = [16, 16], strides = [1, 1]} : vector<16x64xf32> to vector<16x16xf32>
    %191 = arith.truncf %190 : vector<16x16xf32> to vector<16x16xbf16>
    %192 = vector.extract_strided_slice %185 {offsets = [0, 0], sizes = [16, 16], strides = [1, 1]} : vector<16x64xf32> to vector<16x16xf32>
    %193 = arith.truncf %192 : vector<16x16xf32> to vector<16x16xbf16>
    %cst_82 = arith.constant dense<0.000000e+00> : vector<8x16xf32>
    %194 = tpu.matmul %189, %191, %cst_82 {dimension_numbers = #tpu.dot_dimension_numbers<[1], [1], [0], [0], [0, 0, 1, 0], [], []>} : vector<8x16xbf16>, vector<16x16xbf16>, vector<8x16xf32> -> vector<8x16xf32>
    %cst_83 = arith.constant 2.500000e-01 : f32
    %195 = vector.broadcast %cst_83 : f32 to vector<8x16xf32>
    %196 = arith.mulf %194, %195 : vector<8x16xf32>
    %197 = vector.broadcast %187 : vector<1x16xf32> to vector<8x16xf32>
    %198 = arith.addf %196, %197 : vector<8x16xf32>
    %cst_84 = arith.constant dense<0xFF800000> : vector<8xf32>
    %199 = vector.multi_reduction <maximumf>, %198, %cst_84 [1] : vector<8x16xf32> to vector<8xf32>
    %200 = vector.shape_cast %199 : vector<8xf32> to vector<8x1xf32>
    %201 = vector.broadcast %200 : vector<8x1xf32> to vector<8x16xf32>
    %202 = arith.subf %198, %201 : vector<8x16xf32>
    %203 = math.exp %202 : vector<8x16xf32>
    %cst_85 = arith.constant dense<0.000000e+00> : vector<8xf32>
    %204 = vector.multi_reduction <add>, %203, %cst_85 [1] : vector<8x16xf32> to vector<8xf32>
    %205 = vector.shape_cast %204 : vector<8xf32> to vector<8x1xf32>
    %206 = tpu.reciprocal %205 {approx = true} : vector<8x1xf32> -> vector<8x1xf32>
    %207 = vector.broadcast %206 : vector<8x1xf32> to vector<8x16xf32>
    %208 = arith.mulf %203, %207 : vector<8x16xf32>
    %209 = arith.truncf %208 : vector<8x16xf32> to vector<8x16xbf16>
    %cst_86 = arith.constant dense<0.000000e+00> : vector<8x16xf32>
    %210 = tpu.matmul %209, %193, %cst_86 {dimension_numbers = #tpu.dot_dimension_numbers<[1], [0], [0], [1], [0, 0, 1, 1], [], []>} : vector<8x16xbf16>, vector<16x16xbf16>, vector<8x16xf32> -> vector<8x16xf32>
    %211 = vector.extract_strided_slice %176 {offsets = [0, 16], sizes = [8, 16], strides = [1, 1]} : vector<8x64xf32> to vector<8x16xf32>
    %212 = arith.truncf %211 : vector<8x16xf32> to vector<8x16xbf16>
    %213 = vector.extract_strided_slice %184 {offsets = [0, 16], sizes = [16, 16], strides = [1, 1]} : vector<16x64xf32> to vector<16x16xf32>
    %214 = arith.truncf %213 : vector<16x16xf32> to vector<16x16xbf16>
    %215 = vector.extract_strided_slice %185 {offsets = [0, 16], sizes = [16, 16], strides = [1, 1]} : vector<16x64xf32> to vector<16x16xf32>
    %216 = arith.truncf %215 : vector<16x16xf32> to vector<16x16xbf16>
    %cst_87 = arith.constant dense<0.000000e+00> : vector<8x16xf32>
    %217 = tpu.matmul %212, %214, %cst_87 {dimension_numbers = #tpu.dot_dimension_numbers<[1], [1], [0], [0], [0, 0, 1, 0], [], []>} : vector<8x16xbf16>, vector<16x16xbf16>, vector<8x16xf32> -> vector<8x16xf32>
    %cst_88 = arith.constant 2.500000e-01 : f32
    %218 = vector.broadcast %cst_88 : f32 to vector<8x16xf32>
    %219 = arith.mulf %217, %218 : vector<8x16xf32>
    %220 = vector.broadcast %187 : vector<1x16xf32> to vector<8x16xf32>
    %221 = arith.addf %219, %220 : vector<8x16xf32>
    %cst_89 = arith.constant dense<0xFF800000> : vector<8xf32>
    %222 = vector.multi_reduction <maximumf>, %221, %cst_89 [1] : vector<8x16xf32> to vector<8xf32>
    %223 = vector.shape_cast %222 : vector<8xf32> to vector<8x1xf32>
    %224 = vector.broadcast %223 : vector<8x1xf32> to vector<8x16xf32>
    %225 = arith.subf %221, %224 : vector<8x16xf32>
    %226 = math.exp %225 : vector<8x16xf32>
    %cst_90 = arith.constant dense<0.000000e+00> : vector<8xf32>
    %227 = vector.multi_reduction <add>, %226, %cst_90 [1] : vector<8x16xf32> to vector<8xf32>
    %228 = vector.shape_cast %227 : vector<8xf32> to vector<8x1xf32>
    %229 = tpu.reciprocal %228 {approx = true} : vector<8x1xf32> -> vector<8x1xf32>
    %230 = vector.broadcast %229 : vector<8x1xf32> to vector<8x16xf32>
    %231 = arith.mulf %226, %230 : vector<8x16xf32>
    %232 = arith.truncf %231 : vector<8x16xf32> to vector<8x16xbf16>
    %cst_91 = arith.constant dense<0.000000e+00> : vector<8x16xf32>
    %233 = tpu.matmul %232, %216, %cst_91 {dimension_numbers = #tpu.dot_dimension_numbers<[1], [0], [0], [1], [0, 0, 1, 1], [], []>} : vector<8x16xbf16>, vector<16x16xbf16>, vector<8x16xf32> -> vector<8x16xf32>
    %234 = vector.extract_strided_slice %176 {offsets = [0, 32], sizes = [8, 16], strides = [1, 1]} : vector<8x64xf32> to vector<8x16xf32>
    %235 = arith.truncf %234 : vector<8x16xf32> to vector<8x16xbf16>
    %236 = vector.extract_strided_slice %184 {offsets = [0, 32], sizes = [16, 16], strides = [1, 1]} : vector<16x64xf32> to vector<16x16xf32>
    %237 = arith.truncf %236 : vector<16x16xf32> to vector<16x16xbf16>
    %238 = vector.extract_strided_slice %185 {offsets = [0, 32], sizes = [16, 16], strides = [1, 1]} : vector<16x64xf32> to vector<16x16xf32>
    %239 = arith.truncf %238 : vector<16x16xf32> to vector<16x16xbf16>
    %cst_92 = arith.constant dense<0.000000e+00> : vector<8x16xf32>
    %240 = tpu.matmul %235, %237, %cst_92 {dimension_numbers = #tpu.dot_dimension_numbers<[1], [1], [0], [0], [0, 0, 1, 0], [], []>} : vector<8x16xbf16>, vector<16x16xbf16>, vector<8x16xf32> -> vector<8x16xf32>
    %cst_93 = arith.constant 2.500000e-01 : f32
    %241 = vector.broadcast %cst_93 : f32 to vector<8x16xf32>
    %242 = arith.mulf %240, %241 : vector<8x16xf32>
    %243 = vector.broadcast %187 : vector<1x16xf32> to vector<8x16xf32>
    %244 = arith.addf %242, %243 : vector<8x16xf32>
    %cst_94 = arith.constant dense<0xFF800000> : vector<8xf32>
    %245 = vector.multi_reduction <maximumf>, %244, %cst_94 [1] : vector<8x16xf32> to vector<8xf32>
    %246 = vector.shape_cast %245 : vector<8xf32> to vector<8x1xf32>
    %247 = vector.broadcast %246 : vector<8x1xf32> to vector<8x16xf32>
    %248 = arith.subf %244, %247 : vector<8x16xf32>
    %249 = math.exp %248 : vector<8x16xf32>
    %cst_95 = arith.constant dense<0.000000e+00> : vector<8xf32>
    %250 = vector.multi_reduction <add>, %249, %cst_95 [1] : vector<8x16xf32> to vector<8xf32>
    %251 = vector.shape_cast %250 : vector<8xf32> to vector<8x1xf32>
    %252 = tpu.reciprocal %251 {approx = true} : vector<8x1xf32> -> vector<8x1xf32>
    %253 = vector.broadcast %252 : vector<8x1xf32> to vector<8x16xf32>
    %254 = arith.mulf %249, %253 : vector<8x16xf32>
    %255 = arith.truncf %254 : vector<8x16xf32> to vector<8x16xbf16>
    %cst_96 = arith.constant dense<0.000000e+00> : vector<8x16xf32>
    %256 = tpu.matmul %255, %239, %cst_96 {dimension_numbers = #tpu.dot_dimension_numbers<[1], [0], [0], [1], [0, 0, 1, 1], [], []>} : vector<8x16xbf16>, vector<16x16xbf16>, vector<8x16xf32> -> vector<8x16xf32>
    %257 = vector.extract_strided_slice %176 {offsets = [0, 48], sizes = [8, 16], strides = [1, 1]} : vector<8x64xf32> to vector<8x16xf32>
    %258 = arith.truncf %257 : vector<8x16xf32> to vector<8x16xbf16>
    %259 = vector.extract_strided_slice %184 {offsets = [0, 48], sizes = [16, 16], strides = [1, 1]} : vector<16x64xf32> to vector<16x16xf32>
    %260 = arith.truncf %259 : vector<16x16xf32> to vector<16x16xbf16>
    %261 = vector.extract_strided_slice %185 {offsets = [0, 48], sizes = [16, 16], strides = [1, 1]} : vector<16x64xf32> to vector<16x16xf32>
    %262 = arith.truncf %261 : vector<16x16xf32> to vector<16x16xbf16>
    %cst_97 = arith.constant dense<0.000000e+00> : vector<8x16xf32>
    %263 = tpu.matmul %258, %260, %cst_97 {dimension_numbers = #tpu.dot_dimension_numbers<[1], [1], [0], [0], [0, 0, 1, 0], [], []>} : vector<8x16xbf16>, vector<16x16xbf16>, vector<8x16xf32> -> vector<8x16xf32>
    %cst_98 = arith.constant 2.500000e-01 : f32
    %264 = vector.broadcast %cst_98 : f32 to vector<8x16xf32>
    %265 = arith.mulf %263, %264 : vector<8x16xf32>
    %266 = vector.broadcast %187 : vector<1x16xf32> to vector<8x16xf32>
    %267 = arith.addf %265, %266 : vector<8x16xf32>
    %cst_99 = arith.constant dense<0xFF800000> : vector<8xf32>
    %268 = vector.multi_reduction <maximumf>, %267, %cst_99 [1] : vector<8x16xf32> to vector<8xf32>
    %269 = vector.shape_cast %268 : vector<8xf32> to vector<8x1xf32>
    %270 = vector.broadcast %269 : vector<8x1xf32> to vector<8x16xf32>
    %271 = arith.subf %267, %270 : vector<8x16xf32>
    %272 = math.exp %271 : vector<8x16xf32>
    %cst_100 = arith.constant dense<0.000000e+00> : vector<8xf32>
    %273 = vector.multi_reduction <add>, %272, %cst_100 [1] : vector<8x16xf32> to vector<8xf32>
    %274 = vector.shape_cast %273 : vector<8xf32> to vector<8x1xf32>
    %275 = tpu.reciprocal %274 {approx = true} : vector<8x1xf32> -> vector<8x1xf32>
    %276 = vector.broadcast %275 : vector<8x1xf32> to vector<8x16xf32>
    %277 = arith.mulf %272, %276 : vector<8x16xf32>
    %278 = arith.truncf %277 : vector<8x16xf32> to vector<8x16xbf16>
    %cst_101 = arith.constant dense<0.000000e+00> : vector<8x16xf32>
    %279 = tpu.matmul %278, %262, %cst_101 {dimension_numbers = #tpu.dot_dimension_numbers<[1], [0], [0], [1], [0, 0, 1, 1], [], []>} : vector<8x16xbf16>, vector<16x16xbf16>, vector<8x16xf32> -> vector<8x16xf32>
    %280 = tpu.concatenate %210, %233, %256, %279 in 1 : vector<8x16xf32>, vector<8x16xf32>, vector<8x16xf32>, vector<8x16xf32> -> vector<8x64xf32>
    %281 = arith.truncf %280 : vector<8x64xf32> to vector<8x64xbf16>
    %c0_102 = arith.constant 0 : index
    %c0_103 = arith.constant 0 : index
    %c0_104 = arith.constant 0 : index
    %282 = vector.load %arg19[%c0_102, %c0_103, %c0_104] : memref<1x64x64xbf16, #tpu.memory_space<vmem>>, vector<1x64x64xbf16>
    %283 = vector.shape_cast %282 : vector<1x64x64xbf16> to vector<64x64xbf16>
    %cst_105 = arith.constant dense<0.000000e+00> : vector<8x64xf32>
    %284 = tpu.matmul %281, %283, %cst_105 {dimension_numbers = #tpu.dot_dimension_numbers<[1], [0], [0], [1], [0, 0, 1, 1], [], []>} : vector<8x64xbf16>, vector<64x64xbf16>, vector<8x64xf32> -> vector<8x64xf32>
    %285 = arith.addf %144, %284 : vector<8x64xf32>
    %c0_106 = arith.constant 0 : index
    %c0_107 = arith.constant 0 : index
    %c0_108 = arith.constant 0 : index
    %286 = vector.load %arg20[%c0_106, %c0_107, %c0_108] : memref<1x1x64xf32, #tpu.memory_space<vmem>>, vector<1x1x64xf32>
    %287 = vector.shape_cast %286 : vector<1x1x64xf32> to vector<1x64xf32>
    %288 = vector.broadcast %287 : vector<1x64xf32> to vector<8x64xf32>
    %289 = arith.addf %285, %288 : vector<8x64xf32>
    %c0_109 = arith.constant 0 : index
    %c0_110 = arith.constant 0 : index
    %c0_111 = arith.constant 0 : index
    %290 = vector.load %arg21[%c0_109, %c0_110, %c0_111] : memref<1x1x64xf32, #tpu.memory_space<vmem>>, vector<1x1x64xf32>
    %291 = vector.shape_cast %290 : vector<1x1x64xf32> to vector<1x64xf32>
    %c0_112 = arith.constant 0 : index
    %c0_113 = arith.constant 0 : index
    %c0_114 = arith.constant 0 : index
    %292 = vector.load %arg22[%c0_112, %c0_113, %c0_114] : memref<1x1x64xf32, #tpu.memory_space<vmem>>, vector<1x1x64xf32>
    %293 = vector.shape_cast %292 : vector<1x1x64xf32> to vector<1x64xf32>
    %cst_115 = arith.constant dense<0.000000e+00> : vector<8xf32>
    %294 = vector.multi_reduction <add>, %289, %cst_115 [1] : vector<8x64xf32> to vector<8xf32>
    %295 = vector.shape_cast %294 : vector<8xf32> to vector<8x1xf32>
    %cst_116 = arith.constant 6.400000e+01 : f32
    %296 = vector.broadcast %cst_116 : f32 to vector<8x1xf32>
    %297 = arith.divf %295, %296 : vector<8x1xf32>
    %298 = vector.broadcast %297 : vector<8x1xf32> to vector<8x64xf32>
    %299 = arith.subf %289, %298 : vector<8x64xf32>
    %300 = arith.mulf %299, %299 : vector<8x64xf32>
    %cst_117 = arith.constant dense<0.000000e+00> : vector<8xf32>
    %301 = vector.multi_reduction <add>, %300, %cst_117 [1] : vector<8x64xf32> to vector<8xf32>
    %302 = vector.shape_cast %301 : vector<8xf32> to vector<8x1xf32>
    %cst_118 = arith.constant 6.400000e+01 : f32
    %303 = vector.broadcast %cst_118 : f32 to vector<8x1xf32>
    %304 = arith.divf %302, %303 : vector<8x1xf32>
    %cst_119 = arith.constant 9.99999974E-6 : f32
    %305 = vector.broadcast %cst_119 : f32 to vector<8x1xf32>
    %306 = arith.addf %304, %305 : vector<8x1xf32>
    %307 = math.rsqrt %306 : vector<8x1xf32>
    %308 = vector.broadcast %307 : vector<8x1xf32> to vector<8x64xf32>
    %309 = arith.mulf %299, %308 : vector<8x64xf32>
    %310 = vector.broadcast %291 : vector<1x64xf32> to vector<8x64xf32>
    %311 = arith.mulf %309, %310 : vector<8x64xf32>
    %312 = vector.broadcast %293 : vector<1x64xf32> to vector<8x64xf32>
    %313 = arith.addf %311, %312 : vector<8x64xf32>
    %314 = arith.truncf %313 : vector<8x64xf32> to vector<8x64xbf16>
    %c0_120 = arith.constant 0 : index
    %c0_121 = arith.constant 0 : index
    %c0_122 = arith.constant 0 : index
    %315 = vector.load %arg23[%c0_120, %c0_121, %c0_122] : memref<1x64x256xbf16, #tpu.memory_space<vmem>>, vector<1x64x256xbf16>
    %316 = vector.shape_cast %315 : vector<1x64x256xbf16> to vector<64x256xbf16>
    %cst_123 = arith.constant dense<0.000000e+00> : vector<8x256xf32>
    %317 = tpu.matmul %314, %316, %cst_123 {dimension_numbers = #tpu.dot_dimension_numbers<[1], [0], [0], [1], [0, 0, 1, 1], [], []>} : vector<8x64xbf16>, vector<64x256xbf16>, vector<8x256xf32> -> vector<8x256xf32>
    %c0_124 = arith.constant 0 : index
    %c0_125 = arith.constant 0 : index
    %c0_126 = arith.constant 0 : index
    %318 = vector.load %arg24[%c0_124, %c0_125, %c0_126] : memref<1x1x256xf32, #tpu.memory_space<vmem>>, vector<1x1x256xf32>
    %319 = vector.shape_cast %318 : vector<1x1x256xf32> to vector<1x256xf32>
    %320 = vector.broadcast %319 : vector<1x256xf32> to vector<8x256xf32>
    %321 = arith.addf %317, %320 : vector<8x256xf32>
    %cst_127 = arith.constant 0.000000e+00 : f32
    %322 = vector.broadcast %cst_127 : f32 to vector<8x256xf32>
    %323 = arith.maximumf %321, %322 : vector<8x256xf32>
    %324 = arith.truncf %323 : vector<8x256xf32> to vector<8x256xbf16>
    %c0_128 = arith.constant 0 : index
    %c0_129 = arith.constant 0 : index
    %c0_130 = arith.constant 0 : index
    %325 = vector.load %arg25[%c0_128, %c0_129, %c0_130] : memref<1x256x64xbf16, #tpu.memory_space<vmem>>, vector<1x256x64xbf16>
    %326 = vector.shape_cast %325 : vector<1x256x64xbf16> to vector<256x64xbf16>
    %cst_131 = arith.constant dense<0.000000e+00> : vector<8x64xf32>
    %327 = tpu.matmul %324, %326, %cst_131 {dimension_numbers = #tpu.dot_dimension_numbers<[1], [0], [0], [1], [0, 0, 1, 1], [], []>} : vector<8x256xbf16>, vector<256x64xbf16>, vector<8x64xf32> -> vector<8x64xf32>
    %c0_132 = arith.constant 0 : index
    %c0_133 = arith.constant 0 : index
    %c0_134 = arith.constant 0 : index
    %328 = vector.load %arg26[%c0_132, %c0_133, %c0_134] : memref<1x1x64xf32, #tpu.memory_space<vmem>>, vector<1x1x64xf32>
    %329 = vector.shape_cast %328 : vector<1x1x64xf32> to vector<1x64xf32>
    %330 = vector.broadcast %329 : vector<1x64xf32> to vector<8x64xf32>
    %331 = arith.addf %327, %330 : vector<8x64xf32>
    %332 = arith.addf %289, %331 : vector<8x64xf32>
    %c0_135 = arith.constant 0 : index
    %c0_136 = arith.constant 0 : index
    %333 = vector.load %arg28[%c0_135, %c0_136] : memref<8x64xf32, #tpu.memory_space<vmem>>, vector<8x64xf32>
    tpu.vector_store %arg28[%c0_135, %c0_136], %332 {strides = array<i32>} : memref<8x64xf32, #tpu.memory_space<vmem>>, vector<8x64xf32>,
    %c1_i32 = arith.constant 1 : i32
    %334 = arith.cmpi eq, %arg1, %c1_i32 : i32
    %335 = arith.extui %334 : i1 to i32
    %c0_i32_137 = arith.constant 0 : i32
    %336 = arith.cmpi ne, %335, %c0_i32_137 : i32
    scf.if %336 {
      %337 = vector.shape_cast %332 : vector<8x64xf32> to vector<1x8x64xf32>
      %c0_138 = arith.constant 0 : index
      %c0_139 = arith.constant 0 : index
      %c0_140 = arith.constant 0 : index
      %338 = vector.load %arg27[%c0_138, %c0_139, %c0_140] : memref<1x8x64xf32, #tpu.memory_space<vmem>>, vector<1x8x64xf32>
      tpu.vector_store %arg27[%c0_138, %c0_139, %c0_140], %337 {strides = array<i32>} : memref<1x8x64xf32, #tpu.memory_space<vmem>>, vector<1x8x64xf32>,
    } else {
    }
    return
  }
  func.func @transform_0(%arg0: i32, %arg1: i32) -> (i32, i32, i32) {
    %c0_i32 = arith.constant 0 : i32
    %c0_i32_0 = arith.constant 0 : i32
    %c0_i32_1 = arith.constant 0 : i32
    return %arg0, %c0_i32, %c0_i32_0 : i32, i32, i32
  }
  func.func @transform_1(%arg0: i32, %arg1: i32) -> (i32, i32, i32) {
    %c0_i32 = arith.constant 0 : i32
    %c0_i32_0 = arith.constant 0 : i32
    %c0_i32_1 = arith.constant 0 : i32
    return %arg0, %c0_i32, %c0_i32_0 : i32, i32, i32
  }
  func.func @transform_2(%arg0: i32, %arg1: i32) -> (i32, i32) {
    %c0_i32 = arith.constant 0 : i32
    %c0_i32_0 = arith.constant 0 : i32
    %c0_i32_1 = arith.constant 0 : i32
    return %c0_i32, %c0_i32_0 : i32, i32
  }
  func.func @transform_3(%arg0: i32, %arg1: i32) -> (i32, i32, i32) {
    %c0_i32 = arith.constant 0 : i32
    %c0_i32_0 = arith.constant 0 : i32
    %c0_i32_1 = arith.constant 0 : i32
    return %arg0, %c0_i32, %c0_i32_0 : i32, i32, i32
  }
  func.func @transform_4(%arg0: i32, %arg1: i32) -> (i32, i32, i32) {
    %c0_i32 = arith.constant 0 : i32
    %c0_i32_0 = arith.constant 0 : i32
    %c0_i32_1 = arith.constant 0 : i32
    return %arg0, %c0_i32, %c0_i32_0 : i32, i32, i32
  }
  func.func @transform_5(%arg0: i32, %arg1: i32) -> (i32, i32, i32) {
    %c0_i32 = arith.constant 0 : i32
    %c0_i32_0 = arith.constant 0 : i32
    %c0_i32_1 = arith.constant 0 : i32
    return %arg1, %c0_i32, %c0_i32_0 : i32, i32, i32
  }
  func.func @transform_6(%arg0: i32, %arg1: i32) -> (i32, i32, i32) {
    %c0_i32 = arith.constant 0 : i32
    %c0_i32_0 = arith.constant 0 : i32
    %c0_i32_1 = arith.constant 0 : i32
    return %arg1, %c0_i32, %c0_i32_0 : i32, i32, i32
  }
  func.func @transform_7(%arg0: i32, %arg1: i32) -> (i32, i32, i32) {
    %c0_i32 = arith.constant 0 : i32
    %c0_i32_0 = arith.constant 0 : i32
    %c0_i32_1 = arith.constant 0 : i32
    return %arg1, %c0_i32, %c0_i32_0 : i32, i32, i32
  }
  func.func @transform_8(%arg0: i32, %arg1: i32) -> (i32, i32, i32) {
    %c0_i32 = arith.constant 0 : i32
    %c0_i32_0 = arith.constant 0 : i32
    %c0_i32_1 = arith.constant 0 : i32
    return %arg1, %c0_i32, %c0_i32_0 : i32, i32, i32
  }
  func.func @transform_9(%arg0: i32, %arg1: i32) -> (i32, i32, i32) {
    %c0_i32 = arith.constant 0 : i32
    %c0_i32_0 = arith.constant 0 : i32
    %c0_i32_1 = arith.constant 0 : i32
    return %arg1, %c0_i32, %c0_i32_0 : i32, i32, i32
  }
  func.func @transform_10(%arg0: i32, %arg1: i32) -> (i32, i32, i32) {
    %c0_i32 = arith.constant 0 : i32
    %c0_i32_0 = arith.constant 0 : i32
    %c0_i32_1 = arith.constant 0 : i32
    return %arg1, %c0_i32, %c0_i32_0 : i32, i32, i32
  }
  func.func @transform_11(%arg0: i32, %arg1: i32) -> (i32, i32, i32) {
    %c0_i32 = arith.constant 0 : i32
    %c0_i32_0 = arith.constant 0 : i32
    %c0_i32_1 = arith.constant 0 : i32
    return %arg1, %c0_i32, %c0_i32_0 : i32, i32, i32
  }
  func.func @transform_12(%arg0: i32, %arg1: i32) -> (i32, i32, i32) {
    %c0_i32 = arith.constant 0 : i32
    %c0_i32_0 = arith.constant 0 : i32
    %c0_i32_1 = arith.constant 0 : i32
    return %arg1, %c0_i32, %c0_i32_0 : i32, i32, i32
  }
  func.func @transform_13(%arg0: i32, %arg1: i32) -> (i32, i32, i32) {
    %c0_i32 = arith.constant 0 : i32
    %c0_i32_0 = arith.constant 0 : i32
    %c0_i32_1 = arith.constant 0 : i32
    return %arg1, %c0_i32, %c0_i32_0 : i32, i32, i32
  }
  func.func @transform_14(%arg0: i32, %arg1: i32) -> (i32, i32, i32) {
    %c0_i32 = arith.constant 0 : i32
    %c0_i32_0 = arith.constant 0 : i32
    %c0_i32_1 = arith.constant 0 : i32
    return %arg1, %c0_i32, %c0_i32_0 : i32, i32, i32
  }
  func.func @transform_15(%arg0: i32, %arg1: i32) -> (i32, i32, i32) {
    %c0_i32 = arith.constant 0 : i32
    %c0_i32_0 = arith.constant 0 : i32
    %c0_i32_1 = arith.constant 0 : i32
    return %arg1, %c0_i32, %c0_i32_0 : i32, i32, i32
  }
  func.func @transform_16(%arg0: i32, %arg1: i32) -> (i32, i32, i32) {
    %c0_i32 = arith.constant 0 : i32
    %c0_i32_0 = arith.constant 0 : i32
    %c0_i32_1 = arith.constant 0 : i32
    return %arg1, %c0_i32, %c0_i32_0 : i32, i32, i32
  }
  func.func @transform_17(%arg0: i32, %arg1: i32) -> (i32, i32, i32) {
    %c0_i32 = arith.constant 0 : i32
    %c0_i32_0 = arith.constant 0 : i32
    %c0_i32_1 = arith.constant 0 : i32
    return %arg1, %c0_i32, %c0_i32_0 : i32, i32, i32
  }
  func.func @transform_18(%arg0: i32, %arg1: i32) -> (i32, i32, i32) {
    %c0_i32 = arith.constant 0 : i32
    %c0_i32_0 = arith.constant 0 : i32
    %c0_i32_1 = arith.constant 0 : i32
    return %arg1, %c0_i32, %c0_i32_0 : i32, i32, i32
  }
  func.func @transform_19(%arg0: i32, %arg1: i32) -> (i32, i32, i32) {
    %c0_i32 = arith.constant 0 : i32
    %c0_i32_0 = arith.constant 0 : i32
    %c0_i32_1 = arith.constant 0 : i32
    return %arg1, %c0_i32, %c0_i32_0 : i32, i32, i32
  }
  func.func @transform_20(%arg0: i32, %arg1: i32) -> (i32, i32, i32) {
    %c0_i32 = arith.constant 0 : i32
    %c0_i32_0 = arith.constant 0 : i32
    %c0_i32_1 = arith.constant 0 : i32
    return %arg1, %c0_i32, %c0_i32_0 : i32, i32, i32
  }
  func.func @transform_21(%arg0: i32, %arg1: i32) -> (i32, i32, i32) {
    %c0_i32 = arith.constant 0 : i32
    %c0_i32_0 = arith.constant 0 : i32
    %c0_i32_1 = arith.constant 0 : i32
    return %arg1, %c0_i32, %c0_i32_0 : i32, i32, i32
  }
  func.func @transform_22(%arg0: i32, %arg1: i32) -> (i32, i32, i32) {
    %c0_i32 = arith.constant 0 : i32
    %c0_i32_0 = arith.constant 0 : i32
    %c0_i32_1 = arith.constant 0 : i32
    return %arg1, %c0_i32, %c0_i32_0 : i32, i32, i32
  }
  func.func @transform_23(%arg0: i32, %arg1: i32) -> (i32, i32, i32) {
    %c0_i32 = arith.constant 0 : i32
    %c0_i32_0 = arith.constant 0 : i32
    %c0_i32_1 = arith.constant 0 : i32
    return %arg1, %c0_i32, %c0_i32_0 : i32, i32, i32
  }
  func.func @transform_24(%arg0: i32, %arg1: i32) -> (i32, i32, i32) {
    %c0_i32 = arith.constant 0 : i32
    %c0_i32_0 = arith.constant 0 : i32
    %c0_i32_1 = arith.constant 0 : i32
    return %arg1, %c0_i32, %c0_i32_0 : i32, i32, i32
  }
  func.func @transform_25(%arg0: i32, %arg1: i32) -> (i32, i32, i32) {
    %c0_i32 = arith.constant 0 : i32
    %c0_i32_0 = arith.constant 0 : i32
    %c0_i32_1 = arith.constant 0 : i32
    return %arg0, %c0_i32, %c0_i32_0 : i32, i32, i32
  }
}

</mosaic_0001>

<llo_original>
// kernel: audio_captioner_forward.5
$region0: #{audio_captioner_forward.5}
  #allocation0 [shape = 'u32[]', space=smem, size = 0x4, offset = 0x4, fixed_abs, tag = 'smem constant byte address 0x4 - core index']
  #allocation1 [shape = 'u32[144,128]{1,0:T(1,128)}', space=vmem, size = 0x12000, scoped, tag = 'internal scratch']
  %s0 = inlined_call_operand.vmem [shape: f32[16,64], index: 0, kind: input, shape index: {}]
  %s1 = inlined_call_operand.vmem [shape: f32[1,64], index: 1, kind: input, shape index: {}]
  %s2 = inlined_call_operand.vmem [shape: f32[1,64], index: 2, kind: input, shape index: {}]
  %s3 = inlined_call_operand.vmem [shape: bf16[64,128], index: 3, kind: input, shape index: {}]
  %s4 = inlined_call_operand.hbm [shape: f32[16,128], index: 4, kind: output, shape index: {}]
  %s5 = sld [smem:[#allocation0]]
  $region26: #{audio_captioner_forward.5} parent=0
    _
  %s7 = ssub.s32 1, %s5
  %s8 = scalar_select 0, %s7, %s5
  $region1: #{audio_captioner_forward.5} parent=0
    #allocation2 [shape = 'u8[8192]{0}', space=vmem, size = 0x2000, scoped, tag = 'output window, operand 0, single buffered']
    #allocation3 [shape = 's32[1]{0}', space=sflag, size = 0x4, scoped, tag = 'scoped memory for audio_captioner_forward.5']
    %9 = vsyncpa [#allocation3], 0
    // Predicated region
    $region2: #{audio_captioner_forward.5} parent=1 // pred_check
      _
    $region3: #{audio_captioner_forward.5} parent=1 // pred_check_branch
      %11 = sbr.rel (0) target = $region5
    $region4: #{audio_captioner_forward.5} parent=1 // pred_region
      _
    $region5: #{audio_captioner_forward.5} parent=1 // pred_fallthru
      _
    // Predicated region
    $region6: #{audio_captioner_forward.5} parent=1 // pred_check
      _
    $region7: #{audio_captioner_forward.5} parent=1 // pred_check_branch
      %13 = sbr.rel (0) target = $region9
    $region8: #{audio_captioner_forward.5} parent=1 // pred_region
      _
    $region9: #{audio_captioner_forward.5} parent=1 // pred_fallthru
      _
    // Predicated region
    $region10: #{audio_captioner_forward.5} parent=1 // pred_check
      _
    $region11: #{audio_captioner_forward.5} parent=1 // pred_check_branch
      %15 = sbr.rel (0) target = $region13
    $region12: #{audio_captioner_forward.5} parent=1 // pred_region
      _
    $region13: #{audio_captioner_forward.5} parent=1 // pred_fallthru
      _
    // Predicated region
    $region14: #{audio_captioner_forward.5} parent=1 // pred_check
      _
    $region15: #{audio_captioner_forward.5} parent=1 // pred_check_branch
      %17 = sbr.rel (0) target = $region17
    $region16: #{audio_captioner_forward.5} parent=1 // pred_region
      _
    $region17: #{audio_captioner_forward.5} parent=1 // pred_fallthru
      _
    %v19 = vld [vmem:[%s0] sm:$0xff]
    %v20 = vld [vmem:[%s0 + $0x8] sm:$0xff]
    %v21 = vld [vmem:[%s1] sm:$0x1]
    %v22 = vld [vmem:[%s2] sm:$0x1]
    %vm23 = vcmask 523264
    %v24 = vsel %vm23, %v19, 0.0
    %25 = vadd.xlane.f32.xlu0 %v24
    %v26 = vpop.xlane.xlu0 %25
    %v27 = vsel %vm23, %v20, 0.0
    %28 = vadd.xlane.f32.xlu0 %v27
    %v29 = vpop.xlane.xlu0 %28
    %v30 = vrcp.pop 64.0
    %v31 = vmul.f32 %v26, %v30
    %v32 = vmul.f32 %v29, %v30
    %v33 = vsub.f32 %v19, %v31
    %v34 = vsub.f32 %v20, %v32
    %v35 = vmul.f32 %v33, %v33
    %v36 = vmul.f32 %v34, %v34
    %v37 = vsel %vm23, %v35, 0.0
    %38 = vadd.xlane.f32.xlu0 %v37
    %v39 = vpop.xlane.xlu0 %38
    %v40 = vsel %vm23, %v36, 0.0
    %41 = vadd.xlane.f32.xlu0 %v40
    %v42 = vpop.xlane.xlu0 %41
    %v43 = vmul.f32 %v39, %v30
    %v44 = vmul.f32 %v42, %v30
    %v45 = vadd.f32 %v43, 1e-05
    %v46 = vadd.f32 %v44, 1e-05
    %v47 = vrsqrt.pop %v45
    %v48 = vrsqrt.pop %v46
    %v49 = vmul.f32 %v33, %v47
    %v50 = vmul.f32 %v34, %v48
    %v52 = vlaneseq
    %v53 = vshrl.u32 %v52, 7
    %v54 = vsub.s32 0, %v53
    %v55 = vrot.slane %v21, %v54
    %v57 = vmul.f32 %v49, %v55
    %v58 = vmul.f32 %v50, %v55
    %v60 = vlaneseq
    %v61 = vshrl.u32 %v60, 7
    %v62 = vsub.s32 0, %v61
    %v63 = vrot.slane %v22, %v62
    %v65 = vadd.f32 %v57, %v63
    %v66 = vadd.f32 %v58, %v63
    %v67 = vpack.c.bf16 %v66, %v65
    %v68 = vld [vmem:[%s3] sm:$0xf]
    %v69 = vld [vmem:[%s3 + $0x4] sm:$0xf]
    %v70 = vld [vmem:[%s3 + $0x8] sm:$0xf]
    %v71 = vld [vmem:[%s3 + $0xc] sm:$0xf]
    %v72 = vld [vmem:[%s3 + $0x10] sm:$0xf]
    %v73 = vld [vmem:[%s3 + $0x14] sm:$0xf]
    %v74 = vld [vmem:[%s3 + $0x18] sm:$0xf]
    %v75 = vld [vmem:[%s3 + $0x1c] sm:$0xf]
    %v84 = vunpack.c.l.b16 %v68
    %v85 = vunpack.c.l.b16 %v69
    %v86 = vunpack.c.l.b16 %v70
    %v87 = vunpack.c.l.b16 %v71
    %v88 = vunpack.c.l.b16 %v72
    %v89 = vunpack.c.l.b16 %v73
    %v90 = vunpack.c.l.b16 %v74
    %v91 = vunpack.c.l.b16 %v75
    %v92 = vpack.c.b16 %v85, %v84
    %v93 = vpack.c.b16 %v87, %v86
    %v94 = vpack.c.b16 %v89, %v88
    %v95 = vpack.c.b16 %v91, %v90
    %v101 = vsel %vm23, %v67, 0
    %103 = vmatprep.subr.bf16.mxu0 0
    %104 = vmatpush1.bf16.msra.mxu0 %v92
    %105 = vmatprep.subr.bf16.mxu0 0
    %106 = vmatpush1.bf16.msra.mxu0 %v93
    %107 = vmatprep.subr.bf16.mxu0 0
    %108 = vmatpush1.bf16.msra.mxu0 %v94
    %109 = vmatprep.subr.bf16.mxu0 0
    %110 = vmatpush1.bf16.msra.mxu0 %v95
    %111 = vmatprep.subr.bf16.mxu0 0
    %112 = vmatpush1.bf16.msra.mxu0 0
    %113 = vmatprep.subr.bf16.mxu0 0
    %114 = vmatpush1.bf16.msra.mxu0 0
    %115 = vmatprep.subr.bf16.mxu0 0
    %116 = vmatpush1.bf16.msra.mxu0 0
    %117 = vmatprep.subr.bf16.mxu0 0
    %118 = vmatpush1.bf16.msra.mxu0 0
    %119 = vmatprep.subr.bf16.mxu0 0
    %120 = vmatpush1.bf16.msra.mxu0 0
    %121 = vmatprep.subr.bf16.mxu0 0
    %122 = vmatpush1.bf16.msra.mxu0 0
    %123 = vmatprep.subr.bf16.mxu0 0
    %124 = vmatpush1.bf16.msra.mxu0 0
    %125 = vmatprep.subr.bf16.mxu0 0
    %126 = vmatpush1.bf16.msra.mxu0 0
    %127 = vmatprep.subr.bf16.mxu0 0
    %128 = vmatpush1.bf16.msra.mxu0 0
    %129 = vmatprep.subr.bf16.mxu0 0
    %130 = vmatpush1.bf16.msra.mxu0 0
    %131 = vmatprep.subr.bf16.mxu0 0
    %132 = vmatpush1.bf16.msra.mxu0 0
    %133 = vmatprep.subr.bf16.mxu0 0
    %134 = vmatpush1.bf16.msra.mxu0 0
    %135 = vmatprep.mubr.bf16.mxu0 0
    %136 = vmatmul.mubr.bf16.gmra.mrb[0].mxu0 %v101
    %v137 = vpop.f32.mrb[0].mxu0
    %v138 = vadd.f32 0.0, %v137
    %v139 = vpop.f32.mrb[0].mxu0
    %v140 = vpop.f32.mrb[0].mxu0
    %v141 = vadd.f32 0.0, %v140
    %v142 = vpop.f32.mrb[0].mxu0
    %143 = vdwg.mxu0
    %144 = vst [vmem:[#allocation2] sm:$0xff] %v138
    %145 = vst [vmem:[#allocation2 + $0x8] sm:$0xff] %v141
    // Predicated region
    $region18: #{audio_captioner_forward.5} parent=1 // pred_check
      _
    $region19: #{audio_captioner_forward.5} parent=1 // pred_check_branch
      %147 = sbr.rel (0) target = $region21
    $region20: #{audio_captioner_forward.5} parent=1 // pred_region
      %s149 = ssub.s32 256, 256
      %150 = vsyncadd [#allocation3], %s149
      %s151 = sshll.u32 [#allocation2], 4
      %s152 = int_to_ptr.vmem [resolvable:$true] %s151
      %157 = dma.vmem_to_hbm [thread:$0]  %s152, 256, %s4, [#allocation3], 128, 128, 8
    $region21: #{audio_captioner_forward.5} parent=1 // pred_fallthru
      _
    // Predicated region
    $region22: #{audio_captioner_forward.5} parent=1 // pred_check
      _
    $region23: #{audio_captioner_forward.5} parent=1 // pred_check_branch
      %159 = sbr.rel (0) target = $region25
    $region24: #{audio_captioner_forward.5} parent=1 // pred_region
      %160 = dma.done [#allocation3], 256
    $region25: #{audio_captioner_forward.5} parent=1 // pred_fallthru
      _
    %161 = vsyncpa [#allocation3], 1

// kernel: audio_captioner_forward.3
$region0: #{audio_captioner_forward.3}
  #allocation0 [shape = 'u32[]', space=smem, size = 0x4, offset = 0x4, fixed_abs, tag = 'smem constant byte address 0x4 - core index']
  #allocation1 [shape = 'u32[144,128]{1,0:T(1,128)}', space=vmem, size = 0x12000, scoped, tag = 'internal scratch']
  #allocation2 [shape = 'f32[16,64]{1,0:T(8,128)}', space=vmem, size = 0x2000, scoped, tag = 'scratch operand']
  %s0 = inlined_call_operand.vmem [shape: f32[2,16,48], index: 0, kind: input, shape index: {}]
  %s1 = inlined_call_operand.vmem [shape: f32[2,1,16], index: 1, kind: input, shape index: {}]
  %s2 = inlined_call_operand.vmem [shape: f32[16,64], index: 2, kind: input, shape index: {}]
  %s3 = inlined_call_operand.vmem [shape: f32[1,48], index: 3, kind: input, shape index: {}]
  %s4 = inlined_call_operand.vmem [shape: f32[1,48], index: 4, kind: input, shape index: {}]
  %s5 = inlined_call_operand.vmem [shape: bf16[48,64], index: 5, kind: input, shape index: {}]
  %s6 = inlined_call_operand.vmem [shape: f32[1,64], index: 6, kind: input, shape index: {}]
  %s7 = inlined_call_operand.vmem [shape: f32[2,1,64], index: 7, kind: input, shape index: {}]
  %s8 = inlined_call_operand.vmem [shape: f32[2,1,64], index: 8, kind: input, shape index: {}]
  %s9 = inlined_call_operand.vmem [shape: bf16[2,64,192], index: 9, kind: input, shape index: {}]
  %s10 = inlined_call_operand.vmem [shape: f32[2,1,192], index: 10, kind: input, shape index: {}]
  %s11 = inlined_call_operand.vmem [shape: bf16[2,64,64], index: 11, kind: input, shape index: {}]
  %s12 = inlined_call_operand.vmem [shape: f32[2,1,64], index: 12, kind: input, shape index: {}]
  %s13 = inlined_call_operand.vmem [shape: f32[2,1,64], index: 13, kind: input, shape index: {}]
  %s14 = inlined_call_operand.vmem [shape: f32[2,1,64], index: 14, kind: input, shape index: {}]
  %s15 = inlined_call_operand.vmem [shape: bf16[2,64,256], index: 15, kind: input, shape index: {}]
  %s16 = inlined_call_operand.vmem [shape: f32[2,1,256], index: 16, kind: input, shape index: {}]
  %s17 = inlined_call_operand.vmem [shape: bf16[2,256,64], index: 17, kind: input, shape index: {}]
  %s18 = inlined_call_operand.vmem [shape: f32[2,1,64], index: 18, kind: input, shape index: {}]
  %s19 = inlined_call_operand.vmem [shape: f32[2,16,64], index: 19, kind: output, shape index: {}]
  %s20 = sld [smem:[#allocation0]]
  $region117: #{audio_captioner_forward.3} parent=0
    _
  %s22 = ssub.s32 1, %s20
  %s23 = scalar_select 0, %s22, %s20
  loop: start=0, step=1, limit=6
  $region2: #{audio_captioner_forward.3} parent=0 // loop_pre_header
    _
  $region3: #{audio_captioner_forward.3} parent=0 // loop_header
    %s25 = sphi 0, %s29
    %p26 = scmp.ge.s32.totalorder %s25, 6
    %s32 = sphi 0, %s44
    %s33 = sphi 0, %s40
    %s34 = sphi 0, %s32
    %s35 = sphi 0, %s33
    %s36 = sphi 0, %s34
    %s37 = sphi 0, %s35
    %s47 = sphi 0, %s49
    %s50 = sphi 0, %s47
    %s51 = sphi 0, %s50
    %s67 = sphi 0, %s51
    %s73 = sphi 0, %s75
    %s76 = sphi 0, %s73
    %s77 = sphi 0, %s76
    %s93 = sphi 0, %s77
    %s97 = sphi 0, %s97
    %s99 = sphi 0, %s97
    %s100 = sphi 0, %s99
    %s114 = sphi 0, %s100
    %s118 = sphi 0, %s118
    %s120 = sphi 0, %s118
    %s121 = sphi 0, %s120
    %s135 = sphi 0, %s121
    %s139 = sphi 0, %s139
    %s141 = sphi 0, %s139
    %s142 = sphi 0, %s141
    %s156 = sphi 0, %s142
    %s160 = sphi 0, %s160
    %s162 = sphi 0, %s160
    %s163 = sphi 0, %s162
    %s177 = sphi 0, %s163
    %s181 = sphi 0, %s181
    %s183 = sphi 0, %s181
    %s184 = sphi 0, %s183
    %s198 = sphi 0, %s184
    %s204 = sphi 0, %s206
    %s207 = sphi 0, %s204
    %s208 = sphi 0, %s207
    %s224 = sphi 0, %s208
    %s230 = sphi 0, %s232
    %s233 = sphi 0, %s230
    %s234 = sphi 0, %s233
    %s250 = sphi 0, %s234
    %s256 = sphi 0, %s258
    %s259 = sphi 0, %s256
    %s260 = sphi 0, %s259
    %s276 = sphi 0, %s260
    %s282 = sphi 0, %s284
    %s285 = sphi 0, %s282
    %s286 = sphi 0, %s285
    %s302 = sphi 0, %s286
    %s308 = sphi 0, %s310
    %s311 = sphi 0, %s308
    %s312 = sphi 0, %s311
    %s328 = sphi 0, %s312
    %s334 = sphi 0, %s336
    %s337 = sphi 0, %s334
    %s338 = sphi 0, %s337
    %s354 = sphi 0, %s338
    %s360 = sphi 0, %s362
    %s363 = sphi 0, %s360
    %s364 = sphi 0, %s363
    %s380 = sphi 0, %s364
    %s386 = sphi 0, %s388
    %s389 = sphi 0, %s386
    %s390 = sphi 0, %s389
    %s406 = sphi 0, %s390
    %s412 = sphi 0, %s414
    %s415 = sphi 0, %s412
    %s416 = sphi 0, %s415
    %s432 = sphi 0, %s416
    %s438 = sphi 0, %s440
    %s441 = sphi 0, %s438
    %s442 = sphi 0, %s441
    %s458 = sphi 0, %s442
    %s464 = sphi 0, %s466
    %s467 = sphi 0, %s464
    %s468 = sphi 0, %s467
    %s484 = sphi 0, %s468
    %s490 = sphi 0, %s492
    %s493 = sphi 0, %s490
    %s494 = sphi 0, %s493
    %s510 = sphi 0, %s494
    %s516 = sphi 0, %s518
    %s519 = sphi 0, %s516
    %s520 = sphi 0, %s519
    %s536 = sphi 0, %s520
  $region4: #{audio_captioner_forward.3} parent=0 // loop_header_branch
    %28 = sbr.rel (%p26) target = $region8
  $region5: #{audio_captioner_forward.3} parent=0 // loop_body
    %s30 = ssub.s32 %s25, 1
    %s31 = ssub.s32 %s25, 2
    %s38 = sadd.s32 1, %s33
    %p39 = scmp.ge.s32.totalorder %s38, 2
    %s40 = scalar_select %p39, 0, %s38
    %s41 = sadd.s32 1, %s32
    %s42 = scalar_select %p39, %s41, %s32
    %p43 = scmp.ge.s32.totalorder %s42, 2
    %s44 = scalar_select %p43, 0, %s42
    %s45 = ssub.s32 %s32, %s44
    %p46 = scmp.eq.s32.totalorder %s45, 0
    %s48 = sadd.s32 %s47, 1
    %s49 = scalar_select %p46, %s47, %s48
    %p52 = pneg %p46
    %p53 = scmp.eq.s32.totalorder %s25, 3
    %p54 = por %p52, %p53
    %p55 = scmp.ne.s32.totalorder %s47, %s50
    %p56 = scmp.eq.s32.totalorder %s25, 0
    %p57 = por %p55, %p56
    %p58 = scmp.ne.s32.totalorder %s47, %s50
    %p59 = scmp.eq.s32.totalorder %s30, 3
    %p60 = por %p58, %p59
    %p61 = scmp.ne.s32.totalorder %s50, %s51
    %p62 = scmp.eq.s32.totalorder %s30, 0
    %p63 = por %p61, %p62
    %p64 = scmp.ne.s32.totalorder %s50, %s51
    %p65 = scmp.eq.s32.totalorder %s31, 3
    %p66 = por %p64, %p65
    %p68 = scmp.ne.s32.totalorder %s51, %s67
    %p69 = scmp.eq.s32.totalorder %s31, 0
    %p70 = por %p68, %p69
    %s71 = ssub.s32 %s32, %s44
    %p72 = scmp.eq.s32.totalorder %s71, 0
    %s74 = sadd.s32 %s73, 1
    %s75 = scalar_select %p72, %s73, %s74
    %p78 = pneg %p72
    %p79 = scmp.eq.s32.totalorder %s25, 3
    %p80 = por %p78, %p79
    %p81 = scmp.ne.s32.totalorder %s73, %s76
    %p82 = scmp.eq.s32.totalorder %s25, 0
    %p83 = por %p81, %p82
    %p84 = scmp.ne.s32.totalorder %s73, %s76
    %p85 = scmp.eq.s32.totalorder %s30, 3
    %p86 = por %p84, %p85
    %p87 = scmp.ne.s32.totalorder %s76, %s77
    %p88 = scmp.eq.s32.totalorder %s30, 0
    %p89 = por %p87, %p88
    %p90 = scmp.ne.s32.totalorder %s76, %s77
    %p91 = scmp.eq.s32.totalorder %s31, 3
    %p92 = por %p90, %p91
    %p94 = scmp.ne.s32.totalorder %s77, %s93
    %p95 = scmp.eq.s32.totalorder %s31, 0
    %p96 = por %p94, %p95
    %s98 = sadd.s32 %s97, 1
    %p101 = scmp.eq.s32.totalorder %s25, 3
    %p102 = scmp.ne.s32.totalorder %s97, %s99
    %p103 = scmp.eq.s32.totalorder %s25, 0
    %p104 = por %p102, %p103
    %p105 = scmp.ne.s32.totalorder %s97, %s99
    %p106 = scmp.eq.s32.totalorder %s30, 3
    %p107 = por %p105, %p106
    %p108 = scmp.ne.s32.totalorder %s99, %s100
    %p109 = scmp.eq.s32.totalorder %s30, 0
    %p110 = por %p108, %p109
    %p111 = scmp.ne.s32.totalorder %s99, %s100
    %p112 = scmp.eq.s32.totalorder %s31, 3
    %p113 = por %p111, %p112
    %p115 = scmp.ne.s32.totalorder %s100, %s114
    %p116 = scmp.eq.s32.totalorder %s31, 0
    %p117 = por %p115, %p116
    %s119 = sadd.s32 %s118, 1
    %p122 = scmp.eq.s32.totalorder %s25, 3
    %p123 = scmp.ne.s32.totalorder %s118, %s120
    %p124 = scmp.eq.s32.totalorder %s25, 0
    %p125 = por %p123, %p124
    %p126 = scmp.ne.s32.totalorder %s118, %s120
    %p127 = scmp.eq.s32.totalorder %s30, 3
    %p128 = por %p126, %p127
    %p129 = scmp.ne.s32.totalorder %s120, %s121
    %p130 = scmp.eq.s32.totalorder %s30, 0
    %p131 = por %p129, %p130
    %p132 = scmp.ne.s32.totalorder %s120, %s121
    %p133 = scmp.eq.s32.totalorder %s31, 3
    %p134 = por %p132, %p133
    %p136 = scmp.ne.s32.totalorder %s121, %s135
    %p137 = scmp.eq.s32.totalorder %s31, 0
    %p138 = por %p136, %p137
    %s140 = sadd.s32 %s139, 1
    %p143 = scmp.eq.s32.totalorder %s25, 3
    %p144 = scmp.ne.s32.totalorder %s139, %s141
    %p145 = scmp.eq.s32.totalorder %s25, 0
    %p146 = por %p144, %p145
    %p147 = scmp.ne.s32.totalorder %s139, %s141
    %p148 = scmp.eq.s32.totalorder %s30, 3
    %p149 = por %p147, %p148
    %p150 = scmp.ne.s32.totalorder %s141, %s142
    %p151 = scmp.eq.s32.totalorder %s30, 0
    %p152 = por %p150, %p151
    %p153 = scmp.ne.s32.totalorder %s141, %s142
    %p154 = scmp.eq.s32.totalorder %s31, 3
    %p155 = por %p153, %p154
    %p157 = scmp.ne.s32.totalorder %s142, %s156
    %p158 = scmp.eq.s32.totalorder %s31, 0
    %p159 = por %p157, %p158
    %s161 = sadd.s32 %s160, 1
    %p164 = scmp.eq.s32.totalorder %s25, 3
    %p165 = scmp.ne.s32.totalorder %s160, %s162
    %p166 = scmp.eq.s32.totalorder %s25, 0
    %p167 = por %p165, %p166
    %p168 = scmp.ne.s32.totalorder %s160, %s162
    %p169 = scmp.eq.s32.totalorder %s30, 3
    %p170 = por %p168, %p169
    %p171 = scmp.ne.s32.totalorder %s162, %s163
    %p172 = scmp.eq.s32.totalorder %s30, 0
    %p173 = por %p171, %p172
    %p174 = scmp.ne.s32.totalorder %s162, %s163
    %p175 = scmp.eq.s32.totalorder %s31, 3
    %p176 = por %p174, %p175
    %p178 = scmp.ne.s32.totalorder %s163, %s177
    %p179 = scmp.eq.s32.totalorder %s31, 0
    %p180 = por %p178, %p179
    %s182 = sadd.s32 %s181, 1
    %p185 = scmp.eq.s32.totalorder %s25, 3
    %p186 = scmp.ne.s32.totalorder %s181, %s183
    %p187 = scmp.eq.s32.totalorder %s25, 0
    %p188 = por %p186, %p187
    %p189 = scmp.ne.s32.totalorder %s181, %s183
    %p190 = scmp.eq.s32.totalorder %s30, 3
    %p191 = por %p189, %p190
    %p192 = scmp.ne.s32.totalorder %s183, %s184
    %p193 = scmp.eq.s32.totalorder %s30, 0
    %p194 = por %p192, %p193
    %p195 = scmp.ne.s32.totalorder %s183, %s184
    %p196 = scmp.eq.s32.totalorder %s31, 3
    %p197 = por %p195, %p196
    %p199 = scmp.ne.s32.totalorder %s184, %s198
    %p200 = scmp.eq.s32.totalorder %s31, 0
    %p201 = por %p199, %p200
    %s202 = ssub.s32 %s33, %s40
    %p203 = scmp.eq.s32.totalorder %s202, 0
    %s205 = sadd.s32 %s204, 1
    %s206 = scalar_select %p203, %s204, %s205
    %p209 = pneg %p203
    %p210 = scmp.eq.s32.totalorder %s25, 3
    %p211 = por %p209, %p210
    %p212 = scmp.ne.s32.totalorder %s204, %s207
    %p213 = scmp.eq.s32.totalorder %s25, 0
    %p214 = por %p212, %p213
    %p215 = scmp.ne.s32.totalorder %s204, %s207
    %p216 = scmp.eq.s32.totalorder %s30, 3
    %p217 = por %p215, %p216
    %p218 = scmp.ne.s32.totalorder %s207, %s208
    %p219 = scmp.eq.s32.totalorder %s30, 0
    %p220 = por %p218, %p219
    %p221 = scmp.ne.s32.totalorder %s207, %s208
    %p222 = scmp.eq.s32.totalorder %s31, 3
    %p223 = por %p221, %p222
    %p225 = scmp.ne.s32.totalorder %s208, %s224
    %p226 = scmp.eq.s32.totalorder %s31, 0
    %p227 = por %p225, %p226
    %s228 = ssub.s32 %s33, %s40
    %p229 = scmp.eq.s32.totalorder %s228, 0
    %s231 = sadd.s32 %s230, 1
    %s232 = scalar_select %p229, %s230, %s231
    %p235 = pneg %p229
    %p236 = scmp.eq.s32.totalorder %s25, 3
    %p237 = por %p235, %p236
    %p238 = scmp.ne.s32.totalorder %s230, %s233
    %p239 = scmp.eq.s32.totalorder %s25, 0
    %p240 = por %p238, %p239
    %p241 = scmp.ne.s32.totalorder %s230, %s233
    %p242 = scmp.eq.s32.totalorder %s30, 3
    %p243 = por %p241, %p242
    %p244 = scmp.ne.s32.totalorder %s233, %s234
    %p245 = scmp.eq.s32.totalorder %s30, 0
    %p246 = por %p244, %p245
    %p247 = scmp.ne.s32.totalorder %s233, %s234
    %p248 = scmp.eq.s32.totalorder %s31, 3
    %p249 = por %p247, %p248
    %p251 = scmp.ne.s32.totalorder %s234, %s250
    %p252 = scmp.eq.s32.totalorder %s31, 0
    %p253 = por %p251, %p252
    %s254 = ssub.s32 %s33, %s40
    %p255 = scmp.eq.s32.totalorder %s254, 0
    %s257 = sadd.s32 %s256, 1
    %s258 = scalar_select %p255, %s256, %s257
    %p261 = pneg %p255
    %p262 = scmp.eq.s32.totalorder %s25, 3
    %p263 = por %p261, %p262
    %p264 = scmp.ne.s32.totalorder %s256, %s259
    %p265 = scmp.eq.s32.totalorder %s25, 0
    %p266 = por %p264, %p265
    %p267 = scmp.ne.s32.totalorder %s256, %s259
    %p268 = scmp.eq.s32.totalorder %s30, 3
    %p269 = por %p267, %p268
    %p270 = scmp.ne.s32.totalorder %s259, %s260
    %p271 = scmp.eq.s32.totalorder %s30, 0
    %p272 = por %p270, %p271
    %p273 = scmp.ne.s32.totalorder %s259, %s260
    %p274 = scmp.eq.s32.totalorder %s31, 3
    %p275 = por %p273, %p274
    %p277 = scmp.ne.s32.totalorder %s260, %s276
    %p278 = scmp.eq.s32.totalorder %s31, 0
    %p279 = por %p277, %p278
    %s280 = ssub.s32 %s33, %s40
    %p281 = scmp.eq.s32.totalorder %s280, 0
    %s283 = sadd.s32 %s282, 1
    %s284 = scalar_select %p281, %s282, %s283
    %p287 = pneg %p281
    %p288 = scmp.eq.s32.totalorder %s25, 3
    %p289 = por %p287, %p288
    %p290 = scmp.ne.s32.totalorder %s282, %s285
    %p291 = scmp.eq.s32.totalorder %s25, 0
    %p292 = por %p290, %p291
    %p293 = scmp.ne.s32.totalorder %s282, %s285
    %p294 = scmp.eq.s32.totalorder %s30, 3
    %p295 = por %p293, %p294
    %p296 = scmp.ne.s32.totalorder %s285, %s286
    %p297 = scmp.eq.s32.totalorder %s30, 0
    %p298 = por %p296, %p297
    %p299 = scmp.ne.s32.totalorder %s285, %s286
    %p300 = scmp.eq.s32.totalorder %s31, 3
    %p301 = por %p299, %p300
    %p303 = scmp.ne.s32.totalorder %s286, %s302
    %p304 = scmp.eq.s32.totalorder %s31, 0
    %p305 = por %p303, %p304
    %s306 = ssub.s32 %s33, %s40
    %p307 = scmp.eq.s32.totalorder %s306, 0
    %s309 = sadd.s32 %s308, 1
    %s310 = scalar_select %p307, %s308, %s309
    %p313 = pneg %p307
    %p314 = scmp.eq.s32.totalorder %s25, 3
    %p315 = por %p313, %p314
    %p316 = scmp.ne.s32.totalorder %s308, %s311
    %p317 = scmp.eq.s32.totalorder %s25, 0
    %p318 = por %p316, %p317
    %p319 = scmp.ne.s32.totalorder %s308, %s311
    %p320 = scmp.eq.s32.totalorder %s30, 3
    %p321 = por %p319, %p320
    %p322 = scmp.ne.s32.totalorder %s311, %s312
    %p323 = scmp.eq.s32.totalorder %s30, 0
    %p324 = por %p322, %p323
    %p325 = scmp.ne.s32.totalorder %s311, %s312
    %p326 = scmp.eq.s32.totalorder %s31, 3
    %p327 = por %p325, %p326
    %p329 = scmp.ne.s32.totalorder %s312, %s328
    %p330 = scmp.eq.s32.totalorder %s31, 0
    %p331 = por %p329, %p330
    %s332 = ssub.s32 %s33, %s40
    %p333 = scmp.eq.s32.totalorder %s332, 0
    %s335 = sadd.s32 %s334, 1
    %s336 = scalar_select %p333, %s334, %s335
    %p339 = pneg %p333
    %p340 = scmp.eq.s32.totalorder %s25, 3
    %p341 = por %p339, %p340
    %p342 = scmp.ne.s32.totalorder %s334, %s337
    %p343 = scmp.eq.s32.totalorder %s25, 0
    %p344 = por %p342, %p343
    %p345 = scmp.ne.s32.totalorder %s334, %s337
    %p346 = scmp.eq.s32.totalorder %s30, 3
    %p347 = por %p345, %p346
    %p348 = scmp.ne.s32.totalorder %s337, %s338
    %p349 = scmp.eq.s32.totalorder %s30, 0
    %p350 = por %p348, %p349
    %p351 = scmp.ne.s32.totalorder %s337, %s338
    %p352 = scmp.eq.s32.totalorder %s31, 3
    %p353 = por %p351, %p352
    %p355 = scmp.ne.s32.totalorder %s338, %s354
    %p356 = scmp.eq.s32.totalorder %s31, 0
    %p357 = por %p355, %p356
    %s358 = ssub.s32 %s33, %s40
    %p359 = scmp.eq.s32.totalorder %s358, 0
    %s361 = sadd.s32 %s360, 1
    %s362 = scalar_select %p359, %s360, %s361
    %p365 = pneg %p359
    %p366 = scmp.eq.s32.totalorder %s25, 3
    %p367 = por %p365, %p366
    %p368 = scmp.ne.s32.totalorder %s360, %s363
    %p369 = scmp.eq.s32.totalorder %s25, 0
    %p370 = por %p368, %p369
    %p371 = scmp.ne.s32.totalorder %s360, %s363
    %p372 = scmp.eq.s32.totalorder %s30, 3
    %p373 = por %p371, %p372
    %p374 = scmp.ne.s32.totalorder %s363, %s364
    %p375 = scmp.eq.s32.totalorder %s30, 0
    %p376 = por %p374, %p375
    %p377 = scmp.ne.s32.totalorder %s363, %s364
    %p378 = scmp.eq.s32.totalorder %s31, 3
    %p379 = por %p377, %p378
    %p381 = scmp.ne.s32.totalorder %s364, %s380
    %p382 = scmp.eq.s32.totalorder %s31, 0
    %p383 = por %p381, %p382
    %s384 = ssub.s32 %s33, %s40
    %p385 = scmp.eq.s32.totalorder %s384, 0
    %s387 = sadd.s32 %s386, 1
    %s388 = scalar_select %p385, %s386, %s387
    %p391 = pneg %p385
    %p392 = scmp.eq.s32.totalorder %s25, 3
    %p393 = por %p391, %p392
    %p394 = scmp.ne.s32.totalorder %s386, %s389
    %p395 = scmp.eq.s32.totalorder %s25, 0
    %p396 = por %p394, %p395
    %p397 = scmp.ne.s32.totalorder %s386, %s389
    %p398 = scmp.eq.s32.totalorder %s30, 3
    %p399 = por %p397, %p398
    %p400 = scmp.ne.s32.totalorder %s389, %s390
    %p401 = scmp.eq.s32.totalorder %s30, 0
    %p402 = por %p400, %p401
    %p403 = scmp.ne.s32.totalorder %s389, %s390
    %p404 = scmp.eq.s32.totalorder %s31, 3
    %p405 = por %p403, %p404
    %p407 = scmp.ne.s32.totalorder %s390, %s406
    %p408 = scmp.eq.s32.totalorder %s31, 0
    %p409 = por %p407, %p408
    %s410 = ssub.s32 %s33, %s40
    %p411 = scmp.eq.s32.totalorder %s410, 0
    %s413 = sadd.s32 %s412, 1
    %s414 = scalar_select %p411, %s412, %s413
    %p417 = pneg %p411
    %p418 = scmp.eq.s32.totalorder %s25, 3
    %p419 = por %p417, %p418
    %p420 = scmp.ne.s32.totalorder %s412, %s415
    %p421 = scmp.eq.s32.totalorder %s25, 0
    %p422 = por %p420, %p421
    %p423 = scmp.ne.s32.totalorder %s412, %s415
    %p424 = scmp.eq.s32.totalorder %s30, 3
    %p425 = por %p423, %p424
    %p426 = scmp.ne.s32.totalorder %s415, %s416
    %p427 = scmp.eq.s32.totalorder %s30, 0
    %p428 = por %p426, %p427
    %p429 = scmp.ne.s32.totalorder %s415, %s416
    %p430 = scmp.eq.s32.totalorder %s31, 3
    %p431 = por %p429, %p430
    %p433 = scmp.ne.s32.totalorder %s416, %s432
    %p434 = scmp.eq.s32.totalorder %s31, 0
    %p435 = por %p433, %p434
    %s436 = ssub.s32 %s33, %s40
    %p437 = scmp.eq.s32.totalorder %s436, 0
    %s439 = sadd.s32 %s438, 1
    %s440 = scalar_select %p437, %s438, %s439
    %p443 = pneg %p437
    %p444 = scmp.eq.s32.totalorder %s25, 3
    %p445 = por %p443, %p444
    %p446 = scmp.ne.s32.totalorder %s438, %s441
    %p447 = scmp.eq.s32.totalorder %s25, 0
    %p448 = por %p446, %p447
    %p449 = scmp.ne.s32.totalorder %s438, %s441
    %p450 = scmp.eq.s32.totalorder %s30, 3
    %p451 = por %p449, %p450
    %p452 = scmp.ne.s32.totalorder %s441, %s442
    %p453 = scmp.eq.s32.totalorder %s30, 0
    %p454 = por %p452, %p453
    %p455 = scmp.ne.s32.totalorder %s441, %s442
    %p456 = scmp.eq.s32.totalorder %s31, 3
    %p457 = por %p455, %p456
    %p459 = scmp.ne.s32.totalorder %s442, %s458
    %p460 = scmp.eq.s32.totalorder %s31, 0
    %p461 = por %p459, %p460
    %s462 = ssub.s32 %s33, %s40
    %p463 = scmp.eq.s32.totalorder %s462, 0
    %s465 = sadd.s32 %s464, 1
    %s466 = scalar_select %p463, %s464, %s465
    %p469 = pneg %p463
    %p470 = scmp.eq.s32.totalorder %s25, 3
    %p471 = por %p469, %p470
    %p472 = scmp.ne.s32.totalorder %s464, %s467
    %p473 = scmp.eq.s32.totalorder %s25, 0
    %p474 = por %p472, %p473
    %p475 = scmp.ne.s32.totalorder %s464, %s467
    %p476 = scmp.eq.s32.totalorder %s30, 3
    %p477 = por %p475, %p476
    %p478 = scmp.ne.s32.totalorder %s467, %s468
    %p479 = scmp.eq.s32.totalorder %s30, 0
    %p480 = por %p478, %p479
    %p481 = scmp.ne.s32.totalorder %s467, %s468
    %p482 = scmp.eq.s32.totalorder %s31, 3
    %p483 = por %p481, %p482
    %p485 = scmp.ne.s32.totalorder %s468, %s484
    %p486 = scmp.eq.s32.totalorder %s31, 0
    %p487 = por %p485, %p486
    %s488 = ssub.s32 %s33, %s40
    %p489 = scmp.eq.s32.totalorder %s488, 0
    %s491 = sadd.s32 %s490, 1
    %s492 = scalar_select %p489, %s490, %s491
    %p495 = pneg %p489
    %p496 = scmp.eq.s32.totalorder %s25, 3
    %p497 = por %p495, %p496
    %p498 = scmp.ne.s32.totalorder %s490, %s493
    %p499 = scmp.eq.s32.totalorder %s25, 0
    %p500 = por %p498, %p499
    %p501 = scmp.ne.s32.totalorder %s490, %s493
    %p502 = scmp.eq.s32.totalorder %s30, 3
    %p503 = por %p501, %p502
    %p504 = scmp.ne.s32.totalorder %s493, %s494
    %p505 = scmp.eq.s32.totalorder %s30, 0
    %p506 = por %p504, %p505
    %p507 = scmp.ne.s32.totalorder %s493, %s494
    %p508 = scmp.eq.s32.totalorder %s31, 3
    %p509 = por %p507, %p508
    %p511 = scmp.ne.s32.totalorder %s494, %s510
    %p512 = scmp.eq.s32.totalorder %s31, 0
    %p513 = por %p511, %p512
    %s514 = ssub.s32 %s32, %s44
    %p515 = scmp.eq.s32.totalorder %s514, 0
    %s517 = sadd.s32 %s516, 1
    %s518 = scalar_select %p515, %s516, %s517
    %p521 = pneg %p515
    %p522 = scmp.eq.s32.totalorder %s25, 3
    %p523 = por %p521, %p522
    %p524 = scmp.ne.s32.totalorder %s516, %s519
    %p525 = scmp.eq.s32.totalorder %s25, 0
    %p526 = por %p524, %p525
    %p527 = scmp.ne.s32.totalorder %s516, %s519
    %p528 = scmp.eq.s32.totalorder %s30, 3
    %p529 = por %p527, %p528
    %p530 = scmp.ne.s32.totalorder %s519, %s520
    %p531 = scmp.eq.s32.totalorder %s30, 0
    %p532 = por %p530, %p531
    %p533 = scmp.ne.s32.totalorder %s519, %s520
    %p534 = scmp.eq.s32.totalorder %s31, 3
    %p535 = por %p533, %p534
    %p537 = scmp.ne.s32.totalorder %s520, %s536
    %p538 = scmp.eq.s32.totalorder %s31, 0
    %p539 = por %p537, %p538
    %p540 = scmp.le.s32.totalorder 1, %s25
    %p541 = scmp.lt.s32.totalorder %s25, 5
    %p542 = pnand %p540, %p541
    %p543 = pneg %p542
    // Predicated region
    $region9: #{audio_captioner_forward.3} parent=5 // pred_check
      _
    $region10: #{audio_captioner_forward.3} parent=5 // pred_check_branch
      %545 = sbr.rel (%p542) target = $region12
    $region11: #{audio_captioner_forward.3} parent=5 // pred_region
      %s546 = ssub.s32 %s25, 1
      // Predicated region
      $region13: #{audio_captioner_forward.3} parent=11 // pred_check
        %p547 = pneg %p110
      $region14: #{audio_captioner_forward.3} parent=11 // pred_check_branch
        %549 = sbr.rel (%p547) target = $region16
      $region15: #{audio_captioner_forward.3} parent=11 // pred_region
        _
      $region16: #{audio_captioner_forward.3} parent=11 // pred_fallthru
        _
      // Predicated region
      $region17: #{audio_captioner_forward.3} parent=11 // pred_check
        %p550 = pneg %p131
      $region18: #{audio_captioner_forward.3} parent=11 // pred_check_branch
        %552 = sbr.rel (%p550) target = $region20
      $region19: #{audio_captioner_forward.3} parent=11 // pred_region
        _
      $region20: #{audio_captioner_forward.3} parent=11 // pred_fallthru
        _
      // Predicated region
      $region21: #{audio_captioner_forward.3} parent=11 // pred_check
        %p553 = pneg %p152
      $region22: #{audio_captioner_forward.3} parent=11 // pred_check_branch
        %555 = sbr.rel (%p553) target = $region24
      $region23: #{audio_captioner_forward.3} parent=11 // pred_region
        _
      $region24: #{audio_captioner_forward.3} parent=11 // pred_fallthru
        _
      // Predicated region
      $region25: #{audio_captioner_forward.3} parent=11 // pred_check
        %p556 = pneg %p173
      $region26: #{audio_captioner_forward.3} parent=11 // pred_check_branch
        %558 = sbr.rel (%p556) target = $region28
      $region27: #{audio_captioner_forward.3} parent=11 // pred_region
        _
      $region28: #{audio_captioner_forward.3} parent=11 // pred_fallthru
        _
      // Predicated region
      $region29: #{audio_captioner_forward.3} parent=11 // pred_check
        %p559 = pneg %p194
      $region30: #{audio_captioner_forward.3} parent=11 // pred_check_branch
        %561 = sbr.rel (%p559) target = $region32
      $region31: #{audio_captioner_forward.3} parent=11 // pred_region
        _
      $region32: #{audio_captioner_forward.3} parent=11 // pred_fallthru
        _
    $region12: #{audio_captioner_forward.3} parent=5 // pred_fallthru
      _
    %p562 = scmp.lt.s32.totalorder %s25, 4
    // Predicated region
    $region33: #{audio_captioner_forward.3} parent=5 // pred_check
      %p563 = pneg %p562
    $region34: #{audio_captioner_forward.3} parent=5 // pred_check_branch
      %565 = sbr.rel (%p563) target = $region36
    $region35: #{audio_captioner_forward.3} parent=5 // pred_region
      // Predicated region
      $region37: #{audio_captioner_forward.3} parent=35 // pred_check
        %p566 = pneg %p57
      $region38: #{audio_captioner_forward.3} parent=35 // pred_check_branch
        %568 = sbr.rel (%p566) target = $region40
      $region39: #{audio_captioner_forward.3} parent=35 // pred_region
        %p569 = scmp.lt.s32.totalorder %s32, 1
        %s570 = scalar_select %p569, %s32, 1
        %s571 = smul.addr %s570, 2
        %s572 = smul.addr %s571, 8
        %s573 = scalar_lea.vmem %s0, %s572
      $region40: #{audio_captioner_forward.3} parent=35 // pred_fallthru
        _
      // Predicated region
      $region41: #{audio_captioner_forward.3} parent=35 // pred_check
        %p574 = pneg %p83
      $region42: #{audio_captioner_forward.3} parent=35 // pred_check_branch
        %576 = sbr.rel (%p574) target = $region44
      $region43: #{audio_captioner_forward.3} parent=35 // pred_region
        %p577 = scmp.lt.s32.totalorder %s32, 1
        %s578 = scalar_select %p577, %s32, 1
        %s579 = scalar_lea.vmem %s1, %s578
      $region44: #{audio_captioner_forward.3} parent=35 // pred_fallthru
        _
      // Predicated region
      $region45: #{audio_captioner_forward.3} parent=35 // pred_check
        %p580 = pneg %p214
      $region46: #{audio_captioner_forward.3} parent=35 // pred_check_branch
        %582 = sbr.rel (%p580) target = $region48
      $region47: #{audio_captioner_forward.3} parent=35 // pred_region
        %p583 = scmp.lt.s32.totalorder %s33, 1
        %s584 = scalar_select %p583, %s33, 1
        %s585 = scalar_lea.vmem %s7, %s584
      $region48: #{audio_captioner_forward.3} parent=35 // pred_fallthru
        _
      // Predicated region
      $region49: #{audio_captioner_forward.3} parent=35 // pred_check
        %p586 = pneg %p240
      $region50: #{audio_captioner_forward.3} parent=35 // pred_check_branch
        %588 = sbr.rel (%p586) target = $region52
      $region51: #{audio_captioner_forward.3} parent=35 // pred_region
        %p589 = scmp.lt.s32.totalorder %s33, 1
        %s590 = scalar_select %p589, %s33, 1
        %s591 = scalar_lea.vmem %s8, %s590
      $region52: #{audio_captioner_forward.3} parent=35 // pred_fallthru
        _
      // Predicated region
      $region53: #{audio_captioner_forward.3} parent=35 // pred_check
        %p592 = pneg %p266
      $region54: #{audio_captioner_forward.3} parent=35 // pred_check_branch
        %594 = sbr.rel (%p592) target = $region56
      $region55: #{audio_captioner_forward.3} parent=35 // pred_region
        %p595 = scmp.lt.s32.totalorder %s33, 1
        %s596 = scalar_select %p595, %s33, 1
        %s597 = smul.addr %s596, 16
        %s598 = smul.addr %s597, 4
        %s599 = scalar_lea.vmem %s9, %s598
      $region56: #{audio_captioner_forward.3} parent=35 // pred_fallthru
        _
      // Predicated region
      $region57: #{audio_captioner_forward.3} parent=35 // pred_check
        %p600 = pneg %p292
      $region58: #{audio_captioner_forward.3} parent=35 // pred_check_branch
        %602 = sbr.rel (%p600) target = $region60
      $region59: #{audio_captioner_forward.3} parent=35 // pred_region
        %p603 = scmp.lt.s32.totalorder %s33, 1
        %s604 = scalar_select %p603, %s33, 1
        %s605 = smul.addr %s604, 2
        %s606 = scalar_lea.vmem %s10, %s605
      $region60: #{audio_captioner_forward.3} parent=35 // pred_fallthru
        _
      // Predicated region
      $region61: #{audio_captioner_forward.3} parent=35 // pred_check
        %p607 = pneg %p318
      $region62: #{audio_captioner_forward.3} parent=35 // pred_check_branch
        %609 = sbr.rel (%p607) target = $region64
      $region63: #{audio_captioner_forward.3} parent=35 // pred_region
        %p610 = scmp.lt.s32.totalorder %s33, 1
        %s611 = scalar_select %p610, %s33, 1
        %s612 = smul.addr %s611, 8
        %s613 = smul.addr %s612, 4
        %s614 = scalar_lea.vmem %s11, %s613
      $region64: #{audio_captioner_forward.3} parent=35 // pred_fallthru
        _
      // Predicated region
      $region65: #{audio_captioner_forward.3} parent=35 // pred_check
        %p615 = pneg %p344
      $region66: #{audio_captioner_forward.3} parent=35 // pred_check_branch
        %617 = sbr.rel (%p615) target = $region68
      $region67: #{audio_captioner_forward.3} parent=35 // pred_region
        %p618 = scmp.lt.s32.totalorder %s33, 1
        %s619 = scalar_select %p618, %s33, 1
        %s620 = scalar_lea.vmem %s12, %s619
      $region68: #{audio_captioner_forward.3} parent=35 // pred_fallthru
        _
      // Predicated region
      $region69: #{audio_captioner_forward.3} parent=35 // pred_check
        %p621 = pneg %p370
      $region70: #{audio_captioner_forward.3} parent=35 // pred_check_branch
        %623 = sbr.rel (%p621) target = $region72
      $region71: #{audio_captioner_forward.3} parent=35 // pred_region
        %p624 = scmp.lt.s32.totalorder %s33, 1
        %s625 = scalar_select %p624, %s33, 1
        %s626 = scalar_lea.vmem %s13, %s625
      $region72: #{audio_captioner_forward.3} parent=35 // pred_fallthru
        _
      // Predicated region
      $region73: #{audio_captioner_forward.3} parent=35 // pred_check
        %p627 = pneg %p396
      $region74: #{audio_captioner_forward.3} parent=35 // pred_check_branch
        %629 = sbr.rel (%p627) target = $region76
      $region75: #{audio_captioner_forward.3} parent=35 // pred_region
        %p630 = scmp.lt.s32.totalorder %s33, 1
        %s631 = scalar_select %p630, %s33, 1
        %s632 = scalar_lea.vmem %s14, %s631
      $region76: #{audio_captioner_forward.3} parent=35 // pred_fallthru
        _
      // Predicated region
      $region77: #{audio_captioner_forward.3} parent=35 // pred_check
        %p633 = pneg %p422
      $region78: #{audio_captioner_forward.3} parent=35 // pred_check_branch
        %635 = sbr.rel (%p633) target = $region80
      $region79: #{audio_captioner_forward.3} parent=35 // pred_region
        %p636 = scmp.lt.s32.totalorder %s33, 1
        %s637 = scalar_select %p636, %s33, 1
        %s638 = smul.addr %s637, 16
        %s639 = smul.addr %s638, 4
        %s640 = scalar_lea.vmem %s15, %s639
      $region80: #{audio_captioner_forward.3} parent=35 // pred_fallthru
        _
      // Predicated region
      $region81: #{audio_captioner_forward.3} parent=35 // pred_check
        %p641 = pneg %p448
      $region82: #{audio_captioner_forward.3} parent=35 // pred_check_branch
        %643 = sbr.rel (%p641) target = $region84
      $region83: #{audio_captioner_forward.3} parent=35 // pred_region
        %p644 = scmp.lt.s32.totalorder %s33, 1
        %s645 = scalar_select %p644, %s33, 1
        %s646 = smul.addr %s645, 2
        %s647 = scalar_lea.vmem %s16, %s646
      $region84: #{audio_captioner_forward.3} parent=35 // pred_fallthru
        _
      // Predicated region
      $region85: #{audio_captioner_forward.3} parent=35 // pred_check
        %p648 = pneg %p474
      $region86: #{audio_captioner_forward.3} parent=35 // pred_check_branch
        %650 = sbr.rel (%p648) target = $region88
      $region87: #{audio_captioner_forward.3} parent=35 // pred_region
        %p651 = scmp.lt.s32.totalorder %s33, 1
        %s652 = scalar_select %p651, %s33, 1
        %s653 = smul.addr %s652, 32
        %s654 = smul.addr %s653, 4
        %s655 = scalar_lea.vmem %s17, %s654
      $region88: #{audio_captioner_forward.3} parent=35 // pred_fallthru
        _
      // Predicated region
      $region89: #{audio_captioner_forward.3} parent=35 // pred_check
        %p656 = pneg %p500
      $region90: #{audio_captioner_forward.3} parent=35 // pred_check_branch
        %658 = sbr.rel (%p656) target = $region92
      $region91: #{audio_captioner_forward.3} parent=35 // pred_region
        %p659 = scmp.lt.s32.totalorder %s33, 1
        %s660 = scalar_select %p659, %s33, 1
        %s661 = scalar_lea.vmem %s18, %s660
      $region92: #{audio_captioner_forward.3} parent=35 // pred_fallthru
        _
    $region36: #{audio_captioner_forward.3} parent=5 // pred_fallthru
      _
    %p662 = scmp.le.s32.totalorder 1, %s25
    %p663 = scmp.lt.s32.totalorder %s25, 5
    %p664 = pnand %p662, %p663
    %p665 = pneg %p664
    // Predicated region
    $region93: #{audio_captioner_forward.3} parent=5 // pred_check
      _
    $region94: #{audio_captioner_forward.3} parent=5 // pred_check_branch
      %667 = sbr.rel (%p664) target = $region96
    $region95: #{audio_captioner_forward.3} parent=5 // pred_region
      %s668 = ssub.s32 %s25, 1
      %p669 = scmp.lt.s32.totalorder %s34, 1
      %s670 = scalar_select %p669, %s34, 1
      %s671 = smul.addr %s670, 2
      %s672 = smul.addr %s671, 8
      %s673 = scalar_lea.vmem %s0, %s672
      %p674 = pneg %p63
      %p675 = pneg %p60
      %p676 = scmp.lt.s32.totalorder %s34, 1
      %s677 = scalar_select %p676, %s34, 1
      %s678 = scalar_lea.vmem %s1, %s677
      %p679 = pneg %p89
      %p680 = pneg %p86
      %p681 = pneg %p110
      %p682 = pneg %p107
      %p683 = pneg %p131
      %p684 = pneg %p128
      %p685 = pneg %p152
      %p686 = pneg %p149
      %p687 = pneg %p173
      %p688 = pneg %p170
      %p689 = pneg %p194
      %p690 = pneg %p191
      %p691 = scmp.lt.s32.totalorder %s35, 1
      %s692 = scalar_select %p691, %s35, 1
      %s693 = scalar_lea.vmem %s7, %s692
      %p694 = pneg %p220
      %p695 = pneg %p217
      %p696 = scmp.lt.s32.totalorder %s35, 1
      %s697 = scalar_select %p696, %s35, 1
      %s698 = scalar_lea.vmem %s8, %s697
      %p699 = pneg %p246
      %p700 = pneg %p243
      %p701 = scmp.lt.s32.totalorder %s35, 1
      %s702 = scalar_select %p701, %s35, 1
      %s703 = smul.addr %s702, 16
      %s704 = smul.addr %s703, 4
      %s705 = scalar_lea.vmem %s9, %s704
      %p706 = pneg %p272
      %p707 = pneg %p269
      %p708 = scmp.lt.s32.totalorder %s35, 1
      %s709 = scalar_select %p708, %s35, 1
      %s710 = smul.addr %s709, 2
      %s711 = scalar_lea.vmem %s10, %s710
      %p712 = pneg %p298
      %p713 = pneg %p295
      %p714 = scmp.lt.s32.totalorder %s35, 1
      %s715 = scalar_select %p714, %s35, 1
      %s716 = smul.addr %s715, 8
      %s717 = smul.addr %s716, 4
      %s718 = scalar_lea.vmem %s11, %s717
      %p719 = pneg %p324
      %p720 = pneg %p321
      %p721 = scmp.lt.s32.totalorder %s35, 1
      %s722 = scalar_select %p721, %s35, 1
      %s723 = scalar_lea.vmem %s12, %s722
      %p724 = pneg %p350
      %p725 = pneg %p347
      %p726 = scmp.lt.s32.totalorder %s35, 1
      %s727 = scalar_select %p726, %s35, 1
      %s728 = scalar_lea.vmem %s13, %s727
      %p729 = pneg %p376
      %p730 = pneg %p373
      %p731 = scmp.lt.s32.totalorder %s35, 1
      %s732 = scalar_select %p731, %s35, 1
      %s733 = scalar_lea.vmem %s14, %s732
      %p734 = pneg %p402
      %p735 = pneg %p399
      %p736 = scmp.lt.s32.totalorder %s35, 1
      %s737 = scalar_select %p736, %s35, 1
      %s738 = smul.addr %s737, 16
      %s739 = smul.addr %s738, 4
      %s740 = scalar_lea.vmem %s15, %s739
      %p741 = pneg %p428
      %p742 = pneg %p425
      %p743 = scmp.lt.s32.totalorder %s35, 1
      %s744 = scalar_select %p743, %s35, 1
      %s745 = smul.addr %s744, 2
      %s746 = scalar_lea.vmem %s16, %s745
      %p747 = pneg %p454
      %p748 = pneg %p451
      %p749 = scmp.lt.s32.totalorder %s35, 1
      %s750 = scalar_select %p749, %s35, 1
      %s751 = smul.addr %s750, 32
      %s752 = smul.addr %s751, 4
      %s753 = scalar_lea.vmem %s17, %s752
      %p754 = pneg %p480
      %p755 = pneg %p477
      %p756 = scmp.lt.s32.totalorder %s35, 1
      %s757 = scalar_select %p756, %s35, 1
      %s758 = scalar_lea.vmem %s18, %s757
      %p759 = pneg %p506
      %p760 = pneg %p503
      %p761 = pneg %p532
      %p762 = pneg %p529
      %p763 = scmp.lt.s32.totalorder %s34, 1
      %s764 = scalar_select %p763, %s34, 1
      %s765 = smul.addr %s764, 2
      %s766 = smul.addr %s765, 8
      %s767 = scalar_lea.vmem %s19, %s766
      %p768 = scmp.lt.s32.totalorder %s34, 1
      %s769 = scalar_select %p768, %s34, 1
      %s770 = smul.addr %s769, 2
      %s771 = smul.addr %s770, 8
      %s772 = scalar_lea.vmem %s0, %s771
      %p773 = scmp.lt.s32.totalorder %s34, 1
      %s774 = scalar_select %p773, %s34, 1
      %s775 = scalar_lea.vmem %s1, %s774
      %p776 = scmp.lt.s32.totalorder %s35, 1
      %s777 = scalar_select %p776, %s35, 1
      %s778 = scalar_lea.vmem %s7, %s777
      %p779 = scmp.lt.s32.totalorder %s35, 1
      %s780 = scalar_select %p779, %s35, 1
      %s781 = scalar_lea.vmem %s8, %s780
      %p782 = scmp.lt.s32.totalorder %s35, 1
      %s783 = scalar_select %p782, %s35, 1
      %s784 = smul.addr %s783, 16
      %s785 = smul.addr %s784, 4
      %s786 = scalar_lea.vmem %s9, %s785
      %p787 = scmp.lt.s32.totalorder %s35, 1
      %s788 = scalar_select %p787, %s35, 1
      %s789 = smul.addr %s788, 2
      %s790 = scalar_lea.vmem %s10, %s789
      %p791 = scmp.lt.s32.totalorder %s35, 1
      %s792 = scalar_select %p791, %s35, 1
      %s793 = smul.addr %s792, 8
      %s794 = smul.addr %s793, 4
      %s795 = scalar_lea.vmem %s11, %s794
      %p796 = scmp.lt.s32.totalorder %s35, 1
      %s797 = scalar_select %p796, %s35, 1
      %s798 = scalar_lea.vmem %s12, %s797
      %p799 = scmp.lt.s32.totalorder %s35, 1
      %s800 = scalar_select %p799, %s35, 1
      %s801 = scalar_lea.vmem %s13, %s800
      %p802 = scmp.lt.s32.totalorder %s35, 1
      %s803 = scalar_select %p802, %s35, 1
      %s804 = scalar_lea.vmem %s14, %s803
      %p805 = scmp.lt.s32.totalorder %s35, 1
      %s806 = scalar_select %p805, %s35, 1
      %s807 = smul.addr %s806, 16
      %s808 = smul.addr %s807, 4
      %s809 = scalar_lea.vmem %s15, %s808
      %p810 = scmp.lt.s32.totalorder %s35, 1
      %s811 = scalar_select %p810, %s35, 1
      %s812 = smul.addr %s811, 2
      %s813 = scalar_lea.vmem %s16, %s812
      %p814 = scmp.lt.s32.totalorder %s35, 1
      %s815 = scalar_select %p814, %s35, 1
      %s816 = smul.addr %s815, 32
      %s817 = smul.addr %s816, 4
      %s818 = scalar_lea.vmem %s17, %s817
      %p819 = scmp.lt.s32.totalorder %s35, 1
      %s820 = scalar_select %p819, %s35, 1
      %s821 = scalar_lea.vmem %s18, %s820
      %p822 = scmp.lt.s32.totalorder %s34, 1
      %s823 = scalar_select %p822, %s34, 1
      %s824 = smul.addr %s823, 2
      %s825 = smul.addr %s824, 8
      %s826 = scalar_lea.vmem %s19, %s825
      %p828 = scmp.eq.s32.totalorder %s35, 0
      // Predicated region
      $region97: #{audio_captioner_forward.3} parent=95 // pred_check
        %p829 = pneg %p828
      $region98: #{audio_captioner_forward.3} parent=95 // pred_check_branch
        %831 = sbr.rel (%p829) target = $region100
      $region99: #{audio_captioner_forward.3} parent=95 // pred_region
        %v832 = vld [vmem:[%s772] sm:$0xff]
        %v833 = vld [vmem:[%s772 + $0x8] sm:$0xff]
        %v834 = vld [vmem:[%s3] sm:$0x1]
        %v835 = vld [vmem:[%s4] sm:$0x1]
        %vm836 = vcmask 392192
        %v837 = vsel %vm836, %v832, 0.0
        %838 = vadd.xlane.f32.xlu0 %v837
        %v839 = vpop.xlane.xlu0 %838
        %v840 = vsel %vm836, %v833, 0.0
        %841 = vadd.xlane.f32.xlu0 %v840
        %v842 = vpop.xlane.xlu0 %841
        %v843 = vrcp.pop 48.0
        %v844 = vmul.f32 %v839, %v843
        %v845 = vmul.f32 %v842, %v843
        %v846 = vsub.f32 %v832, %v844
        %v847 = vsub.f32 %v833, %v845
        %v848 = vmul.f32 %v846, %v846
        %v849 = vmul.f32 %v847, %v847
        %v850 = vsel %vm836, %v848, 0.0
        %851 = vadd.xlane.f32.xlu0 %v850
        %v852 = vpop.xlane.xlu0 %851
        %v853 = vsel %vm836, %v849, 0.0
        %854 = vadd.xlane.f32.xlu0 %v853
        %v855 = vpop.xlane.xlu0 %854
        %v856 = vmul.f32 %v852, %v843
        %v857 = vmul.f32 %v855, %v843
        %v858 = vadd.f32 %v856, 1e-05
        %v859 = vadd.f32 %v857, 1e-05
        %v860 = vrsqrt.pop %v858
        %v861 = vrsqrt.pop %v859
        %v862 = vmul.f32 %v846, %v860
        %v863 = vmul.f32 %v847, %v861
        %v865 = vlaneseq
        %v866 = vshrl.u32 %v865, 7
        %v867 = vsub.s32 0, %v866
        %v868 = vrot.slane %v834, %v867
        %v870 = vmul.f32 %v862, %v868
        %v871 = vmul.f32 %v863, %v868
        %v873 = vlaneseq
        %v874 = vshrl.u32 %v873, 7
        %v875 = vsub.s32 0, %v874
        %v876 = vrot.slane %v835, %v875
        %v878 = vadd.f32 %v870, %v876
        %v879 = vadd.f32 %v871, %v876
        %v880 = vpack.c.bf16 %v879, %v878
        %v881 = vld [vmem:[%s5] sm:$0xf]
        %v882 = vld [vmem:[%s5 + $0x4] sm:$0xf]
        %v883 = vld [vmem:[%s5 + $0x8] sm:$0xf]
        %v884 = vld [vmem:[%s5 + $0xc] sm:$0xf]
        %v885 = vld [vmem:[%s5 + $0x10] sm:$0xf]
        %v886 = vld [vmem:[%s5 + $0x14] sm:$0xf]
        %v887 = vld [vmem:[%s6] sm:$0x1]
        %v889 = vlaneseq
        %v890 = vshrl.u32 %v889, 7
        %v891 = vsub.s32 0, %v890
        %v892 = vrot.slane %v887, %v891
        %v900 = vunpack.c.l.b16 %v881
        %v901 = vunpack.c.l.b16 %v882
        %v902 = vunpack.c.l.b16 %v883
        %v903 = vunpack.c.l.b16 %v884
        %v904 = vunpack.c.l.b16 %v885
        %v905 = vunpack.c.l.b16 %v886
        %v906 = vpack.c.b16 %v901, %v900
        %v907 = vpack.c.b16 %v903, %v902
        %v908 = vpack.c.b16 %v905, %v904
        %v913 = vsel %vm836, %v880, 0
        %915 = vmatprep.subr.bf16.mxu0 0
        %916 = vmatpush1.bf16.msra.mxu0 %v906
        %917 = vmatprep.subr.bf16.mxu0 0
        %918 = vmatpush1.bf16.msra.mxu0 %v907
        %919 = vmatprep.subr.bf16.mxu0 0
        %920 = vmatpush1.bf16.msra.mxu0 %v908
        %921 = vmatprep.subr.bf16.mxu0 0
        %922 = vmatpush1.bf16.msra.mxu0 0
        %923 = vmatprep.subr.bf16.mxu0 0
        %924 = vmatpush1.bf16.msra.mxu0 0
        %925 = vmatprep.subr.bf16.mxu0 0
        %926 = vmatpush1.bf16.msra.mxu0 0
        %927 = vmatprep.subr.bf16.mxu0 0
        %928 = vmatpush1.bf16.msra.mxu0 0
        %929 = vmatprep.subr.bf16.mxu0 0
        %930 = vmatpush1.bf16.msra.mxu0 0
        %931 = vmatprep.subr.bf16.mxu0 0
        %932 = vmatpush1.bf16.msra.mxu0 0
        %933 = vmatprep.subr.bf16.mxu0 0
        %934 = vmatpush1.bf16.msra.mxu0 0
        %935 = vmatprep.subr.bf16.mxu0 0
        %936 = vmatpush1.bf16.msra.mxu0 0
        %937 = vmatprep.subr.bf16.mxu0 0
        %938 = vmatpush1.bf16.msra.mxu0 0
        %939 = vmatprep.subr.bf16.mxu0 0
        %940 = vmatpush1.bf16.msra.mxu0 0
        %941 = vmatprep.subr.bf16.mxu0 0
        %942 = vmatpush1.bf16.msra.mxu0 0
        %943 = vmatprep.subr.bf16.mxu0 0
        %944 = vmatpush1.bf16.msra.mxu0 0
        %945 = vmatprep.subr.bf16.mxu0 0
        %946 = vmatpush1.bf16.msra.mxu0 0
        %947 = vmatprep.mubr.bf16.mxu0 0
        %948 = vmatmul.mubr.bf16.gmra.mrb[0].mxu0 %v913
        %v949 = vpop.f32.mrb[0].mxu0
        %v950 = vadd.f32 %v892, %v949
        %v951 = vpop.f32.mrb[0].mxu0
        %v952 = vpop.f32.mrb[0].mxu0
        %v953 = vadd.f32 %v892, %v952
        %v954 = vpop.f32.mrb[0].mxu0
        %955 = vdwg.mxu0
        %v956 = vld [vmem:[%s2] sm:$0xff]
        %v957 = vld [vmem:[%s2 + $0x8] sm:$0xff]
        %v958 = vadd.f32 %v950, %v956
        %v959 = vadd.f32 %v953, %v957
        %vm960 = vcmask 523264
        %961 = vst.msk [vmem:[#allocation2] sm:$0xff] %vm960, %v958
        %962 = vst.msk [vmem:[#allocation2 + $0x8] sm:$0xff] %vm960, %v959
      $region100: #{audio_captioner_forward.3} parent=95 // pred_fallthru
        _
      %v963 = vld [vmem:[#allocation2] sm:$0xff]
      %v964 = vld [vmem:[#allocation2 + $0x8] sm:$0xff]
      %v965 = vld [vmem:[%s778] sm:$0x1]
      %v966 = vld [vmem:[%s781] sm:$0x1]
      %vm967 = vcmask 523264
      %v968 = vsel %vm967, %v963, 0.0
      %969 = vadd.xlane.f32.xlu0 %v968
      %v970 = vpop.xlane.xlu0 %969
      %v971 = vsel %vm967, %v964, 0.0
      %972 = vadd.xlane.f32.xlu0 %v971
      %v973 = vpop.xlane.xlu0 %972
      %v974 = vrcp.pop 64.0
      %v975 = vmul.f32 %v970, %v974
      %v976 = vmul.f32 %v973, %v974
      %v977 = vsub.f32 %v963, %v975
      %v978 = vsub.f32 %v964, %v976
      %v979 = vmul.f32 %v977, %v977
      %v980 = vmul.f32 %v978, %v978
      %v981 = vsel %vm967, %v979, 0.0
      %982 = vadd.xlane.f32.xlu0 %v981
      %v983 = vpop.xlane.xlu0 %982
      %v984 = vsel %vm967, %v980, 0.0
      %985 = vadd.xlane.f32.xlu0 %v984
      %v986 = vpop.xlane.xlu0 %985
      %v987 = vmul.f32 %v983, %v974
      %v988 = vmul.f32 %v986, %v974
      %v989 = vadd.f32 %v987, 1e-05
      %v990 = vadd.f32 %v988, 1e-05
      %v991 = vrsqrt.pop %v989
      %v992 = vrsqrt.pop %v990
      %v993 = vmul.f32 %v977, %v991
      %v994 = vmul.f32 %v978, %v992
      %v996 = vlaneseq
      %v997 = vshrl.u32 %v996, 7
      %v998 = vsub.s32 0, %v997
      %v999 = vrot.slane %v965, %v998
      %v1001 = vmul.f32 %v993, %v999
      %v1002 = vmul.f32 %v994, %v999
      %v1004 = vlaneseq
      %v1005 = vshrl.u32 %v1004, 7
      %v1006 = vsub.s32 0, %v1005
      %v1007 = vrot.slane %v966, %v1006
      %v1009 = vadd.f32 %v1001, %v1007
      %v1010 = vadd.f32 %v1002, %v1007
      %v1011 = vpack.c.bf16 %v1010, %v1009
      %v1012 = vld [vmem:[%s786] sm:$0xff]
      %v1013 = vld [vmem:[%s786 + $0x8] sm:$0xff]
      %v1014 = vld [vmem:[%s786 + $0x10] sm:$0xff]
      %v1015 = vld [vmem:[%s786 + $0x18] sm:$0xff]
      %v1016 = vld [vmem:[%s786 + $0x20] sm:$0xff]
      %v1017 = vld [vmem:[%s786 + $0x28] sm:$0xff]
      %v1018 = vld [vmem:[%s786 + $0x30] sm:$0xff]
      %v1019 = vld [vmem:[%s786 + $0x38] sm:$0xff]
      %v1020 = vld [vmem:[%s790] sm:$0x3]
      %v1022 = vlaneseq
      %v1023 = vshrl.u32 %v1022, 7
      %v1024 = vsub.s32 0, %v1023
      %v1025 = vrot.slane %v1020, %v1024
      %v1026 = vlaneseq
      %v1027 = vshrl.u32 %v1026, 7
      %v1028 = vsub.s32 1, %v1027
      %v1029 = vrot.slane %v1020, %v1028
      %v1040 = vunpack.c.l.b16 %v1012
      %v1041 = vunpack.c.h.b16 %v1012
      %v1042 = vunpack.c.l.b16 %v1013
      %v1043 = vunpack.c.h.b16 %v1013
      %v1044 = vunpack.c.l.b16 %v1014
      %v1045 = vunpack.c.h.b16 %v1014
      %v1046 = vunpack.c.l.b16 %v1015
      %v1047 = vunpack.c.h.b16 %v1015
      %v1048 = vunpack.c.l.b16 %v1016
      %v1049 = vunpack.c.h.b16 %v1016
      %v1050 = vunpack.c.l.b16 %v1017
      %v1051 = vunpack.c.h.b16 %v1017
      %v1052 = vunpack.c.l.b16 %v1018
      %v1053 = vunpack.c.h.b16 %v1018
      %v1054 = vunpack.c.l.b16 %v1019
      %v1055 = vunpack.c.h.b16 %v1019
      %v1056 = vpack.c.b16 %v1042, %v1040
      %v1057 = vpack.c.b16 %v1043, %v1041
      %v1058 = vpack.c.b16 %v1046, %v1044
      %v1059 = vpack.c.b16 %v1047, %v1045
      %v1060 = vpack.c.b16 %v1050, %v1048
      %v1061 = vpack.c.b16 %v1051, %v1049
      %v1062 = vpack.c.b16 %v1054, %v1052
      %v1063 = vpack.c.b16 %v1055, %v1053
      %v1073 = vsel %vm967, %v1011, 0
      %1075 = vmatprep.subr.bf16.mxu0 %v1057
      %1076 = vmatpush1.bf16.msra.mxu0 %v1056
      %1077 = vmatprep.subr.bf16.mxu0 %v1059
      %1078 = vmatpush1.bf16.msra.mxu0 %v1058
      %1079 = vmatprep.subr.bf16.mxu0 %v1061
      %1080 = vmatpush1.bf16.msra.mxu0 %v1060
      %1081 = vmatprep.subr.bf16.mxu0 %v1063
      %1082 = vmatpush1.bf16.msra.mxu0 %v1062
      %1083 = vmatprep.subr.bf16.mxu0 0
      %1084 = vmatpush1.bf16.msra.mxu0 0
      %1085 = vmatprep.subr.bf16.mxu0 0
      %1086 = vmatpush1.bf16.msra.mxu0 0
      %1087 = vmatprep.subr.bf16.mxu0 0
      %1088 = vmatpush1.bf16.msra.mxu0 0
      %1089 = vmatprep.subr.bf16.mxu0 0
      %1090 = vmatpush1.bf16.msra.mxu0 0
      %1091 = vmatprep.subr.bf16.mxu0 0
      %1092 = vmatpush1.bf16.msra.mxu0 0
      %1093 = vmatprep.subr.bf16.mxu0 0
      %1094 = vmatpush1.bf16.msra.mxu0 0
      %1095 = vmatprep.subr.bf16.mxu0 0
      %1096 = vmatpush1.bf16.msra.mxu0 0
      %1097 = vmatprep.subr.bf16.mxu0 0
      %1098 = vmatpush1.bf16.msra.mxu0 0
      %1099 = vmatprep.subr.bf16.mxu0 0
      %1100 = vmatpush1.bf16.msra.mxu0 0
      %1101 = vmatprep.subr.bf16.mxu0 0
      %1102 = vmatpush1.bf16.msra.mxu0 0
      %1103 = vmatprep.subr.bf16.mxu0 0
      %1104 = vmatpush1.bf16.msra.mxu0 0
      %1105 = vmatprep.subr.bf16.mxu0 0
      %1106 = vmatpush1.bf16.msra.mxu0 0
      %1107 = vmatprep.mubr.bf16.mxu0 0
      %1108 = vmatmul.mubr.bf16.gmra.mrb[0].mxu0 %v1073
      %v1109 = vpop.f32.mrb[0].mxu0
      %v1110 = vadd.f32 %v1025, %v1109
      %v1111 = vpop.f32.mrb[0].mxu0
      %v1112 = vadd.f32 %v1029, %v1111
      %v1113 = vpop.f32.mrb[0].mxu0
      %v1114 = vadd.f32 %v1025, %v1113
      %v1115 = vpop.f32.mrb[0].mxu0
      %v1116 = vadd.f32 %v1029, %v1115
      %1117 = vdwg.mxu0
      %v1118 = vld [vmem:[%s775] sm:$0x1]
      %v1119 = vpack.c.bf16 %v1114, %v1110
      %v1120 = vpack.c.bf16 %v1116, %v1112
      %1122 = vrot.lane.b32.xlu0 %v1119, 64
      %v1123 = vpop.permute.xlu0 %1122
      %vm1124 = vcmask 130048
      %v1126 = vsel %vm1124, %v1119, 0
      %v1129 = vsel %vm1124, %v1123, 0
      %1131 = vmatprep.subr.bf16.mxu0 0
      %1132 = vmatpush1.bf16.xpose.msra.mxu0 %v1129
      %1133 = vmatprep.subr.bf16.mxu0 0
      %1134 = vmatpush1.bf16.xpose.msra.mxu0 0
      %1135 = vmatprep.subr.bf16.mxu0 0
      %1136 = vmatpush1.bf16.xpose.msra.mxu0 0
      %1137 = vmatprep.subr.bf16.mxu0 0
      %1138 = vmatpush1.bf16.xpose.msra.mxu0 0
      %1139 = vmatprep.subr.bf16.mxu0 0
      %1140 = vmatpush1.bf16.xpose.msra.mxu0 0
      %1141 = vmatprep.subr.bf16.mxu0 0
      %1142 = vmatpush1.bf16.xpose.msra.mxu0 0
      %1143 = vmatprep.subr.bf16.mxu0 0
      %1144 = vmatpush1.bf16.xpose.msra.mxu0 0
      %1145 = vmatprep.subr.bf16.mxu0 0
      %1146 = vmatpush1.bf16.xpose.msra.mxu0 0
      %1147 = vmatprep.subr.bf16.mxu0 0
      %1148 = vmatpush1.bf16.xpose.msra.mxu0 0
      %1149 = vmatprep.subr.bf16.mxu0 0
      %1150 = vmatpush1.bf16.xpose.msra.mxu0 0
      %1151 = vmatprep.subr.bf16.mxu0 0
      %1152 = vmatpush1.bf16.xpose.msra.mxu0 0
      %1153 = vmatprep.subr.bf16.mxu0 0
      %1154 = vmatpush1.bf16.xpose.msra.mxu0 0
      %1155 = vmatprep.subr.bf16.mxu0 0
      %1156 = vmatpush1.bf16.xpose.msra.mxu0 0
      %1157 = vmatprep.subr.bf16.mxu0 0
      %1158 = vmatpush1.bf16.xpose.msra.mxu0 0
      %1159 = vmatprep.subr.bf16.mxu0 0
      %1160 = vmatpush1.bf16.xpose.msra.mxu0 0
      %1161 = vmatprep.subr.bf16.mxu0 0
      %1162 = vmatpush1.bf16.xpose.msra.mxu0 0
      %1163 = vmatprep.mubr.bf16.mxu0 0
      %1164 = vmatmul.mubr.bf16.gmra.mrb[0].mxu0 %v1126
      %v1165 = vpop.f32.mrb[0].mxu0
      %v1166 = vadd.f32 0.0, %v1165
      %v1167 = vpop.f32.mrb[0].mxu0
      %v1168 = vpop.f32.mrb[0].mxu0
      %v1169 = vadd.f32 0.0, %v1168
      %v1170 = vpop.f32.mrb[0].mxu0
      %1171 = vdwg.mxu0
      %v1172 = vmul.f32 %v1166, 0.25
      %v1173 = vmul.f32 %v1169, 0.25
      %v1175 = vlaneseq
      %v1176 = vshrl.u32 %v1175, 7
      %v1177 = vsub.s32 0, %v1176
      %v1178 = vrot.slane %v1118, %v1177
      %v1180 = vadd.f32 %v1172, %v1178
      %v1181 = vadd.f32 %v1173, %v1178
      %v1182 = vsel %vm1124, %v1180, -inf
      %1183 = vmax.xlane.f32.xlu0 %v1182
      %v1184 = vpop.xlane.xlu0 %1183
      %v1185 = vsel %vm1124, %v1181, -inf
      %1186 = vmax.xlane.f32.xlu0 %v1185
      %v1187 = vpop.xlane.xlu0 %1186
      %v1188 = vsub.f32 %v1180, %v1184
      %v1189 = vsub.f32 %v1181, %v1187
      %v1190 = vmul.f32 %v1188, 1.442695
      %v1191 = vpow.pop %v1190
      %v1192 = vmul.f32 %v1189, 1.442695
      %v1193 = vpow.pop %v1192
      %v1194 = vsel %vm1124, %v1191, 0.0
      %1195 = vadd.xlane.f32.xlu0 %v1194
      %v1196 = vpop.xlane.xlu0 %1195
      %v1197 = vsel %vm1124, %v1193, 0.0
      %1198 = vadd.xlane.f32.xlu0 %v1197
      %v1199 = vpop.xlane.xlu0 %1198
      %v1200 = vrcp.pop %v1196
      %v1201 = vrcp.pop %v1199
      %v1202 = vmul.f32 %v1191, %v1200
      %v1203 = vmul.f32 %v1193, %v1201
      %v1204 = vpack.c.bf16 %v1203, %v1202
      %v1206 = vsel %vm1124, %v1204, 0
      %1208 = vmatprep.subr.bf16.mxu0 0
      %1209 = vmatpush1.bf16.msra.mxu0 %v1120
      %1210 = vmatprep.subr.bf16.mxu0 0
      %1211 = vmatpush1.bf16.msra.mxu0 0
      %1212 = vmatprep.subr.bf16.mxu0 0
      %1213 = vmatpush1.bf16.msra.mxu0 0
      %1214 = vmatprep.subr.bf16.mxu0 0
      %1215 = vmatpush1.bf16.msra.mxu0 0
      %1216 = vmatprep.subr.bf16.mxu0 0
      %1217 = vmatpush1.bf16.msra.mxu0 0
      %1218 = vmatprep.subr.bf16.mxu0 0
      %1219 = vmatpush1.bf16.msra.mxu0 0
      %1220 = vmatprep.subr.bf16.mxu0 0
      %1221 = vmatpush1.bf16.msra.mxu0 0
      %1222 = vmatprep.subr.bf16.mxu0 0
      %1223 = vmatpush1.bf16.msra.mxu0 0
      %1224 = vmatprep.subr.bf16.mxu0 0
      %1225 = vmatpush1.bf16.msra.mxu0 0
      %1226 = vmatprep.subr.bf16.mxu0 0
      %1227 = vmatpush1.bf16.msra.mxu0 0
      %1228 = vmatprep.subr.bf16.mxu0 0
      %1229 = vmatpush1.bf16.msra.mxu0 0
      %1230 = vmatprep.subr.bf16.mxu0 0
      %1231 = vmatpush1.bf16.msra.mxu0 0
      %1232 = vmatprep.subr.bf16.mxu0 0
      %1233 = vmatpush1.bf16.msra.mxu0 0
      %1234 = vmatprep.subr.bf16.mxu0 0
      %1235 = vmatpush1.bf16.msra.mxu0 0
      %1236 = vmatprep.subr.bf16.mxu0 0
      %1237 = vmatpush1.bf16.msra.mxu0 0
      %1238 = vmatprep.subr.bf16.mxu0 0
      %1239 = vmatpush1.bf16.msra.mxu0 0
      %1240 = vmatprep.mubr.bf16.mxu0 0
      %1241 = vmatmul.mubr.bf16.gmra.mrb[0].mxu0 %v1206
      %v1242 = vpop.f32.mrb[0].mxu0
      %v1243 = vadd.f32 0.0, %v1242
      %v1244 = vpop.f32.mrb[0].mxu0
      %v1245 = vpop.f32.mrb[0].mxu0
      %v1246 = vadd.f32 0.0, %v1245
      %v1247 = vpop.f32.mrb[0].mxu0
      %1248 = vdwg.mxu0
      %1249 = vrot.lane.b32.xlu0 %v1119, 112
      %v1250 = vpop.permute.xlu0 %1249
      %1251 = vrot.lane.b32.xlu0 %v1119, 48
      %v1252 = vpop.permute.xlu0 %1251
      %v1254 = vsel %vm1124, %v1250, 0
      %v1257 = vsel %vm1124, %v1252, 0
      %1259 = vmatprep.subr.bf16.mxu0 0
      %1260 = vmatpush1.bf16.xpose.msra.mxu0 %v1257
      %1261 = vmatprep.subr.bf16.mxu0 0
      %1262 = vmatpush1.bf16.xpose.msra.mxu0 0
      %1263 = vmatprep.subr.bf16.mxu0 0
      %1264 = vmatpush1.bf16.xpose.msra.mxu0 0
      %1265 = vmatprep.subr.bf16.mxu0 0
      %1266 = vmatpush1.bf16.xpose.msra.mxu0 0
      %1267 = vmatprep.subr.bf16.mxu0 0
      %1268 = vmatpush1.bf16.xpose.msra.mxu0 0
      %1269 = vmatprep.subr.bf16.mxu0 0
      %1270 = vmatpush1.bf16.xpose.msra.mxu0 0
      %1271 = vmatprep.subr.bf16.mxu0 0
      %1272 = vmatpush1.bf16.xpose.msra.mxu0 0
      %1273 = vmatprep.subr.bf16.mxu0 0
      %1274 = vmatpush1.bf16.xpose.msra.mxu0 0
      %1275 = vmatprep.subr.bf16.mxu0 0
      %1276 = vmatpush1.bf16.xpose.msra.mxu0 0
      %1277 = vmatprep.subr.bf16.mxu0 0
      %1278 = vmatpush1.bf16.xpose.msra.mxu0 0
      %1279 = vmatprep.subr.bf16.mxu0 0
      %1280 = vmatpush1.bf16.xpose.msra.mxu0 0
      %1281 = vmatprep.subr.bf16.mxu0 0
      %1282 = vmatpush1.bf16.xpose.msra.mxu0 0
      %1283 = vmatprep.subr.bf16.mxu0 0
      %1284 = vmatpush1.bf16.xpose.msra.mxu0 0
      %1285 = vmatprep.subr.bf16.mxu0 0
      %1286 = vmatpush1.bf16.xpose.msra.mxu0 0
      %1287 = vmatprep.subr.bf16.mxu0 0
      %1288 = vmatpush1.bf16.xpose.msra.mxu0 0
      %1289 = vmatprep.subr.bf16.mxu0 0
      %1290 = vmatpush1.bf16.xpose.msra.mxu0 0
      %1291 = vmatprep.mubr.bf16.mxu0 0
      %1292 = vmatmul.mubr.bf16.gmra.mrb[0].mxu0 %v1254
      %v1293 = vpop.f32.mrb[0].mxu0
      %v1294 = vadd.f32 0.0, %v1293
      %v1295 = vpop.f32.mrb[0].mxu0
      %v1296 = vpop.f32.mrb[0].mxu0
      %v1297 = vadd.f32 0.0, %v1296
      %v1298 = vpop.f32.mrb[0].mxu0
      %1299 = vdwg.mxu0
      %v1300 = vmul.f32 %v1294, 0.25
      %v1301 = vmul.f32 %v1297, 0.25
      %v1302 = vadd.f32 %v1300, %v1178
      %v1303 = vadd.f32 %v1301, %v1178
      %v1304 = vsel %vm1124, %v1302, -inf
      %1305 = vmax.xlane.f32.xlu0 %v1304
      %v1306 = vpop.xlane.xlu0 %1305
      %v1307 = vsel %vm1124, %v1303, -inf
      %1308 = vmax.xlane.f32.xlu0 %v1307
      %v1309 = vpop.xlane.xlu0 %1308
      %v1310 = vsub.f32 %v1302, %v1306
      %v1311 = vsub.f32 %v1303, %v1309
      %v1312 = vmul.f32 %v1310, 1.442695
      %v1313 = vpow.pop %v1312
      %v1314 = vmul.f32 %v1311, 1.442695
      %v1315 = vpow.pop %v1314
      %v1316 = vsel %vm1124, %v1313, 0.0
      %1317 = vadd.xlane.f32.xlu0 %v1316
      %v1318 = vpop.xlane.xlu0 %1317
      %v1319 = vsel %vm1124, %v1315, 0.0
      %1320 = vadd.xlane.f32.xlu0 %v1319
      %v1321 = vpop.xlane.xlu0 %1320
      %v1322 = vrcp.pop %v1318
      %v1323 = vrcp.pop %v1321
      %v1324 = vmul.f32 %v1313, %v1322
      %v1325 = vmul.f32 %v1315, %v1323
      %v1326 = vpack.c.bf16 %v1325, %v1324
      %1328 = vrot.lane.b32.xlu0 %v1120, 112
      %v1329 = vpop.permute.xlu0 %1328
      %v1332 = vsel %vm1124, %v1326, 0
      %1334 = vmatprep.subr.bf16.mxu0 0
      %1335 = vmatpush1.bf16.msra.mxu0 %v1329
      %1336 = vmatprep.subr.bf16.mxu0 0
      %1337 = vmatpush1.bf16.msra.mxu0 0
      %1338 = vmatprep.subr.bf16.mxu0 0
      %1339 = vmatpush1.bf16.msra.mxu0 0
      %1340 = vmatprep.subr.bf16.mxu0 0
      %1341 = vmatpush1.bf16.msra.mxu0 0
      %1342 = vmatprep.subr.bf16.mxu0 0
      %1343 = vmatpush1.bf16.msra.mxu0 0
      %1344 = vmatprep.subr.bf16.mxu0 0
      %1345 = vmatpush1.bf16.msra.mxu0 0
      %1346 = vmatprep.subr.bf16.mxu0 0
      %1347 = vmatpush1.bf16.msra.mxu0 0
      %1348 = vmatprep.subr.bf16.mxu0 0
      %1349 = vmatpush1.bf16.msra.mxu0 0
      %1350 = vmatprep.subr.bf16.mxu0 0
      %1351 = vmatpush1.bf16.msra.mxu0 0
      %1352 = vmatprep.subr.bf16.mxu0 0
      %1353 = vmatpush1.bf16.msra.mxu0 0
      %1354 = vmatprep.subr.bf16.mxu0 0
      %1355 = vmatpush1.bf16.msra.mxu0 0
      %1356 = vmatprep.subr.bf16.mxu0 0
      %1357 = vmatpush1.bf16.msra.mxu0 0
      %1358 = vmatprep.subr.bf16.mxu0 0
      %1359 = vmatpush1.bf16.msra.mxu0 0
      %1360 = vmatprep.subr.bf16.mxu0 0
      %1361 = vmatpush1.bf16.msra.mxu0 0
      %1362 = vmatprep.subr.bf16.mxu0 0
      %1363 = vmatpush1.bf16.msra.mxu0 0
      %1364 = vmatprep.subr.bf16.mxu0 0
      %1365 = vmatpush1.bf16.msra.mxu0 0
      %1366 = vmatprep.mubr.bf16.mxu0 0
      %1367 = vmatmul.mubr.bf16.gmra.mrb[0].mxu0 %v1332
      %v1368 = vpop.f32.mrb[0].mxu0
      %v1369 = vadd.f32 0.0, %v1368
      %v1370 = vpop.f32.mrb[0].mxu0
      %v1371 = vpop.f32.mrb[0].mxu0
      %v1372 = vadd.f32 0.0, %v1371
      %v1373 = vpop.f32.mrb[0].mxu0
      %1374 = vdwg.mxu0
      %1375 = vrot.lane.b32.xlu0 %v1119, 96
      %v1376 = vpop.permute.xlu0 %1375
      %1377 = vrot.lane.b32.xlu0 %v1119, 32
      %v1378 = vpop.permute.xlu0 %1377
      %v1380 = vsel %vm1124, %v1376, 0
      %v1383 = vsel %vm1124, %v1378, 0
      %1385 = vmatprep.subr.bf16.mxu0 0
      %1386 = vmatpush1.bf16.xpose.msra.mxu0 %v1383
      %1387 = vmatprep.subr.bf16.mxu0 0
      %1388 = vmatpush1.bf16.xpose.msra.mxu0 0
      %1389 = vmatprep.subr.bf16.mxu0 0
      %1390 = vmatpush1.bf16.xpose.msra.mxu0 0
      %1391 = vmatprep.subr.bf16.mxu0 0
      %1392 = vmatpush1.bf16.xpose.msra.mxu0 0
      %1393 = vmatprep.subr.bf16.mxu0 0
      %1394 = vmatpush1.bf16.xpose.msra.mxu0 0
      %1395 = vmatprep.subr.bf16.mxu0 0
      %1396 = vmatpush1.bf16.xpose.msra.mxu0 0
      %1397 = vmatprep.subr.bf16.mxu0 0
      %1398 = vmatpush1.bf16.xpose.msra.mxu0 0
      %1399 = vmatprep.subr.bf16.mxu0 0
      %1400 = vmatpush1.bf16.xpose.msra.mxu0 0
      %1401 = vmatprep.subr.bf16.mxu0 0
      %1402 = vmatpush1.bf16.xpose.msra.mxu0 0
      %1403 = vmatprep.subr.bf16.mxu0 0
      %1404 = vmatpush1.bf16.xpose.msra.mxu0 0
      %1405 = vmatprep.subr.bf16.mxu0 0
      %1406 = vmatpush1.bf16.xpose.msra.mxu0 0
      %1407 = vmatprep.subr.bf16.mxu0 0
      %1408 = vmatpush1.bf16.xpose.msra.mxu0 0
      %1409 = vmatprep.subr.bf16.mxu0 0
      %1410 = vmatpush1.bf16.xpose.msra.mxu0 0
      %1411 = vmatprep.subr.bf16.mxu0 0
      %1412 = vmatpush1.bf16.xpose.msra.mxu0 0
      %1413 = vmatprep.subr.bf16.mxu0 0
      %1414 = vmatpush1.bf16.xpose.msra.mxu0 0
      %1415 = vmatprep.subr.bf16.mxu0 0
      %1416 = vmatpush1.bf16.xpose.msra.mxu0 0
      %1417 = vmatprep.mubr.bf16.mxu0 0
      %1418 = vmatmul.mubr.bf16.gmra.mrb[0].mxu0 %v1380
      %v1419 = vpop.f32.mrb[0].mxu0
      %v1420 = vadd.f32 0.0, %v1419
      %v1421 = vpop.f32.mrb[0].mxu0
      %v1422 = vpop.f32.mrb[0].mxu0
      %v1423 = vadd.f32 0.0, %v1422
      %v1424 = vpop.f32.mrb[0].mxu0
      %1425 = vdwg.mxu0
      %v1426 = vmul.f32 %v1420, 0.25
      %v1427 = vmul.f32 %v1423, 0.25
      %v1428 = vadd.f32 %v1426, %v1178
      %v1429 = vadd.f32 %v1427, %v1178
      %v1430 = vsel %vm1124, %v1428, -inf
      %1431 = vmax.xlane.f32.xlu0 %v1430
      %v1432 = vpop.xlane.xlu0 %1431
      %v1433 = vsel %vm1124, %v1429, -inf
      %1434 = vmax.xlane.f32.xlu0 %v1433
      %v1435 = vpop.xlane.xlu0 %1434
      %v1436 = vsub.f32 %v1428, %v1432
      %v1437 = vsub.f32 %v1429, %v1435
      %v1438 = vmul.f32 %v1436, 1.442695
      %v1439 = vpow.pop %v1438
      %v1440 = vmul.f32 %v1437, 1.442695
      %v1441 = vpow.pop %v1440
      %v1442 = vsel %vm1124, %v1439, 0.0
      %1443 = vadd.xlane.f32.xlu0 %v1442
      %v1444 = vpop.xlane.xlu0 %1443
      %v1445 = vsel %vm1124, %v1441, 0.0
      %1446 = vadd.xlane.f32.xlu0 %v1445
      %v1447 = vpop.xlane.xlu0 %1446
      %v1448 = vrcp.pop %v1444
      %v1449 = vrcp.pop %v1447
      %v1450 = vmul.f32 %v1439, %v1448
      %v1451 = vmul.f32 %v1441, %v1449
      %v1452 = vpack.c.bf16 %v1451, %v1450
      %1453 = vrot.lane.b32.xlu0 %v1120, 96
      %v1454 = vpop.permute.xlu0 %1453
      %v1457 = vsel %vm1124, %v1452, 0
      %1459 = vmatprep.subr.bf16.mxu0 0
      %1460 = vmatpush1.bf16.msra.mxu0 %v1454
      %1461 = vmatprep.subr.bf16.mxu0 0
      %1462 = vmatpush1.bf16.msra.mxu0 0
      %1463 = vmatprep.subr.bf16.mxu0 0
      %1464 = vmatpush1.bf16.msra.mxu0 0
      %1465 = vmatprep.subr.bf16.mxu0 0
      %1466 = vmatpush1.bf16.msra.mxu0 0
      %1467 = vmatprep.subr.bf16.mxu0 0
      %1468 = vmatpush1.bf16.msra.mxu0 0
      %1469 = vmatprep.subr.bf16.mxu0 0
      %1470 = vmatpush1.bf16.msra.mxu0 0
      %1471 = vmatprep.subr.bf16.mxu0 0
      %1472 = vmatpush1.bf16.msra.mxu0 0
      %1473 = vmatprep.subr.bf16.mxu0 0
      %1474 = vmatpush1.bf16.msra.mxu0 0
      %1475 = vmatprep.subr.bf16.mxu0 0
      %1476 = vmatpush1.bf16.msra.mxu0 0
      %1477 = vmatprep.subr.bf16.mxu0 0
      %1478 = vmatpush1.bf16.msra.mxu0 0
      %1479 = vmatprep.subr.bf16.mxu0 0
      %1480 = vmatpush1.bf16.msra.mxu0 0
      %1481 = vmatprep.subr.bf16.mxu0 0
      %1482 = vmatpush1.bf16.msra.mxu0 0
      %1483 = vmatprep.subr.bf16.mxu0 0
      %1484 = vmatpush1.bf16.msra.mxu0 0
      %1485 = vmatprep.subr.bf16.mxu0 0
      %1486 = vmatpush1.bf16.msra.mxu0 0
      %1487 = vmatprep.subr.bf16.mxu0 0
      %1488 = vmatpush1.bf16.msra.mxu0 0
      %1489 = vmatprep.subr.bf16.mxu0 0
      %1490 = vmatpush1.bf16.msra.mxu0 0
      %1491 = vmatprep.mubr.bf16.mxu0 0
      %1492 = vmatmul.mubr.bf16.gmra.mrb[0].mxu0 %v1457
      %v1493 = vpop.f32.mrb[0].mxu0
      %v1494 = vadd.f32 0.0, %v1493
      %v1495 = vpop.f32.mrb[0].mxu0
      %v1496 = vpop.f32.mrb[0].mxu0
      %v1497 = vadd.f32 0.0, %v1496
      %v1498 = vpop.f32.mrb[0].mxu0
      %1499 = vdwg.mxu0
      %1500 = vrot.lane.b32.xlu0 %v1119, 80
      %v1501 = vpop.permute.xlu0 %1500
      %1502 = vrot.lane.b32.xlu0 %v1119, 16
      %v1503 = vpop.permute.xlu0 %1502
      %v1505 = vsel %vm1124, %v1501, 0
      %v1508 = vsel %vm1124, %v1503, 0
      %1510 = vmatprep.subr.bf16.mxu0 0
      %1511 = vmatpush1.bf16.xpose.msra.mxu0 %v1508
      %1512 = vmatprep.subr.bf16.mxu0 0
      %1513 = vmatpush1.bf16.xpose.msra.mxu0 0
      %1514 = vmatprep.subr.bf16.mxu0 0
      %1515 = vmatpush1.bf16.xpose.msra.mxu0 0
      %1516 = vmatprep.subr.bf16.mxu0 0
      %1517 = vmatpush1.bf16.xpose.msra.mxu0 0
      %1518 = vmatprep.subr.bf16.mxu0 0
      %1519 = vmatpush1.bf16.xpose.msra.mxu0 0
      %1520 = vmatprep.subr.bf16.mxu0 0
      %1521 = vmatpush1.bf16.xpose.msra.mxu0 0
      %1522 = vmatprep.subr.bf16.mxu0 0
      %1523 = vmatpush1.bf16.xpose.msra.mxu0 0
      %1524 = vmatprep.subr.bf16.mxu0 0
      %1525 = vmatpush1.bf16.xpose.msra.mxu0 0
      %1526 = vmatprep.subr.bf16.mxu0 0
      %1527 = vmatpush1.bf16.xpose.msra.mxu0 0
      %1528 = vmatprep.subr.bf16.mxu0 0
      %1529 = vmatpush1.bf16.xpose.msra.mxu0 0
      %1530 = vmatprep.subr.bf16.mxu0 0
      %1531 = vmatpush1.bf16.xpose.msra.mxu0 0
      %1532 = vmatprep.subr.bf16.mxu0 0
      %1533 = vmatpush1.bf16.xpose.msra.mxu0 0
      %1534 = vmatprep.subr.bf16.mxu0 0
      %1535 = vmatpush1.bf16.xpose.msra.mxu0 0
      %1536 = vmatprep.subr.bf16.mxu0 0
      %1537 = vmatpush1.bf16.xpose.msra.mxu0 0
      %1538 = vmatprep.subr.bf16.mxu0 0
      %1539 = vmatpush1.bf16.xpose.msra.mxu0 0
      %1540 = vmatprep.subr.bf16.mxu0 0
      %1541 = vmatpush1.bf16.xpose.msra.mxu0 0
      %1542 = vmatprep.mubr.bf16.mxu0 0
      %1543 = vmatmul.mubr.bf16.gmra.mrb[0].mxu0 %v1505
      %v1544 = vpop.f32.mrb[0].mxu0
      %v1545 = vadd.f32 0.0, %v1544
      %v1546 = vpop.f32.mrb[0].mxu0
      %v1547 = vpop.f32.mrb[0].mxu0
      %v1548 = vadd.f32 0.0, %v1547
      %v1549 = vpop.f32.mrb[0].mxu0
      %1550 = vdwg.mxu0
      %v1551 = vmul.f32 %v1545, 0.25
      %v1552 = vmul.f32 %v1548, 0.25
      %v1553 = vadd.f32 %v1551, %v1178
      %v1554 = vadd.f32 %v1552, %v1178
      %v1555 = vsel %vm1124, %v1553, -inf
      %1556 = vmax.xlane.f32.xlu0 %v1555
      %v1557 = vpop.xlane.xlu0 %1556
      %v1558 = vsel %vm1124, %v1554, -inf
      %1559 = vmax.xlane.f32.xlu0 %v1558
      %v1560 = vpop.xlane.xlu0 %1559
      %v1561 = vsub.f32 %v1553, %v1557
      %v1562 = vsub.f32 %v1554, %v1560
      %v1563 = vmul.f32 %v1561, 1.442695
      %v1564 = vpow.pop %v1563
      %v1565 = vmul.f32 %v1562, 1.442695
      %v1566 = vpow.pop %v1565
      %v1567 = vsel %vm1124, %v1564, 0.0
      %1568 = vadd.xlane.f32.xlu0 %v1567
      %v1569 = vpop.xlane.xlu0 %1568
      %v1570 = vsel %vm1124, %v1566, 0.0
      %1571 = vadd.xlane.f32.xlu0 %v1570
      %v1572 = vpop.xlane.xlu0 %1571
      %v1573 = vrcp.pop %v1569
      %v1574 = vrcp.pop %v1572
      %v1575 = vmul.f32 %v1564, %v1573
      %v1576 = vmul.f32 %v1566, %v1574
      %v1577 = vpack.c.bf16 %v1576, %v1575
      %1578 = vrot.lane.b32.xlu0 %v1120, 80
      %v1579 = vpop.permute.xlu0 %1578
      %v1582 = vsel %vm1124, %v1577, 0
      %1584 = vmatprep.subr.bf16.mxu0 0
      %1585 = vmatpush1.bf16.msra.mxu0 %v1579
      %1586 = vmatprep.subr.bf16.mxu0 0
      %1587 = vmatpush1.bf16.msra.mxu0 0
      %1588 = vmatprep.subr.bf16.mxu0 0
      %1589 = vmatpush1.bf16.msra.mxu0 0
      %1590 = vmatprep.subr.bf16.mxu0 0
      %1591 = vmatpush1.bf16.msra.mxu0 0
      %1592 = vmatprep.subr.bf16.mxu0 0
      %1593 = vmatpush1.bf16.msra.mxu0 0
      %1594 = vmatprep.subr.bf16.mxu0 0
      %1595 = vmatpush1.bf16.msra.mxu0 0
      %1596 = vmatprep.subr.bf16.mxu0 0
      %1597 = vmatpush1.bf16.msra.mxu0 0
      %1598 = vmatprep.subr.bf16.mxu0 0
      %1599 = vmatpush1.bf16.msra.mxu0 0
      %1600 = vmatprep.subr.bf16.mxu0 0
      %1601 = vmatpush1.bf16.msra.mxu0 0
      %1602 = vmatprep.subr.bf16.mxu0 0
      %1603 = vmatpush1.bf16.msra.mxu0 0
      %1604 = vmatprep.subr.bf16.mxu0 0
      %1605 = vmatpush1.bf16.msra.mxu0 0
      %1606 = vmatprep.subr.bf16.mxu0 0
      %1607 = vmatpush1.bf16.msra.mxu0 0
      %1608 = vmatprep.subr.bf16.mxu0 0
      %1609 = vmatpush1.bf16.msra.mxu0 0
      %1610 = vmatprep.subr.bf16.mxu0 0
      %1611 = vmatpush1.bf16.msra.mxu0 0
      %1612 = vmatprep.subr.bf16.mxu0 0
      %1613 = vmatpush1.bf16.msra.mxu0 0
      %1614 = vmatprep.subr.bf16.mxu0 0
      %1615 = vmatpush1.bf16.msra.mxu0 0
      %1616 = vmatprep.mubr.bf16.mxu0 0
      %1617 = vmatmul.mubr.bf16.gmra.mrb[0].mxu0 %v1582
      %v1618 = vpop.f32.mrb[0].mxu0
      %v1619 = vadd.f32 0.0, %v1618
      %v1620 = vpop.f32.mrb[0].mxu0
      %v1621 = vpop.f32.mrb[0].mxu0
      %v1622 = vadd.f32 0.0, %v1621
      %v1623 = vpop.f32.mrb[0].mxu0
      %1624 = vdwg.mxu0
      %1627 = vrot.lane.b32.xlu0 %v1369, 16
      %v1628 = vpop.permute.xlu0 %1627
      %1629 = vrot.lane.b32.xlu0 %v1372, 16
      %v1630 = vpop.permute.xlu0 %1629
      %1635 = vrot.lane.b32.xlu0 %v1494, 32
      %v1636 = vpop.permute.xlu0 %1635
      %1637 = vrot.lane.b32.xlu0 %v1497, 32
      %v1638 = vpop.permute.xlu0 %1637
      %1643 = vrot.lane.b32.xlu0 %v1619, 48
      %v1644 = vpop.permute.xlu0 %1643
      %1645 = vrot.lane.b32.xlu0 %v1622, 48
      %v1646 = vpop.permute.xlu0 %1645
      %v1649 = vsel %vm1124, %v1243, %v1628
      %v1650 = vsel %vm1124, %v1246, %v1630
      %vm1651 = vcmask 261120
      %v1652 = vsel %vm1651, %v1649, %v1636
      %v1653 = vsel %vm1651, %v1650, %v1638
      %vm1654 = vcmask 392192
      %v1655 = vsel %vm1654, %v1652, %v1644
      %v1656 = vsel %vm1654, %v1653, %v1646
      %v1657 = vpack.c.bf16 %v1656, %v1655
      %v1658 = vld [vmem:[%s795] sm:$0xf]
      %v1659 = vld [vmem:[%s795 + $0x4] sm:$0xf]
      %v1660 = vld [vmem:[%s795 + $0x8] sm:$0xf]
      %v1661 = vld [vmem:[%s795 + $0xc] sm:$0xf]
      %v1662 = vld [vmem:[%s795 + $0x10] sm:$0xf]
      %v1663 = vld [vmem:[%s795 + $0x14] sm:$0xf]
      %v1664 = vld [vmem:[%s795 + $0x18] sm:$0xf]
      %v1665 = vld [vmem:[%s795 + $0x1c] sm:$0xf]
      %v1674 = vunpack.c.l.b16 %v1658
      %v1675 = vunpack.c.l.b16 %v1659
      %v1676 = vunpack.c.l.b16 %v1660
      %v1677 = vunpack.c.l.b16 %v1661
      %v1678 = vunpack.c.l.b16 %v1662
      %v1679 = vunpack.c.l.b16 %v1663
      %v1680 = vunpack.c.l.b16 %v1664
      %v1681 = vunpack.c.l.b16 %v1665
      %v1682 = vpack.c.b16 %v1675, %v1674
      %v1683 = vpack.c.b16 %v1677, %v1676
      %v1684 = vpack.c.b16 %v1679, %v1678
      %v1685 = vpack.c.b16 %v1681, %v1680
      %v1691 = vsel %vm967, %v1657, 0
      %1693 = vmatprep.subr.bf16.mxu0 0
      %1694 = vmatpush1.bf16.msra.mxu0 %v1682
      %1695 = vmatprep.subr.bf16.mxu0 0
      %1696 = vmatpush1.bf16.msra.mxu0 %v1683
      %1697 = vmatprep.subr.bf16.mxu0 0
      %1698 = vmatpush1.bf16.msra.mxu0 %v1684
      %1699 = vmatprep.subr.bf16.mxu0 0
      %1700 = vmatpush1.bf16.msra.mxu0 %v1685
      %1701 = vmatprep.subr.bf16.mxu0 0
      %1702 = vmatpush1.bf16.msra.mxu0 0
      %1703 = vmatprep.subr.bf16.mxu0 0
      %1704 = vmatpush1.bf16.msra.mxu0 0
      %1705 = vmatprep.subr.bf16.mxu0 0
      %1706 = vmatpush1.bf16.msra.mxu0 0
      %1707 = vmatprep.subr.bf16.mxu0 0
      %1708 = vmatpush1.bf16.msra.mxu0 0
      %1709 = vmatprep.subr.bf16.mxu0 0
      %1710 = vmatpush1.bf16.msra.mxu0 0
      %1711 = vmatprep.subr.bf16.mxu0 0
      %1712 = vmatpush1.bf16.msra.mxu0 0
      %1713 = vmatprep.subr.bf16.mxu0 0
      %1714 = vmatpush1.bf16.msra.mxu0 0
      %1715 = vmatprep.subr.bf16.mxu0 0
      %1716 = vmatpush1.bf16.msra.mxu0 0
      %1717 = vmatprep.subr.bf16.mxu0 0
      %1718 = vmatpush1.bf16.msra.mxu0 0
      %1719 = vmatprep.subr.bf16.mxu0 0
      %1720 = vmatpush1.bf16.msra.mxu0 0
      %1721 = vmatprep.subr.bf16.mxu0 0
      %1722 = vmatpush1.bf16.msra.mxu0 0
      %1723 = vmatprep.subr.bf16.mxu0 0
      %1724 = vmatpush1.bf16.msra.mxu0 0
      %1725 = vmatprep.mubr.bf16.mxu0 0
      %1726 = vmatmul.mubr.bf16.gmra.mrb[0].mxu0 %v1691
      %v1727 = vpop.f32.mrb[0].mxu0
      %v1728 = vadd.f32 0.0, %v1727
      %v1729 = vpop.f32.mrb[0].mxu0
      %v1730 = vpop.f32.mrb[0].mxu0
      %v1731 = vadd.f32 0.0, %v1730
      %v1732 = vpop.f32.mrb[0].mxu0
      %1733 = vdwg.mxu0
      %v1734 = vadd.f32 %v963, %v1728
      %v1735 = vadd.f32 %v964, %v1731
      %v1736 = vld [vmem:[%s798] sm:$0x1]
      %v1738 = vlaneseq
      %v1739 = vshrl.u32 %v1738, 7
      %v1740 = vsub.s32 0, %v1739
      %v1741 = vrot.slane %v1736, %v1740
      %v1743 = vadd.f32 %v1734, %v1741
      %v1744 = vadd.f32 %v1735, %v1741
      %v1745 = vld [vmem:[%s801] sm:$0x1]
      %v1746 = vld [vmem:[%s804] sm:$0x1]
      %v1747 = vsel %vm967, %v1743, 0.0
      %1748 = vadd.xlane.f32.xlu0 %v1747
      %v1749 = vpop.xlane.xlu0 %1748
      %v1750 = vsel %vm967, %v1744, 0.0
      %1751 = vadd.xlane.f32.xlu0 %v1750
      %v1752 = vpop.xlane.xlu0 %1751
      %v1753 = vmul.f32 %v1749, %v974
      %v1754 = vmul.f32 %v1752, %v974
      %v1755 = vsub.f32 %v1743, %v1753
      %v1756 = vsub.f32 %v1744, %v1754
      %v1757 = vmul.f32 %v1755, %v1755
      %v1758 = vmul.f32 %v1756, %v1756
      %v1759 = vsel %vm967, %v1757, 0.0
      %1760 = vadd.xlane.f32.xlu0 %v1759
      %v1761 = vpop.xlane.xlu0 %1760
      %v1762 = vsel %vm967, %v1758, 0.0
      %1763 = vadd.xlane.f32.xlu0 %v1762
      %v1764 = vpop.xlane.xlu0 %1763
      %v1765 = vmul.f32 %v1761, %v974
      %v1766 = vmul.f32 %v1764, %v974
      %v1767 = vadd.f32 %v1765, 1e-05
      %v1768 = vadd.f32 %v1766, 1e-05
      %v1769 = vrsqrt.pop %v1767
      %v1770 = vrsqrt.pop %v1768
      %v1771 = vmul.f32 %v1755, %v1769
      %v1772 = vmul.f32 %v1756, %v1770
      %v1774 = vlaneseq
      %v1775 = vshrl.u32 %v1774, 7
      %v1776 = vsub.s32 0, %v1775
      %v1777 = vrot.slane %v1745, %v1776
      %v1779 = vmul.f32 %v1771, %v1777
      %v1780 = vmul.f32 %v1772, %v1777
      %v1782 = vlaneseq
      %v1783 = vshrl.u32 %v1782, 7
      %v1784 = vsub.s32 0, %v1783
      %v1785 = vrot.slane %v1746, %v1784
      %v1787 = vadd.f32 %v1779, %v1785
      %v1788 = vadd.f32 %v1780, %v1785
      %v1789 = vpack.c.bf16 %v1788, %v1787
      %v1790 = vld [vmem:[%s809] sm:$0xff]
      %v1791 = vld [vmem:[%s809 + $0x8] sm:$0xff]
      %v1792 = vld [vmem:[%s809 + $0x10] sm:$0xff]
      %v1793 = vld [vmem:[%s809 + $0x18] sm:$0xff]
      %v1794 = vld [vmem:[%s809 + $0x20] sm:$0xff]
      %v1795 = vld [vmem:[%s809 + $0x28] sm:$0xff]
      %v1796 = vld [vmem:[%s809 + $0x30] sm:$0xff]
      %v1797 = vld [vmem:[%s809 + $0x38] sm:$0xff]
      %v1798 = vld [vmem:[%s813] sm:$0x3]
      %v1800 = vlaneseq
      %v1801 = vshrl.u32 %v1800, 7
      %v1802 = vsub.s32 0, %v1801
      %v1803 = vrot.slane %v1798, %v1802
      %v1804 = vlaneseq
      %v1805 = vshrl.u32 %v1804, 7
      %v1806 = vsub.s32 1, %v1805
      %v1807 = vrot.slane %v1798, %v1806
      %v1818 = vunpack.c.l.b16 %v1790
      %v1819 = vunpack.c.h.b16 %v1790
      %v1820 = vunpack.c.l.b16 %v1791
      %v1821 = vunpack.c.h.b16 %v1791
      %v1822 = vunpack.c.l.b16 %v1792
      %v1823 = vunpack.c.h.b16 %v1792
      %v1824 = vunpack.c.l.b16 %v1793
      %v1825 = vunpack.c.h.b16 %v1793
      %v1826 = vunpack.c.l.b16 %v1794
      %v1827 = vunpack.c.h.b16 %v1794
      %v1828 = vunpack.c.l.b16 %v1795
      %v1829 = vunpack.c.h.b16 %v1795
      %v1830 = vunpack.c.l.b16 %v1796
      %v1831 = vunpack.c.h.b16 %v1796
      %v1832 = vunpack.c.l.b16 %v1797
      %v1833 = vunpack.c.h.b16 %v1797
      %v1834 = vpack.c.b16 %v1820, %v1818
      %v1835 = vpack.c.b16 %v1821, %v1819
      %v1836 = vpack.c.b16 %v1824, %v1822
      %v1837 = vpack.c.b16 %v1825, %v1823
      %v1838 = vpack.c.b16 %v1828, %v1826
      %v1839 = vpack.c.b16 %v1829, %v1827
      %v1840 = vpack.c.b16 %v1832, %v1830
      %v1841 = vpack.c.b16 %v1833, %v1831
      %v1851 = vsel %vm967, %v1789, 0
      %1853 = vmatprep.subr.bf16.mxu0 %v1835
      %1854 = vmatpush1.bf16.msra.mxu0 %v1834
      %1855 = vmatprep.subr.bf16.mxu0 %v1837
      %1856 = vmatpush1.bf16.msra.mxu0 %v1836
      %1857 = vmatprep.subr.bf16.mxu0 %v1839
      %1858 = vmatpush1.bf16.msra.mxu0 %v1838
      %1859 = vmatprep.subr.bf16.mxu0 %v1841
      %1860 = vmatpush1.bf16.msra.mxu0 %v1840
      %1861 = vmatprep.subr.bf16.mxu0 0
      %1862 = vmatpush1.bf16.msra.mxu0 0
      %1863 = vmatprep.subr.bf16.mxu0 0
      %1864 = vmatpush1.bf16.msra.mxu0 0
      %1865 = vmatprep.subr.bf16.mxu0 0
      %1866 = vmatpush1.bf16.msra.mxu0 0
      %1867 = vmatprep.subr.bf16.mxu0 0
      %1868 = vmatpush1.bf16.msra.mxu0 0
      %1869 = vmatprep.subr.bf16.mxu0 0
      %1870 = vmatpush1.bf16.msra.mxu0 0
      %1871 = vmatprep.subr.bf16.mxu0 0
      %1872 = vmatpush1.bf16.msra.mxu0 0
      %1873 = vmatprep.subr.bf16.mxu0 0
      %1874 = vmatpush1.bf16.msra.mxu0 0
      %1875 = vmatprep.subr.bf16.mxu0 0
      %1876 = vmatpush1.bf16.msra.mxu0 0
      %1877 = vmatprep.subr.bf16.mxu0 0
      %1878 = vmatpush1.bf16.msra.mxu0 0
      %1879 = vmatprep.subr.bf16.mxu0 0
      %1880 = vmatpush1.bf16.msra.mxu0 0
      %1881 = vmatprep.subr.bf16.mxu0 0
      %1882 = vmatpush1.bf16.msra.mxu0 0
      %1883 = vmatprep.subr.bf16.mxu0 0
      %1884 = vmatpush1.bf16.msra.mxu0 0
      %1885 = vmatprep.mubr.bf16.mxu0 0
      %1886 = vmatmul.mubr.bf16.gmra.mrb[0].mxu0 %v1851
      %v1887 = vpop.f32.mrb[0].mxu0
      %v1888 = vadd.f32 %v1803, %v1887
      %v1889 = vpop.f32.mrb[0].mxu0
      %v1890 = vadd.f32 %v1807, %v1889
      %v1891 = vpop.f32.mrb[0].mxu0
      %v1892 = vadd.f32 %v1803, %v1891
      %v1893 = vpop.f32.mrb[0].mxu0
      %v1894 = vadd.f32 %v1807, %v1893
      %1895 = vdwg.mxu0
      %v1896 = vmax.f32 %v1888, 0.0
      %v1897 = vmax.f32 %v1890, 0.0
      %v1898 = vmax.f32 %v1892, 0.0
      %v1899 = vmax.f32 %v1894, 0.0
      %v1900 = vpack.c.bf16 %v1898, %v1896
      %v1901 = vpack.c.bf16 %v1899, %v1897
      %v1902 = vld [vmem:[%s818] sm:$0xf]
      %v1903 = vld [vmem:[%s818 + $0x4] sm:$0xf]
      %v1904 = vld [vmem:[%s818 + $0x8] sm:$0xf]
      %v1905 = vld [vmem:[%s818 + $0xc] sm:$0xf]
      %v1906 = vld [vmem:[%s818 + $0x10] sm:$0xf]
      %v1907 = vld [vmem:[%s818 + $0x14] sm:$0xf]
      %v1908 = vld [vmem:[%s818 + $0x18] sm:$0xf]
      %v1909 = vld [vmem:[%s818 + $0x1c] sm:$0xf]
      %v1910 = vld [vmem:[%s818 + $0x20] sm:$0xf]
      %v1911 = vld [vmem:[%s818 + $0x24] sm:$0xf]
      %v1912 = vld [vmem:[%s818 + $0x28] sm:$0xf]
      %v1913 = vld [vmem:[%s818 + $0x2c] sm:$0xf]
      %v1914 = vld [vmem:[%s818 + $0x30] sm:$0xf]
      %v1915 = vld [vmem:[%s818 + $0x34] sm:$0xf]
      %v1916 = vld [vmem:[%s818 + $0x38] sm:$0xf]
      %v1917 = vld [vmem:[%s818 + $0x3c] sm:$0xf]
      %v1918 = vld [vmem:[%s818 + $0x40] sm:$0xf]
      %v1919 = vld [vmem:[%s818 + $0x44] sm:$0xf]
      %v1920 = vld [vmem:[%s818 + $0x48] sm:$0xf]
      %v1921 = vld [vmem:[%s818 + $0x4c] sm:$0xf]
      %v1922 = vld [vmem:[%s818 + $0x50] sm:$0xf]
      %v1923 = vld [vmem:[%s818 + $0x54] sm:$0xf]
      %v1924 = vld [vmem:[%s818 + $0x58] sm:$0xf]
      %v1925 = vld [vmem:[%s818 + $0x5c] sm:$0xf]
      %v1926 = vld [vmem:[%s818 + $0x60] sm:$0xf]
      %v1927 = vld [vmem:[%s818 + $0x64] sm:$0xf]
      %v1928 = vld [vmem:[%s818 + $0x68] sm:$0xf]
      %v1929 = vld [vmem:[%s818 + $0x6c] sm:$0xf]
      %v1930 = vld [vmem:[%s818 + $0x70] sm:$0xf]
      %v1931 = vld [vmem:[%s818 + $0x74] sm:$0xf]
      %v1932 = vld [vmem:[%s818 + $0x78] sm:$0xf]
      %v1933 = vld [vmem:[%s818 + $0x7c] sm:$0xf]
      %v1934 = vld [vmem:[%s821] sm:$0x1]
      %v1936 = vlaneseq
      %v1937 = vshrl.u32 %v1936, 7
      %v1938 = vsub.s32 0, %v1937
      %v1939 = vrot.slane %v1934, %v1938
      %v1973 = vunpack.c.l.b16 %v1902
      %v1974 = vunpack.c.l.b16 %v1903
      %v1975 = vunpack.c.l.b16 %v1904
      %v1976 = vunpack.c.l.b16 %v1905
      %v1977 = vunpack.c.l.b16 %v1906
      %v1978 = vunpack.c.l.b16 %v1907
      %v1979 = vunpack.c.l.b16 %v1908
      %v1980 = vunpack.c.l.b16 %v1909
      %v1981 = vunpack.c.l.b16 %v1910
      %v1982 = vunpack.c.l.b16 %v1911
      %v1983 = vunpack.c.l.b16 %v1912
      %v1984 = vunpack.c.l.b16 %v1913
      %v1985 = vunpack.c.l.b16 %v1914
      %v1986 = vunpack.c.l.b16 %v1915
      %v1987 = vunpack.c.l.b16 %v1916
      %v1988 = vunpack.c.l.b16 %v1917
      %v1989 = vunpack.c.l.b16 %v1918
      %v1990 = vunpack.c.l.b16 %v1919
      %v1991 = vunpack.c.l.b16 %v1920
      %v1992 = vunpack.c.l.b16 %v1921
      %v1993 = vunpack.c.l.b16 %v1922
      %v1994 = vunpack.c.l.b16 %v1923
      %v1995 = vunpack.c.l.b16 %v1924
      %v1996 = vunpack.c.l.b16 %v1925
      %v1997 = vunpack.c.l.b16 %v1926
      %v1998 = vunpack.c.l.b16 %v1927
      %v1999 = vunpack.c.l.b16 %v1928
      %v2000 = vunpack.c.l.b16 %v1929
      %v2001 = vunpack.c.l.b16 %v1930
      %v2002 = vunpack.c.l.b16 %v1931
      %v2003 = vunpack.c.l.b16 %v1932
      %v2004 = vunpack.c.l.b16 %v1933
      %v2005 = vpack.c.b16 %v1974, %v1973
      %v2006 = vpack.c.b16 %v1976, %v1975
      %v2007 = vpack.c.b16 %v1978, %v1977
      %v2008 = vpack.c.b16 %v1980, %v1979
      %v2009 = vpack.c.b16 %v1982, %v1981
      %v2010 = vpack.c.b16 %v1984, %v1983
      %v2011 = vpack.c.b16 %v1986, %v1985
      %v2012 = vpack.c.b16 %v1988, %v1987
      %v2013 = vpack.c.b16 %v1990, %v1989
      %v2014 = vpack.c.b16 %v1992, %v1991
      %v2015 = vpack.c.b16 %v1994, %v1993
      %v2016 = vpack.c.b16 %v1996, %v1995
      %v2017 = vpack.c.b16 %v1998, %v1997
      %v2018 = vpack.c.b16 %v2000, %v1999
      %v2019 = vpack.c.b16 %v2002, %v2001
      %v2020 = vpack.c.b16 %v2004, %v2003
      %2037 = vmatprep.subr.bf16.mxu0 0
      %2038 = vmatpush1.bf16.msra.mxu0 %v2005
      %2039 = vmatprep.subr.bf16.mxu0 0
      %2040 = vmatpush1.bf16.msra.mxu0 %v2006
      %2041 = vmatprep.subr.bf16.mxu0 0
      %2042 = vmatpush1.bf16.msra.mxu0 %v2007
      %2043 = vmatprep.subr.bf16.mxu0 0
      %2044 = vmatpush1.bf16.msra.mxu0 %v2008
      %2045 = vmatprep.subr.bf16.mxu0 0
      %2046 = vmatpush1.bf16.msra.mxu0 %v2009
      %2047 = vmatprep.subr.bf16.mxu0 0
      %2048 = vmatpush1.bf16.msra.mxu0 %v2010
      %2049 = vmatprep.subr.bf16.mxu0 0
      %2050 = vmatpush1.bf16.msra.mxu0 %v2011
      %2051 = vmatprep.subr.bf16.mxu0 0
      %2052 = vmatpush1.bf16.msra.mxu0 %v2012
      %2053 = vmatprep.subr.bf16.mxu0 0
      %2054 = vmatpush1.bf16.msra.mxu0 %v2013
      %2055 = vmatprep.subr.bf16.mxu0 0
      %2056 = vmatpush1.bf16.msra.mxu0 %v2014
      %2057 = vmatprep.subr.bf16.mxu0 0
      %2058 = vmatpush1.bf16.msra.mxu0 %v2015
      %2059 = vmatprep.subr.bf16.mxu0 0
      %2060 = vmatpush1.bf16.msra.mxu0 %v2016
      %2061 = vmatprep.subr.bf16.mxu0 0
      %2062 = vmatpush1.bf16.msra.mxu0 %v2017
      %2063 = vmatprep.subr.bf16.mxu0 0
      %2064 = vmatpush1.bf16.msra.mxu0 %v2018
      %2065 = vmatprep.subr.bf16.mxu0 0
      %2066 = vmatpush1.bf16.msra.mxu0 %v2019
      %2067 = vmatprep.subr.bf16.mxu0 0
      %2068 = vmatpush1.bf16.msra.mxu0 %v2020
      %2069 = vmatprep.mubr.bf16.mxu0 %v1901
      %2070 = vmatmul.mubr.bf16.gmra.mrb[0].mxu0 %v1900
      %v2071 = vpop.f32.mrb[0].mxu0
      %v2072 = vadd.f32 %v1939, %v2071
      %v2073 = vpop.f32.mrb[0].mxu0
      %v2074 = vpop.f32.mrb[0].mxu0
      %v2075 = vadd.f32 %v1939, %v2074
      %v2076 = vpop.f32.mrb[0].mxu0
      %2077 = vdwg.mxu0
      %v2078 = vadd.f32 %v1743, %v2072
      %v2079 = vadd.f32 %v1744, %v2075
      %2080 = vst.msk [vmem:[#allocation2] sm:$0xff] %vm967, %v2078
      %2081 = vst.msk [vmem:[#allocation2 + $0x8] sm:$0xff] %vm967, %v2079
      %p2082 = scmp.eq.s32.totalorder %s35, 1
      // Predicated region
      $region101: #{audio_captioner_forward.3} parent=95 // pred_check
        %p2083 = pneg %p2082
      $region102: #{audio_captioner_forward.3} parent=95 // pred_check_branch
        %2085 = sbr.rel (%p2083) target = $region104
      $region103: #{audio_captioner_forward.3} parent=95 // pred_region
        %2086 = vst.msk [vmem:[%s826] sm:$0xff] %vm967, %v2078
        %2087 = vst.msk [vmem:[%s826 + $0x8] sm:$0xff] %vm967, %v2079
      $region104: #{audio_captioner_forward.3} parent=95 // pred_fallthru
        _
      %p2088 = scmp.lt.s32.totalorder %s34, 1
      %s2089 = scalar_select %p2088, %s34, 1
      %s2090 = smul.addr %s2089, 2
      %s2091 = smul.addr %s2090, 8
      %s2092 = scalar_lea.vmem %s19, %s2091
      // Predicated region
      $region105: #{audio_captioner_forward.3} parent=95 // pred_check
        %p2093 = pneg %p529
      $region106: #{audio_captioner_forward.3} parent=95 // pred_check_branch
        %2095 = sbr.rel (%p2093) target = $region108
      $region107: #{audio_captioner_forward.3} parent=95 // pred_region
        _
      $region108: #{audio_captioner_forward.3} parent=95 // pred_fallthru
        _
    $region96: #{audio_captioner_forward.3} parent=5 // pred_fallthru
      _
    %p2096 = scmp.le.s32.totalorder 2, %s25
    // Predicated region
    $region109: #{audio_captioner_forward.3} parent=5 // pred_check
      %p2097 = pneg %p2096
    $region110: #{audio_captioner_forward.3} parent=5 // pred_check_branch
      %2099 = sbr.rel (%p2097) target = $region112
    $region111: #{audio_captioner_forward.3} parent=5 // pred_region
      %s2100 = ssub.s32 %s25, 2
      // Predicated region
      $region113: #{audio_captioner_forward.3} parent=111 // pred_check
        %p2101 = pneg %p535
      $region114: #{audio_captioner_forward.3} parent=111 // pred_check_branch
        %2103 = sbr.rel (%p2101) target = $region116
      $region115: #{audio_captioner_forward.3} parent=111 // pred_region
        %p2104 = scmp.lt.s32.totalorder %s36, 1
        %s2105 = scalar_select %p2104, %s36, 1
        %s2106 = smul.addr %s2105, 2
        %s2107 = smul.addr %s2106, 8
        %s2108 = scalar_lea.vmem %s19, %s2107
      $region116: #{audio_captioner_forward.3} parent=111 // pred_fallthru
        _
    $region112: #{audio_captioner_forward.3} parent=5 // pred_fallthru
      _
  $region6: #{audio_captioner_forward.3} parent=0 // loop_footer
    %s29 = sadd.s32 1, %s25
  $region7: #{audio_captioner_forward.3} parent=0 // loop_footer_branch
    %24 = sbr.rel target = $region3
  $region8: #{audio_captioner_forward.3} parent=0 // loop_exit
    _

// kernel: audio_captioner_forward.4
$region0: #{audio_captioner_forward.4}
  #allocation0 [shape = 'u32[]', space=smem, size = 0x4, offset = 0x4, fixed_abs, tag = 'smem constant byte address 0x4 - core index']
  #allocation1 [shape = 'u32[144,128]{1,0:T(1,128)}', space=vmem, size = 0x12000, scoped, tag = 'internal scratch']
  #allocation2 [shape = 'f32[8,64]{1,0:T(8,128)}', space=vmem, size = 0x1000, scoped, tag = 'scratch operand']
  %s0 = inlined_call_operand.vmem [shape: f32[2,8,64], index: 0, kind: input, shape index: {}]
  %s1 = inlined_call_operand.vmem [shape: f32[2,16,64], index: 1, kind: input, shape index: {}]
  %s2 = inlined_call_operand.vmem [shape: f32[8,8], index: 2, kind: input, shape index: {}]
  %s3 = inlined_call_operand.vmem [shape: f32[2,1,8], index: 3, kind: input, shape index: {}]
  %s4 = inlined_call_operand.vmem [shape: f32[2,1,16], index: 4, kind: input, shape index: {}]
  %s5 = inlined_call_operand.vmem [shape: f32[2,1,64], index: 5, kind: input, shape index: {}]
  %s6 = inlined_call_operand.vmem [shape: f32[2,1,64], index: 6, kind: input, shape index: {}]
  %s7 = inlined_call_operand.vmem [shape: bf16[2,64,192], index: 7, kind: input, shape index: {}]
  %s8 = inlined_call_operand.vmem [shape: f32[2,1,192], index: 8, kind: input, shape index: {}]
  %s9 = inlined_call_operand.vmem [shape: bf16[2,64,64], index: 9, kind: input, shape index: {}]
  %s10 = inlined_call_operand.vmem [shape: f32[2,1,64], index: 10, kind: input, shape index: {}]
  %s11 = inlined_call_operand.vmem [shape: f32[2,1,64], index: 11, kind: input, shape index: {}]
  %s12 = inlined_call_operand.vmem [shape: f32[2,1,64], index: 12, kind: input, shape index: {}]
  %s13 = inlined_call_operand.vmem [shape: bf16[2,64,64], index: 13, kind: input, shape index: {}]
  %s14 = inlined_call_operand.vmem [shape: f32[2,1,64], index: 14, kind: input, shape index: {}]
  %s15 = inlined_call_operand.vmem [shape: bf16[2,64,128], index: 15, kind: input, shape index: {}]
  %s16 = inlined_call_operand.vmem [shape: f32[2,1,128], index: 16, kind: input, shape index: {}]
  %s17 = inlined_call_operand.vmem [shape: bf16[2,64,64], index: 17, kind: input, shape index: {}]
  %s18 = inlined_call_operand.vmem [shape: f32[2,1,64], index: 18, kind: input, shape index: {}]
  %s19 = inlined_call_operand.vmem [shape: f32[2,1,64], index: 19, kind: input, shape index: {}]
  %s20 = inlined_call_operand.vmem [shape: f32[2,1,64], index: 20, kind: input, shape index: {}]
  %s21 = inlined_call_operand.vmem [shape: bf16[2,64,256], index: 21, kind: input, shape index: {}]
  %s22 = inlined_call_operand.vmem [shape: f32[2,1,256], index: 22, kind: input, shape index: {}]
  %s23 = inlined_call_operand.vmem [shape: bf16[2,256,64], index: 23, kind: input, shape index: {}]
  %s24 = inlined_call_operand.vmem [shape: f32[2,1,64], index: 24, kind: input, shape index: {}]
  %s25 = inlined_call_operand.vmem [shape: f32[2,8,64], index: 25, kind: output, shape index: {}]
  %s26 = sld [smem:[#allocation0]]
  $region141: #{audio_captioner_forward.4} parent=0
    _
  %s28 = ssub.s32 1, %s26
  %s29 = scalar_select 0, %s28, %s26
  loop: start=0, step=1, limit=6
  $region2: #{audio_captioner_forward.4} parent=0 // loop_pre_header
    _
  $region3: #{audio_captioner_forward.4} parent=0 // loop_header
    %s31 = sphi 0, %s35
    %p32 = scmp.ge.s32.totalorder %s31, 6
    %s38 = sphi 0, %s50
    %s39 = sphi 0, %s46
    %s40 = sphi 0, %s38
    %s41 = sphi 0, %s39
    %s42 = sphi 0, %s40
    %s43 = sphi 0, %s41
    %s53 = sphi 0, %s55
    %s56 = sphi 0, %s53
    %s57 = sphi 0, %s56
    %s73 = sphi 0, %s57
    %s79 = sphi 0, %s81
    %s82 = sphi 0, %s79
    %s83 = sphi 0, %s82
    %s99 = sphi 0, %s83
    %s103 = sphi 0, %s103
    %s105 = sphi 0, %s103
    %s106 = sphi 0, %s105
    %s120 = sphi 0, %s106
    %s126 = sphi 0, %s128
    %s129 = sphi 0, %s126
    %s130 = sphi 0, %s129
    %s146 = sphi 0, %s130
    %s152 = sphi 0, %s154
    %s155 = sphi 0, %s152
    %s156 = sphi 0, %s155
    %s172 = sphi 0, %s156
    %s178 = sphi 0, %s180
    %s181 = sphi 0, %s178
    %s182 = sphi 0, %s181
    %s198 = sphi 0, %s182
    %s204 = sphi 0, %s206
    %s207 = sphi 0, %s204
    %s208 = sphi 0, %s207
    %s224 = sphi 0, %s208
    %s230 = sphi 0, %s232
    %s233 = sphi 0, %s230
    %s234 = sphi 0, %s233
    %s250 = sphi 0, %s234
    %s256 = sphi 0, %s258
    %s259 = sphi 0, %s256
    %s260 = sphi 0, %s259
    %s276 = sphi 0, %s260
    %s282 = sphi 0, %s284
    %s285 = sphi 0, %s282
    %s286 = sphi 0, %s285
    %s302 = sphi 0, %s286
    %s308 = sphi 0, %s310
    %s311 = sphi 0, %s308
    %s312 = sphi 0, %s311
    %s328 = sphi 0, %s312
    %s334 = sphi 0, %s336
    %s337 = sphi 0, %s334
    %s338 = sphi 0, %s337
    %s354 = sphi 0, %s338
    %s360 = sphi 0, %s362
    %s363 = sphi 0, %s360
    %s364 = sphi 0, %s363
    %s380 = sphi 0, %s364
    %s386 = sphi 0, %s388
    %s389 = sphi 0, %s386
    %s390 = sphi 0, %s389
    %s406 = sphi 0, %s390
    %s412 = sphi 0, %s414
    %s415 = sphi 0, %s412
    %s416 = sphi 0, %s415
    %s432 = sphi 0, %s416
    %s438 = sphi 0, %s440
    %s441 = sphi 0, %s438
    %s442 = sphi 0, %s441
    %s458 = sphi 0, %s442
    %s464 = sphi 0, %s466
    %s467 = sphi 0, %s464
    %s468 = sphi 0, %s467
    %s484 = sphi 0, %s468
    %s490 = sphi 0, %s492
    %s493 = sphi 0, %s490
    %s494 = sphi 0, %s493
    %s510 = sphi 0, %s494
    %s516 = sphi 0, %s518
    %s519 = sphi 0, %s516
    %s520 = sphi 0, %s519
    %s536 = sphi 0, %s520
    %s542 = sphi 0, %s544
    %s545 = sphi 0, %s542
    %s546 = sphi 0, %s545
    %s562 = sphi 0, %s546
    %s568 = sphi 0, %s570
    %s571 = sphi 0, %s568
    %s572 = sphi 0, %s571
    %s588 = sphi 0, %s572
    %s594 = sphi 0, %s596
    %s597 = sphi 0, %s594
    %s598 = sphi 0, %s597
    %s614 = sphi 0, %s598
    %s620 = sphi 0, %s622
    %s623 = sphi 0, %s620
    %s624 = sphi 0, %s623
    %s640 = sphi 0, %s624
    %s646 = sphi 0, %s648
    %s649 = sphi 0, %s646
    %s650 = sphi 0, %s649
    %s666 = sphi 0, %s650
    %s672 = sphi 0, %s674
    %s675 = sphi 0, %s672
    %s676 = sphi 0, %s675
    %s692 = sphi 0, %s676
    %s698 = sphi 0, %s700
    %s701 = sphi 0, %s698
    %s702 = sphi 0, %s701
    %s718 = sphi 0, %s702
  $region4: #{audio_captioner_forward.4} parent=0 // loop_header_branch
    %34 = sbr.rel (%p32) target = $region8
  $region5: #{audio_captioner_forward.4} parent=0 // loop_body
    %s36 = ssub.s32 %s31, 1
    %s37 = ssub.s32 %s31, 2
    %s44 = sadd.s32 1, %s39
    %p45 = scmp.ge.s32.totalorder %s44, 2
    %s46 = scalar_select %p45, 0, %s44
    %s47 = sadd.s32 1, %s38
    %s48 = scalar_select %p45, %s47, %s38
    %p49 = scmp.ge.s32.totalorder %s48, 2
    %s50 = scalar_select %p49, 0, %s48
    %s51 = ssub.s32 %s38, %s50
    %p52 = scmp.eq.s32.totalorder %s51, 0
    %s54 = sadd.s32 %s53, 1
    %s55 = scalar_select %p52, %s53, %s54
    %p58 = pneg %p52
    %p59 = scmp.eq.s32.totalorder %s31, 3
    %p60 = por %p58, %p59
    %p61 = scmp.ne.s32.totalorder %s53, %s56
    %p62 = scmp.eq.s32.totalorder %s31, 0
    %p63 = por %p61, %p62
    %p64 = scmp.ne.s32.totalorder %s53, %s56
    %p65 = scmp.eq.s32.totalorder %s36, 3
    %p66 = por %p64, %p65
    %p67 = scmp.ne.s32.totalorder %s56, %s57
    %p68 = scmp.eq.s32.totalorder %s36, 0
    %p69 = por %p67, %p68
    %p70 = scmp.ne.s32.totalorder %s56, %s57
    %p71 = scmp.eq.s32.totalorder %s37, 3
    %p72 = por %p70, %p71
    %p74 = scmp.ne.s32.totalorder %s57, %s73
    %p75 = scmp.eq.s32.totalorder %s37, 0
    %p76 = por %p74, %p75
    %s77 = ssub.s32 %s38, %s50
    %p78 = scmp.eq.s32.totalorder %s77, 0
    %s80 = sadd.s32 %s79, 1
    %s81 = scalar_select %p78, %s79, %s80
    %p84 = pneg %p78
    %p85 = scmp.eq.s32.totalorder %s31, 3
    %p86 = por %p84, %p85
    %p87 = scmp.ne.s32.totalorder %s79, %s82
    %p88 = scmp.eq.s32.totalorder %s31, 0
    %p89 = por %p87, %p88
    %p90 = scmp.ne.s32.totalorder %s79, %s82
    %p91 = scmp.eq.s32.totalorder %s36, 3
    %p92 = por %p90, %p91
    %p93 = scmp.ne.s32.totalorder %s82, %s83
    %p94 = scmp.eq.s32.totalorder %s36, 0
    %p95 = por %p93, %p94
    %p96 = scmp.ne.s32.totalorder %s82, %s83
    %p97 = scmp.eq.s32.totalorder %s37, 3
    %p98 = por %p96, %p97
    %p100 = scmp.ne.s32.totalorder %s83, %s99
    %p101 = scmp.eq.s32.totalorder %s37, 0
    %p102 = por %p100, %p101
    %s104 = sadd.s32 %s103, 1
    %p107 = scmp.eq.s32.totalorder %s31, 3
    %p108 = scmp.ne.s32.totalorder %s103, %s105
    %p109 = scmp.eq.s32.totalorder %s31, 0
    %p110 = por %p108, %p109
    %p111 = scmp.ne.s32.totalorder %s103, %s105
    %p112 = scmp.eq.s32.totalorder %s36, 3
    %p113 = por %p111, %p112
    %p114 = scmp.ne.s32.totalorder %s105, %s106
    %p115 = scmp.eq.s32.totalorder %s36, 0
    %p116 = por %p114, %p115
    %p117 = scmp.ne.s32.totalorder %s105, %s106
    %p118 = scmp.eq.s32.totalorder %s37, 3
    %p119 = por %p117, %p118
    %p121 = scmp.ne.s32.totalorder %s106, %s120
    %p122 = scmp.eq.s32.totalorder %s37, 0
    %p123 = por %p121, %p122
    %s124 = ssub.s32 %s38, %s50
    %p125 = scmp.eq.s32.totalorder %s124, 0
    %s127 = sadd.s32 %s126, 1
    %s128 = scalar_select %p125, %s126, %s127
    %p131 = pneg %p125
    %p132 = scmp.eq.s32.totalorder %s31, 3
    %p133 = por %p131, %p132
    %p134 = scmp.ne.s32.totalorder %s126, %s129
    %p135 = scmp.eq.s32.totalorder %s31, 0
    %p136 = por %p134, %p135
    %p137 = scmp.ne.s32.totalorder %s126, %s129
    %p138 = scmp.eq.s32.totalorder %s36, 3
    %p139 = por %p137, %p138
    %p140 = scmp.ne.s32.totalorder %s129, %s130
    %p141 = scmp.eq.s32.totalorder %s36, 0
    %p142 = por %p140, %p141
    %p143 = scmp.ne.s32.totalorder %s129, %s130
    %p144 = scmp.eq.s32.totalorder %s37, 3
    %p145 = por %p143, %p144
    %p147 = scmp.ne.s32.totalorder %s130, %s146
    %p148 = scmp.eq.s32.totalorder %s37, 0
    %p149 = por %p147, %p148
    %s150 = ssub.s32 %s38, %s50
    %p151 = scmp.eq.s32.totalorder %s150, 0
    %s153 = sadd.s32 %s152, 1
    %s154 = scalar_select %p151, %s152, %s153
    %p157 = pneg %p151
    %p158 = scmp.eq.s32.totalorder %s31, 3
    %p159 = por %p157, %p158
    %p160 = scmp.ne.s32.totalorder %s152, %s155
    %p161 = scmp.eq.s32.totalorder %s31, 0
    %p162 = por %p160, %p161
    %p163 = scmp.ne.s32.totalorder %s152, %s155
    %p164 = scmp.eq.s32.totalorder %s36, 3
    %p165 = por %p163, %p164
    %p166 = scmp.ne.s32.totalorder %s155, %s156
    %p167 = scmp.eq.s32.totalorder %s36, 0
    %p168 = por %p166, %p167
    %p169 = scmp.ne.s32.totalorder %s155, %s156
    %p170 = scmp.eq.s32.totalorder %s37, 3
    %p171 = por %p169, %p170
    %p173 = scmp.ne.s32.totalorder %s156, %s172
    %p174 = scmp.eq.s32.totalorder %s37, 0
    %p175 = por %p173, %p174
    %s176 = ssub.s32 %s39, %s46
    %p177 = scmp.eq.s32.totalorder %s176, 0
    %s179 = sadd.s32 %s178, 1
    %s180 = scalar_select %p177, %s178, %s179
    %p183 = pneg %p177
    %p184 = scmp.eq.s32.totalorder %s31, 3
    %p185 = por %p183, %p184
    %p186 = scmp.ne.s32.totalorder %s178, %s181
    %p187 = scmp.eq.s32.totalorder %s31, 0
    %p188 = por %p186, %p187
    %p189 = scmp.ne.s32.totalorder %s178, %s181
    %p190 = scmp.eq.s32.totalorder %s36, 3
    %p191 = por %p189, %p190
    %p192 = scmp.ne.s32.totalorder %s181, %s182
    %p193 = scmp.eq.s32.totalorder %s36, 0
    %p194 = por %p192, %p193
    %p195 = scmp.ne.s32.totalorder %s181, %s182
    %p196 = scmp.eq.s32.totalorder %s37, 3
    %p197 = por %p195, %p196
    %p199 = scmp.ne.s32.totalorder %s182, %s198
    %p200 = scmp.eq.s32.totalorder %s37, 0
    %p201 = por %p199, %p200
    %s202 = ssub.s32 %s39, %s46
    %p203 = scmp.eq.s32.totalorder %s202, 0
    %s205 = sadd.s32 %s204, 1
    %s206 = scalar_select %p203, %s204, %s205
    %p209 = pneg %p203
    %p210 = scmp.eq.s32.totalorder %s31, 3
    %p211 = por %p209, %p210
    %p212 = scmp.ne.s32.totalorder %s204, %s207
    %p213 = scmp.eq.s32.totalorder %s31, 0
    %p214 = por %p212, %p213
    %p215 = scmp.ne.s32.totalorder %s204, %s207
    %p216 = scmp.eq.s32.totalorder %s36, 3
    %p217 = por %p215, %p216
    %p218 = scmp.ne.s32.totalorder %s207, %s208
    %p219 = scmp.eq.s32.totalorder %s36, 0
    %p220 = por %p218, %p219
    %p221 = scmp.ne.s32.totalorder %s207, %s208
    %p222 = scmp.eq.s32.totalorder %s37, 3
    %p223 = por %p221, %p222
    %p225 = scmp.ne.s32.totalorder %s208, %s224
    %p226 = scmp.eq.s32.totalorder %s37, 0
    %p227 = por %p225, %p226
    %s228 = ssub.s32 %s39, %s46
    %p229 = scmp.eq.s32.totalorder %s228, 0
    %s231 = sadd.s32 %s230, 1
    %s232 = scalar_select %p229, %s230, %s231
    %p235 = pneg %p229
    %p236 = scmp.eq.s32.totalorder %s31, 3
    %p237 = por %p235, %p236
    %p238 = scmp.ne.s32.totalorder %s230, %s233
    %p239 = scmp.eq.s32.totalorder %s31, 0
    %p240 = por %p238, %p239
    %p241 = scmp.ne.s32.totalorder %s230, %s233
    %p242 = scmp.eq.s32.totalorder %s36, 3
    %p243 = por %p241, %p242
    %p244 = scmp.ne.s32.totalorder %s233, %s234
    %p245 = scmp.eq.s32.totalorder %s36, 0
    %p246 = por %p244, %p245
    %p247 = scmp.ne.s32.totalorder %s233, %s234
    %p248 = scmp.eq.s32.totalorder %s37, 3
    %p249 = por %p247, %p248
    %p251 = scmp.ne.s32.totalorder %s234, %s250
    %p252 = scmp.eq.s32.totalorder %s37, 0
    %p253 = por %p251, %p252
    %s254 = ssub.s32 %s39, %s46
    %p255 = scmp.eq.s32.totalorder %s254, 0
    %s257 = sadd.s32 %s256, 1
    %s258 = scalar_select %p255, %s256, %s257
    %p261 = pneg %p255
    %p262 = scmp.eq.s32.totalorder %s31, 3
    %p263 = por %p261, %p262
    %p264 = scmp.ne.s32.totalorder %s256, %s259
    %p265 = scmp.eq.s32.totalorder %s31, 0
    %p266 = por %p264, %p265
    %p267 = scmp.ne.s32.totalorder %s256, %s259
    %p268 = scmp.eq.s32.totalorder %s36, 3
    %p269 = por %p267, %p268
    %p270 = scmp.ne.s32.totalorder %s259, %s260
    %p271 = scmp.eq.s32.totalorder %s36, 0
    %p272 = por %p270, %p271
    %p273 = scmp.ne.s32.totalorder %s259, %s260
    %p274 = scmp.eq.s32.totalorder %s37, 3
    %p275 = por %p273, %p274
    %p277 = scmp.ne.s32.totalorder %s260, %s276
    %p278 = scmp.eq.s32.totalorder %s37, 0
    %p279 = por %p277, %p278
    %s280 = ssub.s32 %s39, %s46
    %p281 = scmp.eq.s32.totalorder %s280, 0
    %s283 = sadd.s32 %s282, 1
    %s284 = scalar_select %p281, %s282, %s283
    %p287 = pneg %p281
    %p288 = scmp.eq.s32.totalorder %s31, 3
    %p289 = por %p287, %p288
    %p290 = scmp.ne.s32.totalorder %s282, %s285
    %p291 = scmp.eq.s32.totalorder %s31, 0
    %p292 = por %p290, %p291
    %p293 = scmp.ne.s32.totalorder %s282, %s285
    %p294 = scmp.eq.s32.totalorder %s36, 3
    %p295 = por %p293, %p294
    %p296 = scmp.ne.s32.totalorder %s285, %s286
    %p297 = scmp.eq.s32.totalorder %s36, 0
    %p298 = por %p296, %p297
    %p299 = scmp.ne.s32.totalorder %s285, %s286
    %p300 = scmp.eq.s32.totalorder %s37, 3
    %p301 = por %p299, %p300
    %p303 = scmp.ne.s32.totalorder %s286, %s302
    %p304 = scmp.eq.s32.totalorder %s37, 0
    %p305 = por %p303, %p304
    %s306 = ssub.s32 %s39, %s46
    %p307 = scmp.eq.s32.totalorder %s306, 0
    %s309 = sadd.s32 %s308, 1
    %s310 = scalar_select %p307, %s308, %s309
    %p313 = pneg %p307
    %p314 = scmp.eq.s32.totalorder %s31, 3
    %p315 = por %p313, %p314
    %p316 = scmp.ne.s32.totalorder %s308, %s311
    %p317 = scmp.eq.s32.totalorder %s31, 0
    %p318 = por %p316, %p317
    %p319 = scmp.ne.s32.totalorder %s308, %s311
    %p320 = scmp.eq.s32.totalorder %s36, 3
    %p321 = por %p319, %p320
    %p322 = scmp.ne.s32.totalorder %s311, %s312
    %p323 = scmp.eq.s32.totalorder %s36, 0
    %p324 = por %p322, %p323
    %p325 = scmp.ne.s32.totalorder %s311, %s312
    %p326 = scmp.eq.s32.totalorder %s37, 3
    %p327 = por %p325, %p326
    %p329 = scmp.ne.s32.totalorder %s312, %s328
    %p330 = scmp.eq.s32.totalorder %s37, 0
    %p331 = por %p329, %p330
    %s332 = ssub.s32 %s39, %s46
    %p333 = scmp.eq.s32.totalorder %s332, 0
    %s335 = sadd.s32 %s334, 1
    %s336 = scalar_select %p333, %s334, %s335
    %p339 = pneg %p333
    %p340 = scmp.eq.s32.totalorder %s31, 3
    %p341 = por %p339, %p340
    %p342 = scmp.ne.s32.totalorder %s334, %s337
    %p343 = scmp.eq.s32.totalorder %s31, 0
    %p344 = por %p342, %p343
    %p345 = scmp.ne.s32.totalorder %s334, %s337
    %p346 = scmp.eq.s32.totalorder %s36, 3
    %p347 = por %p345, %p346
    %p348 = scmp.ne.s32.totalorder %s337, %s338
    %p349 = scmp.eq.s32.totalorder %s36, 0
    %p350 = por %p348, %p349
    %p351 = scmp.ne.s32.totalorder %s337, %s338
    %p352 = scmp.eq.s32.totalorder %s37, 3
    %p353 = por %p351, %p352
    %p355 = scmp.ne.s32.totalorder %s338, %s354
    %p356 = scmp.eq.s32.totalorder %s37, 0
    %p357 = por %p355, %p356
    %s358 = ssub.s32 %s39, %s46
    %p359 = scmp.eq.s32.totalorder %s358, 0
    %s361 = sadd.s32 %s360, 1
    %s362 = scalar_select %p359, %s360, %s361
    %p365 = pneg %p359
    %p366 = scmp.eq.s32.totalorder %s31, 3
    %p367 = por %p365, %p366
    %p368 = scmp.ne.s32.totalorder %s360, %s363
    %p369 = scmp.eq.s32.totalorder %s31, 0
    %p370 = por %p368, %p369
    %p371 = scmp.ne.s32.totalorder %s360, %s363
    %p372 = scmp.eq.s32.totalorder %s36, 3
    %p373 = por %p371, %p372
    %p374 = scmp.ne.s32.totalorder %s363, %s364
    %p375 = scmp.eq.s32.totalorder %s36, 0
    %p376 = por %p374, %p375
    %p377 = scmp.ne.s32.totalorder %s363, %s364
    %p378 = scmp.eq.s32.totalorder %s37, 3
    %p379 = por %p377, %p378
    %p381 = scmp.ne.s32.totalorder %s364, %s380
    %p382 = scmp.eq.s32.totalorder %s37, 0
    %p383 = por %p381, %p382
    %s384 = ssub.s32 %s39, %s46
    %p385 = scmp.eq.s32.totalorder %s384, 0
    %s387 = sadd.s32 %s386, 1
    %s388 = scalar_select %p385, %s386, %s387
    %p391 = pneg %p385
    %p392 = scmp.eq.s32.totalorder %s31, 3
    %p393 = por %p391, %p392
    %p394 = scmp.ne.s32.totalorder %s386, %s389
    %p395 = scmp.eq.s32.totalorder %s31, 0
    %p396 = por %p394, %p395
    %p397 = scmp.ne.s32.totalorder %s386, %s389
    %p398 = scmp.eq.s32.totalorder %s36, 3
    %p399 = por %p397, %p398
    %p400 = scmp.ne.s32.totalorder %s389, %s390
    %p401 = scmp.eq.s32.totalorder %s36, 0
    %p402 = por %p400, %p401
    %p403 = scmp.ne.s32.totalorder %s389, %s390
    %p404 = scmp.eq.s32.totalorder %s37, 3
    %p405 = por %p403, %p404
    %p407 = scmp.ne.s32.totalorder %s390, %s406
    %p408 = scmp.eq.s32.totalorder %s37, 0
    %p409 = por %p407, %p408
    %s410 = ssub.s32 %s39, %s46
    %p411 = scmp.eq.s32.totalorder %s410, 0
    %s413 = sadd.s32 %s412, 1
    %s414 = scalar_select %p411, %s412, %s413
    %p417 = pneg %p411
    %p418 = scmp.eq.s32.totalorder %s31, 3
    %p419 = por %p417, %p418
    %p420 = scmp.ne.s32.totalorder %s412, %s415
    %p421 = scmp.eq.s32.totalorder %s31, 0
    %p422 = por %p420, %p421
    %p423 = scmp.ne.s32.totalorder %s412, %s415
    %p424 = scmp.eq.s32.totalorder %s36, 3
    %p425 = por %p423, %p424
    %p426 = scmp.ne.s32.totalorder %s415, %s416
    %p427 = scmp.eq.s32.totalorder %s36, 0
    %p428 = por %p426, %p427
    %p429 = scmp.ne.s32.totalorder %s415, %s416
    %p430 = scmp.eq.s32.totalorder %s37, 3
    %p431 = por %p429, %p430
    %p433 = scmp.ne.s32.totalorder %s416, %s432
    %p434 = scmp.eq.s32.totalorder %s37, 0
    %p435 = por %p433, %p434
    %s436 = ssub.s32 %s39, %s46
    %p437 = scmp.eq.s32.totalorder %s436, 0
    %s439 = sadd.s32 %s438, 1
    %s440 = scalar_select %p437, %s438, %s439
    %p443 = pneg %p437
    %p444 = scmp.eq.s32.totalorder %s31, 3
    %p445 = por %p443, %p444
    %p446 = scmp.ne.s32.totalorder %s438, %s441
    %p447 = scmp.eq.s32.totalorder %s31, 0
    %p448 = por %p446, %p447
    %p449 = scmp.ne.s32.totalorder %s438, %s441
    %p450 = scmp.eq.s32.totalorder %s36, 3
    %p451 = por %p449, %p450
    %p452 = scmp.ne.s32.totalorder %s441, %s442
    %p453 = scmp.eq.s32.totalorder %s36, 0
    %p454 = por %p452, %p453
    %p455 = scmp.ne.s32.totalorder %s441, %s442
    %p456 = scmp.eq.s32.totalorder %s37, 3
    %p457 = por %p455, %p456
    %p459 = scmp.ne.s32.totalorder %s442, %s458
    %p460 = scmp.eq.s32.totalorder %s37, 0
    %p461 = por %p459, %p460
    %s462 = ssub.s32 %s39, %s46
    %p463 = scmp.eq.s32.totalorder %s462, 0
    %s465 = sadd.s32 %s464, 1
    %s466 = scalar_select %p463, %s464, %s465
    %p469 = pneg %p463
    %p470 = scmp.eq.s32.totalorder %s31, 3
    %p471 = por %p469, %p470
    %p472 = scmp.ne.s32.totalorder %s464, %s467
    %p473 = scmp.eq.s32.totalorder %s31, 0
    %p474 = por %p472, %p473
    %p475 = scmp.ne.s32.totalorder %s464, %s467
    %p476 = scmp.eq.s32.totalorder %s36, 3
    %p477 = por %p475, %p476
    %p478 = scmp.ne.s32.totalorder %s467, %s468
    %p479 = scmp.eq.s32.totalorder %s36, 0
    %p480 = por %p478, %p479
    %p481 = scmp.ne.s32.totalorder %s467, %s468
    %p482 = scmp.eq.s32.totalorder %s37, 3
    %p483 = por %p481, %p482
    %p485 = scmp.ne.s32.totalorder %s468, %s484
    %p486 = scmp.eq.s32.totalorder %s37, 0
    %p487 = por %p485, %p486
    %s488 = ssub.s32 %s39, %s46
    %p489 = scmp.eq.s32.totalorder %s488, 0
    %s491 = sadd.s32 %s490, 1
    %s492 = scalar_select %p489, %s490, %s491
    %p495 = pneg %p489
    %p496 = scmp.eq.s32.totalorder %s31, 3
    %p497 = por %p495, %p496
    %p498 = scmp.ne.s32.totalorder %s490, %s493
    %p499 = scmp.eq.s32.totalorder %s31, 0
    %p500 = por %p498, %p499
    %p501 = scmp.ne.s32.totalorder %s490, %s493
    %p502 = scmp.eq.s32.totalorder %s36, 3
    %p503 = por %p501, %p502
    %p504 = scmp.ne.s32.totalorder %s493, %s494
    %p505 = scmp.eq.s32.totalorder %s36, 0
    %p506 = por %p504, %p505
    %p507 = scmp.ne.s32.totalorder %s493, %s494
    %p508 = scmp.eq.s32.totalorder %s37, 3
    %p509 = por %p507, %p508
    %p511 = scmp.ne.s32.totalorder %s494, %s510
    %p512 = scmp.eq.s32.totalorder %s37, 0
    %p513 = por %p511, %p512
    %s514 = ssub.s32 %s39, %s46
    %p515 = scmp.eq.s32.totalorder %s514, 0
    %s517 = sadd.s32 %s516, 1
    %s518 = scalar_select %p515, %s516, %s517
    %p521 = pneg %p515
    %p522 = scmp.eq.s32.totalorder %s31, 3
    %p523 = por %p521, %p522
    %p524 = scmp.ne.s32.totalorder %s516, %s519
    %p525 = scmp.eq.s32.totalorder %s31, 0
    %p526 = por %p524, %p525
    %p527 = scmp.ne.s32.totalorder %s516, %s519
    %p528 = scmp.eq.s32.totalorder %s36, 3
    %p529 = por %p527, %p528
    %p530 = scmp.ne.s32.totalorder %s519, %s520
    %p531 = scmp.eq.s32.totalorder %s36, 0
    %p532 = por %p530, %p531
    %p533 = scmp.ne.s32.totalorder %s519, %s520
    %p534 = scmp.eq.s32.totalorder %s37, 3
    %p535 = por %p533, %p534
    %p537 = scmp.ne.s32.totalorder %s520, %s536
    %p538 = scmp.eq.s32.totalorder %s37, 0
    %p539 = por %p537, %p538
    %s540 = ssub.s32 %s39, %s46
    %p541 = scmp.eq.s32.totalorder %s540, 0
    %s543 = sadd.s32 %s542, 1
    %s544 = scalar_select %p541, %s542, %s543
    %p547 = pneg %p541
    %p548 = scmp.eq.s32.totalorder %s31, 3
    %p549 = por %p547, %p548
    %p550 = scmp.ne.s32.totalorder %s542, %s545
    %p551 = scmp.eq.s32.totalorder %s31, 0
    %p552 = por %p550, %p551
    %p553 = scmp.ne.s32.totalorder %s542, %s545
    %p554 = scmp.eq.s32.totalorder %s36, 3
    %p555 = por %p553, %p554
    %p556 = scmp.ne.s32.totalorder %s545, %s546
    %p557 = scmp.eq.s32.totalorder %s36, 0
    %p558 = por %p556, %p557
    %p559 = scmp.ne.s32.totalorder %s545, %s546
    %p560 = scmp.eq.s32.totalorder %s37, 3
    %p561 = por %p559, %p560
    %p563 = scmp.ne.s32.totalorder %s546, %s562
    %p564 = scmp.eq.s32.totalorder %s37, 0
    %p565 = por %p563, %p564
    %s566 = ssub.s32 %s39, %s46
    %p567 = scmp.eq.s32.totalorder %s566, 0
    %s569 = sadd.s32 %s568, 1
    %s570 = scalar_select %p567, %s568, %s569
    %p573 = pneg %p567
    %p574 = scmp.eq.s32.totalorder %s31, 3
    %p575 = por %p573, %p574
    %p576 = scmp.ne.s32.totalorder %s568, %s571
    %p577 = scmp.eq.s32.totalorder %s31, 0
    %p578 = por %p576, %p577
    %p579 = scmp.ne.s32.totalorder %s568, %s571
    %p580 = scmp.eq.s32.totalorder %s36, 3
    %p581 = por %p579, %p580
    %p582 = scmp.ne.s32.totalorder %s571, %s572
    %p583 = scmp.eq.s32.totalorder %s36, 0
    %p584 = por %p582, %p583
    %p585 = scmp.ne.s32.totalorder %s571, %s572
    %p586 = scmp.eq.s32.totalorder %s37, 3
    %p587 = por %p585, %p586
    %p589 = scmp.ne.s32.totalorder %s572, %s588
    %p590 = scmp.eq.s32.totalorder %s37, 0
    %p591 = por %p589, %p590
    %s592 = ssub.s32 %s39, %s46
    %p593 = scmp.eq.s32.totalorder %s592, 0
    %s595 = sadd.s32 %s594, 1
    %s596 = scalar_select %p593, %s594, %s595
    %p599 = pneg %p593
    %p600 = scmp.eq.s32.totalorder %s31, 3
    %p601 = por %p599, %p600
    %p602 = scmp.ne.s32.totalorder %s594, %s597
    %p603 = scmp.eq.s32.totalorder %s31, 0
    %p604 = por %p602, %p603
    %p605 = scmp.ne.s32.totalorder %s594, %s597
    %p606 = scmp.eq.s32.totalorder %s36, 3
    %p607 = por %p605, %p606
    %p608 = scmp.ne.s32.totalorder %s597, %s598
    %p609 = scmp.eq.s32.totalorder %s36, 0
    %p610 = por %p608, %p609
    %p611 = scmp.ne.s32.totalorder %s597, %s598
    %p612 = scmp.eq.s32.totalorder %s37, 3
    %p613 = por %p611, %p612
    %p615 = scmp.ne.s32.totalorder %s598, %s614
    %p616 = scmp.eq.s32.totalorder %s37, 0
    %p617 = por %p615, %p616
    %s618 = ssub.s32 %s39, %s46
    %p619 = scmp.eq.s32.totalorder %s618, 0
    %s621 = sadd.s32 %s620, 1
    %s622 = scalar_select %p619, %s620, %s621
    %p625 = pneg %p619
    %p626 = scmp.eq.s32.totalorder %s31, 3
    %p627 = por %p625, %p626
    %p628 = scmp.ne.s32.totalorder %s620, %s623
    %p629 = scmp.eq.s32.totalorder %s31, 0
    %p630 = por %p628, %p629
    %p631 = scmp.ne.s32.totalorder %s620, %s623
    %p632 = scmp.eq.s32.totalorder %s36, 3
    %p633 = por %p631, %p632
    %p634 = scmp.ne.s32.totalorder %s623, %s624
    %p635 = scmp.eq.s32.totalorder %s36, 0
    %p636 = por %p634, %p635
    %p637 = scmp.ne.s32.totalorder %s623, %s624
    %p638 = scmp.eq.s32.totalorder %s37, 3
    %p639 = por %p637, %p638
    %p641 = scmp.ne.s32.totalorder %s624, %s640
    %p642 = scmp.eq.s32.totalorder %s37, 0
    %p643 = por %p641, %p642
    %s644 = ssub.s32 %s39, %s46
    %p645 = scmp.eq.s32.totalorder %s644, 0
    %s647 = sadd.s32 %s646, 1
    %s648 = scalar_select %p645, %s646, %s647
    %p651 = pneg %p645
    %p652 = scmp.eq.s32.totalorder %s31, 3
    %p653 = por %p651, %p652
    %p654 = scmp.ne.s32.totalorder %s646, %s649
    %p655 = scmp.eq.s32.totalorder %s31, 0
    %p656 = por %p654, %p655
    %p657 = scmp.ne.s32.totalorder %s646, %s649
    %p658 = scmp.eq.s32.totalorder %s36, 3
    %p659 = por %p657, %p658
    %p660 = scmp.ne.s32.totalorder %s649, %s650
    %p661 = scmp.eq.s32.totalorder %s36, 0
    %p662 = por %p660, %p661
    %p663 = scmp.ne.s32.totalorder %s649, %s650
    %p664 = scmp.eq.s32.totalorder %s37, 3
    %p665 = por %p663, %p664
    %p667 = scmp.ne.s32.totalorder %s650, %s666
    %p668 = scmp.eq.s32.totalorder %s37, 0
    %p669 = por %p667, %p668
    %s670 = ssub.s32 %s39, %s46
    %p671 = scmp.eq.s32.totalorder %s670, 0
    %s673 = sadd.s32 %s672, 1
    %s674 = scalar_select %p671, %s672, %s673
    %p677 = pneg %p671
    %p678 = scmp.eq.s32.totalorder %s31, 3
    %p679 = por %p677, %p678
    %p680 = scmp.ne.s32.totalorder %s672, %s675
    %p681 = scmp.eq.s32.totalorder %s31, 0
    %p682 = por %p680, %p681
    %p683 = scmp.ne.s32.totalorder %s672, %s675
    %p684 = scmp.eq.s32.totalorder %s36, 3
    %p685 = por %p683, %p684
    %p686 = scmp.ne.s32.totalorder %s675, %s676
    %p687 = scmp.eq.s32.totalorder %s36, 0
    %p688 = por %p686, %p687
    %p689 = scmp.ne.s32.totalorder %s675, %s676
    %p690 = scmp.eq.s32.totalorder %s37, 3
    %p691 = por %p689, %p690
    %p693 = scmp.ne.s32.totalorder %s676, %s692
    %p694 = scmp.eq.s32.totalorder %s37, 0
    %p695 = por %p693, %p694
    %s696 = ssub.s32 %s38, %s50
    %p697 = scmp.eq.s32.totalorder %s696, 0
    %s699 = sadd.s32 %s698, 1
    %s700 = scalar_select %p697, %s698, %s699
    %p703 = pneg %p697
    %p704 = scmp.eq.s32.totalorder %s31, 3
    %p705 = por %p703, %p704
    %p706 = scmp.ne.s32.totalorder %s698, %s701
    %p707 = scmp.eq.s32.totalorder %s31, 0
    %p708 = por %p706, %p707
    %p709 = scmp.ne.s32.totalorder %s698, %s701
    %p710 = scmp.eq.s32.totalorder %s36, 3
    %p711 = por %p709, %p710
    %p712 = scmp.ne.s32.totalorder %s701, %s702
    %p713 = scmp.eq.s32.totalorder %s36, 0
    %p714 = por %p712, %p713
    %p715 = scmp.ne.s32.totalorder %s701, %s702
    %p716 = scmp.eq.s32.totalorder %s37, 3
    %p717 = por %p715, %p716
    %p719 = scmp.ne.s32.totalorder %s702, %s718
    %p720 = scmp.eq.s32.totalorder %s37, 0
    %p721 = por %p719, %p720
    %p722 = scmp.le.s32.totalorder 1, %s31
    %p723 = scmp.lt.s32.totalorder %s31, 5
    %p724 = pnand %p722, %p723
    %p725 = pneg %p724
    // Predicated region
    $region9: #{audio_captioner_forward.4} parent=5 // pred_check
      _
    $region10: #{audio_captioner_forward.4} parent=5 // pred_check_branch
      %727 = sbr.rel (%p724) target = $region12
    $region11: #{audio_captioner_forward.4} parent=5 // pred_region
      %s728 = ssub.s32 %s31, 1
      // Predicated region
      $region13: #{audio_captioner_forward.4} parent=11 // pred_check
        %p729 = pneg %p116
      $region14: #{audio_captioner_forward.4} parent=11 // pred_check_branch
        %731 = sbr.rel (%p729) target = $region16
      $region15: #{audio_captioner_forward.4} parent=11 // pred_region
        _
      $region16: #{audio_captioner_forward.4} parent=11 // pred_fallthru
        _
    $region12: #{audio_captioner_forward.4} parent=5 // pred_fallthru
      _
    %p732 = scmp.lt.s32.totalorder %s31, 4
    // Predicated region
    $region17: #{audio_captioner_forward.4} parent=5 // pred_check
      %p733 = pneg %p732
    $region18: #{audio_captioner_forward.4} parent=5 // pred_check_branch
      %735 = sbr.rel (%p733) target = $region20
    $region19: #{audio_captioner_forward.4} parent=5 // pred_region
      // Predicated region
      $region21: #{audio_captioner_forward.4} parent=19 // pred_check
        %p736 = pneg %p63
      $region22: #{audio_captioner_forward.4} parent=19 // pred_check_branch
        %738 = sbr.rel (%p736) target = $region24
      $region23: #{audio_captioner_forward.4} parent=19 // pred_region
        %p739 = scmp.lt.s32.totalorder %s38, 1
        %s740 = scalar_select %p739, %s38, 1
        %s741 = smul.addr %s740, 8
        %s742 = scalar_lea.vmem %s0, %s741
      $region24: #{audio_captioner_forward.4} parent=19 // pred_fallthru
        _
      // Predicated region
      $region25: #{audio_captioner_forward.4} parent=19 // pred_check
        %p743 = pneg %p89
      $region26: #{audio_captioner_forward.4} parent=19 // pred_check_branch
        %745 = sbr.rel (%p743) target = $region28
      $region27: #{audio_captioner_forward.4} parent=19 // pred_region
        %p746 = scmp.lt.s32.totalorder %s38, 1
        %s747 = scalar_select %p746, %s38, 1
        %s748 = smul.addr %s747, 2
        %s749 = smul.addr %s748, 8
        %s750 = scalar_lea.vmem %s1, %s749
      $region28: #{audio_captioner_forward.4} parent=19 // pred_fallthru
        _
      // Predicated region
      $region29: #{audio_captioner_forward.4} parent=19 // pred_check
        %p751 = pneg %p136
      $region30: #{audio_captioner_forward.4} parent=19 // pred_check_branch
        %753 = sbr.rel (%p751) target = $region32
      $region31: #{audio_captioner_forward.4} parent=19 // pred_region
        %p754 = scmp.lt.s32.totalorder %s38, 1
        %s755 = scalar_select %p754, %s38, 1
        %s756 = scalar_lea.vmem %s3, %s755
      $region32: #{audio_captioner_forward.4} parent=19 // pred_fallthru
        _
      // Predicated region
      $region33: #{audio_captioner_forward.4} parent=19 // pred_check
        %p757 = pneg %p162
      $region34: #{audio_captioner_forward.4} parent=19 // pred_check_branch
        %759 = sbr.rel (%p757) target = $region36
      $region35: #{audio_captioner_forward.4} parent=19 // pred_region
        %p760 = scmp.lt.s32.totalorder %s38, 1
        %s761 = scalar_select %p760, %s38, 1
        %s762 = scalar_lea.vmem %s4, %s761
      $region36: #{audio_captioner_forward.4} parent=19 // pred_fallthru
        _
      // Predicated region
      $region37: #{audio_captioner_forward.4} parent=19 // pred_check
        %p763 = pneg %p188
      $region38: #{audio_captioner_forward.4} parent=19 // pred_check_branch
        %765 = sbr.rel (%p763) target = $region40
      $region39: #{audio_captioner_forward.4} parent=19 // pred_region
        %p766 = scmp.lt.s32.totalorder %s39, 1
        %s767 = scalar_select %p766, %s39, 1
        %s768 = scalar_lea.vmem %s5, %s767
      $region40: #{audio_captioner_forward.4} parent=19 // pred_fallthru
        _
      // Predicated region
      $region41: #{audio_captioner_forward.4} parent=19 // pred_check
        %p769 = pneg %p214
      $region42: #{audio_captioner_forward.4} parent=19 // pred_check_branch
        %771 = sbr.rel (%p769) target = $region44
      $region43: #{audio_captioner_forward.4} parent=19 // pred_region
        %p772 = scmp.lt.s32.totalorder %s39, 1
        %s773 = scalar_select %p772, %s39, 1
        %s774 = scalar_lea.vmem %s6, %s773
      $region44: #{audio_captioner_forward.4} parent=19 // pred_fallthru
        _
      // Predicated region
      $region45: #{audio_captioner_forward.4} parent=19 // pred_check
        %p775 = pneg %p240
      $region46: #{audio_captioner_forward.4} parent=19 // pred_check_branch
        %777 = sbr.rel (%p775) target = $region48
      $region47: #{audio_captioner_forward.4} parent=19 // pred_region
        %p778 = scmp.lt.s32.totalorder %s39, 1
        %s779 = scalar_select %p778, %s39, 1
        %s780 = smul.addr %s779, 16
        %s781 = smul.addr %s780, 4
        %s782 = scalar_lea.vmem %s7, %s781
      $region48: #{audio_captioner_forward.4} parent=19 // pred_fallthru
        _
      // Predicated region
      $region49: #{audio_captioner_forward.4} parent=19 // pred_check
        %p783 = pneg %p266
      $region50: #{audio_captioner_forward.4} parent=19 // pred_check_branch
        %785 = sbr.rel (%p783) target = $region52
      $region51: #{audio_captioner_forward.4} parent=19 // pred_region
        %p786 = scmp.lt.s32.totalorder %s39, 1
        %s787 = scalar_select %p786, %s39, 1
        %s788 = smul.addr %s787, 2
        %s789 = scalar_lea.vmem %s8, %s788
      $region52: #{audio_captioner_forward.4} parent=19 // pred_fallthru
        _
      // Predicated region
      $region53: #{audio_captioner_forward.4} parent=19 // pred_check
        %p790 = pneg %p292
      $region54: #{audio_captioner_forward.4} parent=19 // pred_check_branch
        %792 = sbr.rel (%p790) target = $region56
      $region55: #{audio_captioner_forward.4} parent=19 // pred_region
        %p793 = scmp.lt.s32.totalorder %s39, 1
        %s794 = scalar_select %p793, %s39, 1
        %s795 = smul.addr %s794, 8
        %s796 = smul.addr %s795, 4
        %s797 = scalar_lea.vmem %s9, %s796
      $region56: #{audio_captioner_forward.4} parent=19 // pred_fallthru
        _
      // Predicated region
      $region57: #{audio_captioner_forward.4} parent=19 // pred_check
        %p798 = pneg %p318
      $region58: #{audio_captioner_forward.4} parent=19 // pred_check_branch
        %800 = sbr.rel (%p798) target = $region60
      $region59: #{audio_captioner_forward.4} parent=19 // pred_region
        %p801 = scmp.lt.s32.totalorder %s39, 1
        %s802 = scalar_select %p801, %s39, 1
        %s803 = scalar_lea.vmem %s10, %s802
      $region60: #{audio_captioner_forward.4} parent=19 // pred_fallthru
        _
      // Predicated region
      $region61: #{audio_captioner_forward.4} parent=19 // pred_check
        %p804 = pneg %p344
      $region62: #{audio_captioner_forward.4} parent=19 // pred_check_branch
        %806 = sbr.rel (%p804) target = $region64
      $region63: #{audio_captioner_forward.4} parent=19 // pred_region
        %p807 = scmp.lt.s32.totalorder %s39, 1
        %s808 = scalar_select %p807, %s39, 1
        %s809 = scalar_lea.vmem %s11, %s808
      $region64: #{audio_captioner_forward.4} parent=19 // pred_fallthru
        _
      // Predicated region
      $region65: #{audio_captioner_forward.4} parent=19 // pred_check
        %p810 = pneg %p370
      $region66: #{audio_captioner_forward.4} parent=19 // pred_check_branch
        %812 = sbr.rel (%p810) target = $region68
      $region67: #{audio_captioner_forward.4} parent=19 // pred_region
        %p813 = scmp.lt.s32.totalorder %s39, 1
        %s814 = scalar_select %p813, %s39, 1
        %s815 = scalar_lea.vmem %s12, %s814
      $region68: #{audio_captioner_forward.4} parent=19 // pred_fallthru
        _
      // Predicated region
      $region69: #{audio_captioner_forward.4} parent=19 // pred_check
        %p816 = pneg %p396
      $region70: #{audio_captioner_forward.4} parent=19 // pred_check_branch
        %818 = sbr.rel (%p816) target = $region72
      $region71: #{audio_captioner_forward.4} parent=19 // pred_region
        %p819 = scmp.lt.s32.totalorder %s39, 1
        %s820 = scalar_select %p819, %s39, 1
        %s821 = smul.addr %s820, 8
        %s822 = smul.addr %s821, 4
        %s823 = scalar_lea.vmem %s13, %s822
      $region72: #{audio_captioner_forward.4} parent=19 // pred_fallthru
        _
      // Predicated region
      $region73: #{audio_captioner_forward.4} parent=19 // pred_check
        %p824 = pneg %p422
      $region74: #{audio_captioner_forward.4} parent=19 // pred_check_branch
        %826 = sbr.rel (%p824) target = $region76
      $region75: #{audio_captioner_forward.4} parent=19 // pred_region
        %p827 = scmp.lt.s32.totalorder %s39, 1
        %s828 = scalar_select %p827, %s39, 1
        %s829 = scalar_lea.vmem %s14, %s828
      $region76: #{audio_captioner_forward.4} parent=19 // pred_fallthru
        _
      // Predicated region
      $region77: #{audio_captioner_forward.4} parent=19 // pred_check
        %p830 = pneg %p448
      $region78: #{audio_captioner_forward.4} parent=19 // pred_check_branch
        %832 = sbr.rel (%p830) target = $region80
      $region79: #{audio_captioner_forward.4} parent=19 // pred_region
        %p833 = scmp.lt.s32.totalorder %s39, 1
        %s834 = scalar_select %p833, %s39, 1
        %s835 = smul.addr %s834, 8
        %s836 = smul.addr %s835, 4
        %s837 = scalar_lea.vmem %s15, %s836
      $region80: #{audio_captioner_forward.4} parent=19 // pred_fallthru
        _
      // Predicated region
      $region81: #{audio_captioner_forward.4} parent=19 // pred_check
        %p838 = pneg %p474
      $region82: #{audio_captioner_forward.4} parent=19 // pred_check_branch
        %840 = sbr.rel (%p838) target = $region84
      $region83: #{audio_captioner_forward.4} parent=19 // pred_region
        %p841 = scmp.lt.s32.totalorder %s39, 1
        %s842 = scalar_select %p841, %s39, 1
        %s843 = scalar_lea.vmem %s16, %s842
      $region84: #{audio_captioner_forward.4} parent=19 // pred_fallthru
        _
      // Predicated region
      $region85: #{audio_captioner_forward.4} parent=19 // pred_check
        %p844 = pneg %p500
      $region86: #{audio_captioner_forward.4} parent=19 // pred_check_branch
        %846 = sbr.rel (%p844) target = $region88
      $region87: #{audio_captioner_forward.4} parent=19 // pred_region
        %p847 = scmp.lt.s32.totalorder %s39, 1
        %s848 = scalar_select %p847, %s39, 1
        %s849 = smul.addr %s848, 8
        %s850 = smul.addr %s849, 4
        %s851 = scalar_lea.vmem %s17, %s850
      $region88: #{audio_captioner_forward.4} parent=19 // pred_fallthru
        _
      // Predicated region
      $region89: #{audio_captioner_forward.4} parent=19 // pred_check
        %p852 = pneg %p526
      $region90: #{audio_captioner_forward.4} parent=19 // pred_check_branch
        %854 = sbr.rel (%p852) target = $region92
      $region91: #{audio_captioner_forward.4} parent=19 // pred_region
        %p855 = scmp.lt.s32.totalorder %s39, 1
        %s856 = scalar_select %p855, %s39, 1
        %s857 = scalar_lea.vmem %s18, %s856
      $region92: #{audio_captioner_forward.4} parent=19 // pred_fallthru
        _
      // Predicated region
      $region93: #{audio_captioner_forward.4} parent=19 // pred_check
        %p858 = pneg %p552
      $region94: #{audio_captioner_forward.4} parent=19 // pred_check_branch
        %860 = sbr.rel (%p858) target = $region96
      $region95: #{audio_captioner_forward.4} parent=19 // pred_region
        %p861 = scmp.lt.s32.totalorder %s39, 1
        %s862 = scalar_select %p861, %s39, 1
        %s863 = scalar_lea.vmem %s19, %s862
      $region96: #{audio_captioner_forward.4} parent=19 // pred_fallthru
        _
      // Predicated region
      $region97: #{audio_captioner_forward.4} parent=19 // pred_check
        %p864 = pneg %p578
      $region98: #{audio_captioner_forward.4} parent=19 // pred_check_branch
        %866 = sbr.rel (%p864) target = $region100
      $region99: #{audio_captioner_forward.4} parent=19 // pred_region
        %p867 = scmp.lt.s32.totalorder %s39, 1
        %s868 = scalar_select %p867, %s39, 1
        %s869 = scalar_lea.vmem %s20, %s868
      $region100: #{audio_captioner_forward.4} parent=19 // pred_fallthru
        _
      // Predicated region
      $region101: #{audio_captioner_forward.4} parent=19 // pred_check
        %p870 = pneg %p604
      $region102: #{audio_captioner_forward.4} parent=19 // pred_check_branch
        %872 = sbr.rel (%p870) target = $region104
      $region103: #{audio_captioner_forward.4} parent=19 // pred_region
        %p873 = scmp.lt.s32.totalorder %s39, 1
        %s874 = scalar_select %p873, %s39, 1
        %s875 = smul.addr %s874, 16
        %s876 = smul.addr %s875, 4
        %s877 = scalar_lea.vmem %s21, %s876
      $region104: #{audio_captioner_forward.4} parent=19 // pred_fallthru
        _
      // Predicated region
      $region105: #{audio_captioner_forward.4} parent=19 // pred_check
        %p878 = pneg %p630
      $region106: #{audio_captioner_forward.4} parent=19 // pred_check_branch
        %880 = sbr.rel (%p878) target = $region108
      $region107: #{audio_captioner_forward.4} parent=19 // pred_region
        %p881 = scmp.lt.s32.totalorder %s39, 1
        %s882 = scalar_select %p881, %s39, 1
        %s883 = smul.addr %s882, 2
        %s884 = scalar_lea.vmem %s22, %s883
      $region108: #{audio_captioner_forward.4} parent=19 // pred_fallthru
        _
      // Predicated region
      $region109: #{audio_captioner_forward.4} parent=19 // pred_check
        %p885 = pneg %p656
      $region110: #{audio_captioner_forward.4} parent=19 // pred_check_branch
        %887 = sbr.rel (%p885) target = $region112
      $region111: #{audio_captioner_forward.4} parent=19 // pred_region
        %p888 = scmp.lt.s32.totalorder %s39, 1
        %s889 = scalar_select %p888, %s39, 1
        %s890 = smul.addr %s889, 32
        %s891 = smul.addr %s890, 4
        %s892 = scalar_lea.vmem %s23, %s891
      $region112: #{audio_captioner_forward.4} parent=19 // pred_fallthru
        _
      // Predicated region
      $region113: #{audio_captioner_forward.4} parent=19 // pred_check
        %p893 = pneg %p682
      $region114: #{audio_captioner_forward.4} parent=19 // pred_check_branch
        %895 = sbr.rel (%p893) target = $region116
      $region115: #{audio_captioner_forward.4} parent=19 // pred_region
        %p896 = scmp.lt.s32.totalorder %s39, 1
        %s897 = scalar_select %p896, %s39, 1
        %s898 = scalar_lea.vmem %s24, %s897
      $region116: #{audio_captioner_forward.4} parent=19 // pred_fallthru
        _
    $region20: #{audio_captioner_forward.4} parent=5 // pred_fallthru
      _
    %p899 = scmp.le.s32.totalorder 1, %s31
    %p900 = scmp.lt.s32.totalorder %s31, 5
    %p901 = pnand %p899, %p900
    %p902 = pneg %p901
    // Predicated region
    $region117: #{audio_captioner_forward.4} parent=5 // pred_check
      _
    $region118: #{audio_captioner_forward.4} parent=5 // pred_check_branch
      %904 = sbr.rel (%p901) target = $region120
    $region119: #{audio_captioner_forward.4} parent=5 // pred_region
      %s905 = ssub.s32 %s31, 1
      %p906 = scmp.lt.s32.totalorder %s40, 1
      %s907 = scalar_select %p906, %s40, 1
      %s908 = smul.addr %s907, 8
      %s909 = scalar_lea.vmem %s0, %s908
      %p910 = pneg %p69
      %p911 = pneg %p66
      %p912 = scmp.lt.s32.totalorder %s40, 1
      %s913 = scalar_select %p912, %s40, 1
      %s914 = smul.addr %s913, 2
      %s915 = smul.addr %s914, 8
      %s916 = scalar_lea.vmem %s1, %s915
      %p917 = pneg %p95
      %p918 = pneg %p92
      %p919 = pneg %p116
      %p920 = pneg %p113
      %p921 = scmp.lt.s32.totalorder %s40, 1
      %s922 = scalar_select %p921, %s40, 1
      %s923 = scalar_lea.vmem %s3, %s922
      %p924 = pneg %p142
      %p925 = pneg %p139
      %p926 = scmp.lt.s32.totalorder %s40, 1
      %s927 = scalar_select %p926, %s40, 1
      %s928 = scalar_lea.vmem %s4, %s927
      %p929 = pneg %p168
      %p930 = pneg %p165
      %p931 = scmp.lt.s32.totalorder %s41, 1
      %s932 = scalar_select %p931, %s41, 1
      %s933 = scalar_lea.vmem %s5, %s932
      %p934 = pneg %p194
      %p935 = pneg %p191
      %p936 = scmp.lt.s32.totalorder %s41, 1
      %s937 = scalar_select %p936, %s41, 1
      %s938 = scalar_lea.vmem %s6, %s937
      %p939 = pneg %p220
      %p940 = pneg %p217
      %p941 = scmp.lt.s32.totalorder %s41, 1
      %s942 = scalar_select %p941, %s41, 1
      %s943 = smul.addr %s942, 16
      %s944 = smul.addr %s943, 4
      %s945 = scalar_lea.vmem %s7, %s944
      %p946 = pneg %p246
      %p947 = pneg %p243
      %p948 = scmp.lt.s32.totalorder %s41, 1
      %s949 = scalar_select %p948, %s41, 1
      %s950 = smul.addr %s949, 2
      %s951 = scalar_lea.vmem %s8, %s950
      %p952 = pneg %p272
      %p953 = pneg %p269
      %p954 = scmp.lt.s32.totalorder %s41, 1
      %s955 = scalar_select %p954, %s41, 1
      %s956 = smul.addr %s955, 8
      %s957 = smul.addr %s956, 4
      %s958 = scalar_lea.vmem %s9, %s957
      %p959 = pneg %p298
      %p960 = pneg %p295
      %p961 = scmp.lt.s32.totalorder %s41, 1
      %s962 = scalar_select %p961, %s41, 1
      %s963 = scalar_lea.vmem %s10, %s962
      %p964 = pneg %p324
      %p965 = pneg %p321
      %p966 = scmp.lt.s32.totalorder %s41, 1
      %s967 = scalar_select %p966, %s41, 1
      %s968 = scalar_lea.vmem %s11, %s967
      %p969 = pneg %p350
      %p970 = pneg %p347
      %p971 = scmp.lt.s32.totalorder %s41, 1
      %s972 = scalar_select %p971, %s41, 1
      %s973 = scalar_lea.vmem %s12, %s972
      %p974 = pneg %p376
      %p975 = pneg %p373
      %p976 = scmp.lt.s32.totalorder %s41, 1
      %s977 = scalar_select %p976, %s41, 1
      %s978 = smul.addr %s977, 8
      %s979 = smul.addr %s978, 4
      %s980 = scalar_lea.vmem %s13, %s979
      %p981 = pneg %p402
      %p982 = pneg %p399
      %p983 = scmp.lt.s32.totalorder %s41, 1
      %s984 = scalar_select %p983, %s41, 1
      %s985 = scalar_lea.vmem %s14, %s984
      %p986 = pneg %p428
      %p987 = pneg %p425
      %p988 = scmp.lt.s32.totalorder %s41, 1
      %s989 = scalar_select %p988, %s41, 1
      %s990 = smul.addr %s989, 8
      %s991 = smul.addr %s990, 4
      %s992 = scalar_lea.vmem %s15, %s991
      %p993 = pneg %p454
      %p994 = pneg %p451
      %p995 = scmp.lt.s32.totalorder %s41, 1
      %s996 = scalar_select %p995, %s41, 1
      %s997 = scalar_lea.vmem %s16, %s996
      %p998 = pneg %p480
      %p999 = pneg %p477
      %p1000 = scmp.lt.s32.totalorder %s41, 1
      %s1001 = scalar_select %p1000, %s41, 1
      %s1002 = smul.addr %s1001, 8
      %s1003 = smul.addr %s1002, 4
      %s1004 = scalar_lea.vmem %s17, %s1003
      %p1005 = pneg %p506
      %p1006 = pneg %p503
      %p1007 = scmp.lt.s32.totalorder %s41, 1
      %s1008 = scalar_select %p1007, %s41, 1
      %s1009 = scalar_lea.vmem %s18, %s1008
      %p1010 = pneg %p532
      %p1011 = pneg %p529
      %p1012 = scmp.lt.s32.totalorder %s41, 1
      %s1013 = scalar_select %p1012, %s41, 1
      %s1014 = scalar_lea.vmem %s19, %s1013
      %p1015 = pneg %p558
      %p1016 = pneg %p555
      %p1017 = scmp.lt.s32.totalorder %s41, 1
      %s1018 = scalar_select %p1017, %s41, 1
      %s1019 = scalar_lea.vmem %s20, %s1018
      %p1020 = pneg %p584
      %p1021 = pneg %p581
      %p1022 = scmp.lt.s32.totalorder %s41, 1
      %s1023 = scalar_select %p1022, %s41, 1
      %s1024 = smul.addr %s1023, 16
      %s1025 = smul.addr %s1024, 4
      %s1026 = scalar_lea.vmem %s21, %s1025
      %p1027 = pneg %p610
      %p1028 = pneg %p607
      %p1029 = scmp.lt.s32.totalorder %s41, 1
      %s1030 = scalar_select %p1029, %s41, 1
      %s1031 = smul.addr %s1030, 2
      %s1032 = scalar_lea.vmem %s22, %s1031
      %p1033 = pneg %p636
      %p1034 = pneg %p633
      %p1035 = scmp.lt.s32.totalorder %s41, 1
      %s1036 = scalar_select %p1035, %s41, 1
      %s1037 = smul.addr %s1036, 32
      %s1038 = smul.addr %s1037, 4
      %s1039 = scalar_lea.vmem %s23, %s1038
      %p1040 = pneg %p662
      %p1041 = pneg %p659
      %p1042 = scmp.lt.s32.totalorder %s41, 1
      %s1043 = scalar_select %p1042, %s41, 1
      %s1044 = scalar_lea.vmem %s24, %s1043
      %p1045 = pneg %p688
      %p1046 = pneg %p685
      %p1047 = pneg %p714
      %p1048 = pneg %p711
      %p1049 = scmp.lt.s32.totalorder %s40, 1
      %s1050 = scalar_select %p1049, %s40, 1
      %s1051 = smul.addr %s1050, 8
      %s1052 = scalar_lea.vmem %s25, %s1051
      %p1053 = scmp.lt.s32.totalorder %s40, 1
      %s1054 = scalar_select %p1053, %s40, 1
      %s1055 = smul.addr %s1054, 8
      %s1056 = scalar_lea.vmem %s0, %s1055
      %p1057 = scmp.lt.s32.totalorder %s40, 1
      %s1058 = scalar_select %p1057, %s40, 1
      %s1059 = smul.addr %s1058, 2
      %s1060 = smul.addr %s1059, 8
      %s1061 = scalar_lea.vmem %s1, %s1060
      %p1062 = scmp.lt.s32.totalorder %s40, 1
      %s1063 = scalar_select %p1062, %s40, 1
      %s1064 = scalar_lea.vmem %s3, %s1063
      %p1065 = scmp.lt.s32.totalorder %s40, 1
      %s1066 = scalar_select %p1065, %s40, 1
      %s1067 = scalar_lea.vmem %s4, %s1066
      %p1068 = scmp.lt.s32.totalorder %s41, 1
      %s1069 = scalar_select %p1068, %s41, 1
      %s1070 = scalar_lea.vmem %s5, %s1069
      %p1071 = scmp.lt.s32.totalorder %s41, 1
      %s1072 = scalar_select %p1071, %s41, 1
      %s1073 = scalar_lea.vmem %s6, %s1072
      %p1074 = scmp.lt.s32.totalorder %s41, 1
      %s1075 = scalar_select %p1074, %s41, 1
      %s1076 = smul.addr %s1075, 16
      %s1077 = smul.addr %s1076, 4
      %s1078 = scalar_lea.vmem %s7, %s1077
      %p1079 = scmp.lt.s32.totalorder %s41, 1
      %s1080 = scalar_select %p1079, %s41, 1
      %s1081 = smul.addr %s1080, 2
      %s1082 = scalar_lea.vmem %s8, %s1081
      %p1083 = scmp.lt.s32.totalorder %s41, 1
      %s1084 = scalar_select %p1083, %s41, 1
      %s1085 = smul.addr %s1084, 8
      %s1086 = smul.addr %s1085, 4
      %s1087 = scalar_lea.vmem %s9, %s1086
      %p1088 = scmp.lt.s32.totalorder %s41, 1
      %s1089 = scalar_select %p1088, %s41, 1
      %s1090 = scalar_lea.vmem %s10, %s1089
      %p1091 = scmp.lt.s32.totalorder %s41, 1
      %s1092 = scalar_select %p1091, %s41, 1
      %s1093 = scalar_lea.vmem %s11, %s1092
      %p1094 = scmp.lt.s32.totalorder %s41, 1
      %s1095 = scalar_select %p1094, %s41, 1
      %s1096 = scalar_lea.vmem %s12, %s1095
      %p1097 = scmp.lt.s32.totalorder %s41, 1
      %s1098 = scalar_select %p1097, %s41, 1
      %s1099 = smul.addr %s1098, 8
      %s1100 = smul.addr %s1099, 4
      %s1101 = scalar_lea.vmem %s13, %s1100
      %p1102 = scmp.lt.s32.totalorder %s41, 1
      %s1103 = scalar_select %p1102, %s41, 1
      %s1104 = scalar_lea.vmem %s14, %s1103
      %p1105 = scmp.lt.s32.totalorder %s41, 1
      %s1106 = scalar_select %p1105, %s41, 1
      %s1107 = smul.addr %s1106, 8
      %s1108 = smul.addr %s1107, 4
      %s1109 = scalar_lea.vmem %s15, %s1108
      %p1110 = scmp.lt.s32.totalorder %s41, 1
      %s1111 = scalar_select %p1110, %s41, 1
      %s1112 = scalar_lea.vmem %s16, %s1111
      %p1113 = scmp.lt.s32.totalorder %s41, 1
      %s1114 = scalar_select %p1113, %s41, 1
      %s1115 = smul.addr %s1114, 8
      %s1116 = smul.addr %s1115, 4
      %s1117 = scalar_lea.vmem %s17, %s1116
      %p1118 = scmp.lt.s32.totalorder %s41, 1
      %s1119 = scalar_select %p1118, %s41, 1
      %s1120 = scalar_lea.vmem %s18, %s1119
      %p1121 = scmp.lt.s32.totalorder %s41, 1
      %s1122 = scalar_select %p1121, %s41, 1
      %s1123 = scalar_lea.vmem %s19, %s1122
      %p1124 = scmp.lt.s32.totalorder %s41, 1
      %s1125 = scalar_select %p1124, %s41, 1
      %s1126 = scalar_lea.vmem %s20, %s1125
      %p1127 = scmp.lt.s32.totalorder %s41, 1
      %s1128 = scalar_select %p1127, %s41, 1
      %s1129 = smul.addr %s1128, 16
      %s1130 = smul.addr %s1129, 4
      %s1131 = scalar_lea.vmem %s21, %s1130
      %p1132 = scmp.lt.s32.totalorder %s41, 1
      %s1133 = scalar_select %p1132, %s41, 1
      %s1134 = smul.addr %s1133, 2
      %s1135 = scalar_lea.vmem %s22, %s1134
      %p1136 = scmp.lt.s32.totalorder %s41, 1
      %s1137 = scalar_select %p1136, %s41, 1
      %s1138 = smul.addr %s1137, 32
      %s1139 = smul.addr %s1138, 4
      %s1140 = scalar_lea.vmem %s23, %s1139
      %p1141 = scmp.lt.s32.totalorder %s41, 1
      %s1142 = scalar_select %p1141, %s41, 1
      %s1143 = scalar_lea.vmem %s24, %s1142
      %p1144 = scmp.lt.s32.totalorder %s40, 1
      %s1145 = scalar_select %p1144, %s40, 1
      %s1146 = smul.addr %s1145, 8
      %s1147 = scalar_lea.vmem %s25, %s1146
      %p1149 = scmp.eq.s32.totalorder %s41, 0
      // Predicated region
      $region121: #{audio_captioner_forward.4} parent=119 // pred_check
        %p1150 = pneg %p1149
      $region122: #{audio_captioner_forward.4} parent=119 // pred_check_branch
        %1152 = sbr.rel (%p1150) target = $region124
      $region123: #{audio_captioner_forward.4} parent=119 // pred_region
        %v1153 = vld [vmem:[%s1056] sm:$0xff]
        %vm1154 = vcmask 523264
        %1155 = vst.msk [vmem:[#allocation2] sm:$0xff] %vm1154, %v1153
      $region124: #{audio_captioner_forward.4} parent=119 // pred_fallthru
        _
      %v1156 = vld [vmem:[#allocation2] sm:$0xff]
      %v1157 = vld [vmem:[%s1061] sm:$0xff]
      %v1158 = vld [vmem:[%s1061 + $0x8] sm:$0xff]
      %v1159 = vpack.c.bf16 %v1158, %v1157
      %v1160 = vld [vmem:[%s1070] sm:$0x1]
      %v1161 = vld [vmem:[%s1073] sm:$0x1]
      %vm1162 = vcmask 523264
      %v1163 = vsel %vm1162, %v1156, 0.0
      %1164 = vadd.xlane.f32.xlu0 %v1163
      %v1165 = vpop.xlane.xlu0 %1164
      %v1166 = vrcp.pop 64.0
      %v1167 = vmul.f32 %v1165, %v1166
      %v1168 = vsub.f32 %v1156, %v1167
      %v1169 = vmul.f32 %v1168, %v1168
      %v1170 = vsel %vm1162, %v1169, 0.0
      %1171 = vadd.xlane.f32.xlu0 %v1170
      %v1172 = vpop.xlane.xlu0 %1171
      %v1173 = vmul.f32 %v1172, %v1166
      %v1174 = vadd.f32 %v1173, 1e-05
      %v1175 = vrsqrt.pop %v1174
      %v1176 = vmul.f32 %v1168, %v1175
      %v1178 = vlaneseq
      %v1179 = vshrl.u32 %v1178, 7
      %v1180 = vsub.s32 0, %v1179
      %v1181 = vrot.slane %v1160, %v1180
      %v1183 = vmul.f32 %v1176, %v1181
      %v1185 = vlaneseq
      %v1186 = vshrl.u32 %v1185, 7
      %v1187 = vsub.s32 0, %v1186
      %v1188 = vrot.slane %v1161, %v1187
      %v1190 = vadd.f32 %v1183, %v1188
      %v1191 = vpack.c.bf16 %v1190, %v1190
      %v1192 = vld [vmem:[%s1078] sm:$0xff]
      %v1193 = vld [vmem:[%s1078 + $0x8] sm:$0xff]
      %v1194 = vld [vmem:[%s1078 + $0x10] sm:$0xff]
      %v1195 = vld [vmem:[%s1078 + $0x18] sm:$0xff]
      %v1196 = vld [vmem:[%s1078 + $0x20] sm:$0xff]
      %v1197 = vld [vmem:[%s1078 + $0x28] sm:$0xff]
      %v1198 = vld [vmem:[%s1078 + $0x30] sm:$0xff]
      %v1199 = vld [vmem:[%s1078 + $0x38] sm:$0xff]
      %v1200 = vld [vmem:[%s1082] sm:$0x3]
      %v1202 = vlaneseq
      %v1203 = vshrl.u32 %v1202, 7
      %v1204 = vsub.s32 0, %v1203
      %v1205 = vrot.slane %v1200, %v1204
      %v1206 = vlaneseq
      %v1207 = vshrl.u32 %v1206, 7
      %v1208 = vsub.s32 1, %v1207
      %v1209 = vrot.slane %v1200, %v1208
      %v1220 = vunpack.c.l.b16 %v1192
      %v1221 = vunpack.c.h.b16 %v1192
      %v1222 = vunpack.c.l.b16 %v1193
      %v1223 = vunpack.c.h.b16 %v1193
      %v1224 = vunpack.c.l.b16 %v1194
      %v1225 = vunpack.c.h.b16 %v1194
      %v1226 = vunpack.c.l.b16 %v1195
      %v1227 = vunpack.c.h.b16 %v1195
      %v1228 = vunpack.c.l.b16 %v1196
      %v1229 = vunpack.c.h.b16 %v1196
      %v1230 = vunpack.c.l.b16 %v1197
      %v1231 = vunpack.c.h.b16 %v1197
      %v1232 = vunpack.c.l.b16 %v1198
      %v1233 = vunpack.c.h.b16 %v1198
      %v1234 = vunpack.c.l.b16 %v1199
      %v1235 = vunpack.c.h.b16 %v1199
      %v1236 = vpack.c.b16 %v1222, %v1220
      %v1237 = vpack.c.b16 %v1223, %v1221
      %v1238 = vpack.c.b16 %v1226, %v1224
      %v1239 = vpack.c.b16 %v1227, %v1225
      %v1240 = vpack.c.b16 %v1230, %v1228
      %v1241 = vpack.c.b16 %v1231, %v1229
      %v1242 = vpack.c.b16 %v1234, %v1232
      %v1243 = vpack.c.b16 %v1235, %v1233
      %v1253 = vsel %vm1162, %v1191, 0
      %1255 = vmatprep.subr.bf16.mxu0 %v1237
      %1256 = vmatpush1.bf16.msra.mxu0 %v1236
      %1257 = vmatprep.subr.bf16.mxu0 %v1239
      %1258 = vmatpush1.bf16.msra.mxu0 %v1238
      %1259 = vmatprep.subr.bf16.mxu0 %v1241
      %1260 = vmatpush1.bf16.msra.mxu0 %v1240
      %1261 = vmatprep.subr.bf16.mxu0 %v1243
      %1262 = vmatpush1.bf16.msra.mxu0 %v1242
      %1263 = vmatprep.subr.bf16.mxu0 0
      %1264 = vmatpush1.bf16.msra.mxu0 0
      %1265 = vmatprep.subr.bf16.mxu0 0
      %1266 = vmatpush1.bf16.msra.mxu0 0
      %1267 = vmatprep.subr.bf16.mxu0 0
      %1268 = vmatpush1.bf16.msra.mxu0 0
      %1269 = vmatprep.subr.bf16.mxu0 0
      %1270 = vmatpush1.bf16.msra.mxu0 0
      %1271 = vmatprep.subr.bf16.mxu0 0
      %1272 = vmatpush1.bf16.msra.mxu0 0
      %1273 = vmatprep.subr.bf16.mxu0 0
      %1274 = vmatpush1.bf16.msra.mxu0 0
      %1275 = vmatprep.subr.bf16.mxu0 0
      %1276 = vmatpush1.bf16.msra.mxu0 0
      %1277 = vmatprep.subr.bf16.mxu0 0
      %1278 = vmatpush1.bf16.msra.mxu0 0
      %1279 = vmatprep.subr.bf16.mxu0 0
      %1280 = vmatpush1.bf16.msra.mxu0 0
      %1281 = vmatprep.subr.bf16.mxu0 0
      %1282 = vmatpush1.bf16.msra.mxu0 0
      %1283 = vmatprep.subr.bf16.mxu0 0
      %1284 = vmatpush1.bf16.msra.mxu0 0
      %1285 = vmatprep.subr.bf16.mxu0 0
      %1286 = vmatpush1.bf16.msra.mxu0 0
      %1287 = vmatprep.mubr.bf16.mxu0 0
      %1288 = vmatmul.mubr.bf16.gmra.mrb[0].mxu0 %v1253
      %v1289 = vpop.f32.mrb[0].mxu0
      %v1290 = vadd.f32 %v1205, %v1289
      %v1291 = vpop.f32.mrb[0].mxu0
      %v1292 = vadd.f32 %v1209, %v1291
      %v1293 = vpop.f32.mrb[0].mxu0
      %v1294 = vpop.f32.mrb[0].mxu0
      %1295 = vdwg.mxu0
      %v1296 = vld [vmem:[%s2] sm:$0xff]
      %v1297 = vld [vmem:[%s1064] sm:$0x1]
      %v1299 = vlaneseq
      %v1300 = vshrl.u32 %v1299, 7
      %v1301 = vsub.s32 0, %v1300
      %v1302 = vrot.slane %v1297, %v1301
      %v1304 = vadd.f32 %v1296, %v1302
      %v1305 = vpack.c.bf16 %v1290, %v1290
      %v1306 = vpack.c.bf16 %v1292, %v1292
      %1308 = vrot.lane.b32.xlu0 %v1305, 64
      %v1309 = vpop.permute.xlu0 %1308
      %vm1310 = vcmask 130048
      %v1312 = vsel %vm1310, %v1305, 0
      %v1315 = vsel %vm1310, %v1309, 0
      %1317 = vmatprep.subr.bf16.mxu0 0
      %1318 = vmatpush1.bf16.xpose.msra.mxu0 %v1315
      %1319 = vmatprep.subr.bf16.mxu0 0
      %1320 = vmatpush1.bf16.xpose.msra.mxu0 0
      %1321 = vmatprep.subr.bf16.mxu0 0
      %1322 = vmatpush1.bf16.xpose.msra.mxu0 0
      %1323 = vmatprep.subr.bf16.mxu0 0
      %1324 = vmatpush1.bf16.xpose.msra.mxu0 0
      %1325 = vmatprep.subr.bf16.mxu0 0
      %1326 = vmatpush1.bf16.xpose.msra.mxu0 0
      %1327 = vmatprep.subr.bf16.mxu0 0
      %1328 = vmatpush1.bf16.xpose.msra.mxu0 0
      %1329 = vmatprep.subr.bf16.mxu0 0
      %1330 = vmatpush1.bf16.xpose.msra.mxu0 0
      %1331 = vmatprep.subr.bf16.mxu0 0
      %1332 = vmatpush1.bf16.xpose.msra.mxu0 0
      %1333 = vmatprep.subr.bf16.mxu0 0
      %1334 = vmatpush1.bf16.xpose.msra.mxu0 0
      %1335 = vmatprep.subr.bf16.mxu0 0
      %1336 = vmatpush1.bf16.xpose.msra.mxu0 0
      %1337 = vmatprep.subr.bf16.mxu0 0
      %1338 = vmatpush1.bf16.xpose.msra.mxu0 0
      %1339 = vmatprep.subr.bf16.mxu0 0
      %1340 = vmatpush1.bf16.xpose.msra.mxu0 0
      %1341 = vmatprep.subr.bf16.mxu0 0
      %1342 = vmatpush1.bf16.xpose.msra.mxu0 0
      %1343 = vmatprep.subr.bf16.mxu0 0
      %1344 = vmatpush1.bf16.xpose.msra.mxu0 0
      %1345 = vmatprep.subr.bf16.mxu0 0
      %1346 = vmatpush1.bf16.xpose.msra.mxu0 0
      %1347 = vmatprep.subr.bf16.mxu0 0
      %1348 = vmatpush1.bf16.xpose.msra.mxu0 0
      %1349 = vmatprep.mubr.bf16.mxu0 0
      %1350 = vmatmul.mubr.bf16.gmra.mrb[0].mxu0 %v1312
      %v1351 = vpop.f32.mrb[0].mxu0
      %v1352 = vadd.f32 0.0, %v1351
      %v1353 = vpop.f32.mrb[0].mxu0
      %v1354 = vpop.f32.mrb[0].mxu0
      %v1355 = vpop.f32.mrb[0].mxu0
      %1356 = vdwg.mxu0
      %v1357 = vmul.f32 %v1352, 0.25
      %v1358 = vadd.f32 %v1357, %v1304
      %vm1359 = vcmask 64512
      %v1360 = vsel %vm1359, %v1358, -inf
      %1361 = vmax.xlane.f32.xlu0 %v1360
      %v1362 = vpop.xlane.xlu0 %1361
      %v1363 = vsub.f32 %v1358, %v1362
      %v1364 = vmul.f32 %v1363, 1.442695
      %v1365 = vpow.pop %v1364
      %v1366 = vsel %vm1359, %v1365, 0.0
      %1367 = vadd.xlane.f32.xlu0 %v1366
      %v1368 = vpop.xlane.xlu0 %1367
      %v1369 = vrcp.pop %v1368
      %v1370 = vmul.f32 %v1365, %v1369
      %v1371 = vpack.c.bf16 %v1370, %v1370
      %v1373 = vsel %vm1359, %v1371, 0
      %vm1375 = vcmask 1043456
      %v1377 = vsel %vm1375, %v1306, 0
      %1379 = vmatprep.subr.bf16.mxu0 0
      %1380 = vmatpush1.bf16.msra.mxu0 %v1377
      %1381 = vmatprep.subr.bf16.mxu0 0
      %1382 = vmatpush1.bf16.msra.mxu0 0
      %1383 = vmatprep.subr.bf16.mxu0 0
      %1384 = vmatpush1.bf16.msra.mxu0 0
      %1385 = vmatprep.subr.bf16.mxu0 0
      %1386 = vmatpush1.bf16.msra.mxu0 0
      %1387 = vmatprep.subr.bf16.mxu0 0
      %1388 = vmatpush1.bf16.msra.mxu0 0
      %1389 = vmatprep.subr.bf16.mxu0 0
      %1390 = vmatpush1.bf16.msra.mxu0 0
      %1391 = vmatprep.subr.bf16.mxu0 0
      %1392 = vmatpush1.bf16.msra.mxu0 0
      %1393 = vmatprep.subr.bf16.mxu0 0
      %1394 = vmatpush1.bf16.msra.mxu0 0
      %1395 = vmatprep.subr.bf16.mxu0 0
      %1396 = vmatpush1.bf16.msra.mxu0 0
      %1397 = vmatprep.subr.bf16.mxu0 0
      %1398 = vmatpush1.bf16.msra.mxu0 0
      %1399 = vmatprep.subr.bf16.mxu0 0
      %1400 = vmatpush1.bf16.msra.mxu0 0
      %1401 = vmatprep.subr.bf16.mxu0 0
      %1402 = vmatpush1.bf16.msra.mxu0 0
      %1403 = vmatprep.subr.bf16.mxu0 0
      %1404 = vmatpush1.bf16.msra.mxu0 0
      %1405 = vmatprep.subr.bf16.mxu0 0
      %1406 = vmatpush1.bf16.msra.mxu0 0
      %1407 = vmatprep.subr.bf16.mxu0 0
      %1408 = vmatpush1.bf16.msra.mxu0 0
      %1409 = vmatprep.subr.bf16.mxu0 0
      %1410 = vmatpush1.bf16.msra.mxu0 0
      %1411 = vmatprep.mubr.bf16.mxu0 0
      %1412 = vmatmul.mubr.bf16.gmra.mrb[0].mxu0 %v1373
      %v1413 = vpop.f32.mrb[0].mxu0
      %v1414 = vadd.f32 0.0, %v1413
      %v1415 = vpop.f32.mrb[0].mxu0
      %v1416 = vpop.f32.mrb[0].mxu0
      %v1417 = vpop.f32.mrb[0].mxu0
      %1418 = vdwg.mxu0
      %1419 = vrot.lane.b32.xlu0 %v1305, 112
      %v1420 = vpop.permute.xlu0 %1419
      %1421 = vrot.lane.b32.xlu0 %v1305, 48
      %v1422 = vpop.permute.xlu0 %1421
      %v1424 = vsel %vm1310, %v1420, 0
      %v1427 = vsel %vm1310, %v1422, 0
      %1429 = vmatprep.subr.bf16.mxu0 0
      %1430 = vmatpush1.bf16.xpose.msra.mxu0 %v1427
      %1431 = vmatprep.subr.bf16.mxu0 0
      %1432 = vmatpush1.bf16.xpose.msra.mxu0 0
      %1433 = vmatprep.subr.bf16.mxu0 0
      %1434 = vmatpush1.bf16.xpose.msra.mxu0 0
      %1435 = vmatprep.subr.bf16.mxu0 0
      %1436 = vmatpush1.bf16.xpose.msra.mxu0 0
      %1437 = vmatprep.subr.bf16.mxu0 0
      %1438 = vmatpush1.bf16.xpose.msra.mxu0 0
      %1439 = vmatprep.subr.bf16.mxu0 0
      %1440 = vmatpush1.bf16.xpose.msra.mxu0 0
      %1441 = vmatprep.subr.bf16.mxu0 0
      %1442 = vmatpush1.bf16.xpose.msra.mxu0 0
      %1443 = vmatprep.subr.bf16.mxu0 0
      %1444 = vmatpush1.bf16.xpose.msra.mxu0 0
      %1445 = vmatprep.subr.bf16.mxu0 0
      %1446 = vmatpush1.bf16.xpose.msra.mxu0 0
      %1447 = vmatprep.subr.bf16.mxu0 0
      %1448 = vmatpush1.bf16.xpose.msra.mxu0 0
      %1449 = vmatprep.subr.bf16.mxu0 0
      %1450 = vmatpush1.bf16.xpose.msra.mxu0 0
      %1451 = vmatprep.subr.bf16.mxu0 0
      %1452 = vmatpush1.bf16.xpose.msra.mxu0 0
      %1453 = vmatprep.subr.bf16.mxu0 0
      %1454 = vmatpush1.bf16.xpose.msra.mxu0 0
      %1455 = vmatprep.subr.bf16.mxu0 0
      %1456 = vmatpush1.bf16.xpose.msra.mxu0 0
      %1457 = vmatprep.subr.bf16.mxu0 0
      %1458 = vmatpush1.bf16.xpose.msra.mxu0 0
      %1459 = vmatprep.subr.bf16.mxu0 0
      %1460 = vmatpush1.bf16.xpose.msra.mxu0 0
      %1461 = vmatprep.mubr.bf16.mxu0 0
      %1462 = vmatmul.mubr.bf16.gmra.mrb[0].mxu0 %v1424
      %v1463 = vpop.f32.mrb[0].mxu0
      %v1464 = vadd.f32 0.0, %v1463
      %v1465 = vpop.f32.mrb[0].mxu0
      %v1466 = vpop.f32.mrb[0].mxu0
      %v1467 = vpop.f32.mrb[0].mxu0
      %1468 = vdwg.mxu0
      %v1469 = vmul.f32 %v1464, 0.25
      %v1470 = vadd.f32 %v1469, %v1304
      %v1471 = vsel %vm1359, %v1470, -inf
      %1472 = vmax.xlane.f32.xlu0 %v1471
      %v1473 = vpop.xlane.xlu0 %1472
      %v1474 = vsub.f32 %v1470, %v1473
      %v1475 = vmul.f32 %v1474, 1.442695
      %v1476 = vpow.pop %v1475
      %v1477 = vsel %vm1359, %v1476, 0.0
      %1478 = vadd.xlane.f32.xlu0 %v1477
      %v1479 = vpop.xlane.xlu0 %1478
      %v1480 = vrcp.pop %v1479
      %v1481 = vmul.f32 %v1476, %v1480
      %v1482 = vpack.c.bf16 %v1481, %v1481
      %1484 = vrot.lane.b32.xlu0 %v1306, 112
      %v1485 = vpop.permute.xlu0 %1484
      %v1487 = vsel %vm1359, %v1482, 0
      %v1490 = vsel %vm1375, %v1485, 0
      %1492 = vmatprep.subr.bf16.mxu0 0
      %1493 = vmatpush1.bf16.msra.mxu0 %v1490
      %1494 = vmatprep.subr.bf16.mxu0 0
      %1495 = vmatpush1.bf16.msra.mxu0 0
      %1496 = vmatprep.subr.bf16.mxu0 0
      %1497 = vmatpush1.bf16.msra.mxu0 0
      %1498 = vmatprep.subr.bf16.mxu0 0
      %1499 = vmatpush1.bf16.msra.mxu0 0
      %1500 = vmatprep.subr.bf16.mxu0 0
      %1501 = vmatpush1.bf16.msra.mxu0 0
      %1502 = vmatprep.subr.bf16.mxu0 0
      %1503 = vmatpush1.bf16.msra.mxu0 0
      %1504 = vmatprep.subr.bf16.mxu0 0
      %1505 = vmatpush1.bf16.msra.mxu0 0
      %1506 = vmatprep.subr.bf16.mxu0 0
      %1507 = vmatpush1.bf16.msra.mxu0 0
      %1508 = vmatprep.subr.bf16.mxu0 0
      %1509 = vmatpush1.bf16.msra.mxu0 0
      %1510 = vmatprep.subr.bf16.mxu0 0
      %1511 = vmatpush1.bf16.msra.mxu0 0
      %1512 = vmatprep.subr.bf16.mxu0 0
      %1513 = vmatpush1.bf16.msra.mxu0 0
      %1514 = vmatprep.subr.bf16.mxu0 0
      %1515 = vmatpush1.bf16.msra.mxu0 0
      %1516 = vmatprep.subr.bf16.mxu0 0
      %1517 = vmatpush1.bf16.msra.mxu0 0
      %1518 = vmatprep.subr.bf16.mxu0 0
      %1519 = vmatpush1.bf16.msra.mxu0 0
      %1520 = vmatprep.subr.bf16.mxu0 0
      %1521 = vmatpush1.bf16.msra.mxu0 0
      %1522 = vmatprep.subr.bf16.mxu0 0
      %1523 = vmatpush1.bf16.msra.mxu0 0
      %1524 = vmatprep.mubr.bf16.mxu0 0
      %1525 = vmatmul.mubr.bf16.gmra.mrb[0].mxu0 %v1487
      %v1526 = vpop.f32.mrb[0].mxu0
      %v1527 = vadd.f32 0.0, %v1526
      %v1528 = vpop.f32.mrb[0].mxu0
      %v1529 = vpop.f32.mrb[0].mxu0
      %v1530 = vpop.f32.mrb[0].mxu0
      %1531 = vdwg.mxu0
      %1532 = vrot.lane.b32.xlu0 %v1305, 96
      %v1533 = vpop.permute.xlu0 %1532
      %1534 = vrot.lane.b32.xlu0 %v1305, 32
      %v1535 = vpop.permute.xlu0 %1534
      %v1537 = vsel %vm1310, %v1533, 0
      %v1540 = vsel %vm1310, %v1535, 0
      %1542 = vmatprep.subr.bf16.mxu0 0
      %1543 = vmatpush1.bf16.xpose.msra.mxu0 %v1540
      %1544 = vmatprep.subr.bf16.mxu0 0
      %1545 = vmatpush1.bf16.xpose.msra.mxu0 0
      %1546 = vmatprep.subr.bf16.mxu0 0
      %1547 = vmatpush1.bf16.xpose.msra.mxu0 0
      %1548 = vmatprep.subr.bf16.mxu0 0
      %1549 = vmatpush1.bf16.xpose.msra.mxu0 0
      %1550 = vmatprep.subr.bf16.mxu0 0
      %1551 = vmatpush1.bf16.xpose.msra.mxu0 0
      %1552 = vmatprep.subr.bf16.mxu0 0
      %1553 = vmatpush1.bf16.xpose.msra.mxu0 0
      %1554 = vmatprep.subr.bf16.mxu0 0
      %1555 = vmatpush1.bf16.xpose.msra.mxu0 0
      %1556 = vmatprep.subr.bf16.mxu0 0
      %1557 = vmatpush1.bf16.xpose.msra.mxu0 0
      %1558 = vmatprep.subr.bf16.mxu0 0
      %1559 = vmatpush1.bf16.xpose.msra.mxu0 0
      %1560 = vmatprep.subr.bf16.mxu0 0
      %1561 = vmatpush1.bf16.xpose.msra.mxu0 0
      %1562 = vmatprep.subr.bf16.mxu0 0
      %1563 = vmatpush1.bf16.xpose.msra.mxu0 0
      %1564 = vmatprep.subr.bf16.mxu0 0
      %1565 = vmatpush1.bf16.xpose.msra.mxu0 0
      %1566 = vmatprep.subr.bf16.mxu0 0
      %1567 = vmatpush1.bf16.xpose.msra.mxu0 0
      %1568 = vmatprep.subr.bf16.mxu0 0
      %1569 = vmatpush1.bf16.xpose.msra.mxu0 0
      %1570 = vmatprep.subr.bf16.mxu0 0
      %1571 = vmatpush1.bf16.xpose.msra.mxu0 0
      %1572 = vmatprep.subr.bf16.mxu0 0
      %1573 = vmatpush1.bf16.xpose.msra.mxu0 0
      %1574 = vmatprep.mubr.bf16.mxu0 0
      %1575 = vmatmul.mubr.bf16.gmra.mrb[0].mxu0 %v1537
      %v1576 = vpop.f32.mrb[0].mxu0
      %v1577 = vadd.f32 0.0, %v1576
      %v1578 = vpop.f32.mrb[0].mxu0
      %v1579 = vpop.f32.mrb[0].mxu0
      %v1580 = vpop.f32.mrb[0].mxu0
      %1581 = vdwg.mxu0
      %v1582 = vmul.f32 %v1577, 0.25
      %v1583 = vadd.f32 %v1582, %v1304
      %v1584 = vsel %vm1359, %v1583, -inf
      %1585 = vmax.xlane.f32.xlu0 %v1584
      %v1586 = vpop.xlane.xlu0 %1585
      %v1587 = vsub.f32 %v1583, %v1586
      %v1588 = vmul.f32 %v1587, 1.442695
      %v1589 = vpow.pop %v1588
      %v1590 = vsel %vm1359, %v1589, 0.0
      %1591 = vadd.xlane.f32.xlu0 %v1590
      %v1592 = vpop.xlane.xlu0 %1591
      %v1593 = vrcp.pop %v1592
      %v1594 = vmul.f32 %v1589, %v1593
      %v1595 = vpack.c.bf16 %v1594, %v1594
      %1596 = vrot.lane.b32.xlu0 %v1306, 96
      %v1597 = vpop.permute.xlu0 %1596
      %v1599 = vsel %vm1359, %v1595, 0
      %v1602 = vsel %vm1375, %v1597, 0
      %1604 = vmatprep.subr.bf16.mxu0 0
      %1605 = vmatpush1.bf16.msra.mxu0 %v1602
      %1606 = vmatprep.subr.bf16.mxu0 0
      %1607 = vmatpush1.bf16.msra.mxu0 0
      %1608 = vmatprep.subr.bf16.mxu0 0
      %1609 = vmatpush1.bf16.msra.mxu0 0
      %1610 = vmatprep.subr.bf16.mxu0 0
      %1611 = vmatpush1.bf16.msra.mxu0 0
      %1612 = vmatprep.subr.bf16.mxu0 0
      %1613 = vmatpush1.bf16.msra.mxu0 0
      %1614 = vmatprep.subr.bf16.mxu0 0
      %1615 = vmatpush1.bf16.msra.mxu0 0
      %1616 = vmatprep.subr.bf16.mxu0 0
      %1617 = vmatpush1.bf16.msra.mxu0 0
      %1618 = vmatprep.subr.bf16.mxu0 0
      %1619 = vmatpush1.bf16.msra.mxu0 0
      %1620 = vmatprep.subr.bf16.mxu0 0
      %1621 = vmatpush1.bf16.msra.mxu0 0
      %1622 = vmatprep.subr.bf16.mxu0 0
      %1623 = vmatpush1.bf16.msra.mxu0 0
      %1624 = vmatprep.subr.bf16.mxu0 0
      %1625 = vmatpush1.bf16.msra.mxu0 0
      %1626 = vmatprep.subr.bf16.mxu0 0
      %1627 = vmatpush1.bf16.msra.mxu0 0
      %1628 = vmatprep.subr.bf16.mxu0 0
      %1629 = vmatpush1.bf16.msra.mxu0 0
      %1630 = vmatprep.subr.bf16.mxu0 0
      %1631 = vmatpush1.bf16.msra.mxu0 0
      %1632 = vmatprep.subr.bf16.mxu0 0
      %1633 = vmatpush1.bf16.msra.mxu0 0
      %1634 = vmatprep.subr.bf16.mxu0 0
      %1635 = vmatpush1.bf16.msra.mxu0 0
      %1636 = vmatprep.mubr.bf16.mxu0 0
      %1637 = vmatmul.mubr.bf16.gmra.mrb[0].mxu0 %v1599
      %v1638 = vpop.f32.mrb[0].mxu0
      %v1639 = vadd.f32 0.0, %v1638
      %v1640 = vpop.f32.mrb[0].mxu0
      %v1641 = vpop.f32.mrb[0].mxu0
      %v1642 = vpop.f32.mrb[0].mxu0
      %1643 = vdwg.mxu0
      %1644 = vrot.lane.b32.xlu0 %v1305, 80
      %v1645 = vpop.permute.xlu0 %1644
      %1646 = vrot.lane.b32.xlu0 %v1305, 16
      %v1647 = vpop.permute.xlu0 %1646
      %v1649 = vsel %vm1310, %v1645, 0
      %v1652 = vsel %vm1310, %v1647, 0
      %1654 = vmatprep.subr.bf16.mxu0 0
      %1655 = vmatpush1.bf16.xpose.msra.mxu0 %v1652
      %1656 = vmatprep.subr.bf16.mxu0 0
      %1657 = vmatpush1.bf16.xpose.msra.mxu0 0
      %1658 = vmatprep.subr.bf16.mxu0 0
      %1659 = vmatpush1.bf16.xpose.msra.mxu0 0
      %1660 = vmatprep.subr.bf16.mxu0 0
      %1661 = vmatpush1.bf16.xpose.msra.mxu0 0
      %1662 = vmatprep.subr.bf16.mxu0 0
      %1663 = vmatpush1.bf16.xpose.msra.mxu0 0
      %1664 = vmatprep.subr.bf16.mxu0 0
      %1665 = vmatpush1.bf16.xpose.msra.mxu0 0
      %1666 = vmatprep.subr.bf16.mxu0 0
      %1667 = vmatpush1.bf16.xpose.msra.mxu0 0
      %1668 = vmatprep.subr.bf16.mxu0 0
      %1669 = vmatpush1.bf16.xpose.msra.mxu0 0
      %1670 = vmatprep.subr.bf16.mxu0 0
      %1671 = vmatpush1.bf16.xpose.msra.mxu0 0
      %1672 = vmatprep.subr.bf16.mxu0 0
      %1673 = vmatpush1.bf16.xpose.msra.mxu0 0
      %1674 = vmatprep.subr.bf16.mxu0 0
      %1675 = vmatpush1.bf16.xpose.msra.mxu0 0
      %1676 = vmatprep.subr.bf16.mxu0 0
      %1677 = vmatpush1.bf16.xpose.msra.mxu0 0
      %1678 = vmatprep.subr.bf16.mxu0 0
      %1679 = vmatpush1.bf16.xpose.msra.mxu0 0
      %1680 = vmatprep.subr.bf16.mxu0 0
      %1681 = vmatpush1.bf16.xpose.msra.mxu0 0
      %1682 = vmatprep.subr.bf16.mxu0 0
      %1683 = vmatpush1.bf16.xpose.msra.mxu0 0
      %1684 = vmatprep.subr.bf16.mxu0 0
      %1685 = vmatpush1.bf16.xpose.msra.mxu0 0
      %1686 = vmatprep.mubr.bf16.mxu0 0
      %1687 = vmatmul.mubr.bf16.gmra.mrb[0].mxu0 %v1649
      %v1688 = vpop.f32.mrb[0].mxu0
      %v1689 = vadd.f32 0.0, %v1688
      %v1690 = vpop.f32.mrb[0].mxu0
      %v1691 = vpop.f32.mrb[0].mxu0
      %v1692 = vpop.f32.mrb[0].mxu0
      %1693 = vdwg.mxu0
      %v1694 = vmul.f32 %v1689, 0.25
      %v1695 = vadd.f32 %v1694, %v1304
      %v1696 = vsel %vm1359, %v1695, -inf
      %1697 = vmax.xlane.f32.xlu0 %v1696
      %v1698 = vpop.xlane.xlu0 %1697
      %v1699 = vsub.f32 %v1695, %v1698
      %v1700 = vmul.f32 %v1699, 1.442695
      %v1701 = vpow.pop %v1700
      %v1702 = vsel %vm1359, %v1701, 0.0
      %1703 = vadd.xlane.f32.xlu0 %v1702
      %v1704 = vpop.xlane.xlu0 %1703
      %v1705 = vrcp.pop %v1704
      %v1706 = vmul.f32 %v1701, %v1705
      %v1707 = vpack.c.bf16 %v1706, %v1706
      %1708 = vrot.lane.b32.xlu0 %v1306, 80
      %v1709 = vpop.permute.xlu0 %1708
      %v1711 = vsel %vm1359, %v1707, 0
      %v1714 = vsel %vm1375, %v1709, 0
      %1716 = vmatprep.subr.bf16.mxu0 0
      %1717 = vmatpush1.bf16.msra.mxu0 %v1714
      %1718 = vmatprep.subr.bf16.mxu0 0
      %1719 = vmatpush1.bf16.msra.mxu0 0
      %1720 = vmatprep.subr.bf16.mxu0 0
      %1721 = vmatpush1.bf16.msra.mxu0 0
      %1722 = vmatprep.subr.bf16.mxu0 0
      %1723 = vmatpush1.bf16.msra.mxu0 0
      %1724 = vmatprep.subr.bf16.mxu0 0
      %1725 = vmatpush1.bf16.msra.mxu0 0
      %1726 = vmatprep.subr.bf16.mxu0 0
      %1727 = vmatpush1.bf16.msra.mxu0 0
      %1728 = vmatprep.subr.bf16.mxu0 0
      %1729 = vmatpush1.bf16.msra.mxu0 0
      %1730 = vmatprep.subr.bf16.mxu0 0
      %1731 = vmatpush1.bf16.msra.mxu0 0
      %1732 = vmatprep.subr.bf16.mxu0 0
      %1733 = vmatpush1.bf16.msra.mxu0 0
      %1734 = vmatprep.subr.bf16.mxu0 0
      %1735 = vmatpush1.bf16.msra.mxu0 0
      %1736 = vmatprep.subr.bf16.mxu0 0
      %1737 = vmatpush1.bf16.msra.mxu0 0
      %1738 = vmatprep.subr.bf16.mxu0 0
      %1739 = vmatpush1.bf16.msra.mxu0 0
      %1740 = vmatprep.subr.bf16.mxu0 0
      %1741 = vmatpush1.bf16.msra.mxu0 0
      %1742 = vmatprep.subr.bf16.mxu0 0
      %1743 = vmatpush1.bf16.msra.mxu0 0
      %1744 = vmatprep.subr.bf16.mxu0 0
      %1745 = vmatpush1.bf16.msra.mxu0 0
      %1746 = vmatprep.subr.bf16.mxu0 0
      %1747 = vmatpush1.bf16.msra.mxu0 0
      %1748 = vmatprep.mubr.bf16.mxu0 0
      %1749 = vmatmul.mubr.bf16.gmra.mrb[0].mxu0 %v1711
      %v1750 = vpop.f32.mrb[0].mxu0
      %v1751 = vadd.f32 0.0, %v1750
      %v1752 = vpop.f32.mrb[0].mxu0
      %v1753 = vpop.f32.mrb[0].mxu0
      %v1754 = vpop.f32.mrb[0].mxu0
      %1755 = vdwg.mxu0
      %1757 = vrot.lane.b32.xlu0 %v1527, 16
      %v1758 = vpop.permute.xlu0 %1757
      %1761 = vrot.lane.b32.xlu0 %v1639, 32
      %v1762 = vpop.permute.xlu0 %1761
      %1765 = vrot.lane.b32.xlu0 %v1751, 48
      %v1766 = vpop.permute.xlu0 %1765
      %v1768 = vsel %vm1310, %v1414, %v1758
      %vm1769 = vcmask 261120
      %v1770 = vsel %vm1769, %v1768, %v1762
      %vm1771 = vcmask 392192
      %v1772 = vsel %vm1771, %v1770, %v1766
      %v1773 = vpack.c.bf16 %v1772, %v1772
      %v1774 = vld [vmem:[%s1087] sm:$0xf]
      %v1775 = vld [vmem:[%s1087 + $0x4] sm:$0xf]
      %v1776 = vld [vmem:[%s1087 + $0x8] sm:$0xf]
      %v1777 = vld [vmem:[%s1087 + $0xc] sm:$0xf]
      %v1778 = vld [vmem:[%s1087 + $0x10] sm:$0xf]
      %v1779 = vld [vmem:[%s1087 + $0x14] sm:$0xf]
      %v1780 = vld [vmem:[%s1087 + $0x18] sm:$0xf]
      %v1781 = vld [vmem:[%s1087 + $0x1c] sm:$0xf]
      %v1790 = vunpack.c.l.b16 %v1774
      %v1791 = vunpack.c.l.b16 %v1775
      %v1792 = vunpack.c.l.b16 %v1776
      %v1793 = vunpack.c.l.b16 %v1777
      %v1794 = vunpack.c.l.b16 %v1778
      %v1795 = vunpack.c.l.b16 %v1779
      %v1796 = vunpack.c.l.b16 %v1780
      %v1797 = vunpack.c.l.b16 %v1781
      %v1798 = vpack.c.b16 %v1791, %v1790
      %v1799 = vpack.c.b16 %v1793, %v1792
      %v1800 = vpack.c.b16 %v1795, %v1794
      %v1801 = vpack.c.b16 %v1797, %v1796
      %v1807 = vsel %vm1162, %v1773, 0
      %1809 = vmatprep.subr.bf16.mxu0 0
      %1810 = vmatpush1.bf16.msra.mxu0 %v1798
      %1811 = vmatprep.subr.bf16.mxu0 0
      %1812 = vmatpush1.bf16.msra.mxu0 %v1799
      %1813 = vmatprep.subr.bf16.mxu0 0
      %1814 = vmatpush1.bf16.msra.mxu0 %v1800
      %1815 = vmatprep.subr.bf16.mxu0 0
      %1816 = vmatpush1.bf16.msra.mxu0 %v1801
      %1817 = vmatprep.subr.bf16.mxu0 0
      %1818 = vmatpush1.bf16.msra.mxu0 0
      %1819 = vmatprep.subr.bf16.mxu0 0
      %1820 = vmatpush1.bf16.msra.mxu0 0
      %1821 = vmatprep.subr.bf16.mxu0 0
      %1822 = vmatpush1.bf16.msra.mxu0 0
      %1823 = vmatprep.subr.bf16.mxu0 0
      %1824 = vmatpush1.bf16.msra.mxu0 0
      %1825 = vmatprep.subr.bf16.mxu0 0
      %1826 = vmatpush1.bf16.msra.mxu0 0
      %1827 = vmatprep.subr.bf16.mxu0 0
      %1828 = vmatpush1.bf16.msra.mxu0 0
      %1829 = vmatprep.subr.bf16.mxu0 0
      %1830 = vmatpush1.bf16.msra.mxu0 0
      %1831 = vmatprep.subr.bf16.mxu0 0
      %1832 = vmatpush1.bf16.msra.mxu0 0
      %1833 = vmatprep.subr.bf16.mxu0 0
      %1834 = vmatpush1.bf16.msra.mxu0 0
      %1835 = vmatprep.subr.bf16.mxu0 0
      %1836 = vmatpush1.bf16.msra.mxu0 0
      %1837 = vmatprep.subr.bf16.mxu0 0
      %1838 = vmatpush1.bf16.msra.mxu0 0
      %1839 = vmatprep.subr.bf16.mxu0 0
      %1840 = vmatpush1.bf16.msra.mxu0 0
      %1841 = vmatprep.mubr.bf16.mxu0 0
      %1842 = vmatmul.mubr.bf16.gmra.mrb[0].mxu0 %v1807
      %v1843 = vpop.f32.mrb[0].mxu0
      %v1844 = vadd.f32 0.0, %v1843
      %v1845 = vpop.f32.mrb[0].mxu0
      %v1846 = vpop.f32.mrb[0].mxu0
      %v1847 = vpop.f32.mrb[0].mxu0
      %1848 = vdwg.mxu0
      %v1849 = vadd.f32 %v1156, %v1844
      %v1850 = vld [vmem:[%s1090] sm:$0x1]
      %v1852 = vlaneseq
      %v1853 = vshrl.u32 %v1852, 7
      %v1854 = vsub.s32 0, %v1853
      %v1855 = vrot.slane %v1850, %v1854
      %v1857 = vadd.f32 %v1849, %v1855
      %v1858 = vld [vmem:[%s1093] sm:$0x1]
      %v1859 = vld [vmem:[%s1096] sm:$0x1]
      %v1860 = vsel %vm1162, %v1857, 0.0
      %1861 = vadd.xlane.f32.xlu0 %v1860
      %v1862 = vpop.xlane.xlu0 %1861
      %v1863 = vmul.f32 %v1862, %v1166
      %v1864 = vsub.f32 %v1857, %v1863
      %v1865 = vmul.f32 %v1864, %v1864
      %v1866 = vsel %vm1162, %v1865, 0.0
      %1867 = vadd.xlane.f32.xlu0 %v1866
      %v1868 = vpop.xlane.xlu0 %1867
      %v1869 = vmul.f32 %v1868, %v1166
      %v1870 = vadd.f32 %v1869, 1e-05
      %v1871 = vrsqrt.pop %v1870
      %v1872 = vmul.f32 %v1864, %v1871
      %v1874 = vlaneseq
      %v1875 = vshrl.u32 %v1874, 7
      %v1876 = vsub.s32 0, %v1875
      %v1877 = vrot.slane %v1858, %v1876
      %v1879 = vmul.f32 %v1872, %v1877
      %v1881 = vlaneseq
      %v1882 = vshrl.u32 %v1881, 7
      %v1883 = vsub.s32 0, %v1882
      %v1884 = vrot.slane %v1859, %v1883
      %v1886 = vadd.f32 %v1879, %v1884
      %v1887 = vpack.c.bf16 %v1886, %v1886
      %v1888 = vld [vmem:[%s1101] sm:$0xf]
      %v1889 = vld [vmem:[%s1101 + $0x4] sm:$0xf]
      %v1890 = vld [vmem:[%s1101 + $0x8] sm:$0xf]
      %v1891 = vld [vmem:[%s1101 + $0xc] sm:$0xf]
      %v1892 = vld [vmem:[%s1101 + $0x10] sm:$0xf]
      %v1893 = vld [vmem:[%s1101 + $0x14] sm:$0xf]
      %v1894 = vld [vmem:[%s1101 + $0x18] sm:$0xf]
      %v1895 = vld [vmem:[%s1101 + $0x1c] sm:$0xf]
      %v1896 = vld [vmem:[%s1104] sm:$0x1]
      %v1898 = vlaneseq
      %v1899 = vshrl.u32 %v1898, 7
      %v1900 = vsub.s32 0, %v1899
      %v1901 = vrot.slane %v1896, %v1900
      %v1911 = vunpack.c.l.b16 %v1888
      %v1912 = vunpack.c.l.b16 %v1889
      %v1913 = vunpack.c.l.b16 %v1890
      %v1914 = vunpack.c.l.b16 %v1891
      %v1915 = vunpack.c.l.b16 %v1892
      %v1916 = vunpack.c.l.b16 %v1893
      %v1917 = vunpack.c.l.b16 %v1894
      %v1918 = vunpack.c.l.b16 %v1895
      %v1919 = vpack.c.b16 %v1912, %v1911
      %v1920 = vpack.c.b16 %v1914, %v1913
      %v1921 = vpack.c.b16 %v1916, %v1915
      %v1922 = vpack.c.b16 %v1918, %v1917
      %v1928 = vsel %vm1162, %v1887, 0
      %1930 = vmatprep.subr.bf16.mxu0 0
      %1931 = vmatpush1.bf16.msra.mxu0 %v1919
      %1932 = vmatprep.subr.bf16.mxu0 0
      %1933 = vmatpush1.bf16.msra.mxu0 %v1920
      %1934 = vmatprep.subr.bf16.mxu0 0
      %1935 = vmatpush1.bf16.msra.mxu0 %v1921
      %1936 = vmatprep.subr.bf16.mxu0 0
      %1937 = vmatpush1.bf16.msra.mxu0 %v1922
      %1938 = vmatprep.subr.bf16.mxu0 0
      %1939 = vmatpush1.bf16.msra.mxu0 0
      %1940 = vmatprep.subr.bf16.mxu0 0
      %1941 = vmatpush1.bf16.msra.mxu0 0
      %1942 = vmatprep.subr.bf16.mxu0 0
      %1943 = vmatpush1.bf16.msra.mxu0 0
      %1944 = vmatprep.subr.bf16.mxu0 0
      %1945 = vmatpush1.bf16.msra.mxu0 0
      %1946 = vmatprep.subr.bf16.mxu0 0
      %1947 = vmatpush1.bf16.msra.mxu0 0
      %1948 = vmatprep.subr.bf16.mxu0 0
      %1949 = vmatpush1.bf16.msra.mxu0 0
      %1950 = vmatprep.subr.bf16.mxu0 0
      %1951 = vmatpush1.bf16.msra.mxu0 0
      %1952 = vmatprep.subr.bf16.mxu0 0
      %1953 = vmatpush1.bf16.msra.mxu0 0
      %1954 = vmatprep.subr.bf16.mxu0 0
      %1955 = vmatpush1.bf16.msra.mxu0 0
      %1956 = vmatprep.subr.bf16.mxu0 0
      %1957 = vmatpush1.bf16.msra.mxu0 0
      %1958 = vmatprep.subr.bf16.mxu0 0
      %1959 = vmatpush1.bf16.msra.mxu0 0
      %1960 = vmatprep.subr.bf16.mxu0 0
      %1961 = vmatpush1.bf16.msra.mxu0 0
      %1962 = vmatprep.mubr.bf16.mxu0 0
      %1963 = vmatmul.mubr.bf16.gmra.mrb[0].mxu0 %v1928
      %v1964 = vpop.f32.mrb[0].mxu0
      %v1965 = vadd.f32 %v1901, %v1964
      %v1966 = vpop.f32.mrb[0].mxu0
      %v1967 = vpop.f32.mrb[0].mxu0
      %v1968 = vpop.f32.mrb[0].mxu0
      %1969 = vdwg.mxu0
      %v1970 = vld [vmem:[%s1109] sm:$0xf]
      %v1971 = vld [vmem:[%s1109 + $0x4] sm:$0xf]
      %v1972 = vld [vmem:[%s1109 + $0x8] sm:$0xf]
      %v1973 = vld [vmem:[%s1109 + $0xc] sm:$0xf]
      %v1974 = vld [vmem:[%s1109 + $0x10] sm:$0xf]
      %v1975 = vld [vmem:[%s1109 + $0x14] sm:$0xf]
      %v1976 = vld [vmem:[%s1109 + $0x18] sm:$0xf]
      %v1977 = vld [vmem:[%s1109 + $0x1c] sm:$0xf]
      %v1978 = vld [vmem:[%s1112] sm:$0x1]
      %v1980 = vlaneseq
      %v1981 = vshrl.u32 %v1980, 7
      %v1982 = vsub.s32 0, %v1981
      %v1983 = vrot.slane %v1978, %v1982
      %v1993 = vunpack.c.l.b16 %v1970
      %v1994 = vunpack.c.l.b16 %v1971
      %v1995 = vunpack.c.l.b16 %v1972
      %v1996 = vunpack.c.l.b16 %v1973
      %v1997 = vunpack.c.l.b16 %v1974
      %v1998 = vunpack.c.l.b16 %v1975
      %v1999 = vunpack.c.l.b16 %v1976
      %v2000 = vunpack.c.l.b16 %v1977
      %v2001 = vpack.c.b16 %v1994, %v1993
      %v2002 = vpack.c.b16 %v1996, %v1995
      %v2003 = vpack.c.b16 %v1998, %v1997
      %v2004 = vpack.c.b16 %v2000, %v1999
      %v2010 = vsel %vm1162, %v1159, 0
      %2012 = vmatprep.subr.bf16.mxu0 0
      %2013 = vmatpush1.bf16.msra.mxu0 %v2001
      %2014 = vmatprep.subr.bf16.mxu0 0
      %2015 = vmatpush1.bf16.msra.mxu0 %v2002
      %2016 = vmatprep.subr.bf16.mxu0 0
      %2017 = vmatpush1.bf16.msra.mxu0 %v2003
      %2018 = vmatprep.subr.bf16.mxu0 0
      %2019 = vmatpush1.bf16.msra.mxu0 %v2004
      %2020 = vmatprep.subr.bf16.mxu0 0
      %2021 = vmatpush1.bf16.msra.mxu0 0
      %2022 = vmatprep.subr.bf16.mxu0 0
      %2023 = vmatpush1.bf16.msra.mxu0 0
      %2024 = vmatprep.subr.bf16.mxu0 0
      %2025 = vmatpush1.bf16.msra.mxu0 0
      %2026 = vmatprep.subr.bf16.mxu0 0
      %2027 = vmatpush1.bf16.msra.mxu0 0
      %2028 = vmatprep.subr.bf16.mxu0 0
      %2029 = vmatpush1.bf16.msra.mxu0 0
      %2030 = vmatprep.subr.bf16.mxu0 0
      %2031 = vmatpush1.bf16.msra.mxu0 0
      %2032 = vmatprep.subr.bf16.mxu0 0
      %2033 = vmatpush1.bf16.msra.mxu0 0
      %2034 = vmatprep.subr.bf16.mxu0 0
      %2035 = vmatpush1.bf16.msra.mxu0 0
      %2036 = vmatprep.subr.bf16.mxu0 0
      %2037 = vmatpush1.bf16.msra.mxu0 0
      %2038 = vmatprep.subr.bf16.mxu0 0
      %2039 = vmatpush1.bf16.msra.mxu0 0
      %2040 = vmatprep.subr.bf16.mxu0 0
      %2041 = vmatpush1.bf16.msra.mxu0 0
      %2042 = vmatprep.subr.bf16.mxu0 0
      %2043 = vmatpush1.bf16.msra.mxu0 0
      %2044 = vmatprep.mubr.bf16.mxu0 0
      %2045 = vmatmul.mubr.bf16.gmra.mrb[0].mxu0 %v2010
      %v2046 = vpop.f32.mrb[0].mxu0
      %v2047 = vadd.f32 %v1983, %v2046
      %v2048 = vpop.f32.mrb[0].mxu0
      %v2049 = vpop.f32.mrb[0].mxu0
      %v2050 = vadd.f32 %v1983, %v2049
      %v2051 = vpop.f32.mrb[0].mxu0
      %2052 = vdwg.mxu0
      %v2053 = vld [vmem:[%s1067] sm:$0x1]
      %v2054 = vpack.c.bf16 %v1965, %v1965
      %v2055 = vpack.c.bf16 %v2050, %v2047
      %v2057 = vsel %vm1310, %v2054, 0
      %v2060 = vsel %vm1310, %v2055, 0
      %2062 = vmatprep.subr.bf16.mxu0 0
      %2063 = vmatpush1.bf16.xpose.msra.mxu0 %v2060
      %2064 = vmatprep.subr.bf16.mxu0 0
      %2065 = vmatpush1.bf16.xpose.msra.mxu0 0
      %2066 = vmatprep.subr.bf16.mxu0 0
      %2067 = vmatpush1.bf16.xpose.msra.mxu0 0
      %2068 = vmatprep.subr.bf16.mxu0 0
      %2069 = vmatpush1.bf16.xpose.msra.mxu0 0
      %2070 = vmatprep.subr.bf16.mxu0 0
      %2071 = vmatpush1.bf16.xpose.msra.mxu0 0
      %2072 = vmatprep.subr.bf16.mxu0 0
      %2073 = vmatpush1.bf16.xpose.msra.mxu0 0
      %2074 = vmatprep.subr.bf16.mxu0 0
      %2075 = vmatpush1.bf16.xpose.msra.mxu0 0
      %2076 = vmatprep.subr.bf16.mxu0 0
      %2077 = vmatpush1.bf16.xpose.msra.mxu0 0
      %2078 = vmatprep.subr.bf16.mxu0 0
      %2079 = vmatpush1.bf16.xpose.msra.mxu0 0
      %2080 = vmatprep.subr.bf16.mxu0 0
      %2081 = vmatpush1.bf16.xpose.msra.mxu0 0
      %2082 = vmatprep.subr.bf16.mxu0 0
      %2083 = vmatpush1.bf16.xpose.msra.mxu0 0
      %2084 = vmatprep.subr.bf16.mxu0 0
      %2085 = vmatpush1.bf16.xpose.msra.mxu0 0
      %2086 = vmatprep.subr.bf16.mxu0 0
      %2087 = vmatpush1.bf16.xpose.msra.mxu0 0
      %2088 = vmatprep.subr.bf16.mxu0 0
      %2089 = vmatpush1.bf16.xpose.msra.mxu0 0
      %2090 = vmatprep.subr.bf16.mxu0 0
      %2091 = vmatpush1.bf16.xpose.msra.mxu0 0
      %2092 = vmatprep.subr.bf16.mxu0 0
      %2093 = vmatpush1.bf16.xpose.msra.mxu0 0
      %2094 = vmatprep.mubr.bf16.mxu0 0
      %2095 = vmatmul.mubr.bf16.gmra.mrb[0].mxu0 %v2057
      %v2096 = vpop.f32.mrb[0].mxu0
      %v2097 = vadd.f32 0.0, %v2096
      %v2098 = vpop.f32.mrb[0].mxu0
      %v2099 = vpop.f32.mrb[0].mxu0
      %v2100 = vpop.f32.mrb[0].mxu0
      %2101 = vdwg.mxu0
      %v2102 = vmul.f32 %v2097, 0.25
      %v2104 = vlaneseq
      %v2105 = vshrl.u32 %v2104, 7
      %v2106 = vsub.s32 0, %v2105
      %v2107 = vrot.slane %v2053, %v2106
      %v2109 = vadd.f32 %v2102, %v2107
      %v2110 = vsel %vm1310, %v2109, -inf
      %2111 = vmax.xlane.f32.xlu0 %v2110
      %v2112 = vpop.xlane.xlu0 %2111
      %v2113 = vsub.f32 %v2109, %v2112
      %v2114 = vmul.f32 %v2113, 1.442695
      %v2115 = vpow.pop %v2114
      %v2116 = vsel %vm1310, %v2115, 0.0
      %2117 = vadd.xlane.f32.xlu0 %v2116
      %v2118 = vpop.xlane.xlu0 %2117
      %v2119 = vrcp.pop %v2118
      %v2120 = vmul.f32 %v2115, %v2119
      %v2121 = vpack.c.bf16 %v2120, %v2120
      %2123 = vrot.lane.b32.xlu0 %v2055, 64
      %v2124 = vpop.permute.xlu0 %2123
      %v2127 = vsel %vm1310, %v2121, 0
      %2129 = vmatprep.subr.bf16.mxu0 0
      %2130 = vmatpush1.bf16.msra.mxu0 %v2124
      %2131 = vmatprep.subr.bf16.mxu0 0
      %2132 = vmatpush1.bf16.msra.mxu0 0
      %2133 = vmatprep.subr.bf16.mxu0 0
      %2134 = vmatpush1.bf16.msra.mxu0 0
      %2135 = vmatprep.subr.bf16.mxu0 0
      %2136 = vmatpush1.bf16.msra.mxu0 0
      %2137 = vmatprep.subr.bf16.mxu0 0
      %2138 = vmatpush1.bf16.msra.mxu0 0
      %2139 = vmatprep.subr.bf16.mxu0 0
      %2140 = vmatpush1.bf16.msra.mxu0 0
      %2141 = vmatprep.subr.bf16.mxu0 0
      %2142 = vmatpush1.bf16.msra.mxu0 0
      %2143 = vmatprep.subr.bf16.mxu0 0
      %2144 = vmatpush1.bf16.msra.mxu0 0
      %2145 = vmatprep.subr.bf16.mxu0 0
      %2146 = vmatpush1.bf16.msra.mxu0 0
      %2147 = vmatprep.subr.bf16.mxu0 0
      %2148 = vmatpush1.bf16.msra.mxu0 0
      %2149 = vmatprep.subr.bf16.mxu0 0
      %2150 = vmatpush1.bf16.msra.mxu0 0
      %2151 = vmatprep.subr.bf16.mxu0 0
      %2152 = vmatpush1.bf16.msra.mxu0 0
      %2153 = vmatprep.subr.bf16.mxu0 0
      %2154 = vmatpush1.bf16.msra.mxu0 0
      %2155 = vmatprep.subr.bf16.mxu0 0
      %2156 = vmatpush1.bf16.msra.mxu0 0
      %2157 = vmatprep.subr.bf16.mxu0 0
      %2158 = vmatpush1.bf16.msra.mxu0 0
      %2159 = vmatprep.subr.bf16.mxu0 0
      %2160 = vmatpush1.bf16.msra.mxu0 0
      %2161 = vmatprep.mubr.bf16.mxu0 0
      %2162 = vmatmul.mubr.bf16.gmra.mrb[0].mxu0 %v2127
      %v2163 = vpop.f32.mrb[0].mxu0
      %v2164 = vadd.f32 0.0, %v2163
      %v2165 = vpop.f32.mrb[0].mxu0
      %v2166 = vpop.f32.mrb[0].mxu0
      %v2167 = vpop.f32.mrb[0].mxu0
      %2168 = vdwg.mxu0
      %2170 = vrot.lane.b32.xlu0 %v2054, 112
      %v2171 = vpop.permute.xlu0 %2170
      %2172 = vrot.lane.b32.xlu0 %v2055, 112
      %v2173 = vpop.permute.xlu0 %2172
      %v2175 = vsel %vm1310, %v2171, 0
      %v2178 = vsel %vm1310, %v2173, 0
      %2180 = vmatprep.subr.bf16.mxu0 0
      %2181 = vmatpush1.bf16.xpose.msra.mxu0 %v2178
      %2182 = vmatprep.subr.bf16.mxu0 0
      %2183 = vmatpush1.bf16.xpose.msra.mxu0 0
      %2184 = vmatprep.subr.bf16.mxu0 0
      %2185 = vmatpush1.bf16.xpose.msra.mxu0 0
      %2186 = vmatprep.subr.bf16.mxu0 0
      %2187 = vmatpush1.bf16.xpose.msra.mxu0 0
      %2188 = vmatprep.subr.bf16.mxu0 0
      %2189 = vmatpush1.bf16.xpose.msra.mxu0 0
      %2190 = vmatprep.subr.bf16.mxu0 0
      %2191 = vmatpush1.bf16.xpose.msra.mxu0 0
      %2192 = vmatprep.subr.bf16.mxu0 0
      %2193 = vmatpush1.bf16.xpose.msra.mxu0 0
      %2194 = vmatprep.subr.bf16.mxu0 0
      %2195 = vmatpush1.bf16.xpose.msra.mxu0 0
      %2196 = vmatprep.subr.bf16.mxu0 0
      %2197 = vmatpush1.bf16.xpose.msra.mxu0 0
      %2198 = vmatprep.subr.bf16.mxu0 0
      %2199 = vmatpush1.bf16.xpose.msra.mxu0 0
      %2200 = vmatprep.subr.bf16.mxu0 0
      %2201 = vmatpush1.bf16.xpose.msra.mxu0 0
      %2202 = vmatprep.subr.bf16.mxu0 0
      %2203 = vmatpush1.bf16.xpose.msra.mxu0 0
      %2204 = vmatprep.subr.bf16.mxu0 0
      %2205 = vmatpush1.bf16.xpose.msra.mxu0 0
      %2206 = vmatprep.subr.bf16.mxu0 0
      %2207 = vmatpush1.bf16.xpose.msra.mxu0 0
      %2208 = vmatprep.subr.bf16.mxu0 0
      %2209 = vmatpush1.bf16.xpose.msra.mxu0 0
      %2210 = vmatprep.subr.bf16.mxu0 0
      %2211 = vmatpush1.bf16.xpose.msra.mxu0 0
      %2212 = vmatprep.mubr.bf16.mxu0 0
      %2213 = vmatmul.mubr.bf16.gmra.mrb[0].mxu0 %v2175
      %v2214 = vpop.f32.mrb[0].mxu0
      %v2215 = vadd.f32 0.0, %v2214
      %v2216 = vpop.f32.mrb[0].mxu0
      %v2217 = vpop.f32.mrb[0].mxu0
      %v2218 = vpop.f32.mrb[0].mxu0
      %2219 = vdwg.mxu0
      %v2220 = vmul.f32 %v2215, 0.25
      %v2221 = vadd.f32 %v2220, %v2107
      %v2222 = vsel %vm1310, %v2221, -inf
      %2223 = vmax.xlane.f32.xlu0 %v2222
      %v2224 = vpop.xlane.xlu0 %2223
      %v2225 = vsub.f32 %v2221, %v2224
      %v2226 = vmul.f32 %v2225, 1.442695
      %v2227 = vpow.pop %v2226
      %v2228 = vsel %vm1310, %v2227, 0.0
      %2229 = vadd.xlane.f32.xlu0 %v2228
      %v2230 = vpop.xlane.xlu0 %2229
      %v2231 = vrcp.pop %v2230
      %v2232 = vmul.f32 %v2227, %v2231
      %v2233 = vpack.c.bf16 %v2232, %v2232
      %2234 = vrot.lane.b32.xlu0 %v2055, 48
      %v2235 = vpop.permute.xlu0 %2234
      %v2238 = vsel %vm1310, %v2233, 0
      %2240 = vmatprep.subr.bf16.mxu0 0
      %2241 = vmatpush1.bf16.msra.mxu0 %v2235
      %2242 = vmatprep.subr.bf16.mxu0 0
      %2243 = vmatpush1.bf16.msra.mxu0 0
      %2244 = vmatprep.subr.bf16.mxu0 0
      %2245 = vmatpush1.bf16.msra.mxu0 0
      %2246 = vmatprep.subr.bf16.mxu0 0
      %2247 = vmatpush1.bf16.msra.mxu0 0
      %2248 = vmatprep.subr.bf16.mxu0 0
      %2249 = vmatpush1.bf16.msra.mxu0 0
      %2250 = vmatprep.subr.bf16.mxu0 0
      %2251 = vmatpush1.bf16.msra.mxu0 0
      %2252 = vmatprep.subr.bf16.mxu0 0
      %2253 = vmatpush1.bf16.msra.mxu0 0
      %2254 = vmatprep.subr.bf16.mxu0 0
      %2255 = vmatpush1.bf16.msra.mxu0 0
      %2256 = vmatprep.subr.bf16.mxu0 0
      %2257 = vmatpush1.bf16.msra.mxu0 0
      %2258 = vmatprep.subr.bf16.mxu0 0
      %2259 = vmatpush1.bf16.msra.mxu0 0
      %2260 = vmatprep.subr.bf16.mxu0 0
      %2261 = vmatpush1.bf16.msra.mxu0 0
      %2262 = vmatprep.subr.bf16.mxu0 0
      %2263 = vmatpush1.bf16.msra.mxu0 0
      %2264 = vmatprep.subr.bf16.mxu0 0
      %2265 = vmatpush1.bf16.msra.mxu0 0
      %2266 = vmatprep.subr.bf16.mxu0 0
      %2267 = vmatpush1.bf16.msra.mxu0 0
      %2268 = vmatprep.subr.bf16.mxu0 0
      %2269 = vmatpush1.bf16.msra.mxu0 0
      %2270 = vmatprep.subr.bf16.mxu0 0
      %2271 = vmatpush1.bf16.msra.mxu0 0
      %2272 = vmatprep.mubr.bf16.mxu0 0
      %2273 = vmatmul.mubr.bf16.gmra.mrb[0].mxu0 %v2238
      %v2274 = vpop.f32.mrb[0].mxu0
      %v2275 = vadd.f32 0.0, %v2274
      %v2276 = vpop.f32.mrb[0].mxu0
      %v2277 = vpop.f32.mrb[0].mxu0
      %v2278 = vpop.f32.mrb[0].mxu0
      %2279 = vdwg.mxu0
      %2280 = vrot.lane.b32.xlu0 %v2054, 96
      %v2281 = vpop.permute.xlu0 %2280
      %2282 = vrot.lane.b32.xlu0 %v2055, 96
      %v2283 = vpop.permute.xlu0 %2282
      %v2285 = vsel %vm1310, %v2281, 0
      %v2288 = vsel %vm1310, %v2283, 0
      %2290 = vmatprep.subr.bf16.mxu0 0
      %2291 = vmatpush1.bf16.xpose.msra.mxu0 %v2288
      %2292 = vmatprep.subr.bf16.mxu0 0
      %2293 = vmatpush1.bf16.xpose.msra.mxu0 0
      %2294 = vmatprep.subr.bf16.mxu0 0
      %2295 = vmatpush1.bf16.xpose.msra.mxu0 0
      %2296 = vmatprep.subr.bf16.mxu0 0
      %2297 = vmatpush1.bf16.xpose.msra.mxu0 0
      %2298 = vmatprep.subr.bf16.mxu0 0
      %2299 = vmatpush1.bf16.xpose.msra.mxu0 0
      %2300 = vmatprep.subr.bf16.mxu0 0
      %2301 = vmatpush1.bf16.xpose.msra.mxu0 0
      %2302 = vmatprep.subr.bf16.mxu0 0
      %2303 = vmatpush1.bf16.xpose.msra.mxu0 0
      %2304 = vmatprep.subr.bf16.mxu0 0
      %2305 = vmatpush1.bf16.xpose.msra.mxu0 0
      %2306 = vmatprep.subr.bf16.mxu0 0
      %2307 = vmatpush1.bf16.xpose.msra.mxu0 0
      %2308 = vmatprep.subr.bf16.mxu0 0
      %2309 = vmatpush1.bf16.xpose.msra.mxu0 0
      %2310 = vmatprep.subr.bf16.mxu0 0
      %2311 = vmatpush1.bf16.xpose.msra.mxu0 0
      %2312 = vmatprep.subr.bf16.mxu0 0
      %2313 = vmatpush1.bf16.xpose.msra.mxu0 0
      %2314 = vmatprep.subr.bf16.mxu0 0
      %2315 = vmatpush1.bf16.xpose.msra.mxu0 0
      %2316 = vmatprep.subr.bf16.mxu0 0
      %2317 = vmatpush1.bf16.xpose.msra.mxu0 0
      %2318 = vmatprep.subr.bf16.mxu0 0
      %2319 = vmatpush1.bf16.xpose.msra.mxu0 0
      %2320 = vmatprep.subr.bf16.mxu0 0
      %2321 = vmatpush1.bf16.xpose.msra.mxu0 0
      %2322 = vmatprep.mubr.bf16.mxu0 0
      %2323 = vmatmul.mubr.bf16.gmra.mrb[0].mxu0 %v2285
      %v2324 = vpop.f32.mrb[0].mxu0
      %v2325 = vadd.f32 0.0, %v2324
      %v2326 = vpop.f32.mrb[0].mxu0
      %v2327 = vpop.f32.mrb[0].mxu0
      %v2328 = vpop.f32.mrb[0].mxu0
      %2329 = vdwg.mxu0
      %v2330 = vmul.f32 %v2325, 0.25
      %v2331 = vadd.f32 %v2330, %v2107
      %v2332 = vsel %vm1310, %v2331, -inf
      %2333 = vmax.xlane.f32.xlu0 %v2332
      %v2334 = vpop.xlane.xlu0 %2333
      %v2335 = vsub.f32 %v2331, %v2334
      %v2336 = vmul.f32 %v2335, 1.442695
      %v2337 = vpow.pop %v2336
      %v2338 = vsel %vm1310, %v2337, 0.0
      %2339 = vadd.xlane.f32.xlu0 %v2338
      %v2340 = vpop.xlane.xlu0 %2339
      %v2341 = vrcp.pop %v2340
      %v2342 = vmul.f32 %v2337, %v2341
      %v2343 = vpack.c.bf16 %v2342, %v2342
      %2344 = vrot.lane.b32.xlu0 %v2055, 32
      %v2345 = vpop.permute.xlu0 %2344
      %v2348 = vsel %vm1310, %v2343, 0
      %2350 = vmatprep.subr.bf16.mxu0 0
      %2351 = vmatpush1.bf16.msra.mxu0 %v2345
      %2352 = vmatprep.subr.bf16.mxu0 0
      %2353 = vmatpush1.bf16.msra.mxu0 0
      %2354 = vmatprep.subr.bf16.mxu0 0
      %2355 = vmatpush1.bf16.msra.mxu0 0
      %2356 = vmatprep.subr.bf16.mxu0 0
      %2357 = vmatpush1.bf16.msra.mxu0 0
      %2358 = vmatprep.subr.bf16.mxu0 0
      %2359 = vmatpush1.bf16.msra.mxu0 0
      %2360 = vmatprep.subr.bf16.mxu0 0
      %2361 = vmatpush1.bf16.msra.mxu0 0
      %2362 = vmatprep.subr.bf16.mxu0 0
      %2363 = vmatpush1.bf16.msra.mxu0 0
      %2364 = vmatprep.subr.bf16.mxu0 0
      %2365 = vmatpush1.bf16.msra.mxu0 0
      %2366 = vmatprep.subr.bf16.mxu0 0
      %2367 = vmatpush1.bf16.msra.mxu0 0
      %2368 = vmatprep.subr.bf16.mxu0 0
      %2369 = vmatpush1.bf16.msra.mxu0 0
      %2370 = vmatprep.subr.bf16.mxu0 0
      %2371 = vmatpush1.bf16.msra.mxu0 0
      %2372 = vmatprep.subr.bf16.mxu0 0
      %2373 = vmatpush1.bf16.msra.mxu0 0
      %2374 = vmatprep.subr.bf16.mxu0 0
      %2375 = vmatpush1.bf16.msra.mxu0 0
      %2376 = vmatprep.subr.bf16.mxu0 0
      %2377 = vmatpush1.bf16.msra.mxu0 0
      %2378 = vmatprep.subr.bf16.mxu0 0
      %2379 = vmatpush1.bf16.msra.mxu0 0
      %2380 = vmatprep.subr.bf16.mxu0 0
      %2381 = vmatpush1.bf16.msra.mxu0 0
      %2382 = vmatprep.mubr.bf16.mxu0 0
      %2383 = vmatmul.mubr.bf16.gmra.mrb[0].mxu0 %v2348
      %v2384 = vpop.f32.mrb[0].mxu0
      %v2385 = vadd.f32 0.0, %v2384
      %v2386 = vpop.f32.mrb[0].mxu0
      %v2387 = vpop.f32.mrb[0].mxu0
      %v2388 = vpop.f32.mrb[0].mxu0
      %2389 = vdwg.mxu0
      %2390 = vrot.lane.b32.xlu0 %v2054, 80
      %v2391 = vpop.permute.xlu0 %2390
      %2392 = vrot.lane.b32.xlu0 %v2055, 80
      %v2393 = vpop.permute.xlu0 %2392
      %v2395 = vsel %vm1310, %v2391, 0
      %v2398 = vsel %vm1310, %v2393, 0
      %2400 = vmatprep.subr.bf16.mxu0 0
      %2401 = vmatpush1.bf16.xpose.msra.mxu0 %v2398
      %2402 = vmatprep.subr.bf16.mxu0 0
      %2403 = vmatpush1.bf16.xpose.msra.mxu0 0
      %2404 = vmatprep.subr.bf16.mxu0 0
      %2405 = vmatpush1.bf16.xpose.msra.mxu0 0
      %2406 = vmatprep.subr.bf16.mxu0 0
      %2407 = vmatpush1.bf16.xpose.msra.mxu0 0
      %2408 = vmatprep.subr.bf16.mxu0 0
      %2409 = vmatpush1.bf16.xpose.msra.mxu0 0
      %2410 = vmatprep.subr.bf16.mxu0 0
      %2411 = vmatpush1.bf16.xpose.msra.mxu0 0
      %2412 = vmatprep.subr.bf16.mxu0 0
      %2413 = vmatpush1.bf16.xpose.msra.mxu0 0
      %2414 = vmatprep.subr.bf16.mxu0 0
      %2415 = vmatpush1.bf16.xpose.msra.mxu0 0
      %2416 = vmatprep.subr.bf16.mxu0 0
      %2417 = vmatpush1.bf16.xpose.msra.mxu0 0
      %2418 = vmatprep.subr.bf16.mxu0 0
      %2419 = vmatpush1.bf16.xpose.msra.mxu0 0
      %2420 = vmatprep.subr.bf16.mxu0 0
      %2421 = vmatpush1.bf16.xpose.msra.mxu0 0
      %2422 = vmatprep.subr.bf16.mxu0 0
      %2423 = vmatpush1.bf16.xpose.msra.mxu0 0
      %2424 = vmatprep.subr.bf16.mxu0 0
      %2425 = vmatpush1.bf16.xpose.msra.mxu0 0
      %2426 = vmatprep.subr.bf16.mxu0 0
      %2427 = vmatpush1.bf16.xpose.msra.mxu0 0
      %2428 = vmatprep.subr.bf16.mxu0 0
      %2429 = vmatpush1.bf16.xpose.msra.mxu0 0
      %2430 = vmatprep.subr.bf16.mxu0 0
      %2431 = vmatpush1.bf16.xpose.msra.mxu0 0
      %2432 = vmatprep.mubr.bf16.mxu0 0
      %2433 = vmatmul.mubr.bf16.gmra.mrb[0].mxu0 %v2395
      %v2434 = vpop.f32.mrb[0].mxu0
      %v2435 = vadd.f32 0.0, %v2434
      %v2436 = vpop.f32.mrb[0].mxu0
      %v2437 = vpop.f32.mrb[0].mxu0
      %v2438 = vpop.f32.mrb[0].mxu0
      %2439 = vdwg.mxu0
      %v2440 = vmul.f32 %v2435, 0.25
      %v2441 = vadd.f32 %v2440, %v2107
      %v2442 = vsel %vm1310, %v2441, -inf
      %2443 = vmax.xlane.f32.xlu0 %v2442
      %v2444 = vpop.xlane.xlu0 %2443
      %v2445 = vsub.f32 %v2441, %v2444
      %v2446 = vmul.f32 %v2445, 1.442695
      %v2447 = vpow.pop %v2446
      %v2448 = vsel %vm1310, %v2447, 0.0
      %2449 = vadd.xlane.f32.xlu0 %v2448
      %v2450 = vpop.xlane.xlu0 %2449
      %v2451 = vrcp.pop %v2450
      %v2452 = vmul.f32 %v2447, %v2451
      %v2453 = vpack.c.bf16 %v2452, %v2452
      %2454 = vrot.lane.b32.xlu0 %v2055, 16
      %v2455 = vpop.permute.xlu0 %2454
      %v2458 = vsel %vm1310, %v2453, 0
      %2460 = vmatprep.subr.bf16.mxu0 0
      %2461 = vmatpush1.bf16.msra.mxu0 %v2455
      %2462 = vmatprep.subr.bf16.mxu0 0
      %2463 = vmatpush1.bf16.msra.mxu0 0
      %2464 = vmatprep.subr.bf16.mxu0 0
      %2465 = vmatpush1.bf16.msra.mxu0 0
      %2466 = vmatprep.subr.bf16.mxu0 0
      %2467 = vmatpush1.bf16.msra.mxu0 0
      %2468 = vmatprep.subr.bf16.mxu0 0
      %2469 = vmatpush1.bf16.msra.mxu0 0
      %2470 = vmatprep.subr.bf16.mxu0 0
      %2471 = vmatpush1.bf16.msra.mxu0 0
      %2472 = vmatprep.subr.bf16.mxu0 0
      %2473 = vmatpush1.bf16.msra.mxu0 0
      %2474 = vmatprep.subr.bf16.mxu0 0
      %2475 = vmatpush1.bf16.msra.mxu0 0
      %2476 = vmatprep.subr.bf16.mxu0 0
      %2477 = vmatpush1.bf16.msra.mxu0 0
      %2478 = vmatprep.subr.bf16.mxu0 0
      %2479 = vmatpush1.bf16.msra.mxu0 0
      %2480 = vmatprep.subr.bf16.mxu0 0
      %2481 = vmatpush1.bf16.msra.mxu0 0
      %2482 = vmatprep.subr.bf16.mxu0 0
      %2483 = vmatpush1.bf16.msra.mxu0 0
      %2484 = vmatprep.subr.bf16.mxu0 0
      %2485 = vmatpush1.bf16.msra.mxu0 0
      %2486 = vmatprep.subr.bf16.mxu0 0
      %2487 = vmatpush1.bf16.msra.mxu0 0
      %2488 = vmatprep.subr.bf16.mxu0 0
      %2489 = vmatpush1.bf16.msra.mxu0 0
      %2490 = vmatprep.subr.bf16.mxu0 0
      %2491 = vmatpush1.bf16.msra.mxu0 0
      %2492 = vmatprep.mubr.bf16.mxu0 0
      %2493 = vmatmul.mubr.bf16.gmra.mrb[0].mxu0 %v2458
      %v2494 = vpop.f32.mrb[0].mxu0
      %v2495 = vadd.f32 0.0, %v2494
      %v2496 = vpop.f32.mrb[0].mxu0
      %v2497 = vpop.f32.mrb[0].mxu0
      %v2498 = vpop.f32.mrb[0].mxu0
      %2499 = vdwg.mxu0
      %2501 = vrot.lane.b32.xlu0 %v2275, 16
      %v2502 = vpop.permute.xlu0 %2501
      %2505 = vrot.lane.b32.xlu0 %v2385, 32
      %v2506 = vpop.permute.xlu0 %2505
      %2509 = vrot.lane.b32.xlu0 %v2495, 48
      %v2510 = vpop.permute.xlu0 %2509
      %v2512 = vsel %vm1310, %v2164, %v2502
      %v2513 = vsel %vm1769, %v2512, %v2506
      %v2514 = vsel %vm1771, %v2513, %v2510
      %v2515 = vpack.c.bf16 %v2514, %v2514
      %v2516 = vld [vmem:[%s1117] sm:$0xf]
      %v2517 = vld [vmem:[%s1117 + $0x4] sm:$0xf]
      %v2518 = vld [vmem:[%s1117 + $0x8] sm:$0xf]
      %v2519 = vld [vmem:[%s1117 + $0xc] sm:$0xf]
      %v2520 = vld [vmem:[%s1117 + $0x10] sm:$0xf]
      %v2521 = vld [vmem:[%s1117 + $0x14] sm:$0xf]
      %v2522 = vld [vmem:[%s1117 + $0x18] sm:$0xf]
      %v2523 = vld [vmem:[%s1117 + $0x1c] sm:$0xf]
      %v2532 = vunpack.c.l.b16 %v2516
      %v2533 = vunpack.c.l.b16 %v2517
      %v2534 = vunpack.c.l.b16 %v2518
      %v2535 = vunpack.c.l.b16 %v2519
      %v2536 = vunpack.c.l.b16 %v2520
      %v2537 = vunpack.c.l.b16 %v2521
      %v2538 = vunpack.c.l.b16 %v2522
      %v2539 = vunpack.c.l.b16 %v2523
      %v2540 = vpack.c.b16 %v2533, %v2532
      %v2541 = vpack.c.b16 %v2535, %v2534
      %v2542 = vpack.c.b16 %v2537, %v2536
      %v2543 = vpack.c.b16 %v2539, %v2538
      %v2549 = vsel %vm1162, %v2515, 0
      %2551 = vmatprep.subr.bf16.mxu0 0
      %2552 = vmatpush1.bf16.msra.mxu0 %v2540
      %2553 = vmatprep.subr.bf16.mxu0 0
      %2554 = vmatpush1.bf16.msra.mxu0 %v2541
      %2555 = vmatprep.subr.bf16.mxu0 0
      %2556 = vmatpush1.bf16.msra.mxu0 %v2542
      %2557 = vmatprep.subr.bf16.mxu0 0
      %2558 = vmatpush1.bf16.msra.mxu0 %v2543
      %2559 = vmatprep.subr.bf16.mxu0 0
      %2560 = vmatpush1.bf16.msra.mxu0 0
      %2561 = vmatprep.subr.bf16.mxu0 0
      %2562 = vmatpush1.bf16.msra.mxu0 0
      %2563 = vmatprep.subr.bf16.mxu0 0
      %2564 = vmatpush1.bf16.msra.mxu0 0
      %2565 = vmatprep.subr.bf16.mxu0 0
      %2566 = vmatpush1.bf16.msra.mxu0 0
      %2567 = vmatprep.subr.bf16.mxu0 0
      %2568 = vmatpush1.bf16.msra.mxu0 0
      %2569 = vmatprep.subr.bf16.mxu0 0
      %2570 = vmatpush1.bf16.msra.mxu0 0
      %2571 = vmatprep.subr.bf16.mxu0 0
      %2572 = vmatpush1.bf16.msra.mxu0 0
      %2573 = vmatprep.subr.bf16.mxu0 0
      %2574 = vmatpush1.bf16.msra.mxu0 0
      %2575 = vmatprep.subr.bf16.mxu0 0
      %2576 = vmatpush1.bf16.msra.mxu0 0
      %2577 = vmatprep.subr.bf16.mxu0 0
      %2578 = vmatpush1.bf16.msra.mxu0 0
      %2579 = vmatprep.subr.bf16.mxu0 0
      %2580 = vmatpush1.bf16.msra.mxu0 0
      %2581 = vmatprep.subr.bf16.mxu0 0
      %2582 = vmatpush1.bf16.msra.mxu0 0
      %2583 = vmatprep.mubr.bf16.mxu0 0
      %2584 = vmatmul.mubr.bf16.gmra.mrb[0].mxu0 %v2549
      %v2585 = vpop.f32.mrb[0].mxu0
      %v2586 = vadd.f32 0.0, %v2585
      %v2587 = vpop.f32.mrb[0].mxu0
      %v2588 = vpop.f32.mrb[0].mxu0
      %v2589 = vpop.f32.mrb[0].mxu0
      %2590 = vdwg.mxu0
      %v2591 = vadd.f32 %v1857, %v2586
      %v2592 = vld [vmem:[%s1120] sm:$0x1]
      %v2594 = vlaneseq
      %v2595 = vshrl.u32 %v2594, 7
      %v2596 = vsub.s32 0, %v2595
      %v2597 = vrot.slane %v2592, %v2596
      %v2599 = vadd.f32 %v2591, %v2597
      %v2600 = vld [vmem:[%s1123] sm:$0x1]
      %v2601 = vld [vmem:[%s1126] sm:$0x1]
      %v2602 = vsel %vm1162, %v2599, 0.0
      %2603 = vadd.xlane.f32.xlu0 %v2602
      %v2604 = vpop.xlane.xlu0 %2603
      %v2605 = vmul.f32 %v2604, %v1166
      %v2606 = vsub.f32 %v2599, %v2605
      %v2607 = vmul.f32 %v2606, %v2606
      %v2608 = vsel %vm1162, %v2607, 0.0
      %2609 = vadd.xlane.f32.xlu0 %v2608
      %v2610 = vpop.xlane.xlu0 %2609
      %v2611 = vmul.f32 %v2610, %v1166
      %v2612 = vadd.f32 %v2611, 1e-05
      %v2613 = vrsqrt.pop %v2612
      %v2614 = vmul.f32 %v2606, %v2613
      %v2616 = vlaneseq
      %v2617 = vshrl.u32 %v2616, 7
      %v2618 = vsub.s32 0, %v2617
      %v2619 = vrot.slane %v2600, %v2618
      %v2621 = vmul.f32 %v2614, %v2619
      %v2623 = vlaneseq
      %v2624 = vshrl.u32 %v2623, 7
      %v2625 = vsub.s32 0, %v2624
      %v2626 = vrot.slane %v2601, %v2625
      %v2628 = vadd.f32 %v2621, %v2626
      %v2629 = vpack.c.bf16 %v2628, %v2628
      %v2630 = vld [vmem:[%s1131] sm:$0xff]
      %v2631 = vld [vmem:[%s1131 + $0x8] sm:$0xff]
      %v2632 = vld [vmem:[%s1131 + $0x10] sm:$0xff]
      %v2633 = vld [vmem:[%s1131 + $0x18] sm:$0xff]
      %v2634 = vld [vmem:[%s1131 + $0x20] sm:$0xff]
      %v2635 = vld [vmem:[%s1131 + $0x28] sm:$0xff]
      %v2636 = vld [vmem:[%s1131 + $0x30] sm:$0xff]
      %v2637 = vld [vmem:[%s1131 + $0x38] sm:$0xff]
      %v2638 = vld [vmem:[%s1135] sm:$0x3]
      %v2640 = vlaneseq
      %v2641 = vshrl.u32 %v2640, 7
      %v2642 = vsub.s32 0, %v2641
      %v2643 = vrot.slane %v2638, %v2642
      %v2644 = vlaneseq
      %v2645 = vshrl.u32 %v2644, 7
      %v2646 = vsub.s32 1, %v2645
      %v2647 = vrot.slane %v2638, %v2646
      %v2658 = vunpack.c.l.b16 %v2630
      %v2659 = vunpack.c.h.b16 %v2630
      %v2660 = vunpack.c.l.b16 %v2631
      %v2661 = vunpack.c.h.b16 %v2631
      %v2662 = vunpack.c.l.b16 %v2632
      %v2663 = vunpack.c.h.b16 %v2632
      %v2664 = vunpack.c.l.b16 %v2633
      %v2665 = vunpack.c.h.b16 %v2633
      %v2666 = vunpack.c.l.b16 %v2634
      %v2667 = vunpack.c.h.b16 %v2634
      %v2668 = vunpack.c.l.b16 %v2635
      %v2669 = vunpack.c.h.b16 %v2635
      %v2670 = vunpack.c.l.b16 %v2636
      %v2671 = vunpack.c.h.b16 %v2636
      %v2672 = vunpack.c.l.b16 %v2637
      %v2673 = vunpack.c.h.b16 %v2637
      %v2674 = vpack.c.b16 %v2660, %v2658
      %v2675 = vpack.c.b16 %v2661, %v2659
      %v2676 = vpack.c.b16 %v2664, %v2662
      %v2677 = vpack.c.b16 %v2665, %v2663
      %v2678 = vpack.c.b16 %v2668, %v2666
      %v2679 = vpack.c.b16 %v2669, %v2667
      %v2680 = vpack.c.b16 %v2672, %v2670
      %v2681 = vpack.c.b16 %v2673, %v2671
      %v2691 = vsel %vm1162, %v2629, 0
      %2693 = vmatprep.subr.bf16.mxu0 %v2675
      %2694 = vmatpush1.bf16.msra.mxu0 %v2674
      %2695 = vmatprep.subr.bf16.mxu0 %v2677
      %2696 = vmatpush1.bf16.msra.mxu0 %v2676
      %2697 = vmatprep.subr.bf16.mxu0 %v2679
      %2698 = vmatpush1.bf16.msra.mxu0 %v2678
      %2699 = vmatprep.subr.bf16.mxu0 %v2681
      %2700 = vmatpush1.bf16.msra.mxu0 %v2680
      %2701 = vmatprep.subr.bf16.mxu0 0
      %2702 = vmatpush1.bf16.msra.mxu0 0
      %2703 = vmatprep.subr.bf16.mxu0 0
      %2704 = vmatpush1.bf16.msra.mxu0 0
      %2705 = vmatprep.subr.bf16.mxu0 0
      %2706 = vmatpush1.bf16.msra.mxu0 0
      %2707 = vmatprep.subr.bf16.mxu0 0
      %2708 = vmatpush1.bf16.msra.mxu0 0
      %2709 = vmatprep.subr.bf16.mxu0 0
      %2710 = vmatpush1.bf16.msra.mxu0 0
      %2711 = vmatprep.subr.bf16.mxu0 0
      %2712 = vmatpush1.bf16.msra.mxu0 0
      %2713 = vmatprep.subr.bf16.mxu0 0
      %2714 = vmatpush1.bf16.msra.mxu0 0
      %2715 = vmatprep.subr.bf16.mxu0 0
      %2716 = vmatpush1.bf16.msra.mxu0 0
      %2717 = vmatprep.subr.bf16.mxu0 0
      %2718 = vmatpush1.bf16.msra.mxu0 0
      %2719 = vmatprep.subr.bf16.mxu0 0
      %2720 = vmatpush1.bf16.msra.mxu0 0
      %2721 = vmatprep.subr.bf16.mxu0 0
      %2722 = vmatpush1.bf16.msra.mxu0 0
      %2723 = vmatprep.subr.bf16.mxu0 0
      %2724 = vmatpush1.bf16.msra.mxu0 0
      %2725 = vmatprep.mubr.bf16.mxu0 0
      %2726 = vmatmul.mubr.bf16.gmra.mrb[0].mxu0 %v2691
      %v2727 = vpop.f32.mrb[0].mxu0
      %v2728 = vadd.f32 %v2643, %v2727
      %v2729 = vpop.f32.mrb[0].mxu0
      %v2730 = vadd.f32 %v2647, %v2729
      %v2731 = vpop.f32.mrb[0].mxu0
      %v2732 = vpop.f32.mrb[0].mxu0
      %2733 = vdwg.mxu0
      %v2734 = vmax.f32 %v2728, 0.0
      %v2735 = vmax.f32 %v2730, 0.0
      %v2736 = vpack.c.bf16 %v2734, %v2734
      %v2737 = vpack.c.bf16 %v2735, %v2735
      %v2738 = vld [vmem:[%s1140] sm:$0xf]
      %v2739 = vld [vmem:[%s1140 + $0x4] sm:$0xf]
      %v2740 = vld [vmem:[%s1140 + $0x8] sm:$0xf]
      %v2741 = vld [vmem:[%s1140 + $0xc] sm:$0xf]
      %v2742 = vld [vmem:[%s1140 + $0x10] sm:$0xf]
      %v2743 = vld [vmem:[%s1140 + $0x14] sm:$0xf]
      %v2744 = vld [vmem:[%s1140 + $0x18] sm:$0xf]
      %v2745 = vld [vmem:[%s1140 + $0x1c] sm:$0xf]
      %v2746 = vld [vmem:[%s1140 + $0x20] sm:$0xf]
      %v2747 = vld [vmem:[%s1140 + $0x24] sm:$0xf]
      %v2748 = vld [vmem:[%s1140 + $0x28] sm:$0xf]
      %v2749 = vld [vmem:[%s1140 + $0x2c] sm:$0xf]
      %v2750 = vld [vmem:[%s1140 + $0x30] sm:$0xf]
      %v2751 = vld [vmem:[%s1140 + $0x34] sm:$0xf]
      %v2752 = vld [vmem:[%s1140 + $0x38] sm:$0xf]
      %v2753 = vld [vmem:[%s1140 + $0x3c] sm:$0xf]
      %v2754 = vld [vmem:[%s1140 + $0x40] sm:$0xf]
      %v2755 = vld [vmem:[%s1140 + $0x44] sm:$0xf]
      %v2756 = vld [vmem:[%s1140 + $0x48] sm:$0xf]
      %v2757 = vld [vmem:[%s1140 + $0x4c] sm:$0xf]
      %v2758 = vld [vmem:[%s1140 + $0x50] sm:$0xf]
      %v2759 = vld [vmem:[%s1140 + $0x54] sm:$0xf]
      %v2760 = vld [vmem:[%s1140 + $0x58] sm:$0xf]
      %v2761 = vld [vmem:[%s1140 + $0x5c] sm:$0xf]
      %v2762 = vld [vmem:[%s1140 + $0x60] sm:$0xf]
      %v2763 = vld [vmem:[%s1140 + $0x64] sm:$0xf]
      %v2764 = vld [vmem:[%s1140 + $0x68] sm:$0xf]
      %v2765 = vld [vmem:[%s1140 + $0x6c] sm:$0xf]
      %v2766 = vld [vmem:[%s1140 + $0x70] sm:$0xf]
      %v2767 = vld [vmem:[%s1140 + $0x74] sm:$0xf]
      %v2768 = vld [vmem:[%s1140 + $0x78] sm:$0xf]
      %v2769 = vld [vmem:[%s1140 + $0x7c] sm:$0xf]
      %v2770 = vld [vmem:[%s1143] sm:$0x1]
      %v2772 = vlaneseq
      %v2773 = vshrl.u32 %v2772, 7
      %v2774 = vsub.s32 0, %v2773
      %v2775 = vrot.slane %v2770, %v2774
      %v2809 = vunpack.c.l.b16 %v2738
      %v2810 = vunpack.c.l.b16 %v2739
      %v2811 = vunpack.c.l.b16 %v2740
      %v2812 = vunpack.c.l.b16 %v2741
      %v2813 = vunpack.c.l.b16 %v2742
      %v2814 = vunpack.c.l.b16 %v2743
      %v2815 = vunpack.c.l.b16 %v2744
      %v2816 = vunpack.c.l.b16 %v2745
      %v2817 = vunpack.c.l.b16 %v2746
      %v2818 = vunpack.c.l.b16 %v2747
      %v2819 = vunpack.c.l.b16 %v2748
      %v2820 = vunpack.c.l.b16 %v2749
      %v2821 = vunpack.c.l.b16 %v2750
      %v2822 = vunpack.c.l.b16 %v2751
      %v2823 = vunpack.c.l.b16 %v2752
      %v2824 = vunpack.c.l.b16 %v2753
      %v2825 = vunpack.c.l.b16 %v2754
      %v2826 = vunpack.c.l.b16 %v2755
      %v2827 = vunpack.c.l.b16 %v2756
      %v2828 = vunpack.c.l.b16 %v2757
      %v2829 = vunpack.c.l.b16 %v2758
      %v2830 = vunpack.c.l.b16 %v2759
      %v2831 = vunpack.c.l.b16 %v2760
      %v2832 = vunpack.c.l.b16 %v2761
      %v2833 = vunpack.c.l.b16 %v2762
      %v2834 = vunpack.c.l.b16 %v2763
      %v2835 = vunpack.c.l.b16 %v2764
      %v2836 = vunpack.c.l.b16 %v2765
      %v2837 = vunpack.c.l.b16 %v2766
      %v2838 = vunpack.c.l.b16 %v2767
      %v2839 = vunpack.c.l.b16 %v2768
      %v2840 = vunpack.c.l.b16 %v2769
      %v2841 = vpack.c.b16 %v2810, %v2809
      %v2842 = vpack.c.b16 %v2812, %v2811
      %v2843 = vpack.c.b16 %v2814, %v2813
      %v2844 = vpack.c.b16 %v2816, %v2815
      %v2845 = vpack.c.b16 %v2818, %v2817
      %v2846 = vpack.c.b16 %v2820, %v2819
      %v2847 = vpack.c.b16 %v2822, %v2821
      %v2848 = vpack.c.b16 %v2824, %v2823
      %v2849 = vpack.c.b16 %v2826, %v2825
      %v2850 = vpack.c.b16 %v2828, %v2827
      %v2851 = vpack.c.b16 %v2830, %v2829
      %v2852 = vpack.c.b16 %v2832, %v2831
      %v2853 = vpack.c.b16 %v2834, %v2833
      %v2854 = vpack.c.b16 %v2836, %v2835
      %v2855 = vpack.c.b16 %v2838, %v2837
      %v2856 = vpack.c.b16 %v2840, %v2839
      %2873 = vmatprep.subr.bf16.mxu0 0
      %2874 = vmatpush1.bf16.msra.mxu0 %v2841
      %2875 = vmatprep.subr.bf16.mxu0 0
      %2876 = vmatpush1.bf16.msra.mxu0 %v2842
      %2877 = vmatprep.subr.bf16.mxu0 0
      %2878 = vmatpush1.bf16.msra.mxu0 %v2843
      %2879 = vmatprep.subr.bf16.mxu0 0
      %2880 = vmatpush1.bf16.msra.mxu0 %v2844
      %2881 = vmatprep.subr.bf16.mxu0 0
      %2882 = vmatpush1.bf16.msra.mxu0 %v2845
      %2883 = vmatprep.subr.bf16.mxu0 0
      %2884 = vmatpush1.bf16.msra.mxu0 %v2846
      %2885 = vmatprep.subr.bf16.mxu0 0
      %2886 = vmatpush1.bf16.msra.mxu0 %v2847
      %2887 = vmatprep.subr.bf16.mxu0 0
      %2888 = vmatpush1.bf16.msra.mxu0 %v2848
      %2889 = vmatprep.subr.bf16.mxu0 0
      %2890 = vmatpush1.bf16.msra.mxu0 %v2849
      %2891 = vmatprep.subr.bf16.mxu0 0
      %2892 = vmatpush1.bf16.msra.mxu0 %v2850
      %2893 = vmatprep.subr.bf16.mxu0 0
      %2894 = vmatpush1.bf16.msra.mxu0 %v2851
      %2895 = vmatprep.subr.bf16.mxu0 0
      %2896 = vmatpush1.bf16.msra.mxu0 %v2852
      %2897 = vmatprep.subr.bf16.mxu0 0
      %2898 = vmatpush1.bf16.msra.mxu0 %v2853
      %2899 = vmatprep.subr.bf16.mxu0 0
      %2900 = vmatpush1.bf16.msra.mxu0 %v2854
      %2901 = vmatprep.subr.bf16.mxu0 0
      %2902 = vmatpush1.bf16.msra.mxu0 %v2855
      %2903 = vmatprep.subr.bf16.mxu0 0
      %2904 = vmatpush1.bf16.msra.mxu0 %v2856
      %2905 = vmatprep.mubr.bf16.mxu0 %v2737
      %2906 = vmatmul.mubr.bf16.gmra.mrb[0].mxu0 %v2736
      %v2907 = vpop.f32.mrb[0].mxu0
      %v2908 = vadd.f32 %v2775, %v2907
      %v2909 = vpop.f32.mrb[0].mxu0
      %v2910 = vpop.f32.mrb[0].mxu0
      %v2911 = vpop.f32.mrb[0].mxu0
      %2912 = vdwg.mxu0
      %v2913 = vadd.f32 %v2599, %v2908
      %2914 = vst.msk [vmem:[#allocation2] sm:$0xff] %vm1162, %v2913
      %p2915 = scmp.eq.s32.totalorder %s41, 1
      // Predicated region
      $region125: #{audio_captioner_forward.4} parent=119 // pred_check
        %p2916 = pneg %p2915
      $region126: #{audio_captioner_forward.4} parent=119 // pred_check_branch
        %2918 = sbr.rel (%p2916) target = $region128
      $region127: #{audio_captioner_forward.4} parent=119 // pred_region
        %2919 = vst.msk [vmem:[%s1147] sm:$0xff] %vm1162, %v2913
      $region128: #{audio_captioner_forward.4} parent=119 // pred_fallthru
        _
      %p2920 = scmp.lt.s32.totalorder %s40, 1
      %s2921 = scalar_select %p2920, %s40, 1
      %s2922 = smul.addr %s2921, 8
      %s2923 = scalar_lea.vmem %s25, %s2922
      // Predicated region
      $region129: #{audio_captioner_forward.4} parent=119 // pred_check
        %p2924 = pneg %p711
      $region130: #{audio_captioner_forward.4} parent=119 // pred_check_branch
        %2926 = sbr.rel (%p2924) target = $region132
      $region131: #{audio_captioner_forward.4} parent=119 // pred_region
        _
      $region132: #{audio_captioner_forward.4} parent=119 // pred_fallthru
        _
    $region120: #{audio_captioner_forward.4} parent=5 // pred_fallthru
      _
    %p2927 = scmp.le.s32.totalorder 2, %s31
    // Predicated region
    $region133: #{audio_captioner_forward.4} parent=5 // pred_check
      %p2928 = pneg %p2927
    $region134: #{audio_captioner_forward.4} parent=5 // pred_check_branch
      %2930 = sbr.rel (%p2928) target = $region136
    $region135: #{audio_captioner_forward.4} parent=5 // pred_region
      %s2931 = ssub.s32 %s31, 2
      // Predicated region
      $region137: #{audio_captioner_forward.4} parent=135 // pred_check
        %p2932 = pneg %p717
      $region138: #{audio_captioner_forward.4} parent=135 // pred_check_branch
        %2934 = sbr.rel (%p2932) target = $region140
      $region139: #{audio_captioner_forward.4} parent=135 // pred_region
        %p2935 = scmp.lt.s32.totalorder %s42, 1
        %s2936 = scalar_select %p2935, %s42, 1
        %s2937 = smul.addr %s2936, 8
        %s2938 = scalar_lea.vmem %s25, %s2937
      $region140: #{audio_captioner_forward.4} parent=135 // pred_fallthru
        _
    $region136: #{audio_captioner_forward.4} parent=5 // pred_fallthru
      _
  $region6: #{audio_captioner_forward.4} parent=0 // loop_footer
    %s35 = sadd.s32 1, %s31
  $region7: #{audio_captioner_forward.4} parent=0 // loop_footer_branch
    %30 = sbr.rel target = $region3
  $region8: #{audio_captioner_forward.4} parent=0 // loop_exit
    _

</llo_original>
